<compile_context>
chip_gen: v6e
topology: v6e:2x2x1
jax: 0.10.0
libtpu: 0.0.40
codegen_flags: <defaults>
</compile_context>

<pallas_src>
import functools

import jax
import jax.numpy as jnp
from jax.experimental import pallas as pl
from jax.experimental.pallas import tpu as pltpu


def _conv_taps(read_tap, w_ref, b_ref, *, cin, cout, ks, p, Wp, band, act):
    """Scalar-weight conv over a lane-dense band of flattened padded rows.

    read_tap(ci, off) returns the (1, band) f32 slice of input channel `ci`
    shifted by flat offset `off` relative to the band origin.
    w_ref: flat (ks*ks*cin*cout,) f32 SMEM ref in (ky, kx, cin, cout) order,
    with the BN scale already folded in.  b_ref: (cout,) SMEM ref or None.
    Returns `cout` float32 (1, band) values with bias + activation applied
    (values at halo-column positions are garbage and must be masked before
    being used as the next layer's padded input).
    """
    acc = [jnp.zeros((1, band), jnp.float32) for _ in range(cout)]
    for dy in range(ks):
        for dx in range(ks):
            off = (dy - p) * Wp + (dx - p)
            for ci in range(cin):
                t = read_tap(ci, off)          # one shifted load, reused over cout
                base = ((dy * ks + dx) * cin + ci) * cout
                for co in range(cout):
                    acc[co] = acc[co] + t * w_ref[base + co]
    out = []
    for co in range(cout):
        y = acc[co] if b_ref is None else acc[co] + b_ref[co]
        if act == "relu":
            y = jnp.maximum(y, 0.0)
        else:
            y = jax.nn.sigmoid(y)
        out.append(y)
    return out


def salhead_kernel(x_ref, mask_ref, w1, b1, w2, b2, w3, b3, w4,
                   o_ref, buf, *, k1, c_in, c_half, c_out3, H, W, P):
    Wp = W + 2 * P
    band = H * Wp                  # H padded rows, lane-dense
    bs = P + P * Wp                # band start inside an extended flat plane
    Lext = 2 * P + (H + 2 * P) * Wp
    p1 = (k1 - 1) // 2

    mask = mask_ref[...]           # (1, band): 1.0 at real pixels, 0.0 at halo cols

    # Halo-only zeroing of the single staging buffer; the band is always fully
    # overwritten with masked values, so no full-buffer memset is needed.
    buf[:, :, 0:bs] = jnp.zeros((1, c_half, bs), jnp.float32)
    buf[:, :, bs + band:Lext] = jnp.zeros((1, c_half, bs), jnp.float32)

    # layer 1: k1 x k1 conv, c_in -> c_half, BN(folded), ReLU.
    # Reads the pre-padded, flattened input directly (no in-kernel copy).
    y1 = _conv_taps(lambda ci, off: x_ref[:, ci, bs + off:bs + off + band],
                    w1, b1, cin=c_in, cout=c_half, ks=k1, p=p1,
                    Wp=Wp, band=band, act="relu")
    for co in range(c_half):
        buf[:, co, bs:bs + band] = y1[co] * mask

    # layer 2: 3x3 conv, c_half -> c_half, BN(folded), ReLU.
    y2 = _conv_taps(lambda ci, off: buf[:, ci, bs + off:bs + off + band],
                    w2, b2, cin=c_half, cout=c_half, ks=3, p=1,
                    Wp=Wp, band=band, act="relu")
    for co in range(c_half):       # reuse the SAME buffer (halo already zero)
        buf[:, co, bs:bs + band] = y2[co] * mask

    # layer 3: 3x3 conv, c_half -> c_out3, BN(folded), ReLU (stays in vregs).
    y3 = _conv_taps(lambda ci, off: buf[:, ci, bs + off:bs + off + band],
                    w3, b3, cin=c_half, cout=c_out3, ks=3, p=1,
                    Wp=Wp, band=band, act="relu")

    # layer 4: 1x1 conv, c_out3 -> 1, no BN, Sigmoid (VPU fma + EUP sigmoid).
    acc = jnp.zeros((1, band), jnp.float32)
    for ci in range(c_out3):
        acc = acc + y3[ci] * w4[ci]
    o_ref[:, 0, :] = jax.nn.sigmoid(acc)


def salhead_forward(x_nchw, params, inter_ks):
    """Fused SalHead forward.  x_nchw: (N, C, H, W) float32, PyTorch layout."""
    N, c_in, H, W = x_nchw.shape
    assert c_in % 8 == 0, "SalHead needs in_channels divisible by 8"
    assert inter_ks in (1, 3, 5, 7)
    c_half = c_in // 2
    c_out3 = c_in // 8
    p1 = (inter_ks - 1) // 2
    P = max(p1, 1)                 # uniform halo large enough for every layer
    Hp, Wp = H + 2 * P, W + 2 * P
    band = H * Wp
    Lext = 2 * P + Hp * Wp

    # Lane-dense relayout done by XLA in the wrapper (pure layout plumbing):
    # zero-pad spatially, flatten the padded rows onto the lane axis and add a
    # flat margin of P so every static tap slice stays in bounds.
    x = x_nchw.astype(jnp.float32)
    xf = jnp.pad(x, ((0, 0), (0, 0), (P, P), (P, P))).reshape(N, c_in, Hp * Wp)
    xf = jnp.pad(xf, ((0, 0), (0, 0), (P, P)))

    # Interior-column mask over the band (zeros the halo columns of each row).
    col = jnp.arange(band, dtype=jnp.int32) % Wp
    mask = ((col >= P) & (col < P + W)).astype(jnp.float32).reshape(1, band)

    def wfold(p):                  # fold BN scale into the conv weights
        return (p["w"] * p["scale"]).reshape(-1).astype(jnp.float32)

    kernel = functools.partial(salhead_kernel, k1=inter_ks, c_in=c_in,
                               c_half=c_half, c_out3=c_out3, H=H, W=W, P=P)
    smem = pl.BlockSpec(memory_space=pltpu.MemorySpace.SMEM)

    out_band = pl.pallas_call(
        kernel,
        out_shape=jax.ShapeDtypeStruct((N, 1, band), jnp.float32),
        grid=(N,),
        in_specs=[
            pl.BlockSpec((1, c_in, Lext), lambda n: (n, 0, 0)),
            pl.BlockSpec((1, band), lambda n: (0, 0)),
            smem, smem, smem, smem, smem, smem, smem,
        ],
        out_specs=pl.BlockSpec((1, 1, band), lambda n: (n, 0, 0)),
        scratch_shapes=[pltpu.VMEM((1, c_half, Lext), jnp.float32)],
        compiler_params=pltpu.CompilerParams(
            dimension_semantics=("parallel",),
            vmem_limit_bytes=32 * 1024 * 1024),
    )(xf, mask,
      wfold(params[0]), params[0]["bias"].astype(jnp.float32),
      wfold(params[1]), params[1]["bias"].astype(jnp.float32),
      wfold(params[2]), params[2]["bias"].astype(jnp.float32),
      params[3]["w"].reshape(-1).astype(jnp.float32))

    # Kernel output is in padded-row band layout (lane-dense store); strip the
    # halo columns here.
    return out_band.reshape(N, 1, H, Wp)[:, :, :, P:P + W]


def fold_bn(gamma, beta, running_mean, running_var, eps=1e-5):
    scale = gamma / jnp.sqrt(running_var + eps)
    bias = beta - running_mean * scale
    return scale, bias


def init_salhead_params(key, in_channels, inter_ks):
    """Deterministic synthetic parameters matching SalHead.__init__ shapes."""
    c_half = in_channels // 2
    c_eighth = in_channels // 8
    layer_defs = [
        # (cin, cout, ks, use_bn, act)
        (in_channels, c_half, inter_ks, True, "relu"),
        (c_half, c_half, 3, True, "relu"),
        (c_half, c_eighth, 3, True, "relu"),
        (c_eighth, 1, 1, False, "sigmoid"),
    ]
    params = []
    for cin, cout, ks, use_bn, act in layer_defs:
        key, kw_, kg, kb, km, kv = jax.random.split(key, 6)
        w = jax.random.normal(kw_, (ks, ks, cin, cout), jnp.float32) * 0.1
        if use_bn:
            gamma = 1.0 + 0.1 * jax.random.normal(kg, (cout,), jnp.float32)
            beta = 0.1 * jax.random.normal(kb, (cout,), jnp.float32)
            mean = 0.1 * jax.random.normal(km, (cout,), jnp.float32)
            var = 1.0 + 0.1 * jax.random.uniform(kv, (cout,), jnp.float32)
            scale, bias = fold_bn(gamma, beta, mean, var)
        else:
            scale = jnp.ones((cout,), jnp.float32)
            bias = jnp.zeros((cout,), jnp.float32)
        params.append(dict(w=w, scale=scale, bias=bias, act=act))
    return params


def salhead_reference(x_nchw, params):
    """Pure-JAX (lax.conv) reference for correctness checking."""
    x = x_nchw.astype(jnp.float32)
    for p in params:
        # (KH, KW, Cin, Cout) -> (Cout, Cin, KH, KW)
        w = jnp.transpose(p["w"], (3, 2, 0, 1))
        ks = w.shape[-1]
        pad = (ks - 1) // 2
        y = jax.lax.conv_general_dilated(
            x, w, window_strides=(1, 1),
            padding=((pad, pad), (pad, pad)),
            dimension_numbers=("NCHW", "OIHW", "NCHW"))
        y = y * p["scale"][None, :, None, None] + p["bias"][None, :, None, None]
        if p["act"] == "relu":
            y = jnp.maximum(y, 0.0)
        else:
            y = jax.nn.sigmoid(y)
        x = y
    return x


if __name__ == "__main__":
    key = jax.random.PRNGKey(0)
    k_in, k_par = jax.random.split(key)

    in_channels = 8          # SalHead needs in_channels divisible by 8
    inter_ks = 3
    N, H, W = 2, 16, 16

    x = jax.random.normal(k_in, (N, in_channels, H, W), jnp.float32)
    params = init_salhead_params(k_par, in_channels, inter_ks)

    out = salhead_forward(x, params, inter_ks)
    out = jax.block_until_ready(out)

    ref = salhead_reference(x, params)
    assert out.shape == (N, 1, H, W), out.shape
    assert jnp.allclose(out, ref, atol=1e-4, rtol=1e-4), float(
        jnp.max(jnp.abs(out - ref)))

    print("KERNEL_OK")
</pallas_src>

<mosaic_0001>
module attributes {stable_mosaic.version = 11 : i64} {
  func.func @salhead_kernel(%arg0: i32, %arg1: memref<1x8x326xf32, #tpu.memory_space<vmem>>, %arg2: memref<1x288xf32, #tpu.memory_space<vmem>>, %arg3: memref<288xf32, #tpu.memory_space<smem>>, %arg4: memref<4xf32, #tpu.memory_space<smem>>, %arg5: memref<144xf32, #tpu.memory_space<smem>>, %arg6: memref<4xf32, #tpu.memory_space<smem>>, %arg7: memref<36xf32, #tpu.memory_space<smem>>, %arg8: memref<1xf32, #tpu.memory_space<smem>>, %arg9: memref<1xf32, #tpu.memory_space<smem>>, %arg10: memref<1x1x288xf32, #tpu.memory_space<vmem>>, %arg11: memref<1x4x326xf32, #tpu.memory_space<vmem>>) attributes {dimension_semantics = [#tpu.dimension_semantics<parallel>], iteration_bounds = array<i64: 2>, scalar_prefetch = 0 : i64, scratch_operands = 1 : i64, tpu.core_type = #tpu.core_type<tc>, window_params = [{transform_indices = @transform_0, window_bounds = array<i64: 1, 8, 326>}, {pipeline_mode = #tpu.pipeline_mode<synchronous>, transform_indices = @transform_1, window_bounds = array<i64: 1, 288>}, {transform_indices = @transform_2, window_bounds = array<i64: 288>}, {transform_indices = @transform_3, window_bounds = array<i64: 4>}, {transform_indices = @transform_4, window_bounds = array<i64: 144>}, {transform_indices = @transform_5, window_bounds = array<i64: 4>}, {transform_indices = @transform_6, window_bounds = array<i64: 36>}, {transform_indices = @transform_7, window_bounds = array<i64: 1>}, {transform_indices = @transform_8, window_bounds = array<i64: 1>}, {transform_indices = @transform_9, window_bounds = array<i64: 1, 1, 288>}]} {
    %c0 = arith.constant 0 : index
    %c0_0 = arith.constant 0 : index
    %0 = vector.load %arg2[%c0, %c0_0] : memref<1x288xf32, #tpu.memory_space<vmem>>, vector<1x288xf32>
    %cst = arith.constant 0.000000e+00 : f32
    %1 = vector.broadcast %cst : f32 to vector<1x4x19xf32>
    %c0_1 = arith.constant 0 : index
    %c0_2 = arith.constant 0 : index
    %c0_3 = arith.constant 0 : index
    %2 = vector.load %arg11[%c0_1, %c0_2, %c0_3] : memref<1x4x326xf32, #tpu.memory_space<vmem>>, vector<1x4x19xf32>
    tpu.vector_store %arg11[%c0_1, %c0_2, %c0_3], %1 {strides = array<i32>} : memref<1x4x326xf32, #tpu.memory_space<vmem>>, vector<1x4x19xf32>,
    %cst_4 = arith.constant 0.000000e+00 : f32
    %3 = vector.broadcast %cst_4 : f32 to vector<1x4x19xf32>
    %c0_5 = arith.constant 0 : index
    %c0_6 = arith.constant 0 : index
    %c307 = arith.constant 307 : index
    %4 = vector.load %arg11[%c0_5, %c0_6, %c307] : memref<1x4x326xf32, #tpu.memory_space<vmem>>, vector<1x4x19xf32>
    tpu.vector_store %arg11[%c0_5, %c0_6, %c307], %3 {strides = array<i32>} : memref<1x4x326xf32, #tpu.memory_space<vmem>>, vector<1x4x19xf32>,
    %cst_7 = arith.constant 0.000000e+00 : f32
    %5 = vector.broadcast %cst_7 : f32 to vector<1x288xf32>
    %cst_8 = arith.constant 0.000000e+00 : f32
    %6 = vector.broadcast %cst_8 : f32 to vector<1x288xf32>
    %cst_9 = arith.constant 0.000000e+00 : f32
    %7 = vector.broadcast %cst_9 : f32 to vector<1x288xf32>
    %cst_10 = arith.constant 0.000000e+00 : f32
    %8 = vector.broadcast %cst_10 : f32 to vector<1x288xf32>
    %c0_11 = arith.constant 0 : index
    %c0_12 = arith.constant 0 : index
    %c0_13 = arith.constant 0 : index
    %9 = vector.load %arg1[%c0_11, %c0_12, %c0_13] : memref<1x8x326xf32, #tpu.memory_space<vmem>>, vector<1x1x288xf32>
    %10 = vector.shape_cast %9 : vector<1x1x288xf32> to vector<1x288xf32>
    %c0_14 = arith.constant 0 : index
    %11 = memref.load %arg3[%c0_14] : memref<288xf32, #tpu.memory_space<smem>>
    %12 = vector.broadcast %11 : f32 to vector<1x288xf32>
    %13 = arith.mulf %10, %12 : vector<1x288xf32>
    %14 = arith.addf %5, %13 : vector<1x288xf32>
    %c1 = arith.constant 1 : index
    %15 = memref.load %arg3[%c1] : memref<288xf32, #tpu.memory_space<smem>>
    %16 = vector.broadcast %15 : f32 to vector<1x288xf32>
    %17 = arith.mulf %10, %16 : vector<1x288xf32>
    %18 = arith.addf %6, %17 : vector<1x288xf32>
    %c2 = arith.constant 2 : index
    %19 = memref.load %arg3[%c2] : memref<288xf32, #tpu.memory_space<smem>>
    %20 = vector.broadcast %19 : f32 to vector<1x288xf32>
    %21 = arith.mulf %10, %20 : vector<1x288xf32>
    %22 = arith.addf %7, %21 : vector<1x288xf32>
    %c3 = arith.constant 3 : index
    %23 = memref.load %arg3[%c3] : memref<288xf32, #tpu.memory_space<smem>>
    %24 = vector.broadcast %23 : f32 to vector<1x288xf32>
    %25 = arith.mulf %10, %24 : vector<1x288xf32>
    %26 = arith.addf %8, %25 : vector<1x288xf32>
    %c0_15 = arith.constant 0 : index
    %c1_16 = arith.constant 1 : index
    %c0_17 = arith.constant 0 : index
    %27 = vector.load %arg1[%c0_15, %c1_16, %c0_17] : memref<1x8x326xf32, #tpu.memory_space<vmem>>, vector<1x1x288xf32>
    %28 = vector.shape_cast %27 : vector<1x1x288xf32> to vector<1x288xf32>
    %c4 = arith.constant 4 : index
    %29 = memref.load %arg3[%c4] : memref<288xf32, #tpu.memory_space<smem>>
    %30 = vector.broadcast %29 : f32 to vector<1x288xf32>
    %31 = arith.mulf %28, %30 : vector<1x288xf32>
    %32 = arith.addf %14, %31 : vector<1x288xf32>
    %c5 = arith.constant 5 : index
    %33 = memref.load %arg3[%c5] : memref<288xf32, #tpu.memory_space<smem>>
    %34 = vector.broadcast %33 : f32 to vector<1x288xf32>
    %35 = arith.mulf %28, %34 : vector<1x288xf32>
    %36 = arith.addf %18, %35 : vector<1x288xf32>
    %c6 = arith.constant 6 : index
    %37 = memref.load %arg3[%c6] : memref<288xf32, #tpu.memory_space<smem>>
    %38 = vector.broadcast %37 : f32 to vector<1x288xf32>
    %39 = arith.mulf %28, %38 : vector<1x288xf32>
    %40 = arith.addf %22, %39 : vector<1x288xf32>
    %c7 = arith.constant 7 : index
    %41 = memref.load %arg3[%c7] : memref<288xf32, #tpu.memory_space<smem>>
    %42 = vector.broadcast %41 : f32 to vector<1x288xf32>
    %43 = arith.mulf %28, %42 : vector<1x288xf32>
    %44 = arith.addf %26, %43 : vector<1x288xf32>
    %c0_18 = arith.constant 0 : index
    %c2_19 = arith.constant 2 : index
    %c0_20 = arith.constant 0 : index
    %45 = vector.load %arg1[%c0_18, %c2_19, %c0_20] : memref<1x8x326xf32, #tpu.memory_space<vmem>>, vector<1x1x288xf32>
    %46 = vector.shape_cast %45 : vector<1x1x288xf32> to vector<1x288xf32>
    %c8 = arith.constant 8 : index
    %47 = memref.load %arg3[%c8] : memref<288xf32, #tpu.memory_space<smem>>
    %48 = vector.broadcast %47 : f32 to vector<1x288xf32>
    %49 = arith.mulf %46, %48 : vector<1x288xf32>
    %50 = arith.addf %32, %49 : vector<1x288xf32>
    %c9 = arith.constant 9 : index
    %51 = memref.load %arg3[%c9] : memref<288xf32, #tpu.memory_space<smem>>
    %52 = vector.broadcast %51 : f32 to vector<1x288xf32>
    %53 = arith.mulf %46, %52 : vector<1x288xf32>
    %54 = arith.addf %36, %53 : vector<1x288xf32>
    %c10 = arith.constant 10 : index
    %55 = memref.load %arg3[%c10] : memref<288xf32, #tpu.memory_space<smem>>
    %56 = vector.broadcast %55 : f32 to vector<1x288xf32>
    %57 = arith.mulf %46, %56 : vector<1x288xf32>
    %58 = arith.addf %40, %57 : vector<1x288xf32>
    %c11 = arith.constant 11 : index
    %59 = memref.load %arg3[%c11] : memref<288xf32, #tpu.memory_space<smem>>
    %60 = vector.broadcast %59 : f32 to vector<1x288xf32>
    %61 = arith.mulf %46, %60 : vector<1x288xf32>
    %62 = arith.addf %44, %61 : vector<1x288xf32>
    %c0_21 = arith.constant 0 : index
    %c3_22 = arith.constant 3 : index
    %c0_23 = arith.constant 0 : index
    %63 = vector.load %arg1[%c0_21, %c3_22, %c0_23] : memref<1x8x326xf32, #tpu.memory_space<vmem>>, vector<1x1x288xf32>
    %64 = vector.shape_cast %63 : vector<1x1x288xf32> to vector<1x288xf32>
    %c12 = arith.constant 12 : index
    %65 = memref.load %arg3[%c12] : memref<288xf32, #tpu.memory_space<smem>>
    %66 = vector.broadcast %65 : f32 to vector<1x288xf32>
    %67 = arith.mulf %64, %66 : vector<1x288xf32>
    %68 = arith.addf %50, %67 : vector<1x288xf32>
    %c13 = arith.constant 13 : index
    %69 = memref.load %arg3[%c13] : memref<288xf32, #tpu.memory_space<smem>>
    %70 = vector.broadcast %69 : f32 to vector<1x288xf32>
    %71 = arith.mulf %64, %70 : vector<1x288xf32>
    %72 = arith.addf %54, %71 : vector<1x288xf32>
    %c14 = arith.constant 14 : index
    %73 = memref.load %arg3[%c14] : memref<288xf32, #tpu.memory_space<smem>>
    %74 = vector.broadcast %73 : f32 to vector<1x288xf32>
    %75 = arith.mulf %64, %74 : vector<1x288xf32>
    %76 = arith.addf %58, %75 : vector<1x288xf32>
    %c15 = arith.constant 15 : index
    %77 = memref.load %arg3[%c15] : memref<288xf32, #tpu.memory_space<smem>>
    %78 = vector.broadcast %77 : f32 to vector<1x288xf32>
    %79 = arith.mulf %64, %78 : vector<1x288xf32>
    %80 = arith.addf %62, %79 : vector<1x288xf32>
    %c0_24 = arith.constant 0 : index
    %c4_25 = arith.constant 4 : index
    %c0_26 = arith.constant 0 : index
    %81 = vector.load %arg1[%c0_24, %c4_25, %c0_26] : memref<1x8x326xf32, #tpu.memory_space<vmem>>, vector<1x1x288xf32>
    %82 = vector.shape_cast %81 : vector<1x1x288xf32> to vector<1x288xf32>
    %c16 = arith.constant 16 : index
    %83 = memref.load %arg3[%c16] : memref<288xf32, #tpu.memory_space<smem>>
    %84 = vector.broadcast %83 : f32 to vector<1x288xf32>
    %85 = arith.mulf %82, %84 : vector<1x288xf32>
    %86 = arith.addf %68, %85 : vector<1x288xf32>
    %c17 = arith.constant 17 : index
    %87 = memref.load %arg3[%c17] : memref<288xf32, #tpu.memory_space<smem>>
    %88 = vector.broadcast %87 : f32 to vector<1x288xf32>
    %89 = arith.mulf %82, %88 : vector<1x288xf32>
    %90 = arith.addf %72, %89 : vector<1x288xf32>
    %c18 = arith.constant 18 : index
    %91 = memref.load %arg3[%c18] : memref<288xf32, #tpu.memory_space<smem>>
    %92 = vector.broadcast %91 : f32 to vector<1x288xf32>
    %93 = arith.mulf %82, %92 : vector<1x288xf32>
    %94 = arith.addf %76, %93 : vector<1x288xf32>
    %c19 = arith.constant 19 : index
    %95 = memref.load %arg3[%c19] : memref<288xf32, #tpu.memory_space<smem>>
    %96 = vector.broadcast %95 : f32 to vector<1x288xf32>
    %97 = arith.mulf %82, %96 : vector<1x288xf32>
    %98 = arith.addf %80, %97 : vector<1x288xf32>
    %c0_27 = arith.constant 0 : index
    %c5_28 = arith.constant 5 : index
    %c0_29 = arith.constant 0 : index
    %99 = vector.load %arg1[%c0_27, %c5_28, %c0_29] : memref<1x8x326xf32, #tpu.memory_space<vmem>>, vector<1x1x288xf32>
    %100 = vector.shape_cast %99 : vector<1x1x288xf32> to vector<1x288xf32>
    %c20 = arith.constant 20 : index
    %101 = memref.load %arg3[%c20] : memref<288xf32, #tpu.memory_space<smem>>
    %102 = vector.broadcast %101 : f32 to vector<1x288xf32>
    %103 = arith.mulf %100, %102 : vector<1x288xf32>
    %104 = arith.addf %86, %103 : vector<1x288xf32>
    %c21 = arith.constant 21 : index
    %105 = memref.load %arg3[%c21] : memref<288xf32, #tpu.memory_space<smem>>
    %106 = vector.broadcast %105 : f32 to vector<1x288xf32>
    %107 = arith.mulf %100, %106 : vector<1x288xf32>
    %108 = arith.addf %90, %107 : vector<1x288xf32>
    %c22 = arith.constant 22 : index
    %109 = memref.load %arg3[%c22] : memref<288xf32, #tpu.memory_space<smem>>
    %110 = vector.broadcast %109 : f32 to vector<1x288xf32>
    %111 = arith.mulf %100, %110 : vector<1x288xf32>
    %112 = arith.addf %94, %111 : vector<1x288xf32>
    %c23 = arith.constant 23 : index
    %113 = memref.load %arg3[%c23] : memref<288xf32, #tpu.memory_space<smem>>
    %114 = vector.broadcast %113 : f32 to vector<1x288xf32>
    %115 = arith.mulf %100, %114 : vector<1x288xf32>
    %116 = arith.addf %98, %115 : vector<1x288xf32>
    %c0_30 = arith.constant 0 : index
    %c6_31 = arith.constant 6 : index
    %c0_32 = arith.constant 0 : index
    %117 = vector.load %arg1[%c0_30, %c6_31, %c0_32] : memref<1x8x326xf32, #tpu.memory_space<vmem>>, vector<1x1x288xf32>
    %118 = vector.shape_cast %117 : vector<1x1x288xf32> to vector<1x288xf32>
    %c24 = arith.constant 24 : index
    %119 = memref.load %arg3[%c24] : memref<288xf32, #tpu.memory_space<smem>>
    %120 = vector.broadcast %119 : f32 to vector<1x288xf32>
    %121 = arith.mulf %118, %120 : vector<1x288xf32>
    %122 = arith.addf %104, %121 : vector<1x288xf32>
    %c25 = arith.constant 25 : index
    %123 = memref.load %arg3[%c25] : memref<288xf32, #tpu.memory_space<smem>>
    %124 = vector.broadcast %123 : f32 to vector<1x288xf32>
    %125 = arith.mulf %118, %124 : vector<1x288xf32>
    %126 = arith.addf %108, %125 : vector<1x288xf32>
    %c26 = arith.constant 26 : index
    %127 = memref.load %arg3[%c26] : memref<288xf32, #tpu.memory_space<smem>>
    %128 = vector.broadcast %127 : f32 to vector<1x288xf32>
    %129 = arith.mulf %118, %128 : vector<1x288xf32>
    %130 = arith.addf %112, %129 : vector<1x288xf32>
    %c27 = arith.constant 27 : index
    %131 = memref.load %arg3[%c27] : memref<288xf32, #tpu.memory_space<smem>>
    %132 = vector.broadcast %131 : f32 to vector<1x288xf32>
    %133 = arith.mulf %118, %132 : vector<1x288xf32>
    %134 = arith.addf %116, %133 : vector<1x288xf32>
    %c0_33 = arith.constant 0 : index
    %c7_34 = arith.constant 7 : index
    %c0_35 = arith.constant 0 : index
    %135 = vector.load %arg1[%c0_33, %c7_34, %c0_35] : memref<1x8x326xf32, #tpu.memory_space<vmem>>, vector<1x1x288xf32>
    %136 = vector.shape_cast %135 : vector<1x1x288xf32> to vector<1x288xf32>
    %c28 = arith.constant 28 : index
    %137 = memref.load %arg3[%c28] : memref<288xf32, #tpu.memory_space<smem>>
    %138 = vector.broadcast %137 : f32 to vector<1x288xf32>
    %139 = arith.mulf %136, %138 : vector<1x288xf32>
    %140 = arith.addf %122, %139 : vector<1x288xf32>
    %c29 = arith.constant 29 : index
    %141 = memref.load %arg3[%c29] : memref<288xf32, #tpu.memory_space<smem>>
    %142 = vector.broadcast %141 : f32 to vector<1x288xf32>
    %143 = arith.mulf %136, %142 : vector<1x288xf32>
    %144 = arith.addf %126, %143 : vector<1x288xf32>
    %c30 = arith.constant 30 : index
    %145 = memref.load %arg3[%c30] : memref<288xf32, #tpu.memory_space<smem>>
    %146 = vector.broadcast %145 : f32 to vector<1x288xf32>
    %147 = arith.mulf %136, %146 : vector<1x288xf32>
    %148 = arith.addf %130, %147 : vector<1x288xf32>
    %c31 = arith.constant 31 : index
    %149 = memref.load %arg3[%c31] : memref<288xf32, #tpu.memory_space<smem>>
    %150 = vector.broadcast %149 : f32 to vector<1x288xf32>
    %151 = arith.mulf %136, %150 : vector<1x288xf32>
    %152 = arith.addf %134, %151 : vector<1x288xf32>
    %c0_36 = arith.constant 0 : index
    %c0_37 = arith.constant 0 : index
    %c1_38 = arith.constant 1 : index
    %153 = vector.load %arg1[%c0_36, %c0_37, %c1_38] : memref<1x8x326xf32, #tpu.memory_space<vmem>>, vector<1x1x288xf32>
    %154 = vector.shape_cast %153 : vector<1x1x288xf32> to vector<1x288xf32>
    %c32 = arith.constant 32 : index
    %155 = memref.load %arg3[%c32] : memref<288xf32, #tpu.memory_space<smem>>
    %156 = vector.broadcast %155 : f32 to vector<1x288xf32>
    %157 = arith.mulf %154, %156 : vector<1x288xf32>
    %158 = arith.addf %140, %157 : vector<1x288xf32>
    %c33 = arith.constant 33 : index
    %159 = memref.load %arg3[%c33] : memref<288xf32, #tpu.memory_space<smem>>
    %160 = vector.broadcast %159 : f32 to vector<1x288xf32>
    %161 = arith.mulf %154, %160 : vector<1x288xf32>
    %162 = arith.addf %144, %161 : vector<1x288xf32>
    %c34 = arith.constant 34 : index
    %163 = memref.load %arg3[%c34] : memref<288xf32, #tpu.memory_space<smem>>
    %164 = vector.broadcast %163 : f32 to vector<1x288xf32>
    %165 = arith.mulf %154, %164 : vector<1x288xf32>
    %166 = arith.addf %148, %165 : vector<1x288xf32>
    %c35 = arith.constant 35 : index
    %167 = memref.load %arg3[%c35] : memref<288xf32, #tpu.memory_space<smem>>
    %168 = vector.broadcast %167 : f32 to vector<1x288xf32>
    %169 = arith.mulf %154, %168 : vector<1x288xf32>
    %170 = arith.addf %152, %169 : vector<1x288xf32>
    %c0_39 = arith.constant 0 : index
    %c1_40 = arith.constant 1 : index
    %c1_41 = arith.constant 1 : index
    %171 = vector.load %arg1[%c0_39, %c1_40, %c1_41] : memref<1x8x326xf32, #tpu.memory_space<vmem>>, vector<1x1x288xf32>
    %172 = vector.shape_cast %171 : vector<1x1x288xf32> to vector<1x288xf32>
    %c36 = arith.constant 36 : index
    %173 = memref.load %arg3[%c36] : memref<288xf32, #tpu.memory_space<smem>>
    %174 = vector.broadcast %173 : f32 to vector<1x288xf32>
    %175 = arith.mulf %172, %174 : vector<1x288xf32>
    %176 = arith.addf %158, %175 : vector<1x288xf32>
    %c37 = arith.constant 37 : index
    %177 = memref.load %arg3[%c37] : memref<288xf32, #tpu.memory_space<smem>>
    %178 = vector.broadcast %177 : f32 to vector<1x288xf32>
    %179 = arith.mulf %172, %178 : vector<1x288xf32>
    %180 = arith.addf %162, %179 : vector<1x288xf32>
    %c38 = arith.constant 38 : index
    %181 = memref.load %arg3[%c38] : memref<288xf32, #tpu.memory_space<smem>>
    %182 = vector.broadcast %181 : f32 to vector<1x288xf32>
    %183 = arith.mulf %172, %182 : vector<1x288xf32>
    %184 = arith.addf %166, %183 : vector<1x288xf32>
    %c39 = arith.constant 39 : index
    %185 = memref.load %arg3[%c39] : memref<288xf32, #tpu.memory_space<smem>>
    %186 = vector.broadcast %185 : f32 to vector<1x288xf32>
    %187 = arith.mulf %172, %186 : vector<1x288xf32>
    %188 = arith.addf %170, %187 : vector<1x288xf32>
    %c0_42 = arith.constant 0 : index
    %c2_43 = arith.constant 2 : index
    %c1_44 = arith.constant 1 : index
    %189 = vector.load %arg1[%c0_42, %c2_43, %c1_44] : memref<1x8x326xf32, #tpu.memory_space<vmem>>, vector<1x1x288xf32>
    %190 = vector.shape_cast %189 : vector<1x1x288xf32> to vector<1x288xf32>
    %c40 = arith.constant 40 : index
    %191 = memref.load %arg3[%c40] : memref<288xf32, #tpu.memory_space<smem>>
    %192 = vector.broadcast %191 : f32 to vector<1x288xf32>
    %193 = arith.mulf %190, %192 : vector<1x288xf32>
    %194 = arith.addf %176, %193 : vector<1x288xf32>
    %c41 = arith.constant 41 : index
    %195 = memref.load %arg3[%c41] : memref<288xf32, #tpu.memory_space<smem>>
    %196 = vector.broadcast %195 : f32 to vector<1x288xf32>
    %197 = arith.mulf %190, %196 : vector<1x288xf32>
    %198 = arith.addf %180, %197 : vector<1x288xf32>
    %c42 = arith.constant 42 : index
    %199 = memref.load %arg3[%c42] : memref<288xf32, #tpu.memory_space<smem>>
    %200 = vector.broadcast %199 : f32 to vector<1x288xf32>
    %201 = arith.mulf %190, %200 : vector<1x288xf32>
    %202 = arith.addf %184, %201 : vector<1x288xf32>
    %c43 = arith.constant 43 : index
    %203 = memref.load %arg3[%c43] : memref<288xf32, #tpu.memory_space<smem>>
    %204 = vector.broadcast %203 : f32 to vector<1x288xf32>
    %205 = arith.mulf %190, %204 : vector<1x288xf32>
    %206 = arith.addf %188, %205 : vector<1x288xf32>
    %c0_45 = arith.constant 0 : index
    %c3_46 = arith.constant 3 : index
    %c1_47 = arith.constant 1 : index
    %207 = vector.load %arg1[%c0_45, %c3_46, %c1_47] : memref<1x8x326xf32, #tpu.memory_space<vmem>>, vector<1x1x288xf32>
    %208 = vector.shape_cast %207 : vector<1x1x288xf32> to vector<1x288xf32>
    %c44 = arith.constant 44 : index
    %209 = memref.load %arg3[%c44] : memref<288xf32, #tpu.memory_space<smem>>
    %210 = vector.broadcast %209 : f32 to vector<1x288xf32>
    %211 = arith.mulf %208, %210 : vector<1x288xf32>
    %212 = arith.addf %194, %211 : vector<1x288xf32>
    %c45 = arith.constant 45 : index
    %213 = memref.load %arg3[%c45] : memref<288xf32, #tpu.memory_space<smem>>
    %214 = vector.broadcast %213 : f32 to vector<1x288xf32>
    %215 = arith.mulf %208, %214 : vector<1x288xf32>
    %216 = arith.addf %198, %215 : vector<1x288xf32>
    %c46 = arith.constant 46 : index
    %217 = memref.load %arg3[%c46] : memref<288xf32, #tpu.memory_space<smem>>
    %218 = vector.broadcast %217 : f32 to vector<1x288xf32>
    %219 = arith.mulf %208, %218 : vector<1x288xf32>
    %220 = arith.addf %202, %219 : vector<1x288xf32>
    %c47 = arith.constant 47 : index
    %221 = memref.load %arg3[%c47] : memref<288xf32, #tpu.memory_space<smem>>
    %222 = vector.broadcast %221 : f32 to vector<1x288xf32>
    %223 = arith.mulf %208, %222 : vector<1x288xf32>
    %224 = arith.addf %206, %223 : vector<1x288xf32>
    %c0_48 = arith.constant 0 : index
    %c4_49 = arith.constant 4 : index
    %c1_50 = arith.constant 1 : index
    %225 = vector.load %arg1[%c0_48, %c4_49, %c1_50] : memref<1x8x326xf32, #tpu.memory_space<vmem>>, vector<1x1x288xf32>
    %226 = vector.shape_cast %225 : vector<1x1x288xf32> to vector<1x288xf32>
    %c48 = arith.constant 48 : index
    %227 = memref.load %arg3[%c48] : memref<288xf32, #tpu.memory_space<smem>>
    %228 = vector.broadcast %227 : f32 to vector<1x288xf32>
    %229 = arith.mulf %226, %228 : vector<1x288xf32>
    %230 = arith.addf %212, %229 : vector<1x288xf32>
    %c49 = arith.constant 49 : index
    %231 = memref.load %arg3[%c49] : memref<288xf32, #tpu.memory_space<smem>>
    %232 = vector.broadcast %231 : f32 to vector<1x288xf32>
    %233 = arith.mulf %226, %232 : vector<1x288xf32>
    %234 = arith.addf %216, %233 : vector<1x288xf32>
    %c50 = arith.constant 50 : index
    %235 = memref.load %arg3[%c50] : memref<288xf32, #tpu.memory_space<smem>>
    %236 = vector.broadcast %235 : f32 to vector<1x288xf32>
    %237 = arith.mulf %226, %236 : vector<1x288xf32>
    %238 = arith.addf %220, %237 : vector<1x288xf32>
    %c51 = arith.constant 51 : index
    %239 = memref.load %arg3[%c51] : memref<288xf32, #tpu.memory_space<smem>>
    %240 = vector.broadcast %239 : f32 to vector<1x288xf32>
    %241 = arith.mulf %226, %240 : vector<1x288xf32>
    %242 = arith.addf %224, %241 : vector<1x288xf32>
    %c0_51 = arith.constant 0 : index
    %c5_52 = arith.constant 5 : index
    %c1_53 = arith.constant 1 : index
    %243 = vector.load %arg1[%c0_51, %c5_52, %c1_53] : memref<1x8x326xf32, #tpu.memory_space<vmem>>, vector<1x1x288xf32>
    %244 = vector.shape_cast %243 : vector<1x1x288xf32> to vector<1x288xf32>
    %c52 = arith.constant 52 : index
    %245 = memref.load %arg3[%c52] : memref<288xf32, #tpu.memory_space<smem>>
    %246 = vector.broadcast %245 : f32 to vector<1x288xf32>
    %247 = arith.mulf %244, %246 : vector<1x288xf32>
    %248 = arith.addf %230, %247 : vector<1x288xf32>
    %c53 = arith.constant 53 : index
    %249 = memref.load %arg3[%c53] : memref<288xf32, #tpu.memory_space<smem>>
    %250 = vector.broadcast %249 : f32 to vector<1x288xf32>
    %251 = arith.mulf %244, %250 : vector<1x288xf32>
    %252 = arith.addf %234, %251 : vector<1x288xf32>
    %c54 = arith.constant 54 : index
    %253 = memref.load %arg3[%c54] : memref<288xf32, #tpu.memory_space<smem>>
    %254 = vector.broadcast %253 : f32 to vector<1x288xf32>
    %255 = arith.mulf %244, %254 : vector<1x288xf32>
    %256 = arith.addf %238, %255 : vector<1x288xf32>
    %c55 = arith.constant 55 : index
    %257 = memref.load %arg3[%c55] : memref<288xf32, #tpu.memory_space<smem>>
    %258 = vector.broadcast %257 : f32 to vector<1x288xf32>
    %259 = arith.mulf %244, %258 : vector<1x288xf32>
    %260 = arith.addf %242, %259 : vector<1x288xf32>
    %c0_54 = arith.constant 0 : index
    %c6_55 = arith.constant 6 : index
    %c1_56 = arith.constant 1 : index
    %261 = vector.load %arg1[%c0_54, %c6_55, %c1_56] : memref<1x8x326xf32, #tpu.memory_space<vmem>>, vector<1x1x288xf32>
    %262 = vector.shape_cast %261 : vector<1x1x288xf32> to vector<1x288xf32>
    %c56 = arith.constant 56 : index
    %263 = memref.load %arg3[%c56] : memref<288xf32, #tpu.memory_space<smem>>
    %264 = vector.broadcast %263 : f32 to vector<1x288xf32>
    %265 = arith.mulf %262, %264 : vector<1x288xf32>
    %266 = arith.addf %248, %265 : vector<1x288xf32>
    %c57 = arith.constant 57 : index
    %267 = memref.load %arg3[%c57] : memref<288xf32, #tpu.memory_space<smem>>
    %268 = vector.broadcast %267 : f32 to vector<1x288xf32>
    %269 = arith.mulf %262, %268 : vector<1x288xf32>
    %270 = arith.addf %252, %269 : vector<1x288xf32>
    %c58 = arith.constant 58 : index
    %271 = memref.load %arg3[%c58] : memref<288xf32, #tpu.memory_space<smem>>
    %272 = vector.broadcast %271 : f32 to vector<1x288xf32>
    %273 = arith.mulf %262, %272 : vector<1x288xf32>
    %274 = arith.addf %256, %273 : vector<1x288xf32>
    %c59 = arith.constant 59 : index
    %275 = memref.load %arg3[%c59] : memref<288xf32, #tpu.memory_space<smem>>
    %276 = vector.broadcast %275 : f32 to vector<1x288xf32>
    %277 = arith.mulf %262, %276 : vector<1x288xf32>
    %278 = arith.addf %260, %277 : vector<1x288xf32>
    %c0_57 = arith.constant 0 : index
    %c7_58 = arith.constant 7 : index
    %c1_59 = arith.constant 1 : index
    %279 = vector.load %arg1[%c0_57, %c7_58, %c1_59] : memref<1x8x326xf32, #tpu.memory_space<vmem>>, vector<1x1x288xf32>
    %280 = vector.shape_cast %279 : vector<1x1x288xf32> to vector<1x288xf32>
    %c60 = arith.constant 60 : index
    %281 = memref.load %arg3[%c60] : memref<288xf32, #tpu.memory_space<smem>>
    %282 = vector.broadcast %281 : f32 to vector<1x288xf32>
    %283 = arith.mulf %280, %282 : vector<1x288xf32>
    %284 = arith.addf %266, %283 : vector<1x288xf32>
    %c61 = arith.constant 61 : index
    %285 = memref.load %arg3[%c61] : memref<288xf32, #tpu.memory_space<smem>>
    %286 = vector.broadcast %285 : f32 to vector<1x288xf32>
    %287 = arith.mulf %280, %286 : vector<1x288xf32>
    %288 = arith.addf %270, %287 : vector<1x288xf32>
    %c62 = arith.constant 62 : index
    %289 = memref.load %arg3[%c62] : memref<288xf32, #tpu.memory_space<smem>>
    %290 = vector.broadcast %289 : f32 to vector<1x288xf32>
    %291 = arith.mulf %280, %290 : vector<1x288xf32>
    %292 = arith.addf %274, %291 : vector<1x288xf32>
    %c63 = arith.constant 63 : index
    %293 = memref.load %arg3[%c63] : memref<288xf32, #tpu.memory_space<smem>>
    %294 = vector.broadcast %293 : f32 to vector<1x288xf32>
    %295 = arith.mulf %280, %294 : vector<1x288xf32>
    %296 = arith.addf %278, %295 : vector<1x288xf32>
    %c0_60 = arith.constant 0 : index
    %c0_61 = arith.constant 0 : index
    %c2_62 = arith.constant 2 : index
    %297 = vector.load %arg1[%c0_60, %c0_61, %c2_62] : memref<1x8x326xf32, #tpu.memory_space<vmem>>, vector<1x1x288xf32>
    %298 = vector.shape_cast %297 : vector<1x1x288xf32> to vector<1x288xf32>
    %c64 = arith.constant 64 : index
    %299 = memref.load %arg3[%c64] : memref<288xf32, #tpu.memory_space<smem>>
    %300 = vector.broadcast %299 : f32 to vector<1x288xf32>
    %301 = arith.mulf %298, %300 : vector<1x288xf32>
    %302 = arith.addf %284, %301 : vector<1x288xf32>
    %c65 = arith.constant 65 : index
    %303 = memref.load %arg3[%c65] : memref<288xf32, #tpu.memory_space<smem>>
    %304 = vector.broadcast %303 : f32 to vector<1x288xf32>
    %305 = arith.mulf %298, %304 : vector<1x288xf32>
    %306 = arith.addf %288, %305 : vector<1x288xf32>
    %c66 = arith.constant 66 : index
    %307 = memref.load %arg3[%c66] : memref<288xf32, #tpu.memory_space<smem>>
    %308 = vector.broadcast %307 : f32 to vector<1x288xf32>
    %309 = arith.mulf %298, %308 : vector<1x288xf32>
    %310 = arith.addf %292, %309 : vector<1x288xf32>
    %c67 = arith.constant 67 : index
    %311 = memref.load %arg3[%c67] : memref<288xf32, #tpu.memory_space<smem>>
    %312 = vector.broadcast %311 : f32 to vector<1x288xf32>
    %313 = arith.mulf %298, %312 : vector<1x288xf32>
    %314 = arith.addf %296, %313 : vector<1x288xf32>
    %c0_63 = arith.constant 0 : index
    %c1_64 = arith.constant 1 : index
    %c2_65 = arith.constant 2 : index
    %315 = vector.load %arg1[%c0_63, %c1_64, %c2_65] : memref<1x8x326xf32, #tpu.memory_space<vmem>>, vector<1x1x288xf32>
    %316 = vector.shape_cast %315 : vector<1x1x288xf32> to vector<1x288xf32>
    %c68 = arith.constant 68 : index
    %317 = memref.load %arg3[%c68] : memref<288xf32, #tpu.memory_space<smem>>
    %318 = vector.broadcast %317 : f32 to vector<1x288xf32>
    %319 = arith.mulf %316, %318 : vector<1x288xf32>
    %320 = arith.addf %302, %319 : vector<1x288xf32>
    %c69 = arith.constant 69 : index
    %321 = memref.load %arg3[%c69] : memref<288xf32, #tpu.memory_space<smem>>
    %322 = vector.broadcast %321 : f32 to vector<1x288xf32>
    %323 = arith.mulf %316, %322 : vector<1x288xf32>
    %324 = arith.addf %306, %323 : vector<1x288xf32>
    %c70 = arith.constant 70 : index
    %325 = memref.load %arg3[%c70] : memref<288xf32, #tpu.memory_space<smem>>
    %326 = vector.broadcast %325 : f32 to vector<1x288xf32>
    %327 = arith.mulf %316, %326 : vector<1x288xf32>
    %328 = arith.addf %310, %327 : vector<1x288xf32>
    %c71 = arith.constant 71 : index
    %329 = memref.load %arg3[%c71] : memref<288xf32, #tpu.memory_space<smem>>
    %330 = vector.broadcast %329 : f32 to vector<1x288xf32>
    %331 = arith.mulf %316, %330 : vector<1x288xf32>
    %332 = arith.addf %314, %331 : vector<1x288xf32>
    %c0_66 = arith.constant 0 : index
    %c2_67 = arith.constant 2 : index
    %c2_68 = arith.constant 2 : index
    %333 = vector.load %arg1[%c0_66, %c2_67, %c2_68] : memref<1x8x326xf32, #tpu.memory_space<vmem>>, vector<1x1x288xf32>
    %334 = vector.shape_cast %333 : vector<1x1x288xf32> to vector<1x288xf32>
    %c72 = arith.constant 72 : index
    %335 = memref.load %arg3[%c72] : memref<288xf32, #tpu.memory_space<smem>>
    %336 = vector.broadcast %335 : f32 to vector<1x288xf32>
    %337 = arith.mulf %334, %336 : vector<1x288xf32>
    %338 = arith.addf %320, %337 : vector<1x288xf32>
    %c73 = arith.constant 73 : index
    %339 = memref.load %arg3[%c73] : memref<288xf32, #tpu.memory_space<smem>>
    %340 = vector.broadcast %339 : f32 to vector<1x288xf32>
    %341 = arith.mulf %334, %340 : vector<1x288xf32>
    %342 = arith.addf %324, %341 : vector<1x288xf32>
    %c74 = arith.constant 74 : index
    %343 = memref.load %arg3[%c74] : memref<288xf32, #tpu.memory_space<smem>>
    %344 = vector.broadcast %343 : f32 to vector<1x288xf32>
    %345 = arith.mulf %334, %344 : vector<1x288xf32>
    %346 = arith.addf %328, %345 : vector<1x288xf32>
    %c75 = arith.constant 75 : index
    %347 = memref.load %arg3[%c75] : memref<288xf32, #tpu.memory_space<smem>>
    %348 = vector.broadcast %347 : f32 to vector<1x288xf32>
    %349 = arith.mulf %334, %348 : vector<1x288xf32>
    %350 = arith.addf %332, %349 : vector<1x288xf32>
    %c0_69 = arith.constant 0 : index
    %c3_70 = arith.constant 3 : index
    %c2_71 = arith.constant 2 : index
    %351 = vector.load %arg1[%c0_69, %c3_70, %c2_71] : memref<1x8x326xf32, #tpu.memory_space<vmem>>, vector<1x1x288xf32>
    %352 = vector.shape_cast %351 : vector<1x1x288xf32> to vector<1x288xf32>
    %c76 = arith.constant 76 : index
    %353 = memref.load %arg3[%c76] : memref<288xf32, #tpu.memory_space<smem>>
    %354 = vector.broadcast %353 : f32 to vector<1x288xf32>
    %355 = arith.mulf %352, %354 : vector<1x288xf32>
    %356 = arith.addf %338, %355 : vector<1x288xf32>
    %c77 = arith.constant 77 : index
    %357 = memref.load %arg3[%c77] : memref<288xf32, #tpu.memory_space<smem>>
    %358 = vector.broadcast %357 : f32 to vector<1x288xf32>
    %359 = arith.mulf %352, %358 : vector<1x288xf32>
    %360 = arith.addf %342, %359 : vector<1x288xf32>
    %c78 = arith.constant 78 : index
    %361 = memref.load %arg3[%c78] : memref<288xf32, #tpu.memory_space<smem>>
    %362 = vector.broadcast %361 : f32 to vector<1x288xf32>
    %363 = arith.mulf %352, %362 : vector<1x288xf32>
    %364 = arith.addf %346, %363 : vector<1x288xf32>
    %c79 = arith.constant 79 : index
    %365 = memref.load %arg3[%c79] : memref<288xf32, #tpu.memory_space<smem>>
    %366 = vector.broadcast %365 : f32 to vector<1x288xf32>
    %367 = arith.mulf %352, %366 : vector<1x288xf32>
    %368 = arith.addf %350, %367 : vector<1x288xf32>
    %c0_72 = arith.constant 0 : index
    %c4_73 = arith.constant 4 : index
    %c2_74 = arith.constant 2 : index
    %369 = vector.load %arg1[%c0_72, %c4_73, %c2_74] : memref<1x8x326xf32, #tpu.memory_space<vmem>>, vector<1x1x288xf32>
    %370 = vector.shape_cast %369 : vector<1x1x288xf32> to vector<1x288xf32>
    %c80 = arith.constant 80 : index
    %371 = memref.load %arg3[%c80] : memref<288xf32, #tpu.memory_space<smem>>
    %372 = vector.broadcast %371 : f32 to vector<1x288xf32>
    %373 = arith.mulf %370, %372 : vector<1x288xf32>
    %374 = arith.addf %356, %373 : vector<1x288xf32>
    %c81 = arith.constant 81 : index
    %375 = memref.load %arg3[%c81] : memref<288xf32, #tpu.memory_space<smem>>
    %376 = vector.broadcast %375 : f32 to vector<1x288xf32>
    %377 = arith.mulf %370, %376 : vector<1x288xf32>
    %378 = arith.addf %360, %377 : vector<1x288xf32>
    %c82 = arith.constant 82 : index
    %379 = memref.load %arg3[%c82] : memref<288xf32, #tpu.memory_space<smem>>
    %380 = vector.broadcast %379 : f32 to vector<1x288xf32>
    %381 = arith.mulf %370, %380 : vector<1x288xf32>
    %382 = arith.addf %364, %381 : vector<1x288xf32>
    %c83 = arith.constant 83 : index
    %383 = memref.load %arg3[%c83] : memref<288xf32, #tpu.memory_space<smem>>
    %384 = vector.broadcast %383 : f32 to vector<1x288xf32>
    %385 = arith.mulf %370, %384 : vector<1x288xf32>
    %386 = arith.addf %368, %385 : vector<1x288xf32>
    %c0_75 = arith.constant 0 : index
    %c5_76 = arith.constant 5 : index
    %c2_77 = arith.constant 2 : index
    %387 = vector.load %arg1[%c0_75, %c5_76, %c2_77] : memref<1x8x326xf32, #tpu.memory_space<vmem>>, vector<1x1x288xf32>
    %388 = vector.shape_cast %387 : vector<1x1x288xf32> to vector<1x288xf32>
    %c84 = arith.constant 84 : index
    %389 = memref.load %arg3[%c84] : memref<288xf32, #tpu.memory_space<smem>>
    %390 = vector.broadcast %389 : f32 to vector<1x288xf32>
    %391 = arith.mulf %388, %390 : vector<1x288xf32>
    %392 = arith.addf %374, %391 : vector<1x288xf32>
    %c85 = arith.constant 85 : index
    %393 = memref.load %arg3[%c85] : memref<288xf32, #tpu.memory_space<smem>>
    %394 = vector.broadcast %393 : f32 to vector<1x288xf32>
    %395 = arith.mulf %388, %394 : vector<1x288xf32>
    %396 = arith.addf %378, %395 : vector<1x288xf32>
    %c86 = arith.constant 86 : index
    %397 = memref.load %arg3[%c86] : memref<288xf32, #tpu.memory_space<smem>>
    %398 = vector.broadcast %397 : f32 to vector<1x288xf32>
    %399 = arith.mulf %388, %398 : vector<1x288xf32>
    %400 = arith.addf %382, %399 : vector<1x288xf32>
    %c87 = arith.constant 87 : index
    %401 = memref.load %arg3[%c87] : memref<288xf32, #tpu.memory_space<smem>>
    %402 = vector.broadcast %401 : f32 to vector<1x288xf32>
    %403 = arith.mulf %388, %402 : vector<1x288xf32>
    %404 = arith.addf %386, %403 : vector<1x288xf32>
    %c0_78 = arith.constant 0 : index
    %c6_79 = arith.constant 6 : index
    %c2_80 = arith.constant 2 : index
    %405 = vector.load %arg1[%c0_78, %c6_79, %c2_80] : memref<1x8x326xf32, #tpu.memory_space<vmem>>, vector<1x1x288xf32>
    %406 = vector.shape_cast %405 : vector<1x1x288xf32> to vector<1x288xf32>
    %c88 = arith.constant 88 : index
    %407 = memref.load %arg3[%c88] : memref<288xf32, #tpu.memory_space<smem>>
    %408 = vector.broadcast %407 : f32 to vector<1x288xf32>
    %409 = arith.mulf %406, %408 : vector<1x288xf32>
    %410 = arith.addf %392, %409 : vector<1x288xf32>
    %c89 = arith.constant 89 : index
    %411 = memref.load %arg3[%c89] : memref<288xf32, #tpu.memory_space<smem>>
    %412 = vector.broadcast %411 : f32 to vector<1x288xf32>
    %413 = arith.mulf %406, %412 : vector<1x288xf32>
    %414 = arith.addf %396, %413 : vector<1x288xf32>
    %c90 = arith.constant 90 : index
    %415 = memref.load %arg3[%c90] : memref<288xf32, #tpu.memory_space<smem>>
    %416 = vector.broadcast %415 : f32 to vector<1x288xf32>
    %417 = arith.mulf %406, %416 : vector<1x288xf32>
    %418 = arith.addf %400, %417 : vector<1x288xf32>
    %c91 = arith.constant 91 : index
    %419 = memref.load %arg3[%c91] : memref<288xf32, #tpu.memory_space<smem>>
    %420 = vector.broadcast %419 : f32 to vector<1x288xf32>
    %421 = arith.mulf %406, %420 : vector<1x288xf32>
    %422 = arith.addf %404, %421 : vector<1x288xf32>
    %c0_81 = arith.constant 0 : index
    %c7_82 = arith.constant 7 : index
    %c2_83 = arith.constant 2 : index
    %423 = vector.load %arg1[%c0_81, %c7_82, %c2_83] : memref<1x8x326xf32, #tpu.memory_space<vmem>>, vector<1x1x288xf32>
    %424 = vector.shape_cast %423 : vector<1x1x288xf32> to vector<1x288xf32>
    %c92 = arith.constant 92 : index
    %425 = memref.load %arg3[%c92] : memref<288xf32, #tpu.memory_space<smem>>
    %426 = vector.broadcast %425 : f32 to vector<1x288xf32>
    %427 = arith.mulf %424, %426 : vector<1x288xf32>
    %428 = arith.addf %410, %427 : vector<1x288xf32>
    %c93 = arith.constant 93 : index
    %429 = memref.load %arg3[%c93] : memref<288xf32, #tpu.memory_space<smem>>
    %430 = vector.broadcast %429 : f32 to vector<1x288xf32>
    %431 = arith.mulf %424, %430 : vector<1x288xf32>
    %432 = arith.addf %414, %431 : vector<1x288xf32>
    %c94 = arith.constant 94 : index
    %433 = memref.load %arg3[%c94] : memref<288xf32, #tpu.memory_space<smem>>
    %434 = vector.broadcast %433 : f32 to vector<1x288xf32>
    %435 = arith.mulf %424, %434 : vector<1x288xf32>
    %436 = arith.addf %418, %435 : vector<1x288xf32>
    %c95 = arith.constant 95 : index
    %437 = memref.load %arg3[%c95] : memref<288xf32, #tpu.memory_space<smem>>
    %438 = vector.broadcast %437 : f32 to vector<1x288xf32>
    %439 = arith.mulf %424, %438 : vector<1x288xf32>
    %440 = arith.addf %422, %439 : vector<1x288xf32>
    %c0_84 = arith.constant 0 : index
    %c0_85 = arith.constant 0 : index
    %c18_86 = arith.constant 18 : index
    %441 = vector.load %arg1[%c0_84, %c0_85, %c18_86] : memref<1x8x326xf32, #tpu.memory_space<vmem>>, vector<1x1x288xf32>
    %442 = vector.shape_cast %441 : vector<1x1x288xf32> to vector<1x288xf32>
    %c96 = arith.constant 96 : index
    %443 = memref.load %arg3[%c96] : memref<288xf32, #tpu.memory_space<smem>>
    %444 = vector.broadcast %443 : f32 to vector<1x288xf32>
    %445 = arith.mulf %442, %444 : vector<1x288xf32>
    %446 = arith.addf %428, %445 : vector<1x288xf32>
    %c97 = arith.constant 97 : index
    %447 = memref.load %arg3[%c97] : memref<288xf32, #tpu.memory_space<smem>>
    %448 = vector.broadcast %447 : f32 to vector<1x288xf32>
    %449 = arith.mulf %442, %448 : vector<1x288xf32>
    %450 = arith.addf %432, %449 : vector<1x288xf32>
    %c98 = arith.constant 98 : index
    %451 = memref.load %arg3[%c98] : memref<288xf32, #tpu.memory_space<smem>>
    %452 = vector.broadcast %451 : f32 to vector<1x288xf32>
    %453 = arith.mulf %442, %452 : vector<1x288xf32>
    %454 = arith.addf %436, %453 : vector<1x288xf32>
    %c99 = arith.constant 99 : index
    %455 = memref.load %arg3[%c99] : memref<288xf32, #tpu.memory_space<smem>>
    %456 = vector.broadcast %455 : f32 to vector<1x288xf32>
    %457 = arith.mulf %442, %456 : vector<1x288xf32>
    %458 = arith.addf %440, %457 : vector<1x288xf32>
    %c0_87 = arith.constant 0 : index
    %c1_88 = arith.constant 1 : index
    %c18_89 = arith.constant 18 : index
    %459 = vector.load %arg1[%c0_87, %c1_88, %c18_89] : memref<1x8x326xf32, #tpu.memory_space<vmem>>, vector<1x1x288xf32>
    %460 = vector.shape_cast %459 : vector<1x1x288xf32> to vector<1x288xf32>
    %c100 = arith.constant 100 : index
    %461 = memref.load %arg3[%c100] : memref<288xf32, #tpu.memory_space<smem>>
    %462 = vector.broadcast %461 : f32 to vector<1x288xf32>
    %463 = arith.mulf %460, %462 : vector<1x288xf32>
    %464 = arith.addf %446, %463 : vector<1x288xf32>
    %c101 = arith.constant 101 : index
    %465 = memref.load %arg3[%c101] : memref<288xf32, #tpu.memory_space<smem>>
    %466 = vector.broadcast %465 : f32 to vector<1x288xf32>
    %467 = arith.mulf %460, %466 : vector<1x288xf32>
    %468 = arith.addf %450, %467 : vector<1x288xf32>
    %c102 = arith.constant 102 : index
    %469 = memref.load %arg3[%c102] : memref<288xf32, #tpu.memory_space<smem>>
    %470 = vector.broadcast %469 : f32 to vector<1x288xf32>
    %471 = arith.mulf %460, %470 : vector<1x288xf32>
    %472 = arith.addf %454, %471 : vector<1x288xf32>
    %c103 = arith.constant 103 : index
    %473 = memref.load %arg3[%c103] : memref<288xf32, #tpu.memory_space<smem>>
    %474 = vector.broadcast %473 : f32 to vector<1x288xf32>
    %475 = arith.mulf %460, %474 : vector<1x288xf32>
    %476 = arith.addf %458, %475 : vector<1x288xf32>
    %c0_90 = arith.constant 0 : index
    %c2_91 = arith.constant 2 : index
    %c18_92 = arith.constant 18 : index
    %477 = vector.load %arg1[%c0_90, %c2_91, %c18_92] : memref<1x8x326xf32, #tpu.memory_space<vmem>>, vector<1x1x288xf32>
    %478 = vector.shape_cast %477 : vector<1x1x288xf32> to vector<1x288xf32>
    %c104 = arith.constant 104 : index
    %479 = memref.load %arg3[%c104] : memref<288xf32, #tpu.memory_space<smem>>
    %480 = vector.broadcast %479 : f32 to vector<1x288xf32>
    %481 = arith.mulf %478, %480 : vector<1x288xf32>
    %482 = arith.addf %464, %481 : vector<1x288xf32>
    %c105 = arith.constant 105 : index
    %483 = memref.load %arg3[%c105] : memref<288xf32, #tpu.memory_space<smem>>
    %484 = vector.broadcast %483 : f32 to vector<1x288xf32>
    %485 = arith.mulf %478, %484 : vector<1x288xf32>
    %486 = arith.addf %468, %485 : vector<1x288xf32>
    %c106 = arith.constant 106 : index
    %487 = memref.load %arg3[%c106] : memref<288xf32, #tpu.memory_space<smem>>
    %488 = vector.broadcast %487 : f32 to vector<1x288xf32>
    %489 = arith.mulf %478, %488 : vector<1x288xf32>
    %490 = arith.addf %472, %489 : vector<1x288xf32>
    %c107 = arith.constant 107 : index
    %491 = memref.load %arg3[%c107] : memref<288xf32, #tpu.memory_space<smem>>
    %492 = vector.broadcast %491 : f32 to vector<1x288xf32>
    %493 = arith.mulf %478, %492 : vector<1x288xf32>
    %494 = arith.addf %476, %493 : vector<1x288xf32>
    %c0_93 = arith.constant 0 : index
    %c3_94 = arith.constant 3 : index
    %c18_95 = arith.constant 18 : index
    %495 = vector.load %arg1[%c0_93, %c3_94, %c18_95] : memref<1x8x326xf32, #tpu.memory_space<vmem>>, vector<1x1x288xf32>
    %496 = vector.shape_cast %495 : vector<1x1x288xf32> to vector<1x288xf32>
    %c108 = arith.constant 108 : index
    %497 = memref.load %arg3[%c108] : memref<288xf32, #tpu.memory_space<smem>>
    %498 = vector.broadcast %497 : f32 to vector<1x288xf32>
    %499 = arith.mulf %496, %498 : vector<1x288xf32>
    %500 = arith.addf %482, %499 : vector<1x288xf32>
    %c109 = arith.constant 109 : index
    %501 = memref.load %arg3[%c109] : memref<288xf32, #tpu.memory_space<smem>>
    %502 = vector.broadcast %501 : f32 to vector<1x288xf32>
    %503 = arith.mulf %496, %502 : vector<1x288xf32>
    %504 = arith.addf %486, %503 : vector<1x288xf32>
    %c110 = arith.constant 110 : index
    %505 = memref.load %arg3[%c110] : memref<288xf32, #tpu.memory_space<smem>>
    %506 = vector.broadcast %505 : f32 to vector<1x288xf32>
    %507 = arith.mulf %496, %506 : vector<1x288xf32>
    %508 = arith.addf %490, %507 : vector<1x288xf32>
    %c111 = arith.constant 111 : index
    %509 = memref.load %arg3[%c111] : memref<288xf32, #tpu.memory_space<smem>>
    %510 = vector.broadcast %509 : f32 to vector<1x288xf32>
    %511 = arith.mulf %496, %510 : vector<1x288xf32>
    %512 = arith.addf %494, %511 : vector<1x288xf32>
    %c0_96 = arith.constant 0 : index
    %c4_97 = arith.constant 4 : index
    %c18_98 = arith.constant 18 : index
    %513 = vector.load %arg1[%c0_96, %c4_97, %c18_98] : memref<1x8x326xf32, #tpu.memory_space<vmem>>, vector<1x1x288xf32>
    %514 = vector.shape_cast %513 : vector<1x1x288xf32> to vector<1x288xf32>
    %c112 = arith.constant 112 : index
    %515 = memref.load %arg3[%c112] : memref<288xf32, #tpu.memory_space<smem>>
    %516 = vector.broadcast %515 : f32 to vector<1x288xf32>
    %517 = arith.mulf %514, %516 : vector<1x288xf32>
    %518 = arith.addf %500, %517 : vector<1x288xf32>
    %c113 = arith.constant 113 : index
    %519 = memref.load %arg3[%c113] : memref<288xf32, #tpu.memory_space<smem>>
    %520 = vector.broadcast %519 : f32 to vector<1x288xf32>
    %521 = arith.mulf %514, %520 : vector<1x288xf32>
    %522 = arith.addf %504, %521 : vector<1x288xf32>
    %c114 = arith.constant 114 : index
    %523 = memref.load %arg3[%c114] : memref<288xf32, #tpu.memory_space<smem>>
    %524 = vector.broadcast %523 : f32 to vector<1x288xf32>
    %525 = arith.mulf %514, %524 : vector<1x288xf32>
    %526 = arith.addf %508, %525 : vector<1x288xf32>
    %c115 = arith.constant 115 : index
    %527 = memref.load %arg3[%c115] : memref<288xf32, #tpu.memory_space<smem>>
    %528 = vector.broadcast %527 : f32 to vector<1x288xf32>
    %529 = arith.mulf %514, %528 : vector<1x288xf32>
    %530 = arith.addf %512, %529 : vector<1x288xf32>
    %c0_99 = arith.constant 0 : index
    %c5_100 = arith.constant 5 : index
    %c18_101 = arith.constant 18 : index
    %531 = vector.load %arg1[%c0_99, %c5_100, %c18_101] : memref<1x8x326xf32, #tpu.memory_space<vmem>>, vector<1x1x288xf32>
    %532 = vector.shape_cast %531 : vector<1x1x288xf32> to vector<1x288xf32>
    %c116 = arith.constant 116 : index
    %533 = memref.load %arg3[%c116] : memref<288xf32, #tpu.memory_space<smem>>
    %534 = vector.broadcast %533 : f32 to vector<1x288xf32>
    %535 = arith.mulf %532, %534 : vector<1x288xf32>
    %536 = arith.addf %518, %535 : vector<1x288xf32>
    %c117 = arith.constant 117 : index
    %537 = memref.load %arg3[%c117] : memref<288xf32, #tpu.memory_space<smem>>
    %538 = vector.broadcast %537 : f32 to vector<1x288xf32>
    %539 = arith.mulf %532, %538 : vector<1x288xf32>
    %540 = arith.addf %522, %539 : vector<1x288xf32>
    %c118 = arith.constant 118 : index
    %541 = memref.load %arg3[%c118] : memref<288xf32, #tpu.memory_space<smem>>
    %542 = vector.broadcast %541 : f32 to vector<1x288xf32>
    %543 = arith.mulf %532, %542 : vector<1x288xf32>
    %544 = arith.addf %526, %543 : vector<1x288xf32>
    %c119 = arith.constant 119 : index
    %545 = memref.load %arg3[%c119] : memref<288xf32, #tpu.memory_space<smem>>
    %546 = vector.broadcast %545 : f32 to vector<1x288xf32>
    %547 = arith.mulf %532, %546 : vector<1x288xf32>
    %548 = arith.addf %530, %547 : vector<1x288xf32>
    %c0_102 = arith.constant 0 : index
    %c6_103 = arith.constant 6 : index
    %c18_104 = arith.constant 18 : index
    %549 = vector.load %arg1[%c0_102, %c6_103, %c18_104] : memref<1x8x326xf32, #tpu.memory_space<vmem>>, vector<1x1x288xf32>
    %550 = vector.shape_cast %549 : vector<1x1x288xf32> to vector<1x288xf32>
    %c120 = arith.constant 120 : index
    %551 = memref.load %arg3[%c120] : memref<288xf32, #tpu.memory_space<smem>>
    %552 = vector.broadcast %551 : f32 to vector<1x288xf32>
    %553 = arith.mulf %550, %552 : vector<1x288xf32>
    %554 = arith.addf %536, %553 : vector<1x288xf32>
    %c121 = arith.constant 121 : index
    %555 = memref.load %arg3[%c121] : memref<288xf32, #tpu.memory_space<smem>>
    %556 = vector.broadcast %555 : f32 to vector<1x288xf32>
    %557 = arith.mulf %550, %556 : vector<1x288xf32>
    %558 = arith.addf %540, %557 : vector<1x288xf32>
    %c122 = arith.constant 122 : index
    %559 = memref.load %arg3[%c122] : memref<288xf32, #tpu.memory_space<smem>>
    %560 = vector.broadcast %559 : f32 to vector<1x288xf32>
    %561 = arith.mulf %550, %560 : vector<1x288xf32>
    %562 = arith.addf %544, %561 : vector<1x288xf32>
    %c123 = arith.constant 123 : index
    %563 = memref.load %arg3[%c123] : memref<288xf32, #tpu.memory_space<smem>>
    %564 = vector.broadcast %563 : f32 to vector<1x288xf32>
    %565 = arith.mulf %550, %564 : vector<1x288xf32>
    %566 = arith.addf %548, %565 : vector<1x288xf32>
    %c0_105 = arith.constant 0 : index
    %c7_106 = arith.constant 7 : index
    %c18_107 = arith.constant 18 : index
    %567 = vector.load %arg1[%c0_105, %c7_106, %c18_107] : memref<1x8x326xf32, #tpu.memory_space<vmem>>, vector<1x1x288xf32>
    %568 = vector.shape_cast %567 : vector<1x1x288xf32> to vector<1x288xf32>
    %c124 = arith.constant 124 : index
    %569 = memref.load %arg3[%c124] : memref<288xf32, #tpu.memory_space<smem>>
    %570 = vector.broadcast %569 : f32 to vector<1x288xf32>
    %571 = arith.mulf %568, %570 : vector<1x288xf32>
    %572 = arith.addf %554, %571 : vector<1x288xf32>
    %c125 = arith.constant 125 : index
    %573 = memref.load %arg3[%c125] : memref<288xf32, #tpu.memory_space<smem>>
    %574 = vector.broadcast %573 : f32 to vector<1x288xf32>
    %575 = arith.mulf %568, %574 : vector<1x288xf32>
    %576 = arith.addf %558, %575 : vector<1x288xf32>
    %c126 = arith.constant 126 : index
    %577 = memref.load %arg3[%c126] : memref<288xf32, #tpu.memory_space<smem>>
    %578 = vector.broadcast %577 : f32 to vector<1x288xf32>
    %579 = arith.mulf %568, %578 : vector<1x288xf32>
    %580 = arith.addf %562, %579 : vector<1x288xf32>
    %c127 = arith.constant 127 : index
    %581 = memref.load %arg3[%c127] : memref<288xf32, #tpu.memory_space<smem>>
    %582 = vector.broadcast %581 : f32 to vector<1x288xf32>
    %583 = arith.mulf %568, %582 : vector<1x288xf32>
    %584 = arith.addf %566, %583 : vector<1x288xf32>
    %c0_108 = arith.constant 0 : index
    %c0_109 = arith.constant 0 : index
    %c19_110 = arith.constant 19 : index
    %585 = vector.load %arg1[%c0_108, %c0_109, %c19_110] : memref<1x8x326xf32, #tpu.memory_space<vmem>>, vector<1x1x288xf32>
    %586 = vector.shape_cast %585 : vector<1x1x288xf32> to vector<1x288xf32>
    %c128 = arith.constant 128 : index
    %587 = memref.load %arg3[%c128] : memref<288xf32, #tpu.memory_space<smem>>
    %588 = vector.broadcast %587 : f32 to vector<1x288xf32>
    %589 = arith.mulf %586, %588 : vector<1x288xf32>
    %590 = arith.addf %572, %589 : vector<1x288xf32>
    %c129 = arith.constant 129 : index
    %591 = memref.load %arg3[%c129] : memref<288xf32, #tpu.memory_space<smem>>
    %592 = vector.broadcast %591 : f32 to vector<1x288xf32>
    %593 = arith.mulf %586, %592 : vector<1x288xf32>
    %594 = arith.addf %576, %593 : vector<1x288xf32>
    %c130 = arith.constant 130 : index
    %595 = memref.load %arg3[%c130] : memref<288xf32, #tpu.memory_space<smem>>
    %596 = vector.broadcast %595 : f32 to vector<1x288xf32>
    %597 = arith.mulf %586, %596 : vector<1x288xf32>
    %598 = arith.addf %580, %597 : vector<1x288xf32>
    %c131 = arith.constant 131 : index
    %599 = memref.load %arg3[%c131] : memref<288xf32, #tpu.memory_space<smem>>
    %600 = vector.broadcast %599 : f32 to vector<1x288xf32>
    %601 = arith.mulf %586, %600 : vector<1x288xf32>
    %602 = arith.addf %584, %601 : vector<1x288xf32>
    %c0_111 = arith.constant 0 : index
    %c1_112 = arith.constant 1 : index
    %c19_113 = arith.constant 19 : index
    %603 = vector.load %arg1[%c0_111, %c1_112, %c19_113] : memref<1x8x326xf32, #tpu.memory_space<vmem>>, vector<1x1x288xf32>
    %604 = vector.shape_cast %603 : vector<1x1x288xf32> to vector<1x288xf32>
    %c132 = arith.constant 132 : index
    %605 = memref.load %arg3[%c132] : memref<288xf32, #tpu.memory_space<smem>>
    %606 = vector.broadcast %605 : f32 to vector<1x288xf32>
    %607 = arith.mulf %604, %606 : vector<1x288xf32>
    %608 = arith.addf %590, %607 : vector<1x288xf32>
    %c133 = arith.constant 133 : index
    %609 = memref.load %arg3[%c133] : memref<288xf32, #tpu.memory_space<smem>>
    %610 = vector.broadcast %609 : f32 to vector<1x288xf32>
    %611 = arith.mulf %604, %610 : vector<1x288xf32>
    %612 = arith.addf %594, %611 : vector<1x288xf32>
    %c134 = arith.constant 134 : index
    %613 = memref.load %arg3[%c134] : memref<288xf32, #tpu.memory_space<smem>>
    %614 = vector.broadcast %613 : f32 to vector<1x288xf32>
    %615 = arith.mulf %604, %614 : vector<1x288xf32>
    %616 = arith.addf %598, %615 : vector<1x288xf32>
    %c135 = arith.constant 135 : index
    %617 = memref.load %arg3[%c135] : memref<288xf32, #tpu.memory_space<smem>>
    %618 = vector.broadcast %617 : f32 to vector<1x288xf32>
    %619 = arith.mulf %604, %618 : vector<1x288xf32>
    %620 = arith.addf %602, %619 : vector<1x288xf32>
    %c0_114 = arith.constant 0 : index
    %c2_115 = arith.constant 2 : index
    %c19_116 = arith.constant 19 : index
    %621 = vector.load %arg1[%c0_114, %c2_115, %c19_116] : memref<1x8x326xf32, #tpu.memory_space<vmem>>, vector<1x1x288xf32>
    %622 = vector.shape_cast %621 : vector<1x1x288xf32> to vector<1x288xf32>
    %c136 = arith.constant 136 : index
    %623 = memref.load %arg3[%c136] : memref<288xf32, #tpu.memory_space<smem>>
    %624 = vector.broadcast %623 : f32 to vector<1x288xf32>
    %625 = arith.mulf %622, %624 : vector<1x288xf32>
    %626 = arith.addf %608, %625 : vector<1x288xf32>
    %c137 = arith.constant 137 : index
    %627 = memref.load %arg3[%c137] : memref<288xf32, #tpu.memory_space<smem>>
    %628 = vector.broadcast %627 : f32 to vector<1x288xf32>
    %629 = arith.mulf %622, %628 : vector<1x288xf32>
    %630 = arith.addf %612, %629 : vector<1x288xf32>
    %c138 = arith.constant 138 : index
    %631 = memref.load %arg3[%c138] : memref<288xf32, #tpu.memory_space<smem>>
    %632 = vector.broadcast %631 : f32 to vector<1x288xf32>
    %633 = arith.mulf %622, %632 : vector<1x288xf32>
    %634 = arith.addf %616, %633 : vector<1x288xf32>
    %c139 = arith.constant 139 : index
    %635 = memref.load %arg3[%c139] : memref<288xf32, #tpu.memory_space<smem>>
    %636 = vector.broadcast %635 : f32 to vector<1x288xf32>
    %637 = arith.mulf %622, %636 : vector<1x288xf32>
    %638 = arith.addf %620, %637 : vector<1x288xf32>
    %c0_117 = arith.constant 0 : index
    %c3_118 = arith.constant 3 : index
    %c19_119 = arith.constant 19 : index
    %639 = vector.load %arg1[%c0_117, %c3_118, %c19_119] : memref<1x8x326xf32, #tpu.memory_space<vmem>>, vector<1x1x288xf32>
    %640 = vector.shape_cast %639 : vector<1x1x288xf32> to vector<1x288xf32>
    %c140 = arith.constant 140 : index
    %641 = memref.load %arg3[%c140] : memref<288xf32, #tpu.memory_space<smem>>
    %642 = vector.broadcast %641 : f32 to vector<1x288xf32>
    %643 = arith.mulf %640, %642 : vector<1x288xf32>
    %644 = arith.addf %626, %643 : vector<1x288xf32>
    %c141 = arith.constant 141 : index
    %645 = memref.load %arg3[%c141] : memref<288xf32, #tpu.memory_space<smem>>
    %646 = vector.broadcast %645 : f32 to vector<1x288xf32>
    %647 = arith.mulf %640, %646 : vector<1x288xf32>
    %648 = arith.addf %630, %647 : vector<1x288xf32>
    %c142 = arith.constant 142 : index
    %649 = memref.load %arg3[%c142] : memref<288xf32, #tpu.memory_space<smem>>
    %650 = vector.broadcast %649 : f32 to vector<1x288xf32>
    %651 = arith.mulf %640, %650 : vector<1x288xf32>
    %652 = arith.addf %634, %651 : vector<1x288xf32>
    %c143 = arith.constant 143 : index
    %653 = memref.load %arg3[%c143] : memref<288xf32, #tpu.memory_space<smem>>
    %654 = vector.broadcast %653 : f32 to vector<1x288xf32>
    %655 = arith.mulf %640, %654 : vector<1x288xf32>
    %656 = arith.addf %638, %655 : vector<1x288xf32>
    %c0_120 = arith.constant 0 : index
    %c4_121 = arith.constant 4 : index
    %c19_122 = arith.constant 19 : index
    %657 = vector.load %arg1[%c0_120, %c4_121, %c19_122] : memref<1x8x326xf32, #tpu.memory_space<vmem>>, vector<1x1x288xf32>
    %658 = vector.shape_cast %657 : vector<1x1x288xf32> to vector<1x288xf32>
    %c144 = arith.constant 144 : index
    %659 = memref.load %arg3[%c144] : memref<288xf32, #tpu.memory_space<smem>>
    %660 = vector.broadcast %659 : f32 to vector<1x288xf32>
    %661 = arith.mulf %658, %660 : vector<1x288xf32>
    %662 = arith.addf %644, %661 : vector<1x288xf32>
    %c145 = arith.constant 145 : index
    %663 = memref.load %arg3[%c145] : memref<288xf32, #tpu.memory_space<smem>>
    %664 = vector.broadcast %663 : f32 to vector<1x288xf32>
    %665 = arith.mulf %658, %664 : vector<1x288xf32>
    %666 = arith.addf %648, %665 : vector<1x288xf32>
    %c146 = arith.constant 146 : index
    %667 = memref.load %arg3[%c146] : memref<288xf32, #tpu.memory_space<smem>>
    %668 = vector.broadcast %667 : f32 to vector<1x288xf32>
    %669 = arith.mulf %658, %668 : vector<1x288xf32>
    %670 = arith.addf %652, %669 : vector<1x288xf32>
    %c147 = arith.constant 147 : index
    %671 = memref.load %arg3[%c147] : memref<288xf32, #tpu.memory_space<smem>>
    %672 = vector.broadcast %671 : f32 to vector<1x288xf32>
    %673 = arith.mulf %658, %672 : vector<1x288xf32>
    %674 = arith.addf %656, %673 : vector<1x288xf32>
    %c0_123 = arith.constant 0 : index
    %c5_124 = arith.constant 5 : index
    %c19_125 = arith.constant 19 : index
    %675 = vector.load %arg1[%c0_123, %c5_124, %c19_125] : memref<1x8x326xf32, #tpu.memory_space<vmem>>, vector<1x1x288xf32>
    %676 = vector.shape_cast %675 : vector<1x1x288xf32> to vector<1x288xf32>
    %c148 = arith.constant 148 : index
    %677 = memref.load %arg3[%c148] : memref<288xf32, #tpu.memory_space<smem>>
    %678 = vector.broadcast %677 : f32 to vector<1x288xf32>
    %679 = arith.mulf %676, %678 : vector<1x288xf32>
    %680 = arith.addf %662, %679 : vector<1x288xf32>
    %c149 = arith.constant 149 : index
    %681 = memref.load %arg3[%c149] : memref<288xf32, #tpu.memory_space<smem>>
    %682 = vector.broadcast %681 : f32 to vector<1x288xf32>
    %683 = arith.mulf %676, %682 : vector<1x288xf32>
    %684 = arith.addf %666, %683 : vector<1x288xf32>
    %c150 = arith.constant 150 : index
    %685 = memref.load %arg3[%c150] : memref<288xf32, #tpu.memory_space<smem>>
    %686 = vector.broadcast %685 : f32 to vector<1x288xf32>
    %687 = arith.mulf %676, %686 : vector<1x288xf32>
    %688 = arith.addf %670, %687 : vector<1x288xf32>
    %c151 = arith.constant 151 : index
    %689 = memref.load %arg3[%c151] : memref<288xf32, #tpu.memory_space<smem>>
    %690 = vector.broadcast %689 : f32 to vector<1x288xf32>
    %691 = arith.mulf %676, %690 : vector<1x288xf32>
    %692 = arith.addf %674, %691 : vector<1x288xf32>
    %c0_126 = arith.constant 0 : index
    %c6_127 = arith.constant 6 : index
    %c19_128 = arith.constant 19 : index
    %693 = vector.load %arg1[%c0_126, %c6_127, %c19_128] : memref<1x8x326xf32, #tpu.memory_space<vmem>>, vector<1x1x288xf32>
    %694 = vector.shape_cast %693 : vector<1x1x288xf32> to vector<1x288xf32>
    %c152 = arith.constant 152 : index
    %695 = memref.load %arg3[%c152] : memref<288xf32, #tpu.memory_space<smem>>
    %696 = vector.broadcast %695 : f32 to vector<1x288xf32>
    %697 = arith.mulf %694, %696 : vector<1x288xf32>
    %698 = arith.addf %680, %697 : vector<1x288xf32>
    %c153 = arith.constant 153 : index
    %699 = memref.load %arg3[%c153] : memref<288xf32, #tpu.memory_space<smem>>
    %700 = vector.broadcast %699 : f32 to vector<1x288xf32>
    %701 = arith.mulf %694, %700 : vector<1x288xf32>
    %702 = arith.addf %684, %701 : vector<1x288xf32>
    %c154 = arith.constant 154 : index
    %703 = memref.load %arg3[%c154] : memref<288xf32, #tpu.memory_space<smem>>
    %704 = vector.broadcast %703 : f32 to vector<1x288xf32>
    %705 = arith.mulf %694, %704 : vector<1x288xf32>
    %706 = arith.addf %688, %705 : vector<1x288xf32>
    %c155 = arith.constant 155 : index
    %707 = memref.load %arg3[%c155] : memref<288xf32, #tpu.memory_space<smem>>
    %708 = vector.broadcast %707 : f32 to vector<1x288xf32>
    %709 = arith.mulf %694, %708 : vector<1x288xf32>
    %710 = arith.addf %692, %709 : vector<1x288xf32>
    %c0_129 = arith.constant 0 : index
    %c7_130 = arith.constant 7 : index
    %c19_131 = arith.constant 19 : index
    %711 = vector.load %arg1[%c0_129, %c7_130, %c19_131] : memref<1x8x326xf32, #tpu.memory_space<vmem>>, vector<1x1x288xf32>
    %712 = vector.shape_cast %711 : vector<1x1x288xf32> to vector<1x288xf32>
    %c156 = arith.constant 156 : index
    %713 = memref.load %arg3[%c156] : memref<288xf32, #tpu.memory_space<smem>>
    %714 = vector.broadcast %713 : f32 to vector<1x288xf32>
    %715 = arith.mulf %712, %714 : vector<1x288xf32>
    %716 = arith.addf %698, %715 : vector<1x288xf32>
    %c157 = arith.constant 157 : index
    %717 = memref.load %arg3[%c157] : memref<288xf32, #tpu.memory_space<smem>>
    %718 = vector.broadcast %717 : f32 to vector<1x288xf32>
    %719 = arith.mulf %712, %718 : vector<1x288xf32>
    %720 = arith.addf %702, %719 : vector<1x288xf32>
    %c158 = arith.constant 158 : index
    %721 = memref.load %arg3[%c158] : memref<288xf32, #tpu.memory_space<smem>>
    %722 = vector.broadcast %721 : f32 to vector<1x288xf32>
    %723 = arith.mulf %712, %722 : vector<1x288xf32>
    %724 = arith.addf %706, %723 : vector<1x288xf32>
    %c159 = arith.constant 159 : index
    %725 = memref.load %arg3[%c159] : memref<288xf32, #tpu.memory_space<smem>>
    %726 = vector.broadcast %725 : f32 to vector<1x288xf32>
    %727 = arith.mulf %712, %726 : vector<1x288xf32>
    %728 = arith.addf %710, %727 : vector<1x288xf32>
    %c0_132 = arith.constant 0 : index
    %c0_133 = arith.constant 0 : index
    %c20_134 = arith.constant 20 : index
    %729 = vector.load %arg1[%c0_132, %c0_133, %c20_134] : memref<1x8x326xf32, #tpu.memory_space<vmem>>, vector<1x1x288xf32>
    %730 = vector.shape_cast %729 : vector<1x1x288xf32> to vector<1x288xf32>
    %c160 = arith.constant 160 : index
    %731 = memref.load %arg3[%c160] : memref<288xf32, #tpu.memory_space<smem>>
    %732 = vector.broadcast %731 : f32 to vector<1x288xf32>
    %733 = arith.mulf %730, %732 : vector<1x288xf32>
    %734 = arith.addf %716, %733 : vector<1x288xf32>
    %c161 = arith.constant 161 : index
    %735 = memref.load %arg3[%c161] : memref<288xf32, #tpu.memory_space<smem>>
    %736 = vector.broadcast %735 : f32 to vector<1x288xf32>
    %737 = arith.mulf %730, %736 : vector<1x288xf32>
    %738 = arith.addf %720, %737 : vector<1x288xf32>
    %c162 = arith.constant 162 : index
    %739 = memref.load %arg3[%c162] : memref<288xf32, #tpu.memory_space<smem>>
    %740 = vector.broadcast %739 : f32 to vector<1x288xf32>
    %741 = arith.mulf %730, %740 : vector<1x288xf32>
    %742 = arith.addf %724, %741 : vector<1x288xf32>
    %c163 = arith.constant 163 : index
    %743 = memref.load %arg3[%c163] : memref<288xf32, #tpu.memory_space<smem>>
    %744 = vector.broadcast %743 : f32 to vector<1x288xf32>
    %745 = arith.mulf %730, %744 : vector<1x288xf32>
    %746 = arith.addf %728, %745 : vector<1x288xf32>
    %c0_135 = arith.constant 0 : index
    %c1_136 = arith.constant 1 : index
    %c20_137 = arith.constant 20 : index
    %747 = vector.load %arg1[%c0_135, %c1_136, %c20_137] : memref<1x8x326xf32, #tpu.memory_space<vmem>>, vector<1x1x288xf32>
    %748 = vector.shape_cast %747 : vector<1x1x288xf32> to vector<1x288xf32>
    %c164 = arith.constant 164 : index
    %749 = memref.load %arg3[%c164] : memref<288xf32, #tpu.memory_space<smem>>
    %750 = vector.broadcast %749 : f32 to vector<1x288xf32>
    %751 = arith.mulf %748, %750 : vector<1x288xf32>
    %752 = arith.addf %734, %751 : vector<1x288xf32>
    %c165 = arith.constant 165 : index
    %753 = memref.load %arg3[%c165] : memref<288xf32, #tpu.memory_space<smem>>
    %754 = vector.broadcast %753 : f32 to vector<1x288xf32>
    %755 = arith.mulf %748, %754 : vector<1x288xf32>
    %756 = arith.addf %738, %755 : vector<1x288xf32>
    %c166 = arith.constant 166 : index
    %757 = memref.load %arg3[%c166] : memref<288xf32, #tpu.memory_space<smem>>
    %758 = vector.broadcast %757 : f32 to vector<1x288xf32>
    %759 = arith.mulf %748, %758 : vector<1x288xf32>
    %760 = arith.addf %742, %759 : vector<1x288xf32>
    %c167 = arith.constant 167 : index
    %761 = memref.load %arg3[%c167] : memref<288xf32, #tpu.memory_space<smem>>
    %762 = vector.broadcast %761 : f32 to vector<1x288xf32>
    %763 = arith.mulf %748, %762 : vector<1x288xf32>
    %764 = arith.addf %746, %763 : vector<1x288xf32>
    %c0_138 = arith.constant 0 : index
    %c2_139 = arith.constant 2 : index
    %c20_140 = arith.constant 20 : index
    %765 = vector.load %arg1[%c0_138, %c2_139, %c20_140] : memref<1x8x326xf32, #tpu.memory_space<vmem>>, vector<1x1x288xf32>
    %766 = vector.shape_cast %765 : vector<1x1x288xf32> to vector<1x288xf32>
    %c168 = arith.constant 168 : index
    %767 = memref.load %arg3[%c168] : memref<288xf32, #tpu.memory_space<smem>>
    %768 = vector.broadcast %767 : f32 to vector<1x288xf32>
    %769 = arith.mulf %766, %768 : vector<1x288xf32>
    %770 = arith.addf %752, %769 : vector<1x288xf32>
    %c169 = arith.constant 169 : index
    %771 = memref.load %arg3[%c169] : memref<288xf32, #tpu.memory_space<smem>>
    %772 = vector.broadcast %771 : f32 to vector<1x288xf32>
    %773 = arith.mulf %766, %772 : vector<1x288xf32>
    %774 = arith.addf %756, %773 : vector<1x288xf32>
    %c170 = arith.constant 170 : index
    %775 = memref.load %arg3[%c170] : memref<288xf32, #tpu.memory_space<smem>>
    %776 = vector.broadcast %775 : f32 to vector<1x288xf32>
    %777 = arith.mulf %766, %776 : vector<1x288xf32>
    %778 = arith.addf %760, %777 : vector<1x288xf32>
    %c171 = arith.constant 171 : index
    %779 = memref.load %arg3[%c171] : memref<288xf32, #tpu.memory_space<smem>>
    %780 = vector.broadcast %779 : f32 to vector<1x288xf32>
    %781 = arith.mulf %766, %780 : vector<1x288xf32>
    %782 = arith.addf %764, %781 : vector<1x288xf32>
    %c0_141 = arith.constant 0 : index
    %c3_142 = arith.constant 3 : index
    %c20_143 = arith.constant 20 : index
    %783 = vector.load %arg1[%c0_141, %c3_142, %c20_143] : memref<1x8x326xf32, #tpu.memory_space<vmem>>, vector<1x1x288xf32>
    %784 = vector.shape_cast %783 : vector<1x1x288xf32> to vector<1x288xf32>
    %c172 = arith.constant 172 : index
    %785 = memref.load %arg3[%c172] : memref<288xf32, #tpu.memory_space<smem>>
    %786 = vector.broadcast %785 : f32 to vector<1x288xf32>
    %787 = arith.mulf %784, %786 : vector<1x288xf32>
    %788 = arith.addf %770, %787 : vector<1x288xf32>
    %c173 = arith.constant 173 : index
    %789 = memref.load %arg3[%c173] : memref<288xf32, #tpu.memory_space<smem>>
    %790 = vector.broadcast %789 : f32 to vector<1x288xf32>
    %791 = arith.mulf %784, %790 : vector<1x288xf32>
    %792 = arith.addf %774, %791 : vector<1x288xf32>
    %c174 = arith.constant 174 : index
    %793 = memref.load %arg3[%c174] : memref<288xf32, #tpu.memory_space<smem>>
    %794 = vector.broadcast %793 : f32 to vector<1x288xf32>
    %795 = arith.mulf %784, %794 : vector<1x288xf32>
    %796 = arith.addf %778, %795 : vector<1x288xf32>
    %c175 = arith.constant 175 : index
    %797 = memref.load %arg3[%c175] : memref<288xf32, #tpu.memory_space<smem>>
    %798 = vector.broadcast %797 : f32 to vector<1x288xf32>
    %799 = arith.mulf %784, %798 : vector<1x288xf32>
    %800 = arith.addf %782, %799 : vector<1x288xf32>
    %c0_144 = arith.constant 0 : index
    %c4_145 = arith.constant 4 : index
    %c20_146 = arith.constant 20 : index
    %801 = vector.load %arg1[%c0_144, %c4_145, %c20_146] : memref<1x8x326xf32, #tpu.memory_space<vmem>>, vector<1x1x288xf32>
    %802 = vector.shape_cast %801 : vector<1x1x288xf32> to vector<1x288xf32>
    %c176 = arith.constant 176 : index
    %803 = memref.load %arg3[%c176] : memref<288xf32, #tpu.memory_space<smem>>
    %804 = vector.broadcast %803 : f32 to vector<1x288xf32>
    %805 = arith.mulf %802, %804 : vector<1x288xf32>
    %806 = arith.addf %788, %805 : vector<1x288xf32>
    %c177 = arith.constant 177 : index
    %807 = memref.load %arg3[%c177] : memref<288xf32, #tpu.memory_space<smem>>
    %808 = vector.broadcast %807 : f32 to vector<1x288xf32>
    %809 = arith.mulf %802, %808 : vector<1x288xf32>
    %810 = arith.addf %792, %809 : vector<1x288xf32>
    %c178 = arith.constant 178 : index
    %811 = memref.load %arg3[%c178] : memref<288xf32, #tpu.memory_space<smem>>
    %812 = vector.broadcast %811 : f32 to vector<1x288xf32>
    %813 = arith.mulf %802, %812 : vector<1x288xf32>
    %814 = arith.addf %796, %813 : vector<1x288xf32>
    %c179 = arith.constant 179 : index
    %815 = memref.load %arg3[%c179] : memref<288xf32, #tpu.memory_space<smem>>
    %816 = vector.broadcast %815 : f32 to vector<1x288xf32>
    %817 = arith.mulf %802, %816 : vector<1x288xf32>
    %818 = arith.addf %800, %817 : vector<1x288xf32>
    %c0_147 = arith.constant 0 : index
    %c5_148 = arith.constant 5 : index
    %c20_149 = arith.constant 20 : index
    %819 = vector.load %arg1[%c0_147, %c5_148, %c20_149] : memref<1x8x326xf32, #tpu.memory_space<vmem>>, vector<1x1x288xf32>
    %820 = vector.shape_cast %819 : vector<1x1x288xf32> to vector<1x288xf32>
    %c180 = arith.constant 180 : index
    %821 = memref.load %arg3[%c180] : memref<288xf32, #tpu.memory_space<smem>>
    %822 = vector.broadcast %821 : f32 to vector<1x288xf32>
    %823 = arith.mulf %820, %822 : vector<1x288xf32>
    %824 = arith.addf %806, %823 : vector<1x288xf32>
    %c181 = arith.constant 181 : index
    %825 = memref.load %arg3[%c181] : memref<288xf32, #tpu.memory_space<smem>>
    %826 = vector.broadcast %825 : f32 to vector<1x288xf32>
    %827 = arith.mulf %820, %826 : vector<1x288xf32>
    %828 = arith.addf %810, %827 : vector<1x288xf32>
    %c182 = arith.constant 182 : index
    %829 = memref.load %arg3[%c182] : memref<288xf32, #tpu.memory_space<smem>>
    %830 = vector.broadcast %829 : f32 to vector<1x288xf32>
    %831 = arith.mulf %820, %830 : vector<1x288xf32>
    %832 = arith.addf %814, %831 : vector<1x288xf32>
    %c183 = arith.constant 183 : index
    %833 = memref.load %arg3[%c183] : memref<288xf32, #tpu.memory_space<smem>>
    %834 = vector.broadcast %833 : f32 to vector<1x288xf32>
    %835 = arith.mulf %820, %834 : vector<1x288xf32>
    %836 = arith.addf %818, %835 : vector<1x288xf32>
    %c0_150 = arith.constant 0 : index
    %c6_151 = arith.constant 6 : index
    %c20_152 = arith.constant 20 : index
    %837 = vector.load %arg1[%c0_150, %c6_151, %c20_152] : memref<1x8x326xf32, #tpu.memory_space<vmem>>, vector<1x1x288xf32>
    %838 = vector.shape_cast %837 : vector<1x1x288xf32> to vector<1x288xf32>
    %c184 = arith.constant 184 : index
    %839 = memref.load %arg3[%c184] : memref<288xf32, #tpu.memory_space<smem>>
    %840 = vector.broadcast %839 : f32 to vector<1x288xf32>
    %841 = arith.mulf %838, %840 : vector<1x288xf32>
    %842 = arith.addf %824, %841 : vector<1x288xf32>
    %c185 = arith.constant 185 : index
    %843 = memref.load %arg3[%c185] : memref<288xf32, #tpu.memory_space<smem>>
    %844 = vector.broadcast %843 : f32 to vector<1x288xf32>
    %845 = arith.mulf %838, %844 : vector<1x288xf32>
    %846 = arith.addf %828, %845 : vector<1x288xf32>
    %c186 = arith.constant 186 : index
    %847 = memref.load %arg3[%c186] : memref<288xf32, #tpu.memory_space<smem>>
    %848 = vector.broadcast %847 : f32 to vector<1x288xf32>
    %849 = arith.mulf %838, %848 : vector<1x288xf32>
    %850 = arith.addf %832, %849 : vector<1x288xf32>
    %c187 = arith.constant 187 : index
    %851 = memref.load %arg3[%c187] : memref<288xf32, #tpu.memory_space<smem>>
    %852 = vector.broadcast %851 : f32 to vector<1x288xf32>
    %853 = arith.mulf %838, %852 : vector<1x288xf32>
    %854 = arith.addf %836, %853 : vector<1x288xf32>
    %c0_153 = arith.constant 0 : index
    %c7_154 = arith.constant 7 : index
    %c20_155 = arith.constant 20 : index
    %855 = vector.load %arg1[%c0_153, %c7_154, %c20_155] : memref<1x8x326xf32, #tpu.memory_space<vmem>>, vector<1x1x288xf32>
    %856 = vector.shape_cast %855 : vector<1x1x288xf32> to vector<1x288xf32>
    %c188 = arith.constant 188 : index
    %857 = memref.load %arg3[%c188] : memref<288xf32, #tpu.memory_space<smem>>
    %858 = vector.broadcast %857 : f32 to vector<1x288xf32>
    %859 = arith.mulf %856, %858 : vector<1x288xf32>
    %860 = arith.addf %842, %859 : vector<1x288xf32>
    %c189 = arith.constant 189 : index
    %861 = memref.load %arg3[%c189] : memref<288xf32, #tpu.memory_space<smem>>
    %862 = vector.broadcast %861 : f32 to vector<1x288xf32>
    %863 = arith.mulf %856, %862 : vector<1x288xf32>
    %864 = arith.addf %846, %863 : vector<1x288xf32>
    %c190 = arith.constant 190 : index
    %865 = memref.load %arg3[%c190] : memref<288xf32, #tpu.memory_space<smem>>
    %866 = vector.broadcast %865 : f32 to vector<1x288xf32>
    %867 = arith.mulf %856, %866 : vector<1x288xf32>
    %868 = arith.addf %850, %867 : vector<1x288xf32>
    %c191 = arith.constant 191 : index
    %869 = memref.load %arg3[%c191] : memref<288xf32, #tpu.memory_space<smem>>
    %870 = vector.broadcast %869 : f32 to vector<1x288xf32>
    %871 = arith.mulf %856, %870 : vector<1x288xf32>
    %872 = arith.addf %854, %871 : vector<1x288xf32>
    %c0_156 = arith.constant 0 : index
    %c0_157 = arith.constant 0 : index
    %c36_158 = arith.constant 36 : index
    %873 = vector.load %arg1[%c0_156, %c0_157, %c36_158] : memref<1x8x326xf32, #tpu.memory_space<vmem>>, vector<1x1x288xf32>
    %874 = vector.shape_cast %873 : vector<1x1x288xf32> to vector<1x288xf32>
    %c192 = arith.constant 192 : index
    %875 = memref.load %arg3[%c192] : memref<288xf32, #tpu.memory_space<smem>>
    %876 = vector.broadcast %875 : f32 to vector<1x288xf32>
    %877 = arith.mulf %874, %876 : vector<1x288xf32>
    %878 = arith.addf %860, %877 : vector<1x288xf32>
    %c193 = arith.constant 193 : index
    %879 = memref.load %arg3[%c193] : memref<288xf32, #tpu.memory_space<smem>>
    %880 = vector.broadcast %879 : f32 to vector<1x288xf32>
    %881 = arith.mulf %874, %880 : vector<1x288xf32>
    %882 = arith.addf %864, %881 : vector<1x288xf32>
    %c194 = arith.constant 194 : index
    %883 = memref.load %arg3[%c194] : memref<288xf32, #tpu.memory_space<smem>>
    %884 = vector.broadcast %883 : f32 to vector<1x288xf32>
    %885 = arith.mulf %874, %884 : vector<1x288xf32>
    %886 = arith.addf %868, %885 : vector<1x288xf32>
    %c195 = arith.constant 195 : index
    %887 = memref.load %arg3[%c195] : memref<288xf32, #tpu.memory_space<smem>>
    %888 = vector.broadcast %887 : f32 to vector<1x288xf32>
    %889 = arith.mulf %874, %888 : vector<1x288xf32>
    %890 = arith.addf %872, %889 : vector<1x288xf32>
    %c0_159 = arith.constant 0 : index
    %c1_160 = arith.constant 1 : index
    %c36_161 = arith.constant 36 : index
    %891 = vector.load %arg1[%c0_159, %c1_160, %c36_161] : memref<1x8x326xf32, #tpu.memory_space<vmem>>, vector<1x1x288xf32>
    %892 = vector.shape_cast %891 : vector<1x1x288xf32> to vector<1x288xf32>
    %c196 = arith.constant 196 : index
    %893 = memref.load %arg3[%c196] : memref<288xf32, #tpu.memory_space<smem>>
    %894 = vector.broadcast %893 : f32 to vector<1x288xf32>
    %895 = arith.mulf %892, %894 : vector<1x288xf32>
    %896 = arith.addf %878, %895 : vector<1x288xf32>
    %c197 = arith.constant 197 : index
    %897 = memref.load %arg3[%c197] : memref<288xf32, #tpu.memory_space<smem>>
    %898 = vector.broadcast %897 : f32 to vector<1x288xf32>
    %899 = arith.mulf %892, %898 : vector<1x288xf32>
    %900 = arith.addf %882, %899 : vector<1x288xf32>
    %c198 = arith.constant 198 : index
    %901 = memref.load %arg3[%c198] : memref<288xf32, #tpu.memory_space<smem>>
    %902 = vector.broadcast %901 : f32 to vector<1x288xf32>
    %903 = arith.mulf %892, %902 : vector<1x288xf32>
    %904 = arith.addf %886, %903 : vector<1x288xf32>
    %c199 = arith.constant 199 : index
    %905 = memref.load %arg3[%c199] : memref<288xf32, #tpu.memory_space<smem>>
    %906 = vector.broadcast %905 : f32 to vector<1x288xf32>
    %907 = arith.mulf %892, %906 : vector<1x288xf32>
    %908 = arith.addf %890, %907 : vector<1x288xf32>
    %c0_162 = arith.constant 0 : index
    %c2_163 = arith.constant 2 : index
    %c36_164 = arith.constant 36 : index
    %909 = vector.load %arg1[%c0_162, %c2_163, %c36_164] : memref<1x8x326xf32, #tpu.memory_space<vmem>>, vector<1x1x288xf32>
    %910 = vector.shape_cast %909 : vector<1x1x288xf32> to vector<1x288xf32>
    %c200 = arith.constant 200 : index
    %911 = memref.load %arg3[%c200] : memref<288xf32, #tpu.memory_space<smem>>
    %912 = vector.broadcast %911 : f32 to vector<1x288xf32>
    %913 = arith.mulf %910, %912 : vector<1x288xf32>
    %914 = arith.addf %896, %913 : vector<1x288xf32>
    %c201 = arith.constant 201 : index
    %915 = memref.load %arg3[%c201] : memref<288xf32, #tpu.memory_space<smem>>
    %916 = vector.broadcast %915 : f32 to vector<1x288xf32>
    %917 = arith.mulf %910, %916 : vector<1x288xf32>
    %918 = arith.addf %900, %917 : vector<1x288xf32>
    %c202 = arith.constant 202 : index
    %919 = memref.load %arg3[%c202] : memref<288xf32, #tpu.memory_space<smem>>
    %920 = vector.broadcast %919 : f32 to vector<1x288xf32>
    %921 = arith.mulf %910, %920 : vector<1x288xf32>
    %922 = arith.addf %904, %921 : vector<1x288xf32>
    %c203 = arith.constant 203 : index
    %923 = memref.load %arg3[%c203] : memref<288xf32, #tpu.memory_space<smem>>
    %924 = vector.broadcast %923 : f32 to vector<1x288xf32>
    %925 = arith.mulf %910, %924 : vector<1x288xf32>
    %926 = arith.addf %908, %925 : vector<1x288xf32>
    %c0_165 = arith.constant 0 : index
    %c3_166 = arith.constant 3 : index
    %c36_167 = arith.constant 36 : index
    %927 = vector.load %arg1[%c0_165, %c3_166, %c36_167] : memref<1x8x326xf32, #tpu.memory_space<vmem>>, vector<1x1x288xf32>
    %928 = vector.shape_cast %927 : vector<1x1x288xf32> to vector<1x288xf32>
    %c204 = arith.constant 204 : index
    %929 = memref.load %arg3[%c204] : memref<288xf32, #tpu.memory_space<smem>>
    %930 = vector.broadcast %929 : f32 to vector<1x288xf32>
    %931 = arith.mulf %928, %930 : vector<1x288xf32>
    %932 = arith.addf %914, %931 : vector<1x288xf32>
    %c205 = arith.constant 205 : index
    %933 = memref.load %arg3[%c205] : memref<288xf32, #tpu.memory_space<smem>>
    %934 = vector.broadcast %933 : f32 to vector<1x288xf32>
    %935 = arith.mulf %928, %934 : vector<1x288xf32>
    %936 = arith.addf %918, %935 : vector<1x288xf32>
    %c206 = arith.constant 206 : index
    %937 = memref.load %arg3[%c206] : memref<288xf32, #tpu.memory_space<smem>>
    %938 = vector.broadcast %937 : f32 to vector<1x288xf32>
    %939 = arith.mulf %928, %938 : vector<1x288xf32>
    %940 = arith.addf %922, %939 : vector<1x288xf32>
    %c207 = arith.constant 207 : index
    %941 = memref.load %arg3[%c207] : memref<288xf32, #tpu.memory_space<smem>>
    %942 = vector.broadcast %941 : f32 to vector<1x288xf32>
    %943 = arith.mulf %928, %942 : vector<1x288xf32>
    %944 = arith.addf %926, %943 : vector<1x288xf32>
    %c0_168 = arith.constant 0 : index
    %c4_169 = arith.constant 4 : index
    %c36_170 = arith.constant 36 : index
    %945 = vector.load %arg1[%c0_168, %c4_169, %c36_170] : memref<1x8x326xf32, #tpu.memory_space<vmem>>, vector<1x1x288xf32>
    %946 = vector.shape_cast %945 : vector<1x1x288xf32> to vector<1x288xf32>
    %c208 = arith.constant 208 : index
    %947 = memref.load %arg3[%c208] : memref<288xf32, #tpu.memory_space<smem>>
    %948 = vector.broadcast %947 : f32 to vector<1x288xf32>
    %949 = arith.mulf %946, %948 : vector<1x288xf32>
    %950 = arith.addf %932, %949 : vector<1x288xf32>
    %c209 = arith.constant 209 : index
    %951 = memref.load %arg3[%c209] : memref<288xf32, #tpu.memory_space<smem>>
    %952 = vector.broadcast %951 : f32 to vector<1x288xf32>
    %953 = arith.mulf %946, %952 : vector<1x288xf32>
    %954 = arith.addf %936, %953 : vector<1x288xf32>
    %c210 = arith.constant 210 : index
    %955 = memref.load %arg3[%c210] : memref<288xf32, #tpu.memory_space<smem>>
    %956 = vector.broadcast %955 : f32 to vector<1x288xf32>
    %957 = arith.mulf %946, %956 : vector<1x288xf32>
    %958 = arith.addf %940, %957 : vector<1x288xf32>
    %c211 = arith.constant 211 : index
    %959 = memref.load %arg3[%c211] : memref<288xf32, #tpu.memory_space<smem>>
    %960 = vector.broadcast %959 : f32 to vector<1x288xf32>
    %961 = arith.mulf %946, %960 : vector<1x288xf32>
    %962 = arith.addf %944, %961 : vector<1x288xf32>
    %c0_171 = arith.constant 0 : index
    %c5_172 = arith.constant 5 : index
    %c36_173 = arith.constant 36 : index
    %963 = vector.load %arg1[%c0_171, %c5_172, %c36_173] : memref<1x8x326xf32, #tpu.memory_space<vmem>>, vector<1x1x288xf32>
    %964 = vector.shape_cast %963 : vector<1x1x288xf32> to vector<1x288xf32>
    %c212 = arith.constant 212 : index
    %965 = memref.load %arg3[%c212] : memref<288xf32, #tpu.memory_space<smem>>
    %966 = vector.broadcast %965 : f32 to vector<1x288xf32>
    %967 = arith.mulf %964, %966 : vector<1x288xf32>
    %968 = arith.addf %950, %967 : vector<1x288xf32>
    %c213 = arith.constant 213 : index
    %969 = memref.load %arg3[%c213] : memref<288xf32, #tpu.memory_space<smem>>
    %970 = vector.broadcast %969 : f32 to vector<1x288xf32>
    %971 = arith.mulf %964, %970 : vector<1x288xf32>
    %972 = arith.addf %954, %971 : vector<1x288xf32>
    %c214 = arith.constant 214 : index
    %973 = memref.load %arg3[%c214] : memref<288xf32, #tpu.memory_space<smem>>
    %974 = vector.broadcast %973 : f32 to vector<1x288xf32>
    %975 = arith.mulf %964, %974 : vector<1x288xf32>
    %976 = arith.addf %958, %975 : vector<1x288xf32>
    %c215 = arith.constant 215 : index
    %977 = memref.load %arg3[%c215] : memref<288xf32, #tpu.memory_space<smem>>
    %978 = vector.broadcast %977 : f32 to vector<1x288xf32>
    %979 = arith.mulf %964, %978 : vector<1x288xf32>
    %980 = arith.addf %962, %979 : vector<1x288xf32>
    %c0_174 = arith.constant 0 : index
    %c6_175 = arith.constant 6 : index
    %c36_176 = arith.constant 36 : index
    %981 = vector.load %arg1[%c0_174, %c6_175, %c36_176] : memref<1x8x326xf32, #tpu.memory_space<vmem>>, vector<1x1x288xf32>
    %982 = vector.shape_cast %981 : vector<1x1x288xf32> to vector<1x288xf32>
    %c216 = arith.constant 216 : index
    %983 = memref.load %arg3[%c216] : memref<288xf32, #tpu.memory_space<smem>>
    %984 = vector.broadcast %983 : f32 to vector<1x288xf32>
    %985 = arith.mulf %982, %984 : vector<1x288xf32>
    %986 = arith.addf %968, %985 : vector<1x288xf32>
    %c217 = arith.constant 217 : index
    %987 = memref.load %arg3[%c217] : memref<288xf32, #tpu.memory_space<smem>>
    %988 = vector.broadcast %987 : f32 to vector<1x288xf32>
    %989 = arith.mulf %982, %988 : vector<1x288xf32>
    %990 = arith.addf %972, %989 : vector<1x288xf32>
    %c218 = arith.constant 218 : index
    %991 = memref.load %arg3[%c218] : memref<288xf32, #tpu.memory_space<smem>>
    %992 = vector.broadcast %991 : f32 to vector<1x288xf32>
    %993 = arith.mulf %982, %992 : vector<1x288xf32>
    %994 = arith.addf %976, %993 : vector<1x288xf32>
    %c219 = arith.constant 219 : index
    %995 = memref.load %arg3[%c219] : memref<288xf32, #tpu.memory_space<smem>>
    %996 = vector.broadcast %995 : f32 to vector<1x288xf32>
    %997 = arith.mulf %982, %996 : vector<1x288xf32>
    %998 = arith.addf %980, %997 : vector<1x288xf32>
    %c0_177 = arith.constant 0 : index
    %c7_178 = arith.constant 7 : index
    %c36_179 = arith.constant 36 : index
    %999 = vector.load %arg1[%c0_177, %c7_178, %c36_179] : memref<1x8x326xf32, #tpu.memory_space<vmem>>, vector<1x1x288xf32>
    %1000 = vector.shape_cast %999 : vector<1x1x288xf32> to vector<1x288xf32>
    %c220 = arith.constant 220 : index
    %1001 = memref.load %arg3[%c220] : memref<288xf32, #tpu.memory_space<smem>>
    %1002 = vector.broadcast %1001 : f32 to vector<1x288xf32>
    %1003 = arith.mulf %1000, %1002 : vector<1x288xf32>
    %1004 = arith.addf %986, %1003 : vector<1x288xf32>
    %c221 = arith.constant 221 : index
    %1005 = memref.load %arg3[%c221] : memref<288xf32, #tpu.memory_space<smem>>
    %1006 = vector.broadcast %1005 : f32 to vector<1x288xf32>
    %1007 = arith.mulf %1000, %1006 : vector<1x288xf32>
    %1008 = arith.addf %990, %1007 : vector<1x288xf32>
    %c222 = arith.constant 222 : index
    %1009 = memref.load %arg3[%c222] : memref<288xf32, #tpu.memory_space<smem>>
    %1010 = vector.broadcast %1009 : f32 to vector<1x288xf32>
    %1011 = arith.mulf %1000, %1010 : vector<1x288xf32>
    %1012 = arith.addf %994, %1011 : vector<1x288xf32>
    %c223 = arith.constant 223 : index
    %1013 = memref.load %arg3[%c223] : memref<288xf32, #tpu.memory_space<smem>>
    %1014 = vector.broadcast %1013 : f32 to vector<1x288xf32>
    %1015 = arith.mulf %1000, %1014 : vector<1x288xf32>
    %1016 = arith.addf %998, %1015 : vector<1x288xf32>
    %c0_180 = arith.constant 0 : index
    %c0_181 = arith.constant 0 : index
    %c37_182 = arith.constant 37 : index
    %1017 = vector.load %arg1[%c0_180, %c0_181, %c37_182] : memref<1x8x326xf32, #tpu.memory_space<vmem>>, vector<1x1x288xf32>
    %1018 = vector.shape_cast %1017 : vector<1x1x288xf32> to vector<1x288xf32>
    %c224 = arith.constant 224 : index
    %1019 = memref.load %arg3[%c224] : memref<288xf32, #tpu.memory_space<smem>>
    %1020 = vector.broadcast %1019 : f32 to vector<1x288xf32>
    %1021 = arith.mulf %1018, %1020 : vector<1x288xf32>
    %1022 = arith.addf %1004, %1021 : vector<1x288xf32>
    %c225 = arith.constant 225 : index
    %1023 = memref.load %arg3[%c225] : memref<288xf32, #tpu.memory_space<smem>>
    %1024 = vector.broadcast %1023 : f32 to vector<1x288xf32>
    %1025 = arith.mulf %1018, %1024 : vector<1x288xf32>
    %1026 = arith.addf %1008, %1025 : vector<1x288xf32>
    %c226 = arith.constant 226 : index
    %1027 = memref.load %arg3[%c226] : memref<288xf32, #tpu.memory_space<smem>>
    %1028 = vector.broadcast %1027 : f32 to vector<1x288xf32>
    %1029 = arith.mulf %1018, %1028 : vector<1x288xf32>
    %1030 = arith.addf %1012, %1029 : vector<1x288xf32>
    %c227 = arith.constant 227 : index
    %1031 = memref.load %arg3[%c227] : memref<288xf32, #tpu.memory_space<smem>>
    %1032 = vector.broadcast %1031 : f32 to vector<1x288xf32>
    %1033 = arith.mulf %1018, %1032 : vector<1x288xf32>
    %1034 = arith.addf %1016, %1033 : vector<1x288xf32>
    %c0_183 = arith.constant 0 : index
    %c1_184 = arith.constant 1 : index
    %c37_185 = arith.constant 37 : index
    %1035 = vector.load %arg1[%c0_183, %c1_184, %c37_185] : memref<1x8x326xf32, #tpu.memory_space<vmem>>, vector<1x1x288xf32>
    %1036 = vector.shape_cast %1035 : vector<1x1x288xf32> to vector<1x288xf32>
    %c228 = arith.constant 228 : index
    %1037 = memref.load %arg3[%c228] : memref<288xf32, #tpu.memory_space<smem>>
    %1038 = vector.broadcast %1037 : f32 to vector<1x288xf32>
    %1039 = arith.mulf %1036, %1038 : vector<1x288xf32>
    %1040 = arith.addf %1022, %1039 : vector<1x288xf32>
    %c229 = arith.constant 229 : index
    %1041 = memref.load %arg3[%c229] : memref<288xf32, #tpu.memory_space<smem>>
    %1042 = vector.broadcast %1041 : f32 to vector<1x288xf32>
    %1043 = arith.mulf %1036, %1042 : vector<1x288xf32>
    %1044 = arith.addf %1026, %1043 : vector<1x288xf32>
    %c230 = arith.constant 230 : index
    %1045 = memref.load %arg3[%c230] : memref<288xf32, #tpu.memory_space<smem>>
    %1046 = vector.broadcast %1045 : f32 to vector<1x288xf32>
    %1047 = arith.mulf %1036, %1046 : vector<1x288xf32>
    %1048 = arith.addf %1030, %1047 : vector<1x288xf32>
    %c231 = arith.constant 231 : index
    %1049 = memref.load %arg3[%c231] : memref<288xf32, #tpu.memory_space<smem>>
    %1050 = vector.broadcast %1049 : f32 to vector<1x288xf32>
    %1051 = arith.mulf %1036, %1050 : vector<1x288xf32>
    %1052 = arith.addf %1034, %1051 : vector<1x288xf32>
    %c0_186 = arith.constant 0 : index
    %c2_187 = arith.constant 2 : index
    %c37_188 = arith.constant 37 : index
    %1053 = vector.load %arg1[%c0_186, %c2_187, %c37_188] : memref<1x8x326xf32, #tpu.memory_space<vmem>>, vector<1x1x288xf32>
    %1054 = vector.shape_cast %1053 : vector<1x1x288xf32> to vector<1x288xf32>
    %c232 = arith.constant 232 : index
    %1055 = memref.load %arg3[%c232] : memref<288xf32, #tpu.memory_space<smem>>
    %1056 = vector.broadcast %1055 : f32 to vector<1x288xf32>
    %1057 = arith.mulf %1054, %1056 : vector<1x288xf32>
    %1058 = arith.addf %1040, %1057 : vector<1x288xf32>
    %c233 = arith.constant 233 : index
    %1059 = memref.load %arg3[%c233] : memref<288xf32, #tpu.memory_space<smem>>
    %1060 = vector.broadcast %1059 : f32 to vector<1x288xf32>
    %1061 = arith.mulf %1054, %1060 : vector<1x288xf32>
    %1062 = arith.addf %1044, %1061 : vector<1x288xf32>
    %c234 = arith.constant 234 : index
    %1063 = memref.load %arg3[%c234] : memref<288xf32, #tpu.memory_space<smem>>
    %1064 = vector.broadcast %1063 : f32 to vector<1x288xf32>
    %1065 = arith.mulf %1054, %1064 : vector<1x288xf32>
    %1066 = arith.addf %1048, %1065 : vector<1x288xf32>
    %c235 = arith.constant 235 : index
    %1067 = memref.load %arg3[%c235] : memref<288xf32, #tpu.memory_space<smem>>
    %1068 = vector.broadcast %1067 : f32 to vector<1x288xf32>
    %1069 = arith.mulf %1054, %1068 : vector<1x288xf32>
    %1070 = arith.addf %1052, %1069 : vector<1x288xf32>
    %c0_189 = arith.constant 0 : index
    %c3_190 = arith.constant 3 : index
    %c37_191 = arith.constant 37 : index
    %1071 = vector.load %arg1[%c0_189, %c3_190, %c37_191] : memref<1x8x326xf32, #tpu.memory_space<vmem>>, vector<1x1x288xf32>
    %1072 = vector.shape_cast %1071 : vector<1x1x288xf32> to vector<1x288xf32>
    %c236 = arith.constant 236 : index
    %1073 = memref.load %arg3[%c236] : memref<288xf32, #tpu.memory_space<smem>>
    %1074 = vector.broadcast %1073 : f32 to vector<1x288xf32>
    %1075 = arith.mulf %1072, %1074 : vector<1x288xf32>
    %1076 = arith.addf %1058, %1075 : vector<1x288xf32>
    %c237 = arith.constant 237 : index
    %1077 = memref.load %arg3[%c237] : memref<288xf32, #tpu.memory_space<smem>>
    %1078 = vector.broadcast %1077 : f32 to vector<1x288xf32>
    %1079 = arith.mulf %1072, %1078 : vector<1x288xf32>
    %1080 = arith.addf %1062, %1079 : vector<1x288xf32>
    %c238 = arith.constant 238 : index
    %1081 = memref.load %arg3[%c238] : memref<288xf32, #tpu.memory_space<smem>>
    %1082 = vector.broadcast %1081 : f32 to vector<1x288xf32>
    %1083 = arith.mulf %1072, %1082 : vector<1x288xf32>
    %1084 = arith.addf %1066, %1083 : vector<1x288xf32>
    %c239 = arith.constant 239 : index
    %1085 = memref.load %arg3[%c239] : memref<288xf32, #tpu.memory_space<smem>>
    %1086 = vector.broadcast %1085 : f32 to vector<1x288xf32>
    %1087 = arith.mulf %1072, %1086 : vector<1x288xf32>
    %1088 = arith.addf %1070, %1087 : vector<1x288xf32>
    %c0_192 = arith.constant 0 : index
    %c4_193 = arith.constant 4 : index
    %c37_194 = arith.constant 37 : index
    %1089 = vector.load %arg1[%c0_192, %c4_193, %c37_194] : memref<1x8x326xf32, #tpu.memory_space<vmem>>, vector<1x1x288xf32>
    %1090 = vector.shape_cast %1089 : vector<1x1x288xf32> to vector<1x288xf32>
    %c240 = arith.constant 240 : index
    %1091 = memref.load %arg3[%c240] : memref<288xf32, #tpu.memory_space<smem>>
    %1092 = vector.broadcast %1091 : f32 to vector<1x288xf32>
    %1093 = arith.mulf %1090, %1092 : vector<1x288xf32>
    %1094 = arith.addf %1076, %1093 : vector<1x288xf32>
    %c241 = arith.constant 241 : index
    %1095 = memref.load %arg3[%c241] : memref<288xf32, #tpu.memory_space<smem>>
    %1096 = vector.broadcast %1095 : f32 to vector<1x288xf32>
    %1097 = arith.mulf %1090, %1096 : vector<1x288xf32>
    %1098 = arith.addf %1080, %1097 : vector<1x288xf32>
    %c242 = arith.constant 242 : index
    %1099 = memref.load %arg3[%c242] : memref<288xf32, #tpu.memory_space<smem>>
    %1100 = vector.broadcast %1099 : f32 to vector<1x288xf32>
    %1101 = arith.mulf %1090, %1100 : vector<1x288xf32>
    %1102 = arith.addf %1084, %1101 : vector<1x288xf32>
    %c243 = arith.constant 243 : index
    %1103 = memref.load %arg3[%c243] : memref<288xf32, #tpu.memory_space<smem>>
    %1104 = vector.broadcast %1103 : f32 to vector<1x288xf32>
    %1105 = arith.mulf %1090, %1104 : vector<1x288xf32>
    %1106 = arith.addf %1088, %1105 : vector<1x288xf32>
    %c0_195 = arith.constant 0 : index
    %c5_196 = arith.constant 5 : index
    %c37_197 = arith.constant 37 : index
    %1107 = vector.load %arg1[%c0_195, %c5_196, %c37_197] : memref<1x8x326xf32, #tpu.memory_space<vmem>>, vector<1x1x288xf32>
    %1108 = vector.shape_cast %1107 : vector<1x1x288xf32> to vector<1x288xf32>
    %c244 = arith.constant 244 : index
    %1109 = memref.load %arg3[%c244] : memref<288xf32, #tpu.memory_space<smem>>
    %1110 = vector.broadcast %1109 : f32 to vector<1x288xf32>
    %1111 = arith.mulf %1108, %1110 : vector<1x288xf32>
    %1112 = arith.addf %1094, %1111 : vector<1x288xf32>
    %c245 = arith.constant 245 : index
    %1113 = memref.load %arg3[%c245] : memref<288xf32, #tpu.memory_space<smem>>
    %1114 = vector.broadcast %1113 : f32 to vector<1x288xf32>
    %1115 = arith.mulf %1108, %1114 : vector<1x288xf32>
    %1116 = arith.addf %1098, %1115 : vector<1x288xf32>
    %c246 = arith.constant 246 : index
    %1117 = memref.load %arg3[%c246] : memref<288xf32, #tpu.memory_space<smem>>
    %1118 = vector.broadcast %1117 : f32 to vector<1x288xf32>
    %1119 = arith.mulf %1108, %1118 : vector<1x288xf32>
    %1120 = arith.addf %1102, %1119 : vector<1x288xf32>
    %c247 = arith.constant 247 : index
    %1121 = memref.load %arg3[%c247] : memref<288xf32, #tpu.memory_space<smem>>
    %1122 = vector.broadcast %1121 : f32 to vector<1x288xf32>
    %1123 = arith.mulf %1108, %1122 : vector<1x288xf32>
    %1124 = arith.addf %1106, %1123 : vector<1x288xf32>
    %c0_198 = arith.constant 0 : index
    %c6_199 = arith.constant 6 : index
    %c37_200 = arith.constant 37 : index
    %1125 = vector.load %arg1[%c0_198, %c6_199, %c37_200] : memref<1x8x326xf32, #tpu.memory_space<vmem>>, vector<1x1x288xf32>
    %1126 = vector.shape_cast %1125 : vector<1x1x288xf32> to vector<1x288xf32>
    %c248 = arith.constant 248 : index
    %1127 = memref.load %arg3[%c248] : memref<288xf32, #tpu.memory_space<smem>>
    %1128 = vector.broadcast %1127 : f32 to vector<1x288xf32>
    %1129 = arith.mulf %1126, %1128 : vector<1x288xf32>
    %1130 = arith.addf %1112, %1129 : vector<1x288xf32>
    %c249 = arith.constant 249 : index
    %1131 = memref.load %arg3[%c249] : memref<288xf32, #tpu.memory_space<smem>>
    %1132 = vector.broadcast %1131 : f32 to vector<1x288xf32>
    %1133 = arith.mulf %1126, %1132 : vector<1x288xf32>
    %1134 = arith.addf %1116, %1133 : vector<1x288xf32>
    %c250 = arith.constant 250 : index
    %1135 = memref.load %arg3[%c250] : memref<288xf32, #tpu.memory_space<smem>>
    %1136 = vector.broadcast %1135 : f32 to vector<1x288xf32>
    %1137 = arith.mulf %1126, %1136 : vector<1x288xf32>
    %1138 = arith.addf %1120, %1137 : vector<1x288xf32>
    %c251 = arith.constant 251 : index
    %1139 = memref.load %arg3[%c251] : memref<288xf32, #tpu.memory_space<smem>>
    %1140 = vector.broadcast %1139 : f32 to vector<1x288xf32>
    %1141 = arith.mulf %1126, %1140 : vector<1x288xf32>
    %1142 = arith.addf %1124, %1141 : vector<1x288xf32>
    %c0_201 = arith.constant 0 : index
    %c7_202 = arith.constant 7 : index
    %c37_203 = arith.constant 37 : index
    %1143 = vector.load %arg1[%c0_201, %c7_202, %c37_203] : memref<1x8x326xf32, #tpu.memory_space<vmem>>, vector<1x1x288xf32>
    %1144 = vector.shape_cast %1143 : vector<1x1x288xf32> to vector<1x288xf32>
    %c252 = arith.constant 252 : index
    %1145 = memref.load %arg3[%c252] : memref<288xf32, #tpu.memory_space<smem>>
    %1146 = vector.broadcast %1145 : f32 to vector<1x288xf32>
    %1147 = arith.mulf %1144, %1146 : vector<1x288xf32>
    %1148 = arith.addf %1130, %1147 : vector<1x288xf32>
    %c253 = arith.constant 253 : index
    %1149 = memref.load %arg3[%c253] : memref<288xf32, #tpu.memory_space<smem>>
    %1150 = vector.broadcast %1149 : f32 to vector<1x288xf32>
    %1151 = arith.mulf %1144, %1150 : vector<1x288xf32>
    %1152 = arith.addf %1134, %1151 : vector<1x288xf32>
    %c254 = arith.constant 254 : index
    %1153 = memref.load %arg3[%c254] : memref<288xf32, #tpu.memory_space<smem>>
    %1154 = vector.broadcast %1153 : f32 to vector<1x288xf32>
    %1155 = arith.mulf %1144, %1154 : vector<1x288xf32>
    %1156 = arith.addf %1138, %1155 : vector<1x288xf32>
    %c255 = arith.constant 255 : index
    %1157 = memref.load %arg3[%c255] : memref<288xf32, #tpu.memory_space<smem>>
    %1158 = vector.broadcast %1157 : f32 to vector<1x288xf32>
    %1159 = arith.mulf %1144, %1158 : vector<1x288xf32>
    %1160 = arith.addf %1142, %1159 : vector<1x288xf32>
    %c0_204 = arith.constant 0 : index
    %c0_205 = arith.constant 0 : index
    %c38_206 = arith.constant 38 : index
    %1161 = vector.load %arg1[%c0_204, %c0_205, %c38_206] : memref<1x8x326xf32, #tpu.memory_space<vmem>>, vector<1x1x288xf32>
    %1162 = vector.shape_cast %1161 : vector<1x1x288xf32> to vector<1x288xf32>
    %c256 = arith.constant 256 : index
    %1163 = memref.load %arg3[%c256] : memref<288xf32, #tpu.memory_space<smem>>
    %1164 = vector.broadcast %1163 : f32 to vector<1x288xf32>
    %1165 = arith.mulf %1162, %1164 : vector<1x288xf32>
    %1166 = arith.addf %1148, %1165 : vector<1x288xf32>
    %c257 = arith.constant 257 : index
    %1167 = memref.load %arg3[%c257] : memref<288xf32, #tpu.memory_space<smem>>
    %1168 = vector.broadcast %1167 : f32 to vector<1x288xf32>
    %1169 = arith.mulf %1162, %1168 : vector<1x288xf32>
    %1170 = arith.addf %1152, %1169 : vector<1x288xf32>
    %c258 = arith.constant 258 : index
    %1171 = memref.load %arg3[%c258] : memref<288xf32, #tpu.memory_space<smem>>
    %1172 = vector.broadcast %1171 : f32 to vector<1x288xf32>
    %1173 = arith.mulf %1162, %1172 : vector<1x288xf32>
    %1174 = arith.addf %1156, %1173 : vector<1x288xf32>
    %c259 = arith.constant 259 : index
    %1175 = memref.load %arg3[%c259] : memref<288xf32, #tpu.memory_space<smem>>
    %1176 = vector.broadcast %1175 : f32 to vector<1x288xf32>
    %1177 = arith.mulf %1162, %1176 : vector<1x288xf32>
    %1178 = arith.addf %1160, %1177 : vector<1x288xf32>
    %c0_207 = arith.constant 0 : index
    %c1_208 = arith.constant 1 : index
    %c38_209 = arith.constant 38 : index
    %1179 = vector.load %arg1[%c0_207, %c1_208, %c38_209] : memref<1x8x326xf32, #tpu.memory_space<vmem>>, vector<1x1x288xf32>
    %1180 = vector.shape_cast %1179 : vector<1x1x288xf32> to vector<1x288xf32>
    %c260 = arith.constant 260 : index
    %1181 = memref.load %arg3[%c260] : memref<288xf32, #tpu.memory_space<smem>>
    %1182 = vector.broadcast %1181 : f32 to vector<1x288xf32>
    %1183 = arith.mulf %1180, %1182 : vector<1x288xf32>
    %1184 = arith.addf %1166, %1183 : vector<1x288xf32>
    %c261 = arith.constant 261 : index
    %1185 = memref.load %arg3[%c261] : memref<288xf32, #tpu.memory_space<smem>>
    %1186 = vector.broadcast %1185 : f32 to vector<1x288xf32>
    %1187 = arith.mulf %1180, %1186 : vector<1x288xf32>
    %1188 = arith.addf %1170, %1187 : vector<1x288xf32>
    %c262 = arith.constant 262 : index
    %1189 = memref.load %arg3[%c262] : memref<288xf32, #tpu.memory_space<smem>>
    %1190 = vector.broadcast %1189 : f32 to vector<1x288xf32>
    %1191 = arith.mulf %1180, %1190 : vector<1x288xf32>
    %1192 = arith.addf %1174, %1191 : vector<1x288xf32>
    %c263 = arith.constant 263 : index
    %1193 = memref.load %arg3[%c263] : memref<288xf32, #tpu.memory_space<smem>>
    %1194 = vector.broadcast %1193 : f32 to vector<1x288xf32>
    %1195 = arith.mulf %1180, %1194 : vector<1x288xf32>
    %1196 = arith.addf %1178, %1195 : vector<1x288xf32>
    %c0_210 = arith.constant 0 : index
    %c2_211 = arith.constant 2 : index
    %c38_212 = arith.constant 38 : index
    %1197 = vector.load %arg1[%c0_210, %c2_211, %c38_212] : memref<1x8x326xf32, #tpu.memory_space<vmem>>, vector<1x1x288xf32>
    %1198 = vector.shape_cast %1197 : vector<1x1x288xf32> to vector<1x288xf32>
    %c264 = arith.constant 264 : index
    %1199 = memref.load %arg3[%c264] : memref<288xf32, #tpu.memory_space<smem>>
    %1200 = vector.broadcast %1199 : f32 to vector<1x288xf32>
    %1201 = arith.mulf %1198, %1200 : vector<1x288xf32>
    %1202 = arith.addf %1184, %1201 : vector<1x288xf32>
    %c265 = arith.constant 265 : index
    %1203 = memref.load %arg3[%c265] : memref<288xf32, #tpu.memory_space<smem>>
    %1204 = vector.broadcast %1203 : f32 to vector<1x288xf32>
    %1205 = arith.mulf %1198, %1204 : vector<1x288xf32>
    %1206 = arith.addf %1188, %1205 : vector<1x288xf32>
    %c266 = arith.constant 266 : index
    %1207 = memref.load %arg3[%c266] : memref<288xf32, #tpu.memory_space<smem>>
    %1208 = vector.broadcast %1207 : f32 to vector<1x288xf32>
    %1209 = arith.mulf %1198, %1208 : vector<1x288xf32>
    %1210 = arith.addf %1192, %1209 : vector<1x288xf32>
    %c267 = arith.constant 267 : index
    %1211 = memref.load %arg3[%c267] : memref<288xf32, #tpu.memory_space<smem>>
    %1212 = vector.broadcast %1211 : f32 to vector<1x288xf32>
    %1213 = arith.mulf %1198, %1212 : vector<1x288xf32>
    %1214 = arith.addf %1196, %1213 : vector<1x288xf32>
    %c0_213 = arith.constant 0 : index
    %c3_214 = arith.constant 3 : index
    %c38_215 = arith.constant 38 : index
    %1215 = vector.load %arg1[%c0_213, %c3_214, %c38_215] : memref<1x8x326xf32, #tpu.memory_space<vmem>>, vector<1x1x288xf32>
    %1216 = vector.shape_cast %1215 : vector<1x1x288xf32> to vector<1x288xf32>
    %c268 = arith.constant 268 : index
    %1217 = memref.load %arg3[%c268] : memref<288xf32, #tpu.memory_space<smem>>
    %1218 = vector.broadcast %1217 : f32 to vector<1x288xf32>
    %1219 = arith.mulf %1216, %1218 : vector<1x288xf32>
    %1220 = arith.addf %1202, %1219 : vector<1x288xf32>
    %c269 = arith.constant 269 : index
    %1221 = memref.load %arg3[%c269] : memref<288xf32, #tpu.memory_space<smem>>
    %1222 = vector.broadcast %1221 : f32 to vector<1x288xf32>
    %1223 = arith.mulf %1216, %1222 : vector<1x288xf32>
    %1224 = arith.addf %1206, %1223 : vector<1x288xf32>
    %c270 = arith.constant 270 : index
    %1225 = memref.load %arg3[%c270] : memref<288xf32, #tpu.memory_space<smem>>
    %1226 = vector.broadcast %1225 : f32 to vector<1x288xf32>
    %1227 = arith.mulf %1216, %1226 : vector<1x288xf32>
    %1228 = arith.addf %1210, %1227 : vector<1x288xf32>
    %c271 = arith.constant 271 : index
    %1229 = memref.load %arg3[%c271] : memref<288xf32, #tpu.memory_space<smem>>
    %1230 = vector.broadcast %1229 : f32 to vector<1x288xf32>
    %1231 = arith.mulf %1216, %1230 : vector<1x288xf32>
    %1232 = arith.addf %1214, %1231 : vector<1x288xf32>
    %c0_216 = arith.constant 0 : index
    %c4_217 = arith.constant 4 : index
    %c38_218 = arith.constant 38 : index
    %1233 = vector.load %arg1[%c0_216, %c4_217, %c38_218] : memref<1x8x326xf32, #tpu.memory_space<vmem>>, vector<1x1x288xf32>
    %1234 = vector.shape_cast %1233 : vector<1x1x288xf32> to vector<1x288xf32>
    %c272 = arith.constant 272 : index
    %1235 = memref.load %arg3[%c272] : memref<288xf32, #tpu.memory_space<smem>>
    %1236 = vector.broadcast %1235 : f32 to vector<1x288xf32>
    %1237 = arith.mulf %1234, %1236 : vector<1x288xf32>
    %1238 = arith.addf %1220, %1237 : vector<1x288xf32>
    %c273 = arith.constant 273 : index
    %1239 = memref.load %arg3[%c273] : memref<288xf32, #tpu.memory_space<smem>>
    %1240 = vector.broadcast %1239 : f32 to vector<1x288xf32>
    %1241 = arith.mulf %1234, %1240 : vector<1x288xf32>
    %1242 = arith.addf %1224, %1241 : vector<1x288xf32>
    %c274 = arith.constant 274 : index
    %1243 = memref.load %arg3[%c274] : memref<288xf32, #tpu.memory_space<smem>>
    %1244 = vector.broadcast %1243 : f32 to vector<1x288xf32>
    %1245 = arith.mulf %1234, %1244 : vector<1x288xf32>
    %1246 = arith.addf %1228, %1245 : vector<1x288xf32>
    %c275 = arith.constant 275 : index
    %1247 = memref.load %arg3[%c275] : memref<288xf32, #tpu.memory_space<smem>>
    %1248 = vector.broadcast %1247 : f32 to vector<1x288xf32>
    %1249 = arith.mulf %1234, %1248 : vector<1x288xf32>
    %1250 = arith.addf %1232, %1249 : vector<1x288xf32>
    %c0_219 = arith.constant 0 : index
    %c5_220 = arith.constant 5 : index
    %c38_221 = arith.constant 38 : index
    %1251 = vector.load %arg1[%c0_219, %c5_220, %c38_221] : memref<1x8x326xf32, #tpu.memory_space<vmem>>, vector<1x1x288xf32>
    %1252 = vector.shape_cast %1251 : vector<1x1x288xf32> to vector<1x288xf32>
    %c276 = arith.constant 276 : index
    %1253 = memref.load %arg3[%c276] : memref<288xf32, #tpu.memory_space<smem>>
    %1254 = vector.broadcast %1253 : f32 to vector<1x288xf32>
    %1255 = arith.mulf %1252, %1254 : vector<1x288xf32>
    %1256 = arith.addf %1238, %1255 : vector<1x288xf32>
    %c277 = arith.constant 277 : index
    %1257 = memref.load %arg3[%c277] : memref<288xf32, #tpu.memory_space<smem>>
    %1258 = vector.broadcast %1257 : f32 to vector<1x288xf32>
    %1259 = arith.mulf %1252, %1258 : vector<1x288xf32>
    %1260 = arith.addf %1242, %1259 : vector<1x288xf32>
    %c278 = arith.constant 278 : index
    %1261 = memref.load %arg3[%c278] : memref<288xf32, #tpu.memory_space<smem>>
    %1262 = vector.broadcast %1261 : f32 to vector<1x288xf32>
    %1263 = arith.mulf %1252, %1262 : vector<1x288xf32>
    %1264 = arith.addf %1246, %1263 : vector<1x288xf32>
    %c279 = arith.constant 279 : index
    %1265 = memref.load %arg3[%c279] : memref<288xf32, #tpu.memory_space<smem>>
    %1266 = vector.broadcast %1265 : f32 to vector<1x288xf32>
    %1267 = arith.mulf %1252, %1266 : vector<1x288xf32>
    %1268 = arith.addf %1250, %1267 : vector<1x288xf32>
    %c0_222 = arith.constant 0 : index
    %c6_223 = arith.constant 6 : index
    %c38_224 = arith.constant 38 : index
    %1269 = vector.load %arg1[%c0_222, %c6_223, %c38_224] : memref<1x8x326xf32, #tpu.memory_space<vmem>>, vector<1x1x288xf32>
    %1270 = vector.shape_cast %1269 : vector<1x1x288xf32> to vector<1x288xf32>
    %c280 = arith.constant 280 : index
    %1271 = memref.load %arg3[%c280] : memref<288xf32, #tpu.memory_space<smem>>
    %1272 = vector.broadcast %1271 : f32 to vector<1x288xf32>
    %1273 = arith.mulf %1270, %1272 : vector<1x288xf32>
    %1274 = arith.addf %1256, %1273 : vector<1x288xf32>
    %c281 = arith.constant 281 : index
    %1275 = memref.load %arg3[%c281] : memref<288xf32, #tpu.memory_space<smem>>
    %1276 = vector.broadcast %1275 : f32 to vector<1x288xf32>
    %1277 = arith.mulf %1270, %1276 : vector<1x288xf32>
    %1278 = arith.addf %1260, %1277 : vector<1x288xf32>
    %c282 = arith.constant 282 : index
    %1279 = memref.load %arg3[%c282] : memref<288xf32, #tpu.memory_space<smem>>
    %1280 = vector.broadcast %1279 : f32 to vector<1x288xf32>
    %1281 = arith.mulf %1270, %1280 : vector<1x288xf32>
    %1282 = arith.addf %1264, %1281 : vector<1x288xf32>
    %c283 = arith.constant 283 : index
    %1283 = memref.load %arg3[%c283] : memref<288xf32, #tpu.memory_space<smem>>
    %1284 = vector.broadcast %1283 : f32 to vector<1x288xf32>
    %1285 = arith.mulf %1270, %1284 : vector<1x288xf32>
    %1286 = arith.addf %1268, %1285 : vector<1x288xf32>
    %c0_225 = arith.constant 0 : index
    %c7_226 = arith.constant 7 : index
    %c38_227 = arith.constant 38 : index
    %1287 = vector.load %arg1[%c0_225, %c7_226, %c38_227] : memref<1x8x326xf32, #tpu.memory_space<vmem>>, vector<1x1x288xf32>
    %1288 = vector.shape_cast %1287 : vector<1x1x288xf32> to vector<1x288xf32>
    %c284 = arith.constant 284 : index
    %1289 = memref.load %arg3[%c284] : memref<288xf32, #tpu.memory_space<smem>>
    %1290 = vector.broadcast %1289 : f32 to vector<1x288xf32>
    %1291 = arith.mulf %1288, %1290 : vector<1x288xf32>
    %1292 = arith.addf %1274, %1291 : vector<1x288xf32>
    %c285 = arith.constant 285 : index
    %1293 = memref.load %arg3[%c285] : memref<288xf32, #tpu.memory_space<smem>>
    %1294 = vector.broadcast %1293 : f32 to vector<1x288xf32>
    %1295 = arith.mulf %1288, %1294 : vector<1x288xf32>
    %1296 = arith.addf %1278, %1295 : vector<1x288xf32>
    %c286 = arith.constant 286 : index
    %1297 = memref.load %arg3[%c286] : memref<288xf32, #tpu.memory_space<smem>>
    %1298 = vector.broadcast %1297 : f32 to vector<1x288xf32>
    %1299 = arith.mulf %1288, %1298 : vector<1x288xf32>
    %1300 = arith.addf %1282, %1299 : vector<1x288xf32>
    %c287 = arith.constant 287 : index
    %1301 = memref.load %arg3[%c287] : memref<288xf32, #tpu.memory_space<smem>>
    %1302 = vector.broadcast %1301 : f32 to vector<1x288xf32>
    %1303 = arith.mulf %1288, %1302 : vector<1x288xf32>
    %1304 = arith.addf %1286, %1303 : vector<1x288xf32>
    %c0_228 = arith.constant 0 : index
    %1305 = memref.load %arg4[%c0_228] : memref<4xf32, #tpu.memory_space<smem>>
    %1306 = vector.broadcast %1305 : f32 to vector<1x288xf32>
    %1307 = arith.addf %1292, %1306 : vector<1x288xf32>
    %cst_229 = arith.constant 0.000000e+00 : f32
    %1308 = vector.broadcast %cst_229 : f32 to vector<1x288xf32>
    %1309 = arith.maximumf %1307, %1308 : vector<1x288xf32>
    %c1_230 = arith.constant 1 : index
    %1310 = memref.load %arg4[%c1_230] : memref<4xf32, #tpu.memory_space<smem>>
    %1311 = vector.broadcast %1310 : f32 to vector<1x288xf32>
    %1312 = arith.addf %1296, %1311 : vector<1x288xf32>
    %cst_231 = arith.constant 0.000000e+00 : f32
    %1313 = vector.broadcast %cst_231 : f32 to vector<1x288xf32>
    %1314 = arith.maximumf %1312, %1313 : vector<1x288xf32>
    %c2_232 = arith.constant 2 : index
    %1315 = memref.load %arg4[%c2_232] : memref<4xf32, #tpu.memory_space<smem>>
    %1316 = vector.broadcast %1315 : f32 to vector<1x288xf32>
    %1317 = arith.addf %1300, %1316 : vector<1x288xf32>
    %cst_233 = arith.constant 0.000000e+00 : f32
    %1318 = vector.broadcast %cst_233 : f32 to vector<1x288xf32>
    %1319 = arith.maximumf %1317, %1318 : vector<1x288xf32>
    %c3_234 = arith.constant 3 : index
    %1320 = memref.load %arg4[%c3_234] : memref<4xf32, #tpu.memory_space<smem>>
    %1321 = vector.broadcast %1320 : f32 to vector<1x288xf32>
    %1322 = arith.addf %1304, %1321 : vector<1x288xf32>
    %cst_235 = arith.constant 0.000000e+00 : f32
    %1323 = vector.broadcast %cst_235 : f32 to vector<1x288xf32>
    %1324 = arith.maximumf %1322, %1323 : vector<1x288xf32>
    %1325 = arith.mulf %1309, %0 : vector<1x288xf32>
    %c0_236 = arith.constant 0 : index
    %c0_237 = arith.constant 0 : index
    %c19_238 = arith.constant 19 : index
    %1326 = vector.load %arg11[%c0_236, %c0_237, %c19_238] : memref<1x4x326xf32, #tpu.memory_space<vmem>>, vector<1x1x288xf32>
    %1327 = vector.shape_cast %1326 : vector<1x1x288xf32> to vector<1x288xf32>
    %1328 = vector.shape_cast %1325 : vector<1x288xf32> to vector<1x1x288xf32>
    tpu.vector_store %arg11[%c0_236, %c0_237, %c19_238], %1328 {strides = array<i32>} : memref<1x4x326xf32, #tpu.memory_space<vmem>>, vector<1x1x288xf32>,
    %1329 = arith.mulf %1314, %0 : vector<1x288xf32>
    %c0_239 = arith.constant 0 : index
    %c1_240 = arith.constant 1 : index
    %c19_241 = arith.constant 19 : index
    %1330 = vector.load %arg11[%c0_239, %c1_240, %c19_241] : memref<1x4x326xf32, #tpu.memory_space<vmem>>, vector<1x1x288xf32>
    %1331 = vector.shape_cast %1330 : vector<1x1x288xf32> to vector<1x288xf32>
    %1332 = vector.shape_cast %1329 : vector<1x288xf32> to vector<1x1x288xf32>
    tpu.vector_store %arg11[%c0_239, %c1_240, %c19_241], %1332 {strides = array<i32>} : memref<1x4x326xf32, #tpu.memory_space<vmem>>, vector<1x1x288xf32>,
    %1333 = arith.mulf %1319, %0 : vector<1x288xf32>
    %c0_242 = arith.constant 0 : index
    %c2_243 = arith.constant 2 : index
    %c19_244 = arith.constant 19 : index
    %1334 = vector.load %arg11[%c0_242, %c2_243, %c19_244] : memref<1x4x326xf32, #tpu.memory_space<vmem>>, vector<1x1x288xf32>
    %1335 = vector.shape_cast %1334 : vector<1x1x288xf32> to vector<1x288xf32>
    %1336 = vector.shape_cast %1333 : vector<1x288xf32> to vector<1x1x288xf32>
    tpu.vector_store %arg11[%c0_242, %c2_243, %c19_244], %1336 {strides = array<i32>} : memref<1x4x326xf32, #tpu.memory_space<vmem>>, vector<1x1x288xf32>,
    %1337 = arith.mulf %1324, %0 : vector<1x288xf32>
    %c0_245 = arith.constant 0 : index
    %c3_246 = arith.constant 3 : index
    %c19_247 = arith.constant 19 : index
    %1338 = vector.load %arg11[%c0_245, %c3_246, %c19_247] : memref<1x4x326xf32, #tpu.memory_space<vmem>>, vector<1x1x288xf32>
    %1339 = vector.shape_cast %1338 : vector<1x1x288xf32> to vector<1x288xf32>
    %1340 = vector.shape_cast %1337 : vector<1x288xf32> to vector<1x1x288xf32>
    tpu.vector_store %arg11[%c0_245, %c3_246, %c19_247], %1340 {strides = array<i32>} : memref<1x4x326xf32, #tpu.memory_space<vmem>>, vector<1x1x288xf32>,
    %cst_248 = arith.constant 0.000000e+00 : f32
    %1341 = vector.broadcast %cst_248 : f32 to vector<1x288xf32>
    %cst_249 = arith.constant 0.000000e+00 : f32
    %1342 = vector.broadcast %cst_249 : f32 to vector<1x288xf32>
    %cst_250 = arith.constant 0.000000e+00 : f32
    %1343 = vector.broadcast %cst_250 : f32 to vector<1x288xf32>
    %cst_251 = arith.constant 0.000000e+00 : f32
    %1344 = vector.broadcast %cst_251 : f32 to vector<1x288xf32>
    %c0_252 = arith.constant 0 : index
    %c0_253 = arith.constant 0 : index
    %c0_254 = arith.constant 0 : index
    %1345 = vector.load %arg11[%c0_252, %c0_253, %c0_254] : memref<1x4x326xf32, #tpu.memory_space<vmem>>, vector<1x1x288xf32>
    %1346 = vector.shape_cast %1345 : vector<1x1x288xf32> to vector<1x288xf32>
    %c0_255 = arith.constant 0 : index
    %1347 = memref.load %arg5[%c0_255] : memref<144xf32, #tpu.memory_space<smem>>
    %1348 = vector.broadcast %1347 : f32 to vector<1x288xf32>
    %1349 = arith.mulf %1346, %1348 : vector<1x288xf32>
    %1350 = arith.addf %1341, %1349 : vector<1x288xf32>
    %c1_256 = arith.constant 1 : index
    %1351 = memref.load %arg5[%c1_256] : memref<144xf32, #tpu.memory_space<smem>>
    %1352 = vector.broadcast %1351 : f32 to vector<1x288xf32>
    %1353 = arith.mulf %1346, %1352 : vector<1x288xf32>
    %1354 = arith.addf %1342, %1353 : vector<1x288xf32>
    %c2_257 = arith.constant 2 : index
    %1355 = memref.load %arg5[%c2_257] : memref<144xf32, #tpu.memory_space<smem>>
    %1356 = vector.broadcast %1355 : f32 to vector<1x288xf32>
    %1357 = arith.mulf %1346, %1356 : vector<1x288xf32>
    %1358 = arith.addf %1343, %1357 : vector<1x288xf32>
    %c3_258 = arith.constant 3 : index
    %1359 = memref.load %arg5[%c3_258] : memref<144xf32, #tpu.memory_space<smem>>
    %1360 = vector.broadcast %1359 : f32 to vector<1x288xf32>
    %1361 = arith.mulf %1346, %1360 : vector<1x288xf32>
    %1362 = arith.addf %1344, %1361 : vector<1x288xf32>
    %c0_259 = arith.constant 0 : index
    %c1_260 = arith.constant 1 : index
    %c0_261 = arith.constant 0 : index
    %1363 = vector.load %arg11[%c0_259, %c1_260, %c0_261] : memref<1x4x326xf32, #tpu.memory_space<vmem>>, vector<1x1x288xf32>
    %1364 = vector.shape_cast %1363 : vector<1x1x288xf32> to vector<1x288xf32>
    %c4_262 = arith.constant 4 : index
    %1365 = memref.load %arg5[%c4_262] : memref<144xf32, #tpu.memory_space<smem>>
    %1366 = vector.broadcast %1365 : f32 to vector<1x288xf32>
    %1367 = arith.mulf %1364, %1366 : vector<1x288xf32>
    %1368 = arith.addf %1350, %1367 : vector<1x288xf32>
    %c5_263 = arith.constant 5 : index
    %1369 = memref.load %arg5[%c5_263] : memref<144xf32, #tpu.memory_space<smem>>
    %1370 = vector.broadcast %1369 : f32 to vector<1x288xf32>
    %1371 = arith.mulf %1364, %1370 : vector<1x288xf32>
    %1372 = arith.addf %1354, %1371 : vector<1x288xf32>
    %c6_264 = arith.constant 6 : index
    %1373 = memref.load %arg5[%c6_264] : memref<144xf32, #tpu.memory_space<smem>>
    %1374 = vector.broadcast %1373 : f32 to vector<1x288xf32>
    %1375 = arith.mulf %1364, %1374 : vector<1x288xf32>
    %1376 = arith.addf %1358, %1375 : vector<1x288xf32>
    %c7_265 = arith.constant 7 : index
    %1377 = memref.load %arg5[%c7_265] : memref<144xf32, #tpu.memory_space<smem>>
    %1378 = vector.broadcast %1377 : f32 to vector<1x288xf32>
    %1379 = arith.mulf %1364, %1378 : vector<1x288xf32>
    %1380 = arith.addf %1362, %1379 : vector<1x288xf32>
    %c0_266 = arith.constant 0 : index
    %c2_267 = arith.constant 2 : index
    %c0_268 = arith.constant 0 : index
    %1381 = vector.load %arg11[%c0_266, %c2_267, %c0_268] : memref<1x4x326xf32, #tpu.memory_space<vmem>>, vector<1x1x288xf32>
    %1382 = vector.shape_cast %1381 : vector<1x1x288xf32> to vector<1x288xf32>
    %c8_269 = arith.constant 8 : index
    %1383 = memref.load %arg5[%c8_269] : memref<144xf32, #tpu.memory_space<smem>>
    %1384 = vector.broadcast %1383 : f32 to vector<1x288xf32>
    %1385 = arith.mulf %1382, %1384 : vector<1x288xf32>
    %1386 = arith.addf %1368, %1385 : vector<1x288xf32>
    %c9_270 = arith.constant 9 : index
    %1387 = memref.load %arg5[%c9_270] : memref<144xf32, #tpu.memory_space<smem>>
    %1388 = vector.broadcast %1387 : f32 to vector<1x288xf32>
    %1389 = arith.mulf %1382, %1388 : vector<1x288xf32>
    %1390 = arith.addf %1372, %1389 : vector<1x288xf32>
    %c10_271 = arith.constant 10 : index
    %1391 = memref.load %arg5[%c10_271] : memref<144xf32, #tpu.memory_space<smem>>
    %1392 = vector.broadcast %1391 : f32 to vector<1x288xf32>
    %1393 = arith.mulf %1382, %1392 : vector<1x288xf32>
    %1394 = arith.addf %1376, %1393 : vector<1x288xf32>
    %c11_272 = arith.constant 11 : index
    %1395 = memref.load %arg5[%c11_272] : memref<144xf32, #tpu.memory_space<smem>>
    %1396 = vector.broadcast %1395 : f32 to vector<1x288xf32>
    %1397 = arith.mulf %1382, %1396 : vector<1x288xf32>
    %1398 = arith.addf %1380, %1397 : vector<1x288xf32>
    %c0_273 = arith.constant 0 : index
    %c3_274 = arith.constant 3 : index
    %c0_275 = arith.constant 0 : index
    %1399 = vector.load %arg11[%c0_273, %c3_274, %c0_275] : memref<1x4x326xf32, #tpu.memory_space<vmem>>, vector<1x1x288xf32>
    %1400 = vector.shape_cast %1399 : vector<1x1x288xf32> to vector<1x288xf32>
    %c12_276 = arith.constant 12 : index
    %1401 = memref.load %arg5[%c12_276] : memref<144xf32, #tpu.memory_space<smem>>
    %1402 = vector.broadcast %1401 : f32 to vector<1x288xf32>
    %1403 = arith.mulf %1400, %1402 : vector<1x288xf32>
    %1404 = arith.addf %1386, %1403 : vector<1x288xf32>
    %c13_277 = arith.constant 13 : index
    %1405 = memref.load %arg5[%c13_277] : memref<144xf32, #tpu.memory_space<smem>>
    %1406 = vector.broadcast %1405 : f32 to vector<1x288xf32>
    %1407 = arith.mulf %1400, %1406 : vector<1x288xf32>
    %1408 = arith.addf %1390, %1407 : vector<1x288xf32>
    %c14_278 = arith.constant 14 : index
    %1409 = memref.load %arg5[%c14_278] : memref<144xf32, #tpu.memory_space<smem>>
    %1410 = vector.broadcast %1409 : f32 to vector<1x288xf32>
    %1411 = arith.mulf %1400, %1410 : vector<1x288xf32>
    %1412 = arith.addf %1394, %1411 : vector<1x288xf32>
    %c15_279 = arith.constant 15 : index
    %1413 = memref.load %arg5[%c15_279] : memref<144xf32, #tpu.memory_space<smem>>
    %1414 = vector.broadcast %1413 : f32 to vector<1x288xf32>
    %1415 = arith.mulf %1400, %1414 : vector<1x288xf32>
    %1416 = arith.addf %1398, %1415 : vector<1x288xf32>
    %c0_280 = arith.constant 0 : index
    %c0_281 = arith.constant 0 : index
    %c1_282 = arith.constant 1 : index
    %1417 = vector.load %arg11[%c0_280, %c0_281, %c1_282] : memref<1x4x326xf32, #tpu.memory_space<vmem>>, vector<1x1x288xf32>
    %1418 = vector.shape_cast %1417 : vector<1x1x288xf32> to vector<1x288xf32>
    %c16_283 = arith.constant 16 : index
    %1419 = memref.load %arg5[%c16_283] : memref<144xf32, #tpu.memory_space<smem>>
    %1420 = vector.broadcast %1419 : f32 to vector<1x288xf32>
    %1421 = arith.mulf %1418, %1420 : vector<1x288xf32>
    %1422 = arith.addf %1404, %1421 : vector<1x288xf32>
    %c17_284 = arith.constant 17 : index
    %1423 = memref.load %arg5[%c17_284] : memref<144xf32, #tpu.memory_space<smem>>
    %1424 = vector.broadcast %1423 : f32 to vector<1x288xf32>
    %1425 = arith.mulf %1418, %1424 : vector<1x288xf32>
    %1426 = arith.addf %1408, %1425 : vector<1x288xf32>
    %c18_285 = arith.constant 18 : index
    %1427 = memref.load %arg5[%c18_285] : memref<144xf32, #tpu.memory_space<smem>>
    %1428 = vector.broadcast %1427 : f32 to vector<1x288xf32>
    %1429 = arith.mulf %1418, %1428 : vector<1x288xf32>
    %1430 = arith.addf %1412, %1429 : vector<1x288xf32>
    %c19_286 = arith.constant 19 : index
    %1431 = memref.load %arg5[%c19_286] : memref<144xf32, #tpu.memory_space<smem>>
    %1432 = vector.broadcast %1431 : f32 to vector<1x288xf32>
    %1433 = arith.mulf %1418, %1432 : vector<1x288xf32>
    %1434 = arith.addf %1416, %1433 : vector<1x288xf32>
    %c0_287 = arith.constant 0 : index
    %c1_288 = arith.constant 1 : index
    %c1_289 = arith.constant 1 : index
    %1435 = vector.load %arg11[%c0_287, %c1_288, %c1_289] : memref<1x4x326xf32, #tpu.memory_space<vmem>>, vector<1x1x288xf32>
    %1436 = vector.shape_cast %1435 : vector<1x1x288xf32> to vector<1x288xf32>
    %c20_290 = arith.constant 20 : index
    %1437 = memref.load %arg5[%c20_290] : memref<144xf32, #tpu.memory_space<smem>>
    %1438 = vector.broadcast %1437 : f32 to vector<1x288xf32>
    %1439 = arith.mulf %1436, %1438 : vector<1x288xf32>
    %1440 = arith.addf %1422, %1439 : vector<1x288xf32>
    %c21_291 = arith.constant 21 : index
    %1441 = memref.load %arg5[%c21_291] : memref<144xf32, #tpu.memory_space<smem>>
    %1442 = vector.broadcast %1441 : f32 to vector<1x288xf32>
    %1443 = arith.mulf %1436, %1442 : vector<1x288xf32>
    %1444 = arith.addf %1426, %1443 : vector<1x288xf32>
    %c22_292 = arith.constant 22 : index
    %1445 = memref.load %arg5[%c22_292] : memref<144xf32, #tpu.memory_space<smem>>
    %1446 = vector.broadcast %1445 : f32 to vector<1x288xf32>
    %1447 = arith.mulf %1436, %1446 : vector<1x288xf32>
    %1448 = arith.addf %1430, %1447 : vector<1x288xf32>
    %c23_293 = arith.constant 23 : index
    %1449 = memref.load %arg5[%c23_293] : memref<144xf32, #tpu.memory_space<smem>>
    %1450 = vector.broadcast %1449 : f32 to vector<1x288xf32>
    %1451 = arith.mulf %1436, %1450 : vector<1x288xf32>
    %1452 = arith.addf %1434, %1451 : vector<1x288xf32>
    %c0_294 = arith.constant 0 : index
    %c2_295 = arith.constant 2 : index
    %c1_296 = arith.constant 1 : index
    %1453 = vector.load %arg11[%c0_294, %c2_295, %c1_296] : memref<1x4x326xf32, #tpu.memory_space<vmem>>, vector<1x1x288xf32>
    %1454 = vector.shape_cast %1453 : vector<1x1x288xf32> to vector<1x288xf32>
    %c24_297 = arith.constant 24 : index
    %1455 = memref.load %arg5[%c24_297] : memref<144xf32, #tpu.memory_space<smem>>
    %1456 = vector.broadcast %1455 : f32 to vector<1x288xf32>
    %1457 = arith.mulf %1454, %1456 : vector<1x288xf32>
    %1458 = arith.addf %1440, %1457 : vector<1x288xf32>
    %c25_298 = arith.constant 25 : index
    %1459 = memref.load %arg5[%c25_298] : memref<144xf32, #tpu.memory_space<smem>>
    %1460 = vector.broadcast %1459 : f32 to vector<1x288xf32>
    %1461 = arith.mulf %1454, %1460 : vector<1x288xf32>
    %1462 = arith.addf %1444, %1461 : vector<1x288xf32>
    %c26_299 = arith.constant 26 : index
    %1463 = memref.load %arg5[%c26_299] : memref<144xf32, #tpu.memory_space<smem>>
    %1464 = vector.broadcast %1463 : f32 to vector<1x288xf32>
    %1465 = arith.mulf %1454, %1464 : vector<1x288xf32>
    %1466 = arith.addf %1448, %1465 : vector<1x288xf32>
    %c27_300 = arith.constant 27 : index
    %1467 = memref.load %arg5[%c27_300] : memref<144xf32, #tpu.memory_space<smem>>
    %1468 = vector.broadcast %1467 : f32 to vector<1x288xf32>
    %1469 = arith.mulf %1454, %1468 : vector<1x288xf32>
    %1470 = arith.addf %1452, %1469 : vector<1x288xf32>
    %c0_301 = arith.constant 0 : index
    %c3_302 = arith.constant 3 : index
    %c1_303 = arith.constant 1 : index
    %1471 = vector.load %arg11[%c0_301, %c3_302, %c1_303] : memref<1x4x326xf32, #tpu.memory_space<vmem>>, vector<1x1x288xf32>
    %1472 = vector.shape_cast %1471 : vector<1x1x288xf32> to vector<1x288xf32>
    %c28_304 = arith.constant 28 : index
    %1473 = memref.load %arg5[%c28_304] : memref<144xf32, #tpu.memory_space<smem>>
    %1474 = vector.broadcast %1473 : f32 to vector<1x288xf32>
    %1475 = arith.mulf %1472, %1474 : vector<1x288xf32>
    %1476 = arith.addf %1458, %1475 : vector<1x288xf32>
    %c29_305 = arith.constant 29 : index
    %1477 = memref.load %arg5[%c29_305] : memref<144xf32, #tpu.memory_space<smem>>
    %1478 = vector.broadcast %1477 : f32 to vector<1x288xf32>
    %1479 = arith.mulf %1472, %1478 : vector<1x288xf32>
    %1480 = arith.addf %1462, %1479 : vector<1x288xf32>
    %c30_306 = arith.constant 30 : index
    %1481 = memref.load %arg5[%c30_306] : memref<144xf32, #tpu.memory_space<smem>>
    %1482 = vector.broadcast %1481 : f32 to vector<1x288xf32>
    %1483 = arith.mulf %1472, %1482 : vector<1x288xf32>
    %1484 = arith.addf %1466, %1483 : vector<1x288xf32>
    %c31_307 = arith.constant 31 : index
    %1485 = memref.load %arg5[%c31_307] : memref<144xf32, #tpu.memory_space<smem>>
    %1486 = vector.broadcast %1485 : f32 to vector<1x288xf32>
    %1487 = arith.mulf %1472, %1486 : vector<1x288xf32>
    %1488 = arith.addf %1470, %1487 : vector<1x288xf32>
    %c0_308 = arith.constant 0 : index
    %c0_309 = arith.constant 0 : index
    %c2_310 = arith.constant 2 : index
    %1489 = vector.load %arg11[%c0_308, %c0_309, %c2_310] : memref<1x4x326xf32, #tpu.memory_space<vmem>>, vector<1x1x288xf32>
    %1490 = vector.shape_cast %1489 : vector<1x1x288xf32> to vector<1x288xf32>
    %c32_311 = arith.constant 32 : index
    %1491 = memref.load %arg5[%c32_311] : memref<144xf32, #tpu.memory_space<smem>>
    %1492 = vector.broadcast %1491 : f32 to vector<1x288xf32>
    %1493 = arith.mulf %1490, %1492 : vector<1x288xf32>
    %1494 = arith.addf %1476, %1493 : vector<1x288xf32>
    %c33_312 = arith.constant 33 : index
    %1495 = memref.load %arg5[%c33_312] : memref<144xf32, #tpu.memory_space<smem>>
    %1496 = vector.broadcast %1495 : f32 to vector<1x288xf32>
    %1497 = arith.mulf %1490, %1496 : vector<1x288xf32>
    %1498 = arith.addf %1480, %1497 : vector<1x288xf32>
    %c34_313 = arith.constant 34 : index
    %1499 = memref.load %arg5[%c34_313] : memref<144xf32, #tpu.memory_space<smem>>
    %1500 = vector.broadcast %1499 : f32 to vector<1x288xf32>
    %1501 = arith.mulf %1490, %1500 : vector<1x288xf32>
    %1502 = arith.addf %1484, %1501 : vector<1x288xf32>
    %c35_314 = arith.constant 35 : index
    %1503 = memref.load %arg5[%c35_314] : memref<144xf32, #tpu.memory_space<smem>>
    %1504 = vector.broadcast %1503 : f32 to vector<1x288xf32>
    %1505 = arith.mulf %1490, %1504 : vector<1x288xf32>
    %1506 = arith.addf %1488, %1505 : vector<1x288xf32>
    %c0_315 = arith.constant 0 : index
    %c1_316 = arith.constant 1 : index
    %c2_317 = arith.constant 2 : index
    %1507 = vector.load %arg11[%c0_315, %c1_316, %c2_317] : memref<1x4x326xf32, #tpu.memory_space<vmem>>, vector<1x1x288xf32>
    %1508 = vector.shape_cast %1507 : vector<1x1x288xf32> to vector<1x288xf32>
    %c36_318 = arith.constant 36 : index
    %1509 = memref.load %arg5[%c36_318] : memref<144xf32, #tpu.memory_space<smem>>
    %1510 = vector.broadcast %1509 : f32 to vector<1x288xf32>
    %1511 = arith.mulf %1508, %1510 : vector<1x288xf32>
    %1512 = arith.addf %1494, %1511 : vector<1x288xf32>
    %c37_319 = arith.constant 37 : index
    %1513 = memref.load %arg5[%c37_319] : memref<144xf32, #tpu.memory_space<smem>>
    %1514 = vector.broadcast %1513 : f32 to vector<1x288xf32>
    %1515 = arith.mulf %1508, %1514 : vector<1x288xf32>
    %1516 = arith.addf %1498, %1515 : vector<1x288xf32>
    %c38_320 = arith.constant 38 : index
    %1517 = memref.load %arg5[%c38_320] : memref<144xf32, #tpu.memory_space<smem>>
    %1518 = vector.broadcast %1517 : f32 to vector<1x288xf32>
    %1519 = arith.mulf %1508, %1518 : vector<1x288xf32>
    %1520 = arith.addf %1502, %1519 : vector<1x288xf32>
    %c39_321 = arith.constant 39 : index
    %1521 = memref.load %arg5[%c39_321] : memref<144xf32, #tpu.memory_space<smem>>
    %1522 = vector.broadcast %1521 : f32 to vector<1x288xf32>
    %1523 = arith.mulf %1508, %1522 : vector<1x288xf32>
    %1524 = arith.addf %1506, %1523 : vector<1x288xf32>
    %c0_322 = arith.constant 0 : index
    %c2_323 = arith.constant 2 : index
    %c2_324 = arith.constant 2 : index
    %1525 = vector.load %arg11[%c0_322, %c2_323, %c2_324] : memref<1x4x326xf32, #tpu.memory_space<vmem>>, vector<1x1x288xf32>
    %1526 = vector.shape_cast %1525 : vector<1x1x288xf32> to vector<1x288xf32>
    %c40_325 = arith.constant 40 : index
    %1527 = memref.load %arg5[%c40_325] : memref<144xf32, #tpu.memory_space<smem>>
    %1528 = vector.broadcast %1527 : f32 to vector<1x288xf32>
    %1529 = arith.mulf %1526, %1528 : vector<1x288xf32>
    %1530 = arith.addf %1512, %1529 : vector<1x288xf32>
    %c41_326 = arith.constant 41 : index
    %1531 = memref.load %arg5[%c41_326] : memref<144xf32, #tpu.memory_space<smem>>
    %1532 = vector.broadcast %1531 : f32 to vector<1x288xf32>
    %1533 = arith.mulf %1526, %1532 : vector<1x288xf32>
    %1534 = arith.addf %1516, %1533 : vector<1x288xf32>
    %c42_327 = arith.constant 42 : index
    %1535 = memref.load %arg5[%c42_327] : memref<144xf32, #tpu.memory_space<smem>>
    %1536 = vector.broadcast %1535 : f32 to vector<1x288xf32>
    %1537 = arith.mulf %1526, %1536 : vector<1x288xf32>
    %1538 = arith.addf %1520, %1537 : vector<1x288xf32>
    %c43_328 = arith.constant 43 : index
    %1539 = memref.load %arg5[%c43_328] : memref<144xf32, #tpu.memory_space<smem>>
    %1540 = vector.broadcast %1539 : f32 to vector<1x288xf32>
    %1541 = arith.mulf %1526, %1540 : vector<1x288xf32>
    %1542 = arith.addf %1524, %1541 : vector<1x288xf32>
    %c0_329 = arith.constant 0 : index
    %c3_330 = arith.constant 3 : index
    %c2_331 = arith.constant 2 : index
    %1543 = vector.load %arg11[%c0_329, %c3_330, %c2_331] : memref<1x4x326xf32, #tpu.memory_space<vmem>>, vector<1x1x288xf32>
    %1544 = vector.shape_cast %1543 : vector<1x1x288xf32> to vector<1x288xf32>
    %c44_332 = arith.constant 44 : index
    %1545 = memref.load %arg5[%c44_332] : memref<144xf32, #tpu.memory_space<smem>>
    %1546 = vector.broadcast %1545 : f32 to vector<1x288xf32>
    %1547 = arith.mulf %1544, %1546 : vector<1x288xf32>
    %1548 = arith.addf %1530, %1547 : vector<1x288xf32>
    %c45_333 = arith.constant 45 : index
    %1549 = memref.load %arg5[%c45_333] : memref<144xf32, #tpu.memory_space<smem>>
    %1550 = vector.broadcast %1549 : f32 to vector<1x288xf32>
    %1551 = arith.mulf %1544, %1550 : vector<1x288xf32>
    %1552 = arith.addf %1534, %1551 : vector<1x288xf32>
    %c46_334 = arith.constant 46 : index
    %1553 = memref.load %arg5[%c46_334] : memref<144xf32, #tpu.memory_space<smem>>
    %1554 = vector.broadcast %1553 : f32 to vector<1x288xf32>
    %1555 = arith.mulf %1544, %1554 : vector<1x288xf32>
    %1556 = arith.addf %1538, %1555 : vector<1x288xf32>
    %c47_335 = arith.constant 47 : index
    %1557 = memref.load %arg5[%c47_335] : memref<144xf32, #tpu.memory_space<smem>>
    %1558 = vector.broadcast %1557 : f32 to vector<1x288xf32>
    %1559 = arith.mulf %1544, %1558 : vector<1x288xf32>
    %1560 = arith.addf %1542, %1559 : vector<1x288xf32>
    %c0_336 = arith.constant 0 : index
    %c0_337 = arith.constant 0 : index
    %c18_338 = arith.constant 18 : index
    %1561 = vector.load %arg11[%c0_336, %c0_337, %c18_338] : memref<1x4x326xf32, #tpu.memory_space<vmem>>, vector<1x1x288xf32>
    %1562 = vector.shape_cast %1561 : vector<1x1x288xf32> to vector<1x288xf32>
    %c48_339 = arith.constant 48 : index
    %1563 = memref.load %arg5[%c48_339] : memref<144xf32, #tpu.memory_space<smem>>
    %1564 = vector.broadcast %1563 : f32 to vector<1x288xf32>
    %1565 = arith.mulf %1562, %1564 : vector<1x288xf32>
    %1566 = arith.addf %1548, %1565 : vector<1x288xf32>
    %c49_340 = arith.constant 49 : index
    %1567 = memref.load %arg5[%c49_340] : memref<144xf32, #tpu.memory_space<smem>>
    %1568 = vector.broadcast %1567 : f32 to vector<1x288xf32>
    %1569 = arith.mulf %1562, %1568 : vector<1x288xf32>
    %1570 = arith.addf %1552, %1569 : vector<1x288xf32>
    %c50_341 = arith.constant 50 : index
    %1571 = memref.load %arg5[%c50_341] : memref<144xf32, #tpu.memory_space<smem>>
    %1572 = vector.broadcast %1571 : f32 to vector<1x288xf32>
    %1573 = arith.mulf %1562, %1572 : vector<1x288xf32>
    %1574 = arith.addf %1556, %1573 : vector<1x288xf32>
    %c51_342 = arith.constant 51 : index
    %1575 = memref.load %arg5[%c51_342] : memref<144xf32, #tpu.memory_space<smem>>
    %1576 = vector.broadcast %1575 : f32 to vector<1x288xf32>
    %1577 = arith.mulf %1562, %1576 : vector<1x288xf32>
    %1578 = arith.addf %1560, %1577 : vector<1x288xf32>
    %c0_343 = arith.constant 0 : index
    %c1_344 = arith.constant 1 : index
    %c18_345 = arith.constant 18 : index
    %1579 = vector.load %arg11[%c0_343, %c1_344, %c18_345] : memref<1x4x326xf32, #tpu.memory_space<vmem>>, vector<1x1x288xf32>
    %1580 = vector.shape_cast %1579 : vector<1x1x288xf32> to vector<1x288xf32>
    %c52_346 = arith.constant 52 : index
    %1581 = memref.load %arg5[%c52_346] : memref<144xf32, #tpu.memory_space<smem>>
    %1582 = vector.broadcast %1581 : f32 to vector<1x288xf32>
    %1583 = arith.mulf %1580, %1582 : vector<1x288xf32>
    %1584 = arith.addf %1566, %1583 : vector<1x288xf32>
    %c53_347 = arith.constant 53 : index
    %1585 = memref.load %arg5[%c53_347] : memref<144xf32, #tpu.memory_space<smem>>
    %1586 = vector.broadcast %1585 : f32 to vector<1x288xf32>
    %1587 = arith.mulf %1580, %1586 : vector<1x288xf32>
    %1588 = arith.addf %1570, %1587 : vector<1x288xf32>
    %c54_348 = arith.constant 54 : index
    %1589 = memref.load %arg5[%c54_348] : memref<144xf32, #tpu.memory_space<smem>>
    %1590 = vector.broadcast %1589 : f32 to vector<1x288xf32>
    %1591 = arith.mulf %1580, %1590 : vector<1x288xf32>
    %1592 = arith.addf %1574, %1591 : vector<1x288xf32>
    %c55_349 = arith.constant 55 : index
    %1593 = memref.load %arg5[%c55_349] : memref<144xf32, #tpu.memory_space<smem>>
    %1594 = vector.broadcast %1593 : f32 to vector<1x288xf32>
    %1595 = arith.mulf %1580, %1594 : vector<1x288xf32>
    %1596 = arith.addf %1578, %1595 : vector<1x288xf32>
    %c0_350 = arith.constant 0 : index
    %c2_351 = arith.constant 2 : index
    %c18_352 = arith.constant 18 : index
    %1597 = vector.load %arg11[%c0_350, %c2_351, %c18_352] : memref<1x4x326xf32, #tpu.memory_space<vmem>>, vector<1x1x288xf32>
    %1598 = vector.shape_cast %1597 : vector<1x1x288xf32> to vector<1x288xf32>
    %c56_353 = arith.constant 56 : index
    %1599 = memref.load %arg5[%c56_353] : memref<144xf32, #tpu.memory_space<smem>>
    %1600 = vector.broadcast %1599 : f32 to vector<1x288xf32>
    %1601 = arith.mulf %1598, %1600 : vector<1x288xf32>
    %1602 = arith.addf %1584, %1601 : vector<1x288xf32>
    %c57_354 = arith.constant 57 : index
    %1603 = memref.load %arg5[%c57_354] : memref<144xf32, #tpu.memory_space<smem>>
    %1604 = vector.broadcast %1603 : f32 to vector<1x288xf32>
    %1605 = arith.mulf %1598, %1604 : vector<1x288xf32>
    %1606 = arith.addf %1588, %1605 : vector<1x288xf32>
    %c58_355 = arith.constant 58 : index
    %1607 = memref.load %arg5[%c58_355] : memref<144xf32, #tpu.memory_space<smem>>
    %1608 = vector.broadcast %1607 : f32 to vector<1x288xf32>
    %1609 = arith.mulf %1598, %1608 : vector<1x288xf32>
    %1610 = arith.addf %1592, %1609 : vector<1x288xf32>
    %c59_356 = arith.constant 59 : index
    %1611 = memref.load %arg5[%c59_356] : memref<144xf32, #tpu.memory_space<smem>>
    %1612 = vector.broadcast %1611 : f32 to vector<1x288xf32>
    %1613 = arith.mulf %1598, %1612 : vector<1x288xf32>
    %1614 = arith.addf %1596, %1613 : vector<1x288xf32>
    %c0_357 = arith.constant 0 : index
    %c3_358 = arith.constant 3 : index
    %c18_359 = arith.constant 18 : index
    %1615 = vector.load %arg11[%c0_357, %c3_358, %c18_359] : memref<1x4x326xf32, #tpu.memory_space<vmem>>, vector<1x1x288xf32>
    %1616 = vector.shape_cast %1615 : vector<1x1x288xf32> to vector<1x288xf32>
    %c60_360 = arith.constant 60 : index
    %1617 = memref.load %arg5[%c60_360] : memref<144xf32, #tpu.memory_space<smem>>
    %1618 = vector.broadcast %1617 : f32 to vector<1x288xf32>
    %1619 = arith.mulf %1616, %1618 : vector<1x288xf32>
    %1620 = arith.addf %1602, %1619 : vector<1x288xf32>
    %c61_361 = arith.constant 61 : index
    %1621 = memref.load %arg5[%c61_361] : memref<144xf32, #tpu.memory_space<smem>>
    %1622 = vector.broadcast %1621 : f32 to vector<1x288xf32>
    %1623 = arith.mulf %1616, %1622 : vector<1x288xf32>
    %1624 = arith.addf %1606, %1623 : vector<1x288xf32>
    %c62_362 = arith.constant 62 : index
    %1625 = memref.load %arg5[%c62_362] : memref<144xf32, #tpu.memory_space<smem>>
    %1626 = vector.broadcast %1625 : f32 to vector<1x288xf32>
    %1627 = arith.mulf %1616, %1626 : vector<1x288xf32>
    %1628 = arith.addf %1610, %1627 : vector<1x288xf32>
    %c63_363 = arith.constant 63 : index
    %1629 = memref.load %arg5[%c63_363] : memref<144xf32, #tpu.memory_space<smem>>
    %1630 = vector.broadcast %1629 : f32 to vector<1x288xf32>
    %1631 = arith.mulf %1616, %1630 : vector<1x288xf32>
    %1632 = arith.addf %1614, %1631 : vector<1x288xf32>
    %c0_364 = arith.constant 0 : index
    %c0_365 = arith.constant 0 : index
    %c19_366 = arith.constant 19 : index
    %1633 = vector.load %arg11[%c0_364, %c0_365, %c19_366] : memref<1x4x326xf32, #tpu.memory_space<vmem>>, vector<1x1x288xf32>
    %1634 = vector.shape_cast %1633 : vector<1x1x288xf32> to vector<1x288xf32>
    %c64_367 = arith.constant 64 : index
    %1635 = memref.load %arg5[%c64_367] : memref<144xf32, #tpu.memory_space<smem>>
    %1636 = vector.broadcast %1635 : f32 to vector<1x288xf32>
    %1637 = arith.mulf %1634, %1636 : vector<1x288xf32>
    %1638 = arith.addf %1620, %1637 : vector<1x288xf32>
    %c65_368 = arith.constant 65 : index
    %1639 = memref.load %arg5[%c65_368] : memref<144xf32, #tpu.memory_space<smem>>
    %1640 = vector.broadcast %1639 : f32 to vector<1x288xf32>
    %1641 = arith.mulf %1634, %1640 : vector<1x288xf32>
    %1642 = arith.addf %1624, %1641 : vector<1x288xf32>
    %c66_369 = arith.constant 66 : index
    %1643 = memref.load %arg5[%c66_369] : memref<144xf32, #tpu.memory_space<smem>>
    %1644 = vector.broadcast %1643 : f32 to vector<1x288xf32>
    %1645 = arith.mulf %1634, %1644 : vector<1x288xf32>
    %1646 = arith.addf %1628, %1645 : vector<1x288xf32>
    %c67_370 = arith.constant 67 : index
    %1647 = memref.load %arg5[%c67_370] : memref<144xf32, #tpu.memory_space<smem>>
    %1648 = vector.broadcast %1647 : f32 to vector<1x288xf32>
    %1649 = arith.mulf %1634, %1648 : vector<1x288xf32>
    %1650 = arith.addf %1632, %1649 : vector<1x288xf32>
    %c0_371 = arith.constant 0 : index
    %c1_372 = arith.constant 1 : index
    %c19_373 = arith.constant 19 : index
    %1651 = vector.load %arg11[%c0_371, %c1_372, %c19_373] : memref<1x4x326xf32, #tpu.memory_space<vmem>>, vector<1x1x288xf32>
    %1652 = vector.shape_cast %1651 : vector<1x1x288xf32> to vector<1x288xf32>
    %c68_374 = arith.constant 68 : index
    %1653 = memref.load %arg5[%c68_374] : memref<144xf32, #tpu.memory_space<smem>>
    %1654 = vector.broadcast %1653 : f32 to vector<1x288xf32>
    %1655 = arith.mulf %1652, %1654 : vector<1x288xf32>
    %1656 = arith.addf %1638, %1655 : vector<1x288xf32>
    %c69_375 = arith.constant 69 : index
    %1657 = memref.load %arg5[%c69_375] : memref<144xf32, #tpu.memory_space<smem>>
    %1658 = vector.broadcast %1657 : f32 to vector<1x288xf32>
    %1659 = arith.mulf %1652, %1658 : vector<1x288xf32>
    %1660 = arith.addf %1642, %1659 : vector<1x288xf32>
    %c70_376 = arith.constant 70 : index
    %1661 = memref.load %arg5[%c70_376] : memref<144xf32, #tpu.memory_space<smem>>
    %1662 = vector.broadcast %1661 : f32 to vector<1x288xf32>
    %1663 = arith.mulf %1652, %1662 : vector<1x288xf32>
    %1664 = arith.addf %1646, %1663 : vector<1x288xf32>
    %c71_377 = arith.constant 71 : index
    %1665 = memref.load %arg5[%c71_377] : memref<144xf32, #tpu.memory_space<smem>>
    %1666 = vector.broadcast %1665 : f32 to vector<1x288xf32>
    %1667 = arith.mulf %1652, %1666 : vector<1x288xf32>
    %1668 = arith.addf %1650, %1667 : vector<1x288xf32>
    %c0_378 = arith.constant 0 : index
    %c2_379 = arith.constant 2 : index
    %c19_380 = arith.constant 19 : index
    %1669 = vector.load %arg11[%c0_378, %c2_379, %c19_380] : memref<1x4x326xf32, #tpu.memory_space<vmem>>, vector<1x1x288xf32>
    %1670 = vector.shape_cast %1669 : vector<1x1x288xf32> to vector<1x288xf32>
    %c72_381 = arith.constant 72 : index
    %1671 = memref.load %arg5[%c72_381] : memref<144xf32, #tpu.memory_space<smem>>
    %1672 = vector.broadcast %1671 : f32 to vector<1x288xf32>
    %1673 = arith.mulf %1670, %1672 : vector<1x288xf32>
    %1674 = arith.addf %1656, %1673 : vector<1x288xf32>
    %c73_382 = arith.constant 73 : index
    %1675 = memref.load %arg5[%c73_382] : memref<144xf32, #tpu.memory_space<smem>>
    %1676 = vector.broadcast %1675 : f32 to vector<1x288xf32>
    %1677 = arith.mulf %1670, %1676 : vector<1x288xf32>
    %1678 = arith.addf %1660, %1677 : vector<1x288xf32>
    %c74_383 = arith.constant 74 : index
    %1679 = memref.load %arg5[%c74_383] : memref<144xf32, #tpu.memory_space<smem>>
    %1680 = vector.broadcast %1679 : f32 to vector<1x288xf32>
    %1681 = arith.mulf %1670, %1680 : vector<1x288xf32>
    %1682 = arith.addf %1664, %1681 : vector<1x288xf32>
    %c75_384 = arith.constant 75 : index
    %1683 = memref.load %arg5[%c75_384] : memref<144xf32, #tpu.memory_space<smem>>
    %1684 = vector.broadcast %1683 : f32 to vector<1x288xf32>
    %1685 = arith.mulf %1670, %1684 : vector<1x288xf32>
    %1686 = arith.addf %1668, %1685 : vector<1x288xf32>
    %c0_385 = arith.constant 0 : index
    %c3_386 = arith.constant 3 : index
    %c19_387 = arith.constant 19 : index
    %1687 = vector.load %arg11[%c0_385, %c3_386, %c19_387] : memref<1x4x326xf32, #tpu.memory_space<vmem>>, vector<1x1x288xf32>
    %1688 = vector.shape_cast %1687 : vector<1x1x288xf32> to vector<1x288xf32>
    %c76_388 = arith.constant 76 : index
    %1689 = memref.load %arg5[%c76_388] : memref<144xf32, #tpu.memory_space<smem>>
    %1690 = vector.broadcast %1689 : f32 to vector<1x288xf32>
    %1691 = arith.mulf %1688, %1690 : vector<1x288xf32>
    %1692 = arith.addf %1674, %1691 : vector<1x288xf32>
    %c77_389 = arith.constant 77 : index
    %1693 = memref.load %arg5[%c77_389] : memref<144xf32, #tpu.memory_space<smem>>
    %1694 = vector.broadcast %1693 : f32 to vector<1x288xf32>
    %1695 = arith.mulf %1688, %1694 : vector<1x288xf32>
    %1696 = arith.addf %1678, %1695 : vector<1x288xf32>
    %c78_390 = arith.constant 78 : index
    %1697 = memref.load %arg5[%c78_390] : memref<144xf32, #tpu.memory_space<smem>>
    %1698 = vector.broadcast %1697 : f32 to vector<1x288xf32>
    %1699 = arith.mulf %1688, %1698 : vector<1x288xf32>
    %1700 = arith.addf %1682, %1699 : vector<1x288xf32>
    %c79_391 = arith.constant 79 : index
    %1701 = memref.load %arg5[%c79_391] : memref<144xf32, #tpu.memory_space<smem>>
    %1702 = vector.broadcast %1701 : f32 to vector<1x288xf32>
    %1703 = arith.mulf %1688, %1702 : vector<1x288xf32>
    %1704 = arith.addf %1686, %1703 : vector<1x288xf32>
    %c0_392 = arith.constant 0 : index
    %c0_393 = arith.constant 0 : index
    %c20_394 = arith.constant 20 : index
    %1705 = vector.load %arg11[%c0_392, %c0_393, %c20_394] : memref<1x4x326xf32, #tpu.memory_space<vmem>>, vector<1x1x288xf32>
    %1706 = vector.shape_cast %1705 : vector<1x1x288xf32> to vector<1x288xf32>
    %c80_395 = arith.constant 80 : index
    %1707 = memref.load %arg5[%c80_395] : memref<144xf32, #tpu.memory_space<smem>>
    %1708 = vector.broadcast %1707 : f32 to vector<1x288xf32>
    %1709 = arith.mulf %1706, %1708 : vector<1x288xf32>
    %1710 = arith.addf %1692, %1709 : vector<1x288xf32>
    %c81_396 = arith.constant 81 : index
    %1711 = memref.load %arg5[%c81_396] : memref<144xf32, #tpu.memory_space<smem>>
    %1712 = vector.broadcast %1711 : f32 to vector<1x288xf32>
    %1713 = arith.mulf %1706, %1712 : vector<1x288xf32>
    %1714 = arith.addf %1696, %1713 : vector<1x288xf32>
    %c82_397 = arith.constant 82 : index
    %1715 = memref.load %arg5[%c82_397] : memref<144xf32, #tpu.memory_space<smem>>
    %1716 = vector.broadcast %1715 : f32 to vector<1x288xf32>
    %1717 = arith.mulf %1706, %1716 : vector<1x288xf32>
    %1718 = arith.addf %1700, %1717 : vector<1x288xf32>
    %c83_398 = arith.constant 83 : index
    %1719 = memref.load %arg5[%c83_398] : memref<144xf32, #tpu.memory_space<smem>>
    %1720 = vector.broadcast %1719 : f32 to vector<1x288xf32>
    %1721 = arith.mulf %1706, %1720 : vector<1x288xf32>
    %1722 = arith.addf %1704, %1721 : vector<1x288xf32>
    %c0_399 = arith.constant 0 : index
    %c1_400 = arith.constant 1 : index
    %c20_401 = arith.constant 20 : index
    %1723 = vector.load %arg11[%c0_399, %c1_400, %c20_401] : memref<1x4x326xf32, #tpu.memory_space<vmem>>, vector<1x1x288xf32>
    %1724 = vector.shape_cast %1723 : vector<1x1x288xf32> to vector<1x288xf32>
    %c84_402 = arith.constant 84 : index
    %1725 = memref.load %arg5[%c84_402] : memref<144xf32, #tpu.memory_space<smem>>
    %1726 = vector.broadcast %1725 : f32 to vector<1x288xf32>
    %1727 = arith.mulf %1724, %1726 : vector<1x288xf32>
    %1728 = arith.addf %1710, %1727 : vector<1x288xf32>
    %c85_403 = arith.constant 85 : index
    %1729 = memref.load %arg5[%c85_403] : memref<144xf32, #tpu.memory_space<smem>>
    %1730 = vector.broadcast %1729 : f32 to vector<1x288xf32>
    %1731 = arith.mulf %1724, %1730 : vector<1x288xf32>
    %1732 = arith.addf %1714, %1731 : vector<1x288xf32>
    %c86_404 = arith.constant 86 : index
    %1733 = memref.load %arg5[%c86_404] : memref<144xf32, #tpu.memory_space<smem>>
    %1734 = vector.broadcast %1733 : f32 to vector<1x288xf32>
    %1735 = arith.mulf %1724, %1734 : vector<1x288xf32>
    %1736 = arith.addf %1718, %1735 : vector<1x288xf32>
    %c87_405 = arith.constant 87 : index
    %1737 = memref.load %arg5[%c87_405] : memref<144xf32, #tpu.memory_space<smem>>
    %1738 = vector.broadcast %1737 : f32 to vector<1x288xf32>
    %1739 = arith.mulf %1724, %1738 : vector<1x288xf32>
    %1740 = arith.addf %1722, %1739 : vector<1x288xf32>
    %c0_406 = arith.constant 0 : index
    %c2_407 = arith.constant 2 : index
    %c20_408 = arith.constant 20 : index
    %1741 = vector.load %arg11[%c0_406, %c2_407, %c20_408] : memref<1x4x326xf32, #tpu.memory_space<vmem>>, vector<1x1x288xf32>
    %1742 = vector.shape_cast %1741 : vector<1x1x288xf32> to vector<1x288xf32>
    %c88_409 = arith.constant 88 : index
    %1743 = memref.load %arg5[%c88_409] : memref<144xf32, #tpu.memory_space<smem>>
    %1744 = vector.broadcast %1743 : f32 to vector<1x288xf32>
    %1745 = arith.mulf %1742, %1744 : vector<1x288xf32>
    %1746 = arith.addf %1728, %1745 : vector<1x288xf32>
    %c89_410 = arith.constant 89 : index
    %1747 = memref.load %arg5[%c89_410] : memref<144xf32, #tpu.memory_space<smem>>
    %1748 = vector.broadcast %1747 : f32 to vector<1x288xf32>
    %1749 = arith.mulf %1742, %1748 : vector<1x288xf32>
    %1750 = arith.addf %1732, %1749 : vector<1x288xf32>
    %c90_411 = arith.constant 90 : index
    %1751 = memref.load %arg5[%c90_411] : memref<144xf32, #tpu.memory_space<smem>>
    %1752 = vector.broadcast %1751 : f32 to vector<1x288xf32>
    %1753 = arith.mulf %1742, %1752 : vector<1x288xf32>
    %1754 = arith.addf %1736, %1753 : vector<1x288xf32>
    %c91_412 = arith.constant 91 : index
    %1755 = memref.load %arg5[%c91_412] : memref<144xf32, #tpu.memory_space<smem>>
    %1756 = vector.broadcast %1755 : f32 to vector<1x288xf32>
    %1757 = arith.mulf %1742, %1756 : vector<1x288xf32>
    %1758 = arith.addf %1740, %1757 : vector<1x288xf32>
    %c0_413 = arith.constant 0 : index
    %c3_414 = arith.constant 3 : index
    %c20_415 = arith.constant 20 : index
    %1759 = vector.load %arg11[%c0_413, %c3_414, %c20_415] : memref<1x4x326xf32, #tpu.memory_space<vmem>>, vector<1x1x288xf32>
    %1760 = vector.shape_cast %1759 : vector<1x1x288xf32> to vector<1x288xf32>
    %c92_416 = arith.constant 92 : index
    %1761 = memref.load %arg5[%c92_416] : memref<144xf32, #tpu.memory_space<smem>>
    %1762 = vector.broadcast %1761 : f32 to vector<1x288xf32>
    %1763 = arith.mulf %1760, %1762 : vector<1x288xf32>
    %1764 = arith.addf %1746, %1763 : vector<1x288xf32>
    %c93_417 = arith.constant 93 : index
    %1765 = memref.load %arg5[%c93_417] : memref<144xf32, #tpu.memory_space<smem>>
    %1766 = vector.broadcast %1765 : f32 to vector<1x288xf32>
    %1767 = arith.mulf %1760, %1766 : vector<1x288xf32>
    %1768 = arith.addf %1750, %1767 : vector<1x288xf32>
    %c94_418 = arith.constant 94 : index
    %1769 = memref.load %arg5[%c94_418] : memref<144xf32, #tpu.memory_space<smem>>
    %1770 = vector.broadcast %1769 : f32 to vector<1x288xf32>
    %1771 = arith.mulf %1760, %1770 : vector<1x288xf32>
    %1772 = arith.addf %1754, %1771 : vector<1x288xf32>
    %c95_419 = arith.constant 95 : index
    %1773 = memref.load %arg5[%c95_419] : memref<144xf32, #tpu.memory_space<smem>>
    %1774 = vector.broadcast %1773 : f32 to vector<1x288xf32>
    %1775 = arith.mulf %1760, %1774 : vector<1x288xf32>
    %1776 = arith.addf %1758, %1775 : vector<1x288xf32>
    %c0_420 = arith.constant 0 : index
    %c0_421 = arith.constant 0 : index
    %c36_422 = arith.constant 36 : index
    %1777 = vector.load %arg11[%c0_420, %c0_421, %c36_422] : memref<1x4x326xf32, #tpu.memory_space<vmem>>, vector<1x1x288xf32>
    %1778 = vector.shape_cast %1777 : vector<1x1x288xf32> to vector<1x288xf32>
    %c96_423 = arith.constant 96 : index
    %1779 = memref.load %arg5[%c96_423] : memref<144xf32, #tpu.memory_space<smem>>
    %1780 = vector.broadcast %1779 : f32 to vector<1x288xf32>
    %1781 = arith.mulf %1778, %1780 : vector<1x288xf32>
    %1782 = arith.addf %1764, %1781 : vector<1x288xf32>
    %c97_424 = arith.constant 97 : index
    %1783 = memref.load %arg5[%c97_424] : memref<144xf32, #tpu.memory_space<smem>>
    %1784 = vector.broadcast %1783 : f32 to vector<1x288xf32>
    %1785 = arith.mulf %1778, %1784 : vector<1x288xf32>
    %1786 = arith.addf %1768, %1785 : vector<1x288xf32>
    %c98_425 = arith.constant 98 : index
    %1787 = memref.load %arg5[%c98_425] : memref<144xf32, #tpu.memory_space<smem>>
    %1788 = vector.broadcast %1787 : f32 to vector<1x288xf32>
    %1789 = arith.mulf %1778, %1788 : vector<1x288xf32>
    %1790 = arith.addf %1772, %1789 : vector<1x288xf32>
    %c99_426 = arith.constant 99 : index
    %1791 = memref.load %arg5[%c99_426] : memref<144xf32, #tpu.memory_space<smem>>
    %1792 = vector.broadcast %1791 : f32 to vector<1x288xf32>
    %1793 = arith.mulf %1778, %1792 : vector<1x288xf32>
    %1794 = arith.addf %1776, %1793 : vector<1x288xf32>
    %c0_427 = arith.constant 0 : index
    %c1_428 = arith.constant 1 : index
    %c36_429 = arith.constant 36 : index
    %1795 = vector.load %arg11[%c0_427, %c1_428, %c36_429] : memref<1x4x326xf32, #tpu.memory_space<vmem>>, vector<1x1x288xf32>
    %1796 = vector.shape_cast %1795 : vector<1x1x288xf32> to vector<1x288xf32>
    %c100_430 = arith.constant 100 : index
    %1797 = memref.load %arg5[%c100_430] : memref<144xf32, #tpu.memory_space<smem>>
    %1798 = vector.broadcast %1797 : f32 to vector<1x288xf32>
    %1799 = arith.mulf %1796, %1798 : vector<1x288xf32>
    %1800 = arith.addf %1782, %1799 : vector<1x288xf32>
    %c101_431 = arith.constant 101 : index
    %1801 = memref.load %arg5[%c101_431] : memref<144xf32, #tpu.memory_space<smem>>
    %1802 = vector.broadcast %1801 : f32 to vector<1x288xf32>
    %1803 = arith.mulf %1796, %1802 : vector<1x288xf32>
    %1804 = arith.addf %1786, %1803 : vector<1x288xf32>
    %c102_432 = arith.constant 102 : index
    %1805 = memref.load %arg5[%c102_432] : memref<144xf32, #tpu.memory_space<smem>>
    %1806 = vector.broadcast %1805 : f32 to vector<1x288xf32>
    %1807 = arith.mulf %1796, %1806 : vector<1x288xf32>
    %1808 = arith.addf %1790, %1807 : vector<1x288xf32>
    %c103_433 = arith.constant 103 : index
    %1809 = memref.load %arg5[%c103_433] : memref<144xf32, #tpu.memory_space<smem>>
    %1810 = vector.broadcast %1809 : f32 to vector<1x288xf32>
    %1811 = arith.mulf %1796, %1810 : vector<1x288xf32>
    %1812 = arith.addf %1794, %1811 : vector<1x288xf32>
    %c0_434 = arith.constant 0 : index
    %c2_435 = arith.constant 2 : index
    %c36_436 = arith.constant 36 : index
    %1813 = vector.load %arg11[%c0_434, %c2_435, %c36_436] : memref<1x4x326xf32, #tpu.memory_space<vmem>>, vector<1x1x288xf32>
    %1814 = vector.shape_cast %1813 : vector<1x1x288xf32> to vector<1x288xf32>
    %c104_437 = arith.constant 104 : index
    %1815 = memref.load %arg5[%c104_437] : memref<144xf32, #tpu.memory_space<smem>>
    %1816 = vector.broadcast %1815 : f32 to vector<1x288xf32>
    %1817 = arith.mulf %1814, %1816 : vector<1x288xf32>
    %1818 = arith.addf %1800, %1817 : vector<1x288xf32>
    %c105_438 = arith.constant 105 : index
    %1819 = memref.load %arg5[%c105_438] : memref<144xf32, #tpu.memory_space<smem>>
    %1820 = vector.broadcast %1819 : f32 to vector<1x288xf32>
    %1821 = arith.mulf %1814, %1820 : vector<1x288xf32>
    %1822 = arith.addf %1804, %1821 : vector<1x288xf32>
    %c106_439 = arith.constant 106 : index
    %1823 = memref.load %arg5[%c106_439] : memref<144xf32, #tpu.memory_space<smem>>
    %1824 = vector.broadcast %1823 : f32 to vector<1x288xf32>
    %1825 = arith.mulf %1814, %1824 : vector<1x288xf32>
    %1826 = arith.addf %1808, %1825 : vector<1x288xf32>
    %c107_440 = arith.constant 107 : index
    %1827 = memref.load %arg5[%c107_440] : memref<144xf32, #tpu.memory_space<smem>>
    %1828 = vector.broadcast %1827 : f32 to vector<1x288xf32>
    %1829 = arith.mulf %1814, %1828 : vector<1x288xf32>
    %1830 = arith.addf %1812, %1829 : vector<1x288xf32>
    %c0_441 = arith.constant 0 : index
    %c3_442 = arith.constant 3 : index
    %c36_443 = arith.constant 36 : index
    %1831 = vector.load %arg11[%c0_441, %c3_442, %c36_443] : memref<1x4x326xf32, #tpu.memory_space<vmem>>, vector<1x1x288xf32>
    %1832 = vector.shape_cast %1831 : vector<1x1x288xf32> to vector<1x288xf32>
    %c108_444 = arith.constant 108 : index
    %1833 = memref.load %arg5[%c108_444] : memref<144xf32, #tpu.memory_space<smem>>
    %1834 = vector.broadcast %1833 : f32 to vector<1x288xf32>
    %1835 = arith.mulf %1832, %1834 : vector<1x288xf32>
    %1836 = arith.addf %1818, %1835 : vector<1x288xf32>
    %c109_445 = arith.constant 109 : index
    %1837 = memref.load %arg5[%c109_445] : memref<144xf32, #tpu.memory_space<smem>>
    %1838 = vector.broadcast %1837 : f32 to vector<1x288xf32>
    %1839 = arith.mulf %1832, %1838 : vector<1x288xf32>
    %1840 = arith.addf %1822, %1839 : vector<1x288xf32>
    %c110_446 = arith.constant 110 : index
    %1841 = memref.load %arg5[%c110_446] : memref<144xf32, #tpu.memory_space<smem>>
    %1842 = vector.broadcast %1841 : f32 to vector<1x288xf32>
    %1843 = arith.mulf %1832, %1842 : vector<1x288xf32>
    %1844 = arith.addf %1826, %1843 : vector<1x288xf32>
    %c111_447 = arith.constant 111 : index
    %1845 = memref.load %arg5[%c111_447] : memref<144xf32, #tpu.memory_space<smem>>
    %1846 = vector.broadcast %1845 : f32 to vector<1x288xf32>
    %1847 = arith.mulf %1832, %1846 : vector<1x288xf32>
    %1848 = arith.addf %1830, %1847 : vector<1x288xf32>
    %c0_448 = arith.constant 0 : index
    %c0_449 = arith.constant 0 : index
    %c37_450 = arith.constant 37 : index
    %1849 = vector.load %arg11[%c0_448, %c0_449, %c37_450] : memref<1x4x326xf32, #tpu.memory_space<vmem>>, vector<1x1x288xf32>
    %1850 = vector.shape_cast %1849 : vector<1x1x288xf32> to vector<1x288xf32>
    %c112_451 = arith.constant 112 : index
    %1851 = memref.load %arg5[%c112_451] : memref<144xf32, #tpu.memory_space<smem>>
    %1852 = vector.broadcast %1851 : f32 to vector<1x288xf32>
    %1853 = arith.mulf %1850, %1852 : vector<1x288xf32>
    %1854 = arith.addf %1836, %1853 : vector<1x288xf32>
    %c113_452 = arith.constant 113 : index
    %1855 = memref.load %arg5[%c113_452] : memref<144xf32, #tpu.memory_space<smem>>
    %1856 = vector.broadcast %1855 : f32 to vector<1x288xf32>
    %1857 = arith.mulf %1850, %1856 : vector<1x288xf32>
    %1858 = arith.addf %1840, %1857 : vector<1x288xf32>
    %c114_453 = arith.constant 114 : index
    %1859 = memref.load %arg5[%c114_453] : memref<144xf32, #tpu.memory_space<smem>>
    %1860 = vector.broadcast %1859 : f32 to vector<1x288xf32>
    %1861 = arith.mulf %1850, %1860 : vector<1x288xf32>
    %1862 = arith.addf %1844, %1861 : vector<1x288xf32>
    %c115_454 = arith.constant 115 : index
    %1863 = memref.load %arg5[%c115_454] : memref<144xf32, #tpu.memory_space<smem>>
    %1864 = vector.broadcast %1863 : f32 to vector<1x288xf32>
    %1865 = arith.mulf %1850, %1864 : vector<1x288xf32>
    %1866 = arith.addf %1848, %1865 : vector<1x288xf32>
    %c0_455 = arith.constant 0 : index
    %c1_456 = arith.constant 1 : index
    %c37_457 = arith.constant 37 : index
    %1867 = vector.load %arg11[%c0_455, %c1_456, %c37_457] : memref<1x4x326xf32, #tpu.memory_space<vmem>>, vector<1x1x288xf32>
    %1868 = vector.shape_cast %1867 : vector<1x1x288xf32> to vector<1x288xf32>
    %c116_458 = arith.constant 116 : index
    %1869 = memref.load %arg5[%c116_458] : memref<144xf32, #tpu.memory_space<smem>>
    %1870 = vector.broadcast %1869 : f32 to vector<1x288xf32>
    %1871 = arith.mulf %1868, %1870 : vector<1x288xf32>
    %1872 = arith.addf %1854, %1871 : vector<1x288xf32>
    %c117_459 = arith.constant 117 : index
    %1873 = memref.load %arg5[%c117_459] : memref<144xf32, #tpu.memory_space<smem>>
    %1874 = vector.broadcast %1873 : f32 to vector<1x288xf32>
    %1875 = arith.mulf %1868, %1874 : vector<1x288xf32>
    %1876 = arith.addf %1858, %1875 : vector<1x288xf32>
    %c118_460 = arith.constant 118 : index
    %1877 = memref.load %arg5[%c118_460] : memref<144xf32, #tpu.memory_space<smem>>
    %1878 = vector.broadcast %1877 : f32 to vector<1x288xf32>
    %1879 = arith.mulf %1868, %1878 : vector<1x288xf32>
    %1880 = arith.addf %1862, %1879 : vector<1x288xf32>
    %c119_461 = arith.constant 119 : index
    %1881 = memref.load %arg5[%c119_461] : memref<144xf32, #tpu.memory_space<smem>>
    %1882 = vector.broadcast %1881 : f32 to vector<1x288xf32>
    %1883 = arith.mulf %1868, %1882 : vector<1x288xf32>
    %1884 = arith.addf %1866, %1883 : vector<1x288xf32>
    %c0_462 = arith.constant 0 : index
    %c2_463 = arith.constant 2 : index
    %c37_464 = arith.constant 37 : index
    %1885 = vector.load %arg11[%c0_462, %c2_463, %c37_464] : memref<1x4x326xf32, #tpu.memory_space<vmem>>, vector<1x1x288xf32>
    %1886 = vector.shape_cast %1885 : vector<1x1x288xf32> to vector<1x288xf32>
    %c120_465 = arith.constant 120 : index
    %1887 = memref.load %arg5[%c120_465] : memref<144xf32, #tpu.memory_space<smem>>
    %1888 = vector.broadcast %1887 : f32 to vector<1x288xf32>
    %1889 = arith.mulf %1886, %1888 : vector<1x288xf32>
    %1890 = arith.addf %1872, %1889 : vector<1x288xf32>
    %c121_466 = arith.constant 121 : index
    %1891 = memref.load %arg5[%c121_466] : memref<144xf32, #tpu.memory_space<smem>>
    %1892 = vector.broadcast %1891 : f32 to vector<1x288xf32>
    %1893 = arith.mulf %1886, %1892 : vector<1x288xf32>
    %1894 = arith.addf %1876, %1893 : vector<1x288xf32>
    %c122_467 = arith.constant 122 : index
    %1895 = memref.load %arg5[%c122_467] : memref<144xf32, #tpu.memory_space<smem>>
    %1896 = vector.broadcast %1895 : f32 to vector<1x288xf32>
    %1897 = arith.mulf %1886, %1896 : vector<1x288xf32>
    %1898 = arith.addf %1880, %1897 : vector<1x288xf32>
    %c123_468 = arith.constant 123 : index
    %1899 = memref.load %arg5[%c123_468] : memref<144xf32, #tpu.memory_space<smem>>
    %1900 = vector.broadcast %1899 : f32 to vector<1x288xf32>
    %1901 = arith.mulf %1886, %1900 : vector<1x288xf32>
    %1902 = arith.addf %1884, %1901 : vector<1x288xf32>
    %c0_469 = arith.constant 0 : index
    %c3_470 = arith.constant 3 : index
    %c37_471 = arith.constant 37 : index
    %1903 = vector.load %arg11[%c0_469, %c3_470, %c37_471] : memref<1x4x326xf32, #tpu.memory_space<vmem>>, vector<1x1x288xf32>
    %1904 = vector.shape_cast %1903 : vector<1x1x288xf32> to vector<1x288xf32>
    %c124_472 = arith.constant 124 : index
    %1905 = memref.load %arg5[%c124_472] : memref<144xf32, #tpu.memory_space<smem>>
    %1906 = vector.broadcast %1905 : f32 to vector<1x288xf32>
    %1907 = arith.mulf %1904, %1906 : vector<1x288xf32>
    %1908 = arith.addf %1890, %1907 : vector<1x288xf32>
    %c125_473 = arith.constant 125 : index
    %1909 = memref.load %arg5[%c125_473] : memref<144xf32, #tpu.memory_space<smem>>
    %1910 = vector.broadcast %1909 : f32 to vector<1x288xf32>
    %1911 = arith.mulf %1904, %1910 : vector<1x288xf32>
    %1912 = arith.addf %1894, %1911 : vector<1x288xf32>
    %c126_474 = arith.constant 126 : index
    %1913 = memref.load %arg5[%c126_474] : memref<144xf32, #tpu.memory_space<smem>>
    %1914 = vector.broadcast %1913 : f32 to vector<1x288xf32>
    %1915 = arith.mulf %1904, %1914 : vector<1x288xf32>
    %1916 = arith.addf %1898, %1915 : vector<1x288xf32>
    %c127_475 = arith.constant 127 : index
    %1917 = memref.load %arg5[%c127_475] : memref<144xf32, #tpu.memory_space<smem>>
    %1918 = vector.broadcast %1917 : f32 to vector<1x288xf32>
    %1919 = arith.mulf %1904, %1918 : vector<1x288xf32>
    %1920 = arith.addf %1902, %1919 : vector<1x288xf32>
    %c0_476 = arith.constant 0 : index
    %c0_477 = arith.constant 0 : index
    %c38_478 = arith.constant 38 : index
    %1921 = vector.load %arg11[%c0_476, %c0_477, %c38_478] : memref<1x4x326xf32, #tpu.memory_space<vmem>>, vector<1x1x288xf32>
    %1922 = vector.shape_cast %1921 : vector<1x1x288xf32> to vector<1x288xf32>
    %c128_479 = arith.constant 128 : index
    %1923 = memref.load %arg5[%c128_479] : memref<144xf32, #tpu.memory_space<smem>>
    %1924 = vector.broadcast %1923 : f32 to vector<1x288xf32>
    %1925 = arith.mulf %1922, %1924 : vector<1x288xf32>
    %1926 = arith.addf %1908, %1925 : vector<1x288xf32>
    %c129_480 = arith.constant 129 : index
    %1927 = memref.load %arg5[%c129_480] : memref<144xf32, #tpu.memory_space<smem>>
    %1928 = vector.broadcast %1927 : f32 to vector<1x288xf32>
    %1929 = arith.mulf %1922, %1928 : vector<1x288xf32>
    %1930 = arith.addf %1912, %1929 : vector<1x288xf32>
    %c130_481 = arith.constant 130 : index
    %1931 = memref.load %arg5[%c130_481] : memref<144xf32, #tpu.memory_space<smem>>
    %1932 = vector.broadcast %1931 : f32 to vector<1x288xf32>
    %1933 = arith.mulf %1922, %1932 : vector<1x288xf32>
    %1934 = arith.addf %1916, %1933 : vector<1x288xf32>
    %c131_482 = arith.constant 131 : index
    %1935 = memref.load %arg5[%c131_482] : memref<144xf32, #tpu.memory_space<smem>>
    %1936 = vector.broadcast %1935 : f32 to vector<1x288xf32>
    %1937 = arith.mulf %1922, %1936 : vector<1x288xf32>
    %1938 = arith.addf %1920, %1937 : vector<1x288xf32>
    %c0_483 = arith.constant 0 : index
    %c1_484 = arith.constant 1 : index
    %c38_485 = arith.constant 38 : index
    %1939 = vector.load %arg11[%c0_483, %c1_484, %c38_485] : memref<1x4x326xf32, #tpu.memory_space<vmem>>, vector<1x1x288xf32>
    %1940 = vector.shape_cast %1939 : vector<1x1x288xf32> to vector<1x288xf32>
    %c132_486 = arith.constant 132 : index
    %1941 = memref.load %arg5[%c132_486] : memref<144xf32, #tpu.memory_space<smem>>
    %1942 = vector.broadcast %1941 : f32 to vector<1x288xf32>
    %1943 = arith.mulf %1940, %1942 : vector<1x288xf32>
    %1944 = arith.addf %1926, %1943 : vector<1x288xf32>
    %c133_487 = arith.constant 133 : index
    %1945 = memref.load %arg5[%c133_487] : memref<144xf32, #tpu.memory_space<smem>>
    %1946 = vector.broadcast %1945 : f32 to vector<1x288xf32>
    %1947 = arith.mulf %1940, %1946 : vector<1x288xf32>
    %1948 = arith.addf %1930, %1947 : vector<1x288xf32>
    %c134_488 = arith.constant 134 : index
    %1949 = memref.load %arg5[%c134_488] : memref<144xf32, #tpu.memory_space<smem>>
    %1950 = vector.broadcast %1949 : f32 to vector<1x288xf32>
    %1951 = arith.mulf %1940, %1950 : vector<1x288xf32>
    %1952 = arith.addf %1934, %1951 : vector<1x288xf32>
    %c135_489 = arith.constant 135 : index
    %1953 = memref.load %arg5[%c135_489] : memref<144xf32, #tpu.memory_space<smem>>
    %1954 = vector.broadcast %1953 : f32 to vector<1x288xf32>
    %1955 = arith.mulf %1940, %1954 : vector<1x288xf32>
    %1956 = arith.addf %1938, %1955 : vector<1x288xf32>
    %c0_490 = arith.constant 0 : index
    %c2_491 = arith.constant 2 : index
    %c38_492 = arith.constant 38 : index
    %1957 = vector.load %arg11[%c0_490, %c2_491, %c38_492] : memref<1x4x326xf32, #tpu.memory_space<vmem>>, vector<1x1x288xf32>
    %1958 = vector.shape_cast %1957 : vector<1x1x288xf32> to vector<1x288xf32>
    %c136_493 = arith.constant 136 : index
    %1959 = memref.load %arg5[%c136_493] : memref<144xf32, #tpu.memory_space<smem>>
    %1960 = vector.broadcast %1959 : f32 to vector<1x288xf32>
    %1961 = arith.mulf %1958, %1960 : vector<1x288xf32>
    %1962 = arith.addf %1944, %1961 : vector<1x288xf32>
    %c137_494 = arith.constant 137 : index
    %1963 = memref.load %arg5[%c137_494] : memref<144xf32, #tpu.memory_space<smem>>
    %1964 = vector.broadcast %1963 : f32 to vector<1x288xf32>
    %1965 = arith.mulf %1958, %1964 : vector<1x288xf32>
    %1966 = arith.addf %1948, %1965 : vector<1x288xf32>
    %c138_495 = arith.constant 138 : index
    %1967 = memref.load %arg5[%c138_495] : memref<144xf32, #tpu.memory_space<smem>>
    %1968 = vector.broadcast %1967 : f32 to vector<1x288xf32>
    %1969 = arith.mulf %1958, %1968 : vector<1x288xf32>
    %1970 = arith.addf %1952, %1969 : vector<1x288xf32>
    %c139_496 = arith.constant 139 : index
    %1971 = memref.load %arg5[%c139_496] : memref<144xf32, #tpu.memory_space<smem>>
    %1972 = vector.broadcast %1971 : f32 to vector<1x288xf32>
    %1973 = arith.mulf %1958, %1972 : vector<1x288xf32>
    %1974 = arith.addf %1956, %1973 : vector<1x288xf32>
    %c0_497 = arith.constant 0 : index
    %c3_498 = arith.constant 3 : index
    %c38_499 = arith.constant 38 : index
    %1975 = vector.load %arg11[%c0_497, %c3_498, %c38_499] : memref<1x4x326xf32, #tpu.memory_space<vmem>>, vector<1x1x288xf32>
    %1976 = vector.shape_cast %1975 : vector<1x1x288xf32> to vector<1x288xf32>
    %c140_500 = arith.constant 140 : index
    %1977 = memref.load %arg5[%c140_500] : memref<144xf32, #tpu.memory_space<smem>>
    %1978 = vector.broadcast %1977 : f32 to vector<1x288xf32>
    %1979 = arith.mulf %1976, %1978 : vector<1x288xf32>
    %1980 = arith.addf %1962, %1979 : vector<1x288xf32>
    %c141_501 = arith.constant 141 : index
    %1981 = memref.load %arg5[%c141_501] : memref<144xf32, #tpu.memory_space<smem>>
    %1982 = vector.broadcast %1981 : f32 to vector<1x288xf32>
    %1983 = arith.mulf %1976, %1982 : vector<1x288xf32>
    %1984 = arith.addf %1966, %1983 : vector<1x288xf32>
    %c142_502 = arith.constant 142 : index
    %1985 = memref.load %arg5[%c142_502] : memref<144xf32, #tpu.memory_space<smem>>
    %1986 = vector.broadcast %1985 : f32 to vector<1x288xf32>
    %1987 = arith.mulf %1976, %1986 : vector<1x288xf32>
    %1988 = arith.addf %1970, %1987 : vector<1x288xf32>
    %c143_503 = arith.constant 143 : index
    %1989 = memref.load %arg5[%c143_503] : memref<144xf32, #tpu.memory_space<smem>>
    %1990 = vector.broadcast %1989 : f32 to vector<1x288xf32>
    %1991 = arith.mulf %1976, %1990 : vector<1x288xf32>
    %1992 = arith.addf %1974, %1991 : vector<1x288xf32>
    %c0_504 = arith.constant 0 : index
    %1993 = memref.load %arg6[%c0_504] : memref<4xf32, #tpu.memory_space<smem>>
    %1994 = vector.broadcast %1993 : f32 to vector<1x288xf32>
    %1995 = arith.addf %1980, %1994 : vector<1x288xf32>
    %cst_505 = arith.constant 0.000000e+00 : f32
    %1996 = vector.broadcast %cst_505 : f32 to vector<1x288xf32>
    %1997 = arith.maximumf %1995, %1996 : vector<1x288xf32>
    %c1_506 = arith.constant 1 : index
    %1998 = memref.load %arg6[%c1_506] : memref<4xf32, #tpu.memory_space<smem>>
    %1999 = vector.broadcast %1998 : f32 to vector<1x288xf32>
    %2000 = arith.addf %1984, %1999 : vector<1x288xf32>
    %cst_507 = arith.constant 0.000000e+00 : f32
    %2001 = vector.broadcast %cst_507 : f32 to vector<1x288xf32>
    %2002 = arith.maximumf %2000, %2001 : vector<1x288xf32>
    %c2_508 = arith.constant 2 : index
    %2003 = memref.load %arg6[%c2_508] : memref<4xf32, #tpu.memory_space<smem>>
    %2004 = vector.broadcast %2003 : f32 to vector<1x288xf32>
    %2005 = arith.addf %1988, %2004 : vector<1x288xf32>
    %cst_509 = arith.constant 0.000000e+00 : f32
    %2006 = vector.broadcast %cst_509 : f32 to vector<1x288xf32>
    %2007 = arith.maximumf %2005, %2006 : vector<1x288xf32>
    %c3_510 = arith.constant 3 : index
    %2008 = memref.load %arg6[%c3_510] : memref<4xf32, #tpu.memory_space<smem>>
    %2009 = vector.broadcast %2008 : f32 to vector<1x288xf32>
    %2010 = arith.addf %1992, %2009 : vector<1x288xf32>
    %cst_511 = arith.constant 0.000000e+00 : f32
    %2011 = vector.broadcast %cst_511 : f32 to vector<1x288xf32>
    %2012 = arith.maximumf %2010, %2011 : vector<1x288xf32>
    %2013 = arith.mulf %1997, %0 : vector<1x288xf32>
    %c0_512 = arith.constant 0 : index
    %c0_513 = arith.constant 0 : index
    %c19_514 = arith.constant 19 : index
    %2014 = vector.load %arg11[%c0_512, %c0_513, %c19_514] : memref<1x4x326xf32, #tpu.memory_space<vmem>>, vector<1x1x288xf32>
    %2015 = vector.shape_cast %2014 : vector<1x1x288xf32> to vector<1x288xf32>
    %2016 = vector.shape_cast %2013 : vector<1x288xf32> to vector<1x1x288xf32>
    tpu.vector_store %arg11[%c0_512, %c0_513, %c19_514], %2016 {strides = array<i32>} : memref<1x4x326xf32, #tpu.memory_space<vmem>>, vector<1x1x288xf32>,
    %2017 = arith.mulf %2002, %0 : vector<1x288xf32>
    %c0_515 = arith.constant 0 : index
    %c1_516 = arith.constant 1 : index
    %c19_517 = arith.constant 19 : index
    %2018 = vector.load %arg11[%c0_515, %c1_516, %c19_517] : memref<1x4x326xf32, #tpu.memory_space<vmem>>, vector<1x1x288xf32>
    %2019 = vector.shape_cast %2018 : vector<1x1x288xf32> to vector<1x288xf32>
    %2020 = vector.shape_cast %2017 : vector<1x288xf32> to vector<1x1x288xf32>
    tpu.vector_store %arg11[%c0_515, %c1_516, %c19_517], %2020 {strides = array<i32>} : memref<1x4x326xf32, #tpu.memory_space<vmem>>, vector<1x1x288xf32>,
    %2021 = arith.mulf %2007, %0 : vector<1x288xf32>
    %c0_518 = arith.constant 0 : index
    %c2_519 = arith.constant 2 : index
    %c19_520 = arith.constant 19 : index
    %2022 = vector.load %arg11[%c0_518, %c2_519, %c19_520] : memref<1x4x326xf32, #tpu.memory_space<vmem>>, vector<1x1x288xf32>
    %2023 = vector.shape_cast %2022 : vector<1x1x288xf32> to vector<1x288xf32>
    %2024 = vector.shape_cast %2021 : vector<1x288xf32> to vector<1x1x288xf32>
    tpu.vector_store %arg11[%c0_518, %c2_519, %c19_520], %2024 {strides = array<i32>} : memref<1x4x326xf32, #tpu.memory_space<vmem>>, vector<1x1x288xf32>,
    %2025 = arith.mulf %2012, %0 : vector<1x288xf32>
    %c0_521 = arith.constant 0 : index
    %c3_522 = arith.constant 3 : index
    %c19_523 = arith.constant 19 : index
    %2026 = vector.load %arg11[%c0_521, %c3_522, %c19_523] : memref<1x4x326xf32, #tpu.memory_space<vmem>>, vector<1x1x288xf32>
    %2027 = vector.shape_cast %2026 : vector<1x1x288xf32> to vector<1x288xf32>
    %2028 = vector.shape_cast %2025 : vector<1x288xf32> to vector<1x1x288xf32>
    tpu.vector_store %arg11[%c0_521, %c3_522, %c19_523], %2028 {strides = array<i32>} : memref<1x4x326xf32, #tpu.memory_space<vmem>>, vector<1x1x288xf32>,
    %cst_524 = arith.constant 0.000000e+00 : f32
    %2029 = vector.broadcast %cst_524 : f32 to vector<1x288xf32>
    %c0_525 = arith.constant 0 : index
    %c0_526 = arith.constant 0 : index
    %c0_527 = arith.constant 0 : index
    %2030 = vector.load %arg11[%c0_525, %c0_526, %c0_527] : memref<1x4x326xf32, #tpu.memory_space<vmem>>, vector<1x1x288xf32>
    %2031 = vector.shape_cast %2030 : vector<1x1x288xf32> to vector<1x288xf32>
    %c0_528 = arith.constant 0 : index
    %2032 = memref.load %arg7[%c0_528] : memref<36xf32, #tpu.memory_space<smem>>
    %2033 = vector.broadcast %2032 : f32 to vector<1x288xf32>
    %2034 = arith.mulf %2031, %2033 : vector<1x288xf32>
    %2035 = arith.addf %2029, %2034 : vector<1x288xf32>
    %c0_529 = arith.constant 0 : index
    %c1_530 = arith.constant 1 : index
    %c0_531 = arith.constant 0 : index
    %2036 = vector.load %arg11[%c0_529, %c1_530, %c0_531] : memref<1x4x326xf32, #tpu.memory_space<vmem>>, vector<1x1x288xf32>
    %2037 = vector.shape_cast %2036 : vector<1x1x288xf32> to vector<1x288xf32>
    %c1_532 = arith.constant 1 : index
    %2038 = memref.load %arg7[%c1_532] : memref<36xf32, #tpu.memory_space<smem>>
    %2039 = vector.broadcast %2038 : f32 to vector<1x288xf32>
    %2040 = arith.mulf %2037, %2039 : vector<1x288xf32>
    %2041 = arith.addf %2035, %2040 : vector<1x288xf32>
    %c0_533 = arith.constant 0 : index
    %c2_534 = arith.constant 2 : index
    %c0_535 = arith.constant 0 : index
    %2042 = vector.load %arg11[%c0_533, %c2_534, %c0_535] : memref<1x4x326xf32, #tpu.memory_space<vmem>>, vector<1x1x288xf32>
    %2043 = vector.shape_cast %2042 : vector<1x1x288xf32> to vector<1x288xf32>
    %c2_536 = arith.constant 2 : index
    %2044 = memref.load %arg7[%c2_536] : memref<36xf32, #tpu.memory_space<smem>>
    %2045 = vector.broadcast %2044 : f32 to vector<1x288xf32>
    %2046 = arith.mulf %2043, %2045 : vector<1x288xf32>
    %2047 = arith.addf %2041, %2046 : vector<1x288xf32>
    %c0_537 = arith.constant 0 : index
    %c3_538 = arith.constant 3 : index
    %c0_539 = arith.constant 0 : index
    %2048 = vector.load %arg11[%c0_537, %c3_538, %c0_539] : memref<1x4x326xf32, #tpu.memory_space<vmem>>, vector<1x1x288xf32>
    %2049 = vector.shape_cast %2048 : vector<1x1x288xf32> to vector<1x288xf32>
    %c3_540 = arith.constant 3 : index
    %2050 = memref.load %arg7[%c3_540] : memref<36xf32, #tpu.memory_space<smem>>
    %2051 = vector.broadcast %2050 : f32 to vector<1x288xf32>
    %2052 = arith.mulf %2049, %2051 : vector<1x288xf32>
    %2053 = arith.addf %2047, %2052 : vector<1x288xf32>
    %c0_541 = arith.constant 0 : index
    %c0_542 = arith.constant 0 : index
    %c1_543 = arith.constant 1 : index
    %2054 = vector.load %arg11[%c0_541, %c0_542, %c1_543] : memref<1x4x326xf32, #tpu.memory_space<vmem>>, vector<1x1x288xf32>
    %2055 = vector.shape_cast %2054 : vector<1x1x288xf32> to vector<1x288xf32>
    %c4_544 = arith.constant 4 : index
    %2056 = memref.load %arg7[%c4_544] : memref<36xf32, #tpu.memory_space<smem>>
    %2057 = vector.broadcast %2056 : f32 to vector<1x288xf32>
    %2058 = arith.mulf %2055, %2057 : vector<1x288xf32>
    %2059 = arith.addf %2053, %2058 : vector<1x288xf32>
    %c0_545 = arith.constant 0 : index
    %c1_546 = arith.constant 1 : index
    %c1_547 = arith.constant 1 : index
    %2060 = vector.load %arg11[%c0_545, %c1_546, %c1_547] : memref<1x4x326xf32, #tpu.memory_space<vmem>>, vector<1x1x288xf32>
    %2061 = vector.shape_cast %2060 : vector<1x1x288xf32> to vector<1x288xf32>
    %c5_548 = arith.constant 5 : index
    %2062 = memref.load %arg7[%c5_548] : memref<36xf32, #tpu.memory_space<smem>>
    %2063 = vector.broadcast %2062 : f32 to vector<1x288xf32>
    %2064 = arith.mulf %2061, %2063 : vector<1x288xf32>
    %2065 = arith.addf %2059, %2064 : vector<1x288xf32>
    %c0_549 = arith.constant 0 : index
    %c2_550 = arith.constant 2 : index
    %c1_551 = arith.constant 1 : index
    %2066 = vector.load %arg11[%c0_549, %c2_550, %c1_551] : memref<1x4x326xf32, #tpu.memory_space<vmem>>, vector<1x1x288xf32>
    %2067 = vector.shape_cast %2066 : vector<1x1x288xf32> to vector<1x288xf32>
    %c6_552 = arith.constant 6 : index
    %2068 = memref.load %arg7[%c6_552] : memref<36xf32, #tpu.memory_space<smem>>
    %2069 = vector.broadcast %2068 : f32 to vector<1x288xf32>
    %2070 = arith.mulf %2067, %2069 : vector<1x288xf32>
    %2071 = arith.addf %2065, %2070 : vector<1x288xf32>
    %c0_553 = arith.constant 0 : index
    %c3_554 = arith.constant 3 : index
    %c1_555 = arith.constant 1 : index
    %2072 = vector.load %arg11[%c0_553, %c3_554, %c1_555] : memref<1x4x326xf32, #tpu.memory_space<vmem>>, vector<1x1x288xf32>
    %2073 = vector.shape_cast %2072 : vector<1x1x288xf32> to vector<1x288xf32>
    %c7_556 = arith.constant 7 : index
    %2074 = memref.load %arg7[%c7_556] : memref<36xf32, #tpu.memory_space<smem>>
    %2075 = vector.broadcast %2074 : f32 to vector<1x288xf32>
    %2076 = arith.mulf %2073, %2075 : vector<1x288xf32>
    %2077 = arith.addf %2071, %2076 : vector<1x288xf32>
    %c0_557 = arith.constant 0 : index
    %c0_558 = arith.constant 0 : index
    %c2_559 = arith.constant 2 : index
    %2078 = vector.load %arg11[%c0_557, %c0_558, %c2_559] : memref<1x4x326xf32, #tpu.memory_space<vmem>>, vector<1x1x288xf32>
    %2079 = vector.shape_cast %2078 : vector<1x1x288xf32> to vector<1x288xf32>
    %c8_560 = arith.constant 8 : index
    %2080 = memref.load %arg7[%c8_560] : memref<36xf32, #tpu.memory_space<smem>>
    %2081 = vector.broadcast %2080 : f32 to vector<1x288xf32>
    %2082 = arith.mulf %2079, %2081 : vector<1x288xf32>
    %2083 = arith.addf %2077, %2082 : vector<1x288xf32>
    %c0_561 = arith.constant 0 : index
    %c1_562 = arith.constant 1 : index
    %c2_563 = arith.constant 2 : index
    %2084 = vector.load %arg11[%c0_561, %c1_562, %c2_563] : memref<1x4x326xf32, #tpu.memory_space<vmem>>, vector<1x1x288xf32>
    %2085 = vector.shape_cast %2084 : vector<1x1x288xf32> to vector<1x288xf32>
    %c9_564 = arith.constant 9 : index
    %2086 = memref.load %arg7[%c9_564] : memref<36xf32, #tpu.memory_space<smem>>
    %2087 = vector.broadcast %2086 : f32 to vector<1x288xf32>
    %2088 = arith.mulf %2085, %2087 : vector<1x288xf32>
    %2089 = arith.addf %2083, %2088 : vector<1x288xf32>
    %c0_565 = arith.constant 0 : index
    %c2_566 = arith.constant 2 : index
    %c2_567 = arith.constant 2 : index
    %2090 = vector.load %arg11[%c0_565, %c2_566, %c2_567] : memref<1x4x326xf32, #tpu.memory_space<vmem>>, vector<1x1x288xf32>
    %2091 = vector.shape_cast %2090 : vector<1x1x288xf32> to vector<1x288xf32>
    %c10_568 = arith.constant 10 : index
    %2092 = memref.load %arg7[%c10_568] : memref<36xf32, #tpu.memory_space<smem>>
    %2093 = vector.broadcast %2092 : f32 to vector<1x288xf32>
    %2094 = arith.mulf %2091, %2093 : vector<1x288xf32>
    %2095 = arith.addf %2089, %2094 : vector<1x288xf32>
    %c0_569 = arith.constant 0 : index
    %c3_570 = arith.constant 3 : index
    %c2_571 = arith.constant 2 : index
    %2096 = vector.load %arg11[%c0_569, %c3_570, %c2_571] : memref<1x4x326xf32, #tpu.memory_space<vmem>>, vector<1x1x288xf32>
    %2097 = vector.shape_cast %2096 : vector<1x1x288xf32> to vector<1x288xf32>
    %c11_572 = arith.constant 11 : index
    %2098 = memref.load %arg7[%c11_572] : memref<36xf32, #tpu.memory_space<smem>>
    %2099 = vector.broadcast %2098 : f32 to vector<1x288xf32>
    %2100 = arith.mulf %2097, %2099 : vector<1x288xf32>
    %2101 = arith.addf %2095, %2100 : vector<1x288xf32>
    %c0_573 = arith.constant 0 : index
    %c0_574 = arith.constant 0 : index
    %c18_575 = arith.constant 18 : index
    %2102 = vector.load %arg11[%c0_573, %c0_574, %c18_575] : memref<1x4x326xf32, #tpu.memory_space<vmem>>, vector<1x1x288xf32>
    %2103 = vector.shape_cast %2102 : vector<1x1x288xf32> to vector<1x288xf32>
    %c12_576 = arith.constant 12 : index
    %2104 = memref.load %arg7[%c12_576] : memref<36xf32, #tpu.memory_space<smem>>
    %2105 = vector.broadcast %2104 : f32 to vector<1x288xf32>
    %2106 = arith.mulf %2103, %2105 : vector<1x288xf32>
    %2107 = arith.addf %2101, %2106 : vector<1x288xf32>
    %c0_577 = arith.constant 0 : index
    %c1_578 = arith.constant 1 : index
    %c18_579 = arith.constant 18 : index
    %2108 = vector.load %arg11[%c0_577, %c1_578, %c18_579] : memref<1x4x326xf32, #tpu.memory_space<vmem>>, vector<1x1x288xf32>
    %2109 = vector.shape_cast %2108 : vector<1x1x288xf32> to vector<1x288xf32>
    %c13_580 = arith.constant 13 : index
    %2110 = memref.load %arg7[%c13_580] : memref<36xf32, #tpu.memory_space<smem>>
    %2111 = vector.broadcast %2110 : f32 to vector<1x288xf32>
    %2112 = arith.mulf %2109, %2111 : vector<1x288xf32>
    %2113 = arith.addf %2107, %2112 : vector<1x288xf32>
    %c0_581 = arith.constant 0 : index
    %c2_582 = arith.constant 2 : index
    %c18_583 = arith.constant 18 : index
    %2114 = vector.load %arg11[%c0_581, %c2_582, %c18_583] : memref<1x4x326xf32, #tpu.memory_space<vmem>>, vector<1x1x288xf32>
    %2115 = vector.shape_cast %2114 : vector<1x1x288xf32> to vector<1x288xf32>
    %c14_584 = arith.constant 14 : index
    %2116 = memref.load %arg7[%c14_584] : memref<36xf32, #tpu.memory_space<smem>>
    %2117 = vector.broadcast %2116 : f32 to vector<1x288xf32>
    %2118 = arith.mulf %2115, %2117 : vector<1x288xf32>
    %2119 = arith.addf %2113, %2118 : vector<1x288xf32>
    %c0_585 = arith.constant 0 : index
    %c3_586 = arith.constant 3 : index
    %c18_587 = arith.constant 18 : index
    %2120 = vector.load %arg11[%c0_585, %c3_586, %c18_587] : memref<1x4x326xf32, #tpu.memory_space<vmem>>, vector<1x1x288xf32>
    %2121 = vector.shape_cast %2120 : vector<1x1x288xf32> to vector<1x288xf32>
    %c15_588 = arith.constant 15 : index
    %2122 = memref.load %arg7[%c15_588] : memref<36xf32, #tpu.memory_space<smem>>
    %2123 = vector.broadcast %2122 : f32 to vector<1x288xf32>
    %2124 = arith.mulf %2121, %2123 : vector<1x288xf32>
    %2125 = arith.addf %2119, %2124 : vector<1x288xf32>
    %c0_589 = arith.constant 0 : index
    %c0_590 = arith.constant 0 : index
    %c19_591 = arith.constant 19 : index
    %2126 = vector.load %arg11[%c0_589, %c0_590, %c19_591] : memref<1x4x326xf32, #tpu.memory_space<vmem>>, vector<1x1x288xf32>
    %2127 = vector.shape_cast %2126 : vector<1x1x288xf32> to vector<1x288xf32>
    %c16_592 = arith.constant 16 : index
    %2128 = memref.load %arg7[%c16_592] : memref<36xf32, #tpu.memory_space<smem>>
    %2129 = vector.broadcast %2128 : f32 to vector<1x288xf32>
    %2130 = arith.mulf %2127, %2129 : vector<1x288xf32>
    %2131 = arith.addf %2125, %2130 : vector<1x288xf32>
    %c0_593 = arith.constant 0 : index
    %c1_594 = arith.constant 1 : index
    %c19_595 = arith.constant 19 : index
    %2132 = vector.load %arg11[%c0_593, %c1_594, %c19_595] : memref<1x4x326xf32, #tpu.memory_space<vmem>>, vector<1x1x288xf32>
    %2133 = vector.shape_cast %2132 : vector<1x1x288xf32> to vector<1x288xf32>
    %c17_596 = arith.constant 17 : index
    %2134 = memref.load %arg7[%c17_596] : memref<36xf32, #tpu.memory_space<smem>>
    %2135 = vector.broadcast %2134 : f32 to vector<1x288xf32>
    %2136 = arith.mulf %2133, %2135 : vector<1x288xf32>
    %2137 = arith.addf %2131, %2136 : vector<1x288xf32>
    %c0_597 = arith.constant 0 : index
    %c2_598 = arith.constant 2 : index
    %c19_599 = arith.constant 19 : index
    %2138 = vector.load %arg11[%c0_597, %c2_598, %c19_599] : memref<1x4x326xf32, #tpu.memory_space<vmem>>, vector<1x1x288xf32>
    %2139 = vector.shape_cast %2138 : vector<1x1x288xf32> to vector<1x288xf32>
    %c18_600 = arith.constant 18 : index
    %2140 = memref.load %arg7[%c18_600] : memref<36xf32, #tpu.memory_space<smem>>
    %2141 = vector.broadcast %2140 : f32 to vector<1x288xf32>
    %2142 = arith.mulf %2139, %2141 : vector<1x288xf32>
    %2143 = arith.addf %2137, %2142 : vector<1x288xf32>
    %c0_601 = arith.constant 0 : index
    %c3_602 = arith.constant 3 : index
    %c19_603 = arith.constant 19 : index
    %2144 = vector.load %arg11[%c0_601, %c3_602, %c19_603] : memref<1x4x326xf32, #tpu.memory_space<vmem>>, vector<1x1x288xf32>
    %2145 = vector.shape_cast %2144 : vector<1x1x288xf32> to vector<1x288xf32>
    %c19_604 = arith.constant 19 : index
    %2146 = memref.load %arg7[%c19_604] : memref<36xf32, #tpu.memory_space<smem>>
    %2147 = vector.broadcast %2146 : f32 to vector<1x288xf32>
    %2148 = arith.mulf %2145, %2147 : vector<1x288xf32>
    %2149 = arith.addf %2143, %2148 : vector<1x288xf32>
    %c0_605 = arith.constant 0 : index
    %c0_606 = arith.constant 0 : index
    %c20_607 = arith.constant 20 : index
    %2150 = vector.load %arg11[%c0_605, %c0_606, %c20_607] : memref<1x4x326xf32, #tpu.memory_space<vmem>>, vector<1x1x288xf32>
    %2151 = vector.shape_cast %2150 : vector<1x1x288xf32> to vector<1x288xf32>
    %c20_608 = arith.constant 20 : index
    %2152 = memref.load %arg7[%c20_608] : memref<36xf32, #tpu.memory_space<smem>>
    %2153 = vector.broadcast %2152 : f32 to vector<1x288xf32>
    %2154 = arith.mulf %2151, %2153 : vector<1x288xf32>
    %2155 = arith.addf %2149, %2154 : vector<1x288xf32>
    %c0_609 = arith.constant 0 : index
    %c1_610 = arith.constant 1 : index
    %c20_611 = arith.constant 20 : index
    %2156 = vector.load %arg11[%c0_609, %c1_610, %c20_611] : memref<1x4x326xf32, #tpu.memory_space<vmem>>, vector<1x1x288xf32>
    %2157 = vector.shape_cast %2156 : vector<1x1x288xf32> to vector<1x288xf32>
    %c21_612 = arith.constant 21 : index
    %2158 = memref.load %arg7[%c21_612] : memref<36xf32, #tpu.memory_space<smem>>
    %2159 = vector.broadcast %2158 : f32 to vector<1x288xf32>
    %2160 = arith.mulf %2157, %2159 : vector<1x288xf32>
    %2161 = arith.addf %2155, %2160 : vector<1x288xf32>
    %c0_613 = arith.constant 0 : index
    %c2_614 = arith.constant 2 : index
    %c20_615 = arith.constant 20 : index
    %2162 = vector.load %arg11[%c0_613, %c2_614, %c20_615] : memref<1x4x326xf32, #tpu.memory_space<vmem>>, vector<1x1x288xf32>
    %2163 = vector.shape_cast %2162 : vector<1x1x288xf32> to vector<1x288xf32>
    %c22_616 = arith.constant 22 : index
    %2164 = memref.load %arg7[%c22_616] : memref<36xf32, #tpu.memory_space<smem>>
    %2165 = vector.broadcast %2164 : f32 to vector<1x288xf32>
    %2166 = arith.mulf %2163, %2165 : vector<1x288xf32>
    %2167 = arith.addf %2161, %2166 : vector<1x288xf32>
    %c0_617 = arith.constant 0 : index
    %c3_618 = arith.constant 3 : index
    %c20_619 = arith.constant 20 : index
    %2168 = vector.load %arg11[%c0_617, %c3_618, %c20_619] : memref<1x4x326xf32, #tpu.memory_space<vmem>>, vector<1x1x288xf32>
    %2169 = vector.shape_cast %2168 : vector<1x1x288xf32> to vector<1x288xf32>
    %c23_620 = arith.constant 23 : index
    %2170 = memref.load %arg7[%c23_620] : memref<36xf32, #tpu.memory_space<smem>>
    %2171 = vector.broadcast %2170 : f32 to vector<1x288xf32>
    %2172 = arith.mulf %2169, %2171 : vector<1x288xf32>
    %2173 = arith.addf %2167, %2172 : vector<1x288xf32>
    %c0_621 = arith.constant 0 : index
    %c0_622 = arith.constant 0 : index
    %c36_623 = arith.constant 36 : index
    %2174 = vector.load %arg11[%c0_621, %c0_622, %c36_623] : memref<1x4x326xf32, #tpu.memory_space<vmem>>, vector<1x1x288xf32>
    %2175 = vector.shape_cast %2174 : vector<1x1x288xf32> to vector<1x288xf32>
    %c24_624 = arith.constant 24 : index
    %2176 = memref.load %arg7[%c24_624] : memref<36xf32, #tpu.memory_space<smem>>
    %2177 = vector.broadcast %2176 : f32 to vector<1x288xf32>
    %2178 = arith.mulf %2175, %2177 : vector<1x288xf32>
    %2179 = arith.addf %2173, %2178 : vector<1x288xf32>
    %c0_625 = arith.constant 0 : index
    %c1_626 = arith.constant 1 : index
    %c36_627 = arith.constant 36 : index
    %2180 = vector.load %arg11[%c0_625, %c1_626, %c36_627] : memref<1x4x326xf32, #tpu.memory_space<vmem>>, vector<1x1x288xf32>
    %2181 = vector.shape_cast %2180 : vector<1x1x288xf32> to vector<1x288xf32>
    %c25_628 = arith.constant 25 : index
    %2182 = memref.load %arg7[%c25_628] : memref<36xf32, #tpu.memory_space<smem>>
    %2183 = vector.broadcast %2182 : f32 to vector<1x288xf32>
    %2184 = arith.mulf %2181, %2183 : vector<1x288xf32>
    %2185 = arith.addf %2179, %2184 : vector<1x288xf32>
    %c0_629 = arith.constant 0 : index
    %c2_630 = arith.constant 2 : index
    %c36_631 = arith.constant 36 : index
    %2186 = vector.load %arg11[%c0_629, %c2_630, %c36_631] : memref<1x4x326xf32, #tpu.memory_space<vmem>>, vector<1x1x288xf32>
    %2187 = vector.shape_cast %2186 : vector<1x1x288xf32> to vector<1x288xf32>
    %c26_632 = arith.constant 26 : index
    %2188 = memref.load %arg7[%c26_632] : memref<36xf32, #tpu.memory_space<smem>>
    %2189 = vector.broadcast %2188 : f32 to vector<1x288xf32>
    %2190 = arith.mulf %2187, %2189 : vector<1x288xf32>
    %2191 = arith.addf %2185, %2190 : vector<1x288xf32>
    %c0_633 = arith.constant 0 : index
    %c3_634 = arith.constant 3 : index
    %c36_635 = arith.constant 36 : index
    %2192 = vector.load %arg11[%c0_633, %c3_634, %c36_635] : memref<1x4x326xf32, #tpu.memory_space<vmem>>, vector<1x1x288xf32>
    %2193 = vector.shape_cast %2192 : vector<1x1x288xf32> to vector<1x288xf32>
    %c27_636 = arith.constant 27 : index
    %2194 = memref.load %arg7[%c27_636] : memref<36xf32, #tpu.memory_space<smem>>
    %2195 = vector.broadcast %2194 : f32 to vector<1x288xf32>
    %2196 = arith.mulf %2193, %2195 : vector<1x288xf32>
    %2197 = arith.addf %2191, %2196 : vector<1x288xf32>
    %c0_637 = arith.constant 0 : index
    %c0_638 = arith.constant 0 : index
    %c37_639 = arith.constant 37 : index
    %2198 = vector.load %arg11[%c0_637, %c0_638, %c37_639] : memref<1x4x326xf32, #tpu.memory_space<vmem>>, vector<1x1x288xf32>
    %2199 = vector.shape_cast %2198 : vector<1x1x288xf32> to vector<1x288xf32>
    %c28_640 = arith.constant 28 : index
    %2200 = memref.load %arg7[%c28_640] : memref<36xf32, #tpu.memory_space<smem>>
    %2201 = vector.broadcast %2200 : f32 to vector<1x288xf32>
    %2202 = arith.mulf %2199, %2201 : vector<1x288xf32>
    %2203 = arith.addf %2197, %2202 : vector<1x288xf32>
    %c0_641 = arith.constant 0 : index
    %c1_642 = arith.constant 1 : index
    %c37_643 = arith.constant 37 : index
    %2204 = vector.load %arg11[%c0_641, %c1_642, %c37_643] : memref<1x4x326xf32, #tpu.memory_space<vmem>>, vector<1x1x288xf32>
    %2205 = vector.shape_cast %2204 : vector<1x1x288xf32> to vector<1x288xf32>
    %c29_644 = arith.constant 29 : index
    %2206 = memref.load %arg7[%c29_644] : memref<36xf32, #tpu.memory_space<smem>>
    %2207 = vector.broadcast %2206 : f32 to vector<1x288xf32>
    %2208 = arith.mulf %2205, %2207 : vector<1x288xf32>
    %2209 = arith.addf %2203, %2208 : vector<1x288xf32>
    %c0_645 = arith.constant 0 : index
    %c2_646 = arith.constant 2 : index
    %c37_647 = arith.constant 37 : index
    %2210 = vector.load %arg11[%c0_645, %c2_646, %c37_647] : memref<1x4x326xf32, #tpu.memory_space<vmem>>, vector<1x1x288xf32>
    %2211 = vector.shape_cast %2210 : vector<1x1x288xf32> to vector<1x288xf32>
    %c30_648 = arith.constant 30 : index
    %2212 = memref.load %arg7[%c30_648] : memref<36xf32, #tpu.memory_space<smem>>
    %2213 = vector.broadcast %2212 : f32 to vector<1x288xf32>
    %2214 = arith.mulf %2211, %2213 : vector<1x288xf32>
    %2215 = arith.addf %2209, %2214 : vector<1x288xf32>
    %c0_649 = arith.constant 0 : index
    %c3_650 = arith.constant 3 : index
    %c37_651 = arith.constant 37 : index
    %2216 = vector.load %arg11[%c0_649, %c3_650, %c37_651] : memref<1x4x326xf32, #tpu.memory_space<vmem>>, vector<1x1x288xf32>
    %2217 = vector.shape_cast %2216 : vector<1x1x288xf32> to vector<1x288xf32>
    %c31_652 = arith.constant 31 : index
    %2218 = memref.load %arg7[%c31_652] : memref<36xf32, #tpu.memory_space<smem>>
    %2219 = vector.broadcast %2218 : f32 to vector<1x288xf32>
    %2220 = arith.mulf %2217, %2219 : vector<1x288xf32>
    %2221 = arith.addf %2215, %2220 : vector<1x288xf32>
    %c0_653 = arith.constant 0 : index
    %c0_654 = arith.constant 0 : index
    %c38_655 = arith.constant 38 : index
    %2222 = vector.load %arg11[%c0_653, %c0_654, %c38_655] : memref<1x4x326xf32, #tpu.memory_space<vmem>>, vector<1x1x288xf32>
    %2223 = vector.shape_cast %2222 : vector<1x1x288xf32> to vector<1x288xf32>
    %c32_656 = arith.constant 32 : index
    %2224 = memref.load %arg7[%c32_656] : memref<36xf32, #tpu.memory_space<smem>>
    %2225 = vector.broadcast %2224 : f32 to vector<1x288xf32>
    %2226 = arith.mulf %2223, %2225 : vector<1x288xf32>
    %2227 = arith.addf %2221, %2226 : vector<1x288xf32>
    %c0_657 = arith.constant 0 : index
    %c1_658 = arith.constant 1 : index
    %c38_659 = arith.constant 38 : index
    %2228 = vector.load %arg11[%c0_657, %c1_658, %c38_659] : memref<1x4x326xf32, #tpu.memory_space<vmem>>, vector<1x1x288xf32>
    %2229 = vector.shape_cast %2228 : vector<1x1x288xf32> to vector<1x288xf32>
    %c33_660 = arith.constant 33 : index
    %2230 = memref.load %arg7[%c33_660] : memref<36xf32, #tpu.memory_space<smem>>
    %2231 = vector.broadcast %2230 : f32 to vector<1x288xf32>
    %2232 = arith.mulf %2229, %2231 : vector<1x288xf32>
    %2233 = arith.addf %2227, %2232 : vector<1x288xf32>
    %c0_661 = arith.constant 0 : index
    %c2_662 = arith.constant 2 : index
    %c38_663 = arith.constant 38 : index
    %2234 = vector.load %arg11[%c0_661, %c2_662, %c38_663] : memref<1x4x326xf32, #tpu.memory_space<vmem>>, vector<1x1x288xf32>
    %2235 = vector.shape_cast %2234 : vector<1x1x288xf32> to vector<1x288xf32>
    %c34_664 = arith.constant 34 : index
    %2236 = memref.load %arg7[%c34_664] : memref<36xf32, #tpu.memory_space<smem>>
    %2237 = vector.broadcast %2236 : f32 to vector<1x288xf32>
    %2238 = arith.mulf %2235, %2237 : vector<1x288xf32>
    %2239 = arith.addf %2233, %2238 : vector<1x288xf32>
    %c0_665 = arith.constant 0 : index
    %c3_666 = arith.constant 3 : index
    %c38_667 = arith.constant 38 : index
    %2240 = vector.load %arg11[%c0_665, %c3_666, %c38_667] : memref<1x4x326xf32, #tpu.memory_space<vmem>>, vector<1x1x288xf32>
    %2241 = vector.shape_cast %2240 : vector<1x1x288xf32> to vector<1x288xf32>
    %c35_668 = arith.constant 35 : index
    %2242 = memref.load %arg7[%c35_668] : memref<36xf32, #tpu.memory_space<smem>>
    %2243 = vector.broadcast %2242 : f32 to vector<1x288xf32>
    %2244 = arith.mulf %2241, %2243 : vector<1x288xf32>
    %2245 = arith.addf %2239, %2244 : vector<1x288xf32>
    %c0_669 = arith.constant 0 : index
    %2246 = memref.load %arg8[%c0_669] : memref<1xf32, #tpu.memory_space<smem>>
    %2247 = vector.broadcast %2246 : f32 to vector<1x288xf32>
    %2248 = arith.addf %2245, %2247 : vector<1x288xf32>
    %cst_670 = arith.constant 0.000000e+00 : f32
    %2249 = vector.broadcast %cst_670 : f32 to vector<1x288xf32>
    %2250 = arith.maximumf %2248, %2249 : vector<1x288xf32>
    %cst_671 = arith.constant 0.000000e+00 : f32
    %2251 = vector.broadcast %cst_671 : f32 to vector<1x288xf32>
    %c0_672 = arith.constant 0 : index
    %2252 = memref.load %arg9[%c0_672] : memref<1xf32, #tpu.memory_space<smem>>
    %2253 = vector.broadcast %2252 : f32 to vector<1x288xf32>
    %2254 = arith.mulf %2250, %2253 : vector<1x288xf32>
    %2255 = arith.addf %2251, %2254 : vector<1x288xf32>
    %2256 = arith.negf %2255 : vector<1x288xf32>
    %2257 = math.exp %2256 : vector<1x288xf32>
    %cst_673 = arith.constant 1.000000e+00 : f32
    %2258 = vector.broadcast %cst_673 : f32 to vector<1x288xf32>
    %2259 = arith.addf %2258, %2257 : vector<1x288xf32>
    %2260 = arith.divf %2258, %2259 : vector<1x288xf32>
    %c0_674 = arith.constant 0 : index
    %c0_675 = arith.constant 0 : index
    %c0_676 = arith.constant 0 : index
    %2261 = vector.load %arg10[%c0_674, %c0_675, %c0_676] : memref<1x1x288xf32, #tpu.memory_space<vmem>>, vector<1x1x288xf32>
    %2262 = vector.shape_cast %2261 : vector<1x1x288xf32> to vector<1x288xf32>
    %2263 = vector.shape_cast %2260 : vector<1x288xf32> to vector<1x1x288xf32>
    tpu.vector_store %arg10[%c0_674, %c0_675, %c0_676], %2263 {strides = array<i32>} : memref<1x1x288xf32, #tpu.memory_space<vmem>>, vector<1x1x288xf32>,
    return
  }
  func.func @transform_0(%arg0: i32) -> (i32, i32, i32) {
    %c0_i32 = arith.constant 0 : i32
    %c0_i32_0 = arith.constant 0 : i32
    %c0_i32_1 = arith.constant 0 : i32
    return %arg0, %c0_i32, %c0_i32_0 : i32, i32, i32
  }
  func.func @transform_1(%arg0: i32) -> (i32, i32) {
    %c0_i32 = arith.constant 0 : i32
    %c0_i32_0 = arith.constant 0 : i32
    %c0_i32_1 = arith.constant 0 : i32
    return %c0_i32, %c0_i32_0 : i32, i32
  }
  func.func @transform_2(%arg0: i32) -> i32 {
    %c0_i32 = arith.constant 0 : i32
    %c0_i32_0 = arith.constant 0 : i32
    return %c0_i32 : i32
  }
  func.func @transform_3(%arg0: i32) -> i32 {
    %c0_i32 = arith.constant 0 : i32
    %c0_i32_0 = arith.constant 0 : i32
    return %c0_i32 : i32
  }
  func.func @transform_4(%arg0: i32) -> i32 {
    %c0_i32 = arith.constant 0 : i32
    %c0_i32_0 = arith.constant 0 : i32
    return %c0_i32 : i32
  }
  func.func @transform_5(%arg0: i32) -> i32 {
    %c0_i32 = arith.constant 0 : i32
    %c0_i32_0 = arith.constant 0 : i32
    return %c0_i32 : i32
  }
  func.func @transform_6(%arg0: i32) -> i32 {
    %c0_i32 = arith.constant 0 : i32
    %c0_i32_0 = arith.constant 0 : i32
    return %c0_i32 : i32
  }
  func.func @transform_7(%arg0: i32) -> i32 {
    %c0_i32 = arith.constant 0 : i32
    %c0_i32_0 = arith.constant 0 : i32
    return %c0_i32 : i32
  }
  func.func @transform_8(%arg0: i32) -> i32 {
    %c0_i32 = arith.constant 0 : i32
    %c0_i32_0 = arith.constant 0 : i32
    return %c0_i32 : i32
  }
  func.func @transform_9(%arg0: i32) -> (i32, i32, i32) {
    %c0_i32 = arith.constant 0 : i32
    %c0_i32_0 = arith.constant 0 : i32
    %c0_i32_1 = arith.constant 0 : i32
    return %arg0, %c0_i32, %c0_i32_0 : i32, i32, i32
  }
}

</mosaic_0001>

<llo_original>
// kernel: tpu_custom_call.1
$region0: #{tpu_custom_call.1}
  #allocation0 [shape = 'u32[]', space=smem, size = 0x4, offset = 0x4, fixed_abs, tag = 'smem constant byte address 0x4 - core index']
  #allocation1 [shape = 'u32[144,128]{1,0:T(1,128)}', space=vmem, size = 0x12000, scoped, tag = 'internal scratch']
  #allocation2 [shape = 'f32[1,4,326]{2,1,0:T(4,128)}', space=vmem, size = 0x1800, scoped, tag = 'scratch operand']
  #allocation3 [shape = 'f32[1]{0:T(128)S(6)}', space=smem, size = 0x200, scoped, tag = 'scoped memory for tpu_custom_call.1']
  #allocation4 [shape = 'f32[1]{0:T(128)S(6)}', space=smem, size = 0x200, scoped, tag = 'scoped memory for tpu_custom_call.1']
  %s0 = inlined_call_operand.hbm [shape: f32[2,8,326], index: 0, kind: input, shape index: {}]
  %s1 = inlined_call_operand.vmem [shape: f32[1,288], index: 1, kind: input, shape index: {}]
  %s2 = inlined_call_operand.vmem [shape: f32[288], index: 2, kind: input, shape index: {}]
  %s3 = inlined_call_operand.hbm [shape: f32[4], index: 3, kind: input, shape index: {}]
  %s4 = inlined_call_operand.vmem [shape: f32[144], index: 4, kind: input, shape index: {}]
  %s5 = inlined_call_operand.vmem [shape: f32[4], index: 5, kind: input, shape index: {}]
  %s6 = inlined_call_operand.vmem [shape: f32[36], index: 6, kind: input, shape index: {}]
  %s7 = inlined_call_operand.<no memory space> [shape: f32[1], index: 7, kind: input, shape index: {}]
  %s8 = inlined_call_operand.<no memory space> [shape: f32[1], index: 8, kind: input, shape index: {}]
  %s9 = inlined_call_operand.hbm [shape: f32[2,1,288], index: 9, kind: output, shape index: {}]
  %s10 = sld [smem:[#allocation0]]
  $region93: #{tpu_custom_call.1} parent=0
    _
  %s12 = ssub.s32 1, %s10
  %s13 = scalar_select 0, %s12, %s10
  %14 = sst [smem:[#allocation3]] %s7
  %15 = sst [smem:[#allocation4]] %s8
  $region1: #{tpu_custom_call.1} parent=0
    #allocation5 [shape = 'u8[24576]{0}', space=vmem, size = 0x6000, scoped, tag = 'input window, operand 0']
    #allocation6 [shape = 's32[2]{0}', space=sflag, size = 0x8, scoped, tag = 'scoped memory for tpu_custom_call.1']
    #allocation7 [shape = 's32[2]{0}', space=sflag, size = 0x8, scoped, tag = 'scoped memory for tpu_custom_call.1']
    #allocation8 [shape = 's32[2]{0}', space=sflag, size = 0x8, scoped, tag = 'scoped memory for tpu_custom_call.1']
    #allocation9 [shape = 's32[2]{0}', space=sflag, size = 0x8, scoped, tag = 'scoped memory for tpu_custom_call.1']
    #allocation10 [shape = 'u8[1536]{0}', space=smem, size = 0x600, scoped, tag = 'input window, operand 2, single buffered']
    #allocation11 [shape = 'u8[512]{0}', space=smem, size = 0x200, scoped, tag = 'input window, operand 3, single buffered']
    #allocation12 [shape = 'u8[1024]{0}', space=smem, size = 0x400, scoped, tag = 'input window, operand 4, single buffered']
    #allocation13 [shape = 's32[1]{0}', space=sflag, size = 0x4, scoped, tag = 'scoped memory for tpu_custom_call.1']
    #allocation14 [shape = 'u8[512]{0}', space=smem, size = 0x200, scoped, tag = 'input window, operand 5, single buffered']
    #allocation15 [shape = 'u8[512]{0}', space=smem, size = 0x200, scoped, tag = 'input window, operand 6, single buffered']
    #allocation16 [shape = 's32[1]{0}', space=sflag, size = 0x4, scoped, tag = 'scoped memory for tpu_custom_call.1']
    #allocation17 [shape = 'u8[3072]{0}', space=vmem, size = 0xc00, scoped, tag = 'output window, operand 0']
    %16 = vsyncpa [#allocation6], 0
    %s17 = scalar_lea.sflag [#allocation6], 1
    %18 = vsyncpa %s17, 0
    %19 = vsyncpa [#allocation9], 0
    %20 = vsyncpa [#allocation8], 0
    %21 = vsyncpa [#allocation13], 0
    %22 = vsyncpa [#allocation16], 0
    %23 = vsyncpa [#allocation7], 0
    %s24 = scalar_lea.sflag [#allocation7], 1
    %25 = vsyncpa %s24, 0
    loop: start=0, step=1, limit=4
    $region2: #{tpu_custom_call.1} parent=1 // loop_pre_header
      _
    $region3: #{tpu_custom_call.1} parent=1 // loop_header
      %s27 = sphi 0, %s31
      %p28 = scmp.ge.s32.totalorder %s27, 4
      %s37 = sphi 0, %s39
      %s40 = sphi 0, %s37
      %s41 = sphi 0, %s40
      %s57 = sphi 0, %s41
      %s61 = sphi 0, %s61
      %s63 = sphi 0, %s61
      %s64 = sphi 0, %s63
      %s78 = sphi 0, %s64
      %s82 = sphi 0, %s82
      %s84 = sphi 0, %s82
      %s85 = sphi 0, %s84
      %s99 = sphi 0, %s85
      %s103 = sphi 0, %s103
      %s105 = sphi 0, %s103
      %s106 = sphi 0, %s105
      %s120 = sphi 0, %s106
      %s124 = sphi 0, %s124
      %s126 = sphi 0, %s124
      %s127 = sphi 0, %s126
      %s141 = sphi 0, %s127
      %s145 = sphi 0, %s145
      %s147 = sphi 0, %s145
      %s148 = sphi 0, %s147
      %s162 = sphi 0, %s148
      %s166 = sphi 0, %s166
      %s168 = sphi 0, %s166
      %s169 = sphi 0, %s168
      %s183 = sphi 0, %s169
      %s187 = sphi 0, %s187
      %s189 = sphi 0, %s187
      %s190 = sphi 0, %s189
      %s204 = sphi 0, %s190
      %s208 = sphi 0, %s208
      %s210 = sphi 0, %s208
      %s211 = sphi 0, %s210
      %s225 = sphi 0, %s211
      %s231 = sphi 0, %s233
      %s234 = sphi 0, %s231
      %s235 = sphi 0, %s234
      %s251 = sphi 0, %s235
    $region4: #{tpu_custom_call.1} parent=1 // loop_header_branch
      %30 = sbr.rel (%p28) target = $region8
    $region5: #{tpu_custom_call.1} parent=1 // loop_body
      %s32 = ssub.s32 %s27, 1
      %s33 = ssub.s32 %s27, 2
      %s34 = sadd.s32 %s27, 1
      %s35 = ssub.s32 %s27, %s34
      %p36 = scmp.eq.s32.totalorder %s35, 0
      %s38 = sadd.s32 %s37, 1
      %s39 = scalar_select %p36, %s37, %s38
      %p42 = pneg %p36
      %p43 = scmp.eq.s32.totalorder %s27, 1
      %p44 = por %p42, %p43
      %p45 = scmp.ne.s32.totalorder %s37, %s40
      %p46 = scmp.eq.s32.totalorder %s27, 0
      %p47 = por %p45, %p46
      %p48 = scmp.ne.s32.totalorder %s37, %s40
      %p49 = scmp.eq.s32.totalorder %s32, 1
      %p50 = por %p48, %p49
      %p51 = scmp.ne.s32.totalorder %s40, %s41
      %p52 = scmp.eq.s32.totalorder %s32, 0
      %p53 = por %p51, %p52
      %p54 = scmp.ne.s32.totalorder %s40, %s41
      %p55 = scmp.eq.s32.totalorder %s33, 1
      %p56 = por %p54, %p55
      %p58 = scmp.ne.s32.totalorder %s41, %s57
      %p59 = scmp.eq.s32.totalorder %s33, 0
      %p60 = por %p58, %p59
      %s62 = sadd.s32 %s61, 1
      %p65 = scmp.eq.s32.totalorder %s27, 1
      %p66 = scmp.ne.s32.totalorder %s61, %s63
      %p67 = scmp.eq.s32.totalorder %s27, 0
      %p68 = por %p66, %p67
      %p69 = scmp.ne.s32.totalorder %s61, %s63
      %p70 = scmp.eq.s32.totalorder %s32, 1
      %p71 = por %p69, %p70
      %p72 = scmp.ne.s32.totalorder %s63, %s64
      %p73 = scmp.eq.s32.totalorder %s32, 0
      %p74 = por %p72, %p73
      %p75 = scmp.ne.s32.totalorder %s63, %s64
      %p76 = scmp.eq.s32.totalorder %s33, 1
      %p77 = por %p75, %p76
      %p79 = scmp.ne.s32.totalorder %s64, %s78
      %p80 = scmp.eq.s32.totalorder %s33, 0
      %p81 = por %p79, %p80
      %s83 = sadd.s32 %s82, 1
      %p86 = scmp.eq.s32.totalorder %s27, 1
      %p87 = scmp.ne.s32.totalorder %s82, %s84
      %p88 = scmp.eq.s32.totalorder %s27, 0
      %p89 = por %p87, %p88
      %p90 = scmp.ne.s32.totalorder %s82, %s84
      %p91 = scmp.eq.s32.totalorder %s32, 1
      %p92 = por %p90, %p91
      %p93 = scmp.ne.s32.totalorder %s84, %s85
      %p94 = scmp.eq.s32.totalorder %s32, 0
      %p95 = por %p93, %p94
      %p96 = scmp.ne.s32.totalorder %s84, %s85
      %p97 = scmp.eq.s32.totalorder %s33, 1
      %p98 = por %p96, %p97
      %p100 = scmp.ne.s32.totalorder %s85, %s99
      %p101 = scmp.eq.s32.totalorder %s33, 0
      %p102 = por %p100, %p101
      %s104 = sadd.s32 %s103, 1
      %p107 = scmp.eq.s32.totalorder %s27, 1
      %p108 = scmp.ne.s32.totalorder %s103, %s105
      %p109 = scmp.eq.s32.totalorder %s27, 0
      %p110 = por %p108, %p109
      %p111 = scmp.ne.s32.totalorder %s103, %s105
      %p112 = scmp.eq.s32.totalorder %s32, 1
      %p113 = por %p111, %p112
      %p114 = scmp.ne.s32.totalorder %s105, %s106
      %p115 = scmp.eq.s32.totalorder %s32, 0
      %p116 = por %p114, %p115
      %p117 = scmp.ne.s32.totalorder %s105, %s106
      %p118 = scmp.eq.s32.totalorder %s33, 1
      %p119 = por %p117, %p118
      %p121 = scmp.ne.s32.totalorder %s106, %s120
      %p122 = scmp.eq.s32.totalorder %s33, 0
      %p123 = por %p121, %p122
      %s125 = sadd.s32 %s124, 1
      %p128 = scmp.eq.s32.totalorder %s27, 1
      %p129 = scmp.ne.s32.totalorder %s124, %s126
      %p130 = scmp.eq.s32.totalorder %s27, 0
      %p131 = por %p129, %p130
      %p132 = scmp.ne.s32.totalorder %s124, %s126
      %p133 = scmp.eq.s32.totalorder %s32, 1
      %p134 = por %p132, %p133
      %p135 = scmp.ne.s32.totalorder %s126, %s127
      %p136 = scmp.eq.s32.totalorder %s32, 0
      %p137 = por %p135, %p136
      %p138 = scmp.ne.s32.totalorder %s126, %s127
      %p139 = scmp.eq.s32.totalorder %s33, 1
      %p140 = por %p138, %p139
      %p142 = scmp.ne.s32.totalorder %s127, %s141
      %p143 = scmp.eq.s32.totalorder %s33, 0
      %p144 = por %p142, %p143
      %s146 = sadd.s32 %s145, 1
      %p149 = scmp.eq.s32.totalorder %s27, 1
      %p150 = scmp.ne.s32.totalorder %s145, %s147
      %p151 = scmp.eq.s32.totalorder %s27, 0
      %p152 = por %p150, %p151
      %p153 = scmp.ne.s32.totalorder %s145, %s147
      %p154 = scmp.eq.s32.totalorder %s32, 1
      %p155 = por %p153, %p154
      %p156 = scmp.ne.s32.totalorder %s147, %s148
      %p157 = scmp.eq.s32.totalorder %s32, 0
      %p158 = por %p156, %p157
      %p159 = scmp.ne.s32.totalorder %s147, %s148
      %p160 = scmp.eq.s32.totalorder %s33, 1
      %p161 = por %p159, %p160
      %p163 = scmp.ne.s32.totalorder %s148, %s162
      %p164 = scmp.eq.s32.totalorder %s33, 0
      %p165 = por %p163, %p164
      %s167 = sadd.s32 %s166, 1
      %p170 = scmp.eq.s32.totalorder %s27, 1
      %p171 = scmp.ne.s32.totalorder %s166, %s168
      %p172 = scmp.eq.s32.totalorder %s27, 0
      %p173 = por %p171, %p172
      %p174 = scmp.ne.s32.totalorder %s166, %s168
      %p175 = scmp.eq.s32.totalorder %s32, 1
      %p176 = por %p174, %p175
      %p177 = scmp.ne.s32.totalorder %s168, %s169
      %p178 = scmp.eq.s32.totalorder %s32, 0
      %p179 = por %p177, %p178
      %p180 = scmp.ne.s32.totalorder %s168, %s169
      %p181 = scmp.eq.s32.totalorder %s33, 1
      %p182 = por %p180, %p181
      %p184 = scmp.ne.s32.totalorder %s169, %s183
      %p185 = scmp.eq.s32.totalorder %s33, 0
      %p186 = por %p184, %p185
      %s188 = sadd.s32 %s187, 1
      %p191 = scmp.eq.s32.totalorder %s27, 1
      %p192 = scmp.ne.s32.totalorder %s187, %s189
      %p193 = scmp.eq.s32.totalorder %s27, 0
      %p194 = por %p192, %p193
      %p195 = scmp.ne.s32.totalorder %s187, %s189
      %p196 = scmp.eq.s32.totalorder %s32, 1
      %p197 = por %p195, %p196
      %p198 = scmp.ne.s32.totalorder %s189, %s190
      %p199 = scmp.eq.s32.totalorder %s32, 0
      %p200 = por %p198, %p199
      %p201 = scmp.ne.s32.totalorder %s189, %s190
      %p202 = scmp.eq.s32.totalorder %s33, 1
      %p203 = por %p201, %p202
      %p205 = scmp.ne.s32.totalorder %s190, %s204
      %p206 = scmp.eq.s32.totalorder %s33, 0
      %p207 = por %p205, %p206
      %s209 = sadd.s32 %s208, 1
      %p212 = scmp.eq.s32.totalorder %s27, 1
      %p213 = scmp.ne.s32.totalorder %s208, %s210
      %p214 = scmp.eq.s32.totalorder %s27, 0
      %p215 = por %p213, %p214
      %p216 = scmp.ne.s32.totalorder %s208, %s210
      %p217 = scmp.eq.s32.totalorder %s32, 1
      %p218 = por %p216, %p217
      %p219 = scmp.ne.s32.totalorder %s210, %s211
      %p220 = scmp.eq.s32.totalorder %s32, 0
      %p221 = por %p219, %p220
      %p222 = scmp.ne.s32.totalorder %s210, %s211
      %p223 = scmp.eq.s32.totalorder %s33, 1
      %p224 = por %p222, %p223
      %p226 = scmp.ne.s32.totalorder %s211, %s225
      %p227 = scmp.eq.s32.totalorder %s33, 0
      %p228 = por %p226, %p227
      %s229 = ssub.s32 %s27, %s34
      %p230 = scmp.eq.s32.totalorder %s229, 0
      %s232 = sadd.s32 %s231, 1
      %s233 = scalar_select %p230, %s231, %s232
      %p236 = pneg %p230
      %p237 = scmp.eq.s32.totalorder %s27, 1
      %p238 = por %p236, %p237
      %p239 = scmp.ne.s32.totalorder %s231, %s234
      %p240 = scmp.eq.s32.totalorder %s27, 0
      %p241 = por %p239, %p240
      %p242 = scmp.ne.s32.totalorder %s231, %s234
      %p243 = scmp.eq.s32.totalorder %s32, 1
      %p244 = por %p242, %p243
      %p245 = scmp.ne.s32.totalorder %s234, %s235
      %p246 = scmp.eq.s32.totalorder %s32, 0
      %p247 = por %p245, %p246
      %p248 = scmp.ne.s32.totalorder %s234, %s235
      %p249 = scmp.eq.s32.totalorder %s33, 1
      %p250 = por %p248, %p249
      %p252 = scmp.ne.s32.totalorder %s235, %s251
      %p253 = scmp.eq.s32.totalorder %s33, 0
      %p254 = por %p252, %p253
      %p255 = scmp.le.s32.totalorder 1, %s27
      %p256 = scmp.lt.s32.totalorder %s27, 3
      %p257 = pnand %p255, %p256
      %p258 = pneg %p257
      // Predicated region
      $region9: #{tpu_custom_call.1} parent=5 // pred_check
        _
      $region10: #{tpu_custom_call.1} parent=5 // pred_check_branch
        %260 = sbr.rel (%p257) target = $region12
      $region11: #{tpu_custom_call.1} parent=5 // pred_region
        %s261 = ssub.s32 %s27, 1
        // Predicated region
        $region13: #{tpu_custom_call.1} parent=11 // pred_check
          %p262 = pneg %p74
        $region14: #{tpu_custom_call.1} parent=11 // pred_check_branch
          %264 = sbr.rel (%p262) target = $region16
        $region15: #{tpu_custom_call.1} parent=11 // pred_region
          _
        $region16: #{tpu_custom_call.1} parent=11 // pred_fallthru
          _
        // Predicated region
        $region17: #{tpu_custom_call.1} parent=11 // pred_check
          %p265 = pneg %p95
        $region18: #{tpu_custom_call.1} parent=11 // pred_check_branch
          %267 = sbr.rel (%p265) target = $region20
        $region19: #{tpu_custom_call.1} parent=11 // pred_region
          %s269 = ssub.s32 48, 48
          %270 = vsyncadd [#allocation9], %s269
          %s272 = sshll.u32 %s2, 4
          %s273 = int_to_ptr.vmem [resolvable:$true] %s272
          %275 = dma.vmem_to_smem %s273, 48, [#allocation10], [#allocation9]
        $region20: #{tpu_custom_call.1} parent=11 // pred_fallthru
          _
        // Predicated region
        $region21: #{tpu_custom_call.1} parent=11 // pred_check
          %p276 = pneg %p116
        $region22: #{tpu_custom_call.1} parent=11 // pred_check_branch
          %278 = sbr.rel (%p276) target = $region24
        $region23: #{tpu_custom_call.1} parent=11 // pred_region
          %s280 = ssub.s32 16, 16
          %281 = vsyncadd [#allocation8], %s280
          %284 = dma.hbm_to_smem %s3, 16, [#allocation11], [#allocation8]
        $region24: #{tpu_custom_call.1} parent=11 // pred_fallthru
          _
        // Predicated region
        $region25: #{tpu_custom_call.1} parent=11 // pred_check
          %p285 = pneg %p137
        $region26: #{tpu_custom_call.1} parent=11 // pred_check_branch
          %287 = sbr.rel (%p285) target = $region28
        $region27: #{tpu_custom_call.1} parent=11 // pred_region
          %s289 = ssub.s32 32, 32
          %290 = vsyncadd [#allocation13], %s289
          %s292 = sshll.u32 %s4, 4
          %s293 = int_to_ptr.vmem [resolvable:$true] %s292
          %295 = dma.vmem_to_smem %s293, 32, [#allocation12], [#allocation13]
        $region28: #{tpu_custom_call.1} parent=11 // pred_fallthru
          _
        // Predicated region
        $region29: #{tpu_custom_call.1} parent=11 // pred_check
          %p296 = pneg %p158
        $region30: #{tpu_custom_call.1} parent=11 // pred_check_branch
          %298 = sbr.rel (%p296) target = $region32
        $region31: #{tpu_custom_call.1} parent=11 // pred_region
          %s300 = ssub.s32 16, 16
          %301 = vsyncadd [#allocation13], %s300
          %s303 = sshll.u32 %s5, 4
          %s304 = int_to_ptr.vmem [resolvable:$true] %s303
          %306 = dma.vmem_to_smem %s304, 16, [#allocation14], [#allocation13]
        $region32: #{tpu_custom_call.1} parent=11 // pred_fallthru
          _
        // Predicated region
        $region33: #{tpu_custom_call.1} parent=11 // pred_check
          %p307 = pneg %p179
        $region34: #{tpu_custom_call.1} parent=11 // pred_check_branch
          %309 = sbr.rel (%p307) target = $region36
        $region35: #{tpu_custom_call.1} parent=11 // pred_region
          %s311 = ssub.s32 16, 16
          %312 = vsyncadd [#allocation16], %s311
          %s314 = sshll.u32 %s6, 4
          %s315 = int_to_ptr.vmem [resolvable:$true] %s314
          %317 = dma.vmem_to_smem %s315, 16, [#allocation15], [#allocation16]
        $region36: #{tpu_custom_call.1} parent=11 // pred_fallthru
          _
        // Predicated region
        $region37: #{tpu_custom_call.1} parent=11 // pred_check
          %p318 = pneg %p200
        $region38: #{tpu_custom_call.1} parent=11 // pred_check_branch
          %320 = sbr.rel (%p318) target = $region40
        $region39: #{tpu_custom_call.1} parent=11 // pred_region
          _
        $region40: #{tpu_custom_call.1} parent=11 // pred_fallthru
          _
        // Predicated region
        $region41: #{tpu_custom_call.1} parent=11 // pred_check
          %p321 = pneg %p221
        $region42: #{tpu_custom_call.1} parent=11 // pred_check_branch
          %323 = sbr.rel (%p321) target = $region44
        $region43: #{tpu_custom_call.1} parent=11 // pred_region
          _
        $region44: #{tpu_custom_call.1} parent=11 // pred_fallthru
          _
      $region12: #{tpu_custom_call.1} parent=5 // pred_fallthru
        _
      %p324 = scmp.lt.s32.totalorder %s27, 2
      // Predicated region
      $region45: #{tpu_custom_call.1} parent=5 // pred_check
        %p325 = pneg %p324
      $region46: #{tpu_custom_call.1} parent=5 // pred_check_branch
        %327 = sbr.rel (%p325) target = $region48
      $region47: #{tpu_custom_call.1} parent=5 // pred_region
        // Predicated region
        $region49: #{tpu_custom_call.1} parent=47 // pred_check
          %p328 = pneg %p47
        $region50: #{tpu_custom_call.1} parent=47 // pred_check_branch
          %330 = sbr.rel (%p328) target = $region52
        $region51: #{tpu_custom_call.1} parent=47 // pred_region
          %s331 = sand.u32 %s37, 1
          %s332 = scalar_lea.sflag [#allocation6], %s331
          %s333 = sand.u32 %s37, 1
          %s334 = smul.addr %s333, 24
          %s335 = scalar_lea.vmem [#allocation5], %s334
          %s337 = ssub.s32 384, 384
          %338 = vsyncadd %s332, %s337
          %s339 = smul.addr %s27, 3
          %s340 = smul.addr %s339, 128
          %s341 = scalar_lea.hbm %s0, %s340
          %s343 = sshll.u32 %s335, 4
          %s344 = int_to_ptr.vmem [resolvable:$true] %s343
          %346 = dma.hbm_to_vmem [thread:$0]  %s341, 384, %s344, %s332
        $region52: #{tpu_custom_call.1} parent=47 // pred_fallthru
          _
      $region48: #{tpu_custom_call.1} parent=5 // pred_fallthru
        _
      %p347 = scmp.le.s32.totalorder 1, %s27
      %p348 = scmp.lt.s32.totalorder %s27, 3
      %p349 = pnand %p347, %p348
      %p350 = pneg %p349
      // Predicated region
      $region53: #{tpu_custom_call.1} parent=5 // pred_check
        _
      $region54: #{tpu_custom_call.1} parent=5 // pred_check_branch
        %352 = sbr.rel (%p349) target = $region56
      $region55: #{tpu_custom_call.1} parent=5 // pred_region
        %s353 = ssub.s32 %s27, 1
        %s354 = sand.u32 %s40, 1
        %s355 = scalar_lea.sflag [#allocation6], %s354
        %s356 = sand.u32 %s40, 1
        %s357 = smul.addr %s356, 24
        %s358 = scalar_lea.vmem [#allocation5], %s357
        // Predicated region
        $region57: #{tpu_custom_call.1} parent=55 // pred_check
          %p359 = pneg %p53
        $region58: #{tpu_custom_call.1} parent=55 // pred_check_branch
          %361 = sbr.rel (%p359) target = $region60
        $region59: #{tpu_custom_call.1} parent=55 // pred_region
          %362 = dma.done %s355, 384
        $region60: #{tpu_custom_call.1} parent=55 // pred_fallthru
          _
        // Predicated region
        $region61: #{tpu_custom_call.1} parent=55 // pred_check
          %p363 = pneg %p95
        $region62: #{tpu_custom_call.1} parent=55 // pred_check_branch
          %365 = sbr.rel (%p363) target = $region64
        $region63: #{tpu_custom_call.1} parent=55 // pred_region
          %366 = dma.done [#allocation9], 48
        $region64: #{tpu_custom_call.1} parent=55 // pred_fallthru
          _
        // Predicated region
        $region65: #{tpu_custom_call.1} parent=55 // pred_check
          %p367 = pneg %p116
        $region66: #{tpu_custom_call.1} parent=55 // pred_check_branch
          %369 = sbr.rel (%p367) target = $region68
        $region67: #{tpu_custom_call.1} parent=55 // pred_region
          %370 = dma.done [#allocation8], 16
        $region68: #{tpu_custom_call.1} parent=55 // pred_fallthru
          _
        // Predicated region
        $region69: #{tpu_custom_call.1} parent=55 // pred_check
          %p371 = pneg %p137
        $region70: #{tpu_custom_call.1} parent=55 // pred_check_branch
          %373 = sbr.rel (%p371) target = $region72
        $region71: #{tpu_custom_call.1} parent=55 // pred_region
          %374 = dma.done [#allocation13], 32
        $region72: #{tpu_custom_call.1} parent=55 // pred_fallthru
          _
        // Predicated region
        $region73: #{tpu_custom_call.1} parent=55 // pred_check
          %p375 = pneg %p158
        $region74: #{tpu_custom_call.1} parent=55 // pred_check_branch
          %377 = sbr.rel (%p375) target = $region76
        $region75: #{tpu_custom_call.1} parent=55 // pred_region
          %378 = dma.done [#allocation13], 16
        $region76: #{tpu_custom_call.1} parent=55 // pred_fallthru
          _
        // Predicated region
        $region77: #{tpu_custom_call.1} parent=55 // pred_check
          %p379 = pneg %p179
        $region78: #{tpu_custom_call.1} parent=55 // pred_check_branch
          %381 = sbr.rel (%p379) target = $region80
        $region79: #{tpu_custom_call.1} parent=55 // pred_region
          %382 = dma.done [#allocation16], 16
        $region80: #{tpu_custom_call.1} parent=55 // pred_fallthru
          _
        %383 = sfence
        %s384 = sand.u32 %s40, 1
        %s385 = scalar_lea.sflag [#allocation6], %s384
        %s386 = sand.u32 %s40, 1
        %s387 = smul.addr %s386, 24
        %s388 = scalar_lea.vmem [#allocation5], %s387
        %p389 = pneg %p53
        %p390 = pneg %p50
        %p391 = pneg %p74
        %p392 = pneg %p71
        %p393 = pneg %p95
        %p394 = pneg %p92
        %p395 = pneg %p116
        %p396 = pneg %p113
        %p397 = pneg %p137
        %p398 = pneg %p134
        %p399 = pneg %p158
        %p400 = pneg %p155
        %p401 = pneg %p179
        %p402 = pneg %p176
        %p403 = pneg %p200
        %p404 = pneg %p197
        %p405 = pneg %p221
        %p406 = pneg %p218
        %p407 = pneg %p247
        %p408 = pneg %p244
        %s409 = sand.u32 %s234, 1
        %s410 = scalar_lea.sflag [#allocation7], %s409
        %s411 = sand.u32 %s234, 1
        %s412 = smul.addr %s411, 3
        %s413 = scalar_lea.vmem [#allocation17], %s412
        %v414 = vld [vmem:[%s1] sm:$0x7]
        %vm415 = vcmask 150528
        %416 = vst.msk [vmem:[#allocation2] sm:$0xf] %vm415, 0.0
        %vm417 = vcmask 568728
        %418 = vst.msk [vmem:[#allocation2 + $0x8] sm:$0xf] %vm417, 0.0
        %v419 = vld [vmem:[%s358] ss:$8 sm:$0x7]
        %s420 = sld [smem:[#allocation10]]
        %v421 = vstv %s420
        %v422 = vmul.f32 %v419, %v421
        %v423 = vadd.f32 %v422, 0.0
        %s424 = sld [smem:[#allocation10 + $0x1]]
        %v425 = vstv %s424
        %v426 = vmul.f32 %v419, %v425
        %v427 = vadd.f32 %v426, 0.0
        %s428 = sld [smem:[#allocation10 + $0x2]]
        %v429 = vstv %s428
        %v430 = vmul.f32 %v419, %v429
        %v431 = vadd.f32 %v430, 0.0
        %s432 = sld [smem:[#allocation10 + $0x3]]
        %v433 = vstv %s432
        %v434 = vmul.f32 %v419, %v433
        %v435 = vadd.f32 %v434, 0.0
        %s436 = scalar_lea.vmem %s358, 1 [#allocation5]
        %v437 = vld [vmem:[%s436] ss:$8 sm:$0x7]
        %s438 = sld [smem:[#allocation10 + $0x4]]
        %v439 = vstv %s438
        %v440 = vmul.f32 %v437, %v439
        %v441 = vadd.f32 %v423, %v440
        %s442 = sld [smem:[#allocation10 + $0x5]]
        %v443 = vstv %s442
        %v444 = vmul.f32 %v437, %v443
        %v445 = vadd.f32 %v427, %v444
        %s446 = sld [smem:[#allocation10 + $0x6]]
        %v447 = vstv %s446
        %v448 = vmul.f32 %v437, %v447
        %v449 = vadd.f32 %v431, %v448
        %s450 = sld [smem:[#allocation10 + $0x7]]
        %v451 = vstv %s450
        %v452 = vmul.f32 %v437, %v451
        %v453 = vadd.f32 %v435, %v452
        %s454 = scalar_lea.vmem %s358, 2 [#allocation5]
        %v455 = vld [vmem:[%s454] ss:$8 sm:$0x7]
        %s456 = sld [smem:[#allocation10 + $0x8]]
        %v457 = vstv %s456
        %v458 = vmul.f32 %v455, %v457
        %v459 = vadd.f32 %v441, %v458
        %s460 = sld [smem:[#allocation10 + $0x9]]
        %v461 = vstv %s460
        %v462 = vmul.f32 %v455, %v461
        %v463 = vadd.f32 %v445, %v462
        %s464 = sld [smem:[#allocation10 + $0xa]]
        %v465 = vstv %s464
        %v466 = vmul.f32 %v455, %v465
        %v467 = vadd.f32 %v449, %v466
        %s468 = sld [smem:[#allocation10 + $0xb]]
        %v469 = vstv %s468
        %v470 = vmul.f32 %v455, %v469
        %v471 = vadd.f32 %v453, %v470
        %s472 = scalar_lea.vmem %s358, 3 [#allocation5]
        %v473 = vld [vmem:[%s472] ss:$8 sm:$0x7]
        %s474 = sld [smem:[#allocation10 + $0xc]]
        %v475 = vstv %s474
        %v476 = vmul.f32 %v473, %v475
        %v477 = vadd.f32 %v459, %v476
        %s478 = sld [smem:[#allocation10 + $0xd]]
        %v479 = vstv %s478
        %v480 = vmul.f32 %v473, %v479
        %v481 = vadd.f32 %v463, %v480
        %s482 = sld [smem:[#allocation10 + $0xe]]
        %v483 = vstv %s482
        %v484 = vmul.f32 %v473, %v483
        %v485 = vadd.f32 %v467, %v484
        %s486 = sld [smem:[#allocation10 + $0xf]]
        %v487 = vstv %s486
        %v488 = vmul.f32 %v473, %v487
        %v489 = vadd.f32 %v471, %v488
        %s490 = scalar_lea.vmem %s358, 4 [#allocation5]
        %v491 = vld [vmem:[%s490] ss:$8 sm:$0x7]
        %s492 = sld [smem:[#allocation10 + $0x10]]
        %v493 = vstv %s492
        %v494 = vmul.f32 %v491, %v493
        %v495 = vadd.f32 %v477, %v494
        %s496 = sld [smem:[#allocation10 + $0x11]]
        %v497 = vstv %s496
        %v498 = vmul.f32 %v491, %v497
        %v499 = vadd.f32 %v481, %v498
        %s500 = sld [smem:[#allocation10 + $0x12]]
        %v501 = vstv %s500
        %v502 = vmul.f32 %v491, %v501
        %v503 = vadd.f32 %v485, %v502
        %s504 = sld [smem:[#allocation10 + $0x13]]
        %v505 = vstv %s504
        %v506 = vmul.f32 %v491, %v505
        %v507 = vadd.f32 %v489, %v506
        %s508 = scalar_lea.vmem %s358, 5 [#allocation5]
        %v509 = vld [vmem:[%s508] ss:$8 sm:$0x7]
        %s510 = sld [smem:[#allocation10 + $0x14]]
        %v511 = vstv %s510
        %v512 = vmul.f32 %v509, %v511
        %v513 = vadd.f32 %v495, %v512
        %s514 = sld [smem:[#allocation10 + $0x15]]
        %v515 = vstv %s514
        %v516 = vmul.f32 %v509, %v515
        %v517 = vadd.f32 %v499, %v516
        %s518 = sld [smem:[#allocation10 + $0x16]]
        %v519 = vstv %s518
        %v520 = vmul.f32 %v509, %v519
        %v521 = vadd.f32 %v503, %v520
        %s522 = sld [smem:[#allocation10 + $0x17]]
        %v523 = vstv %s522
        %v524 = vmul.f32 %v509, %v523
        %v525 = vadd.f32 %v507, %v524
        %s526 = scalar_lea.vmem %s358, 6 [#allocation5]
        %v527 = vld [vmem:[%s526] ss:$8 sm:$0x7]
        %s528 = sld [smem:[#allocation10 + $0x18]]
        %v529 = vstv %s528
        %v530 = vmul.f32 %v527, %v529
        %v531 = vadd.f32 %v513, %v530
        %s532 = sld [smem:[#allocation10 + $0x19]]
        %v533 = vstv %s532
        %v534 = vmul.f32 %v527, %v533
        %v535 = vadd.f32 %v517, %v534
        %s536 = sld [smem:[#allocation10 + $0x1a]]
        %v537 = vstv %s536
        %v538 = vmul.f32 %v527, %v537
        %v539 = vadd.f32 %v521, %v538
        %s540 = sld [smem:[#allocation10 + $0x1b]]
        %v541 = vstv %s540
        %v542 = vmul.f32 %v527, %v541
        %v543 = vadd.f32 %v525, %v542
        %s544 = scalar_lea.vmem %s358, 7 [#allocation5]
        %v545 = vld [vmem:[%s544] ss:$8 sm:$0x7]
        %s546 = sld [smem:[#allocation10 + $0x1c]]
        %v547 = vstv %s546
        %v548 = vmul.f32 %v545, %v547
        %v549 = vadd.f32 %v531, %v548
        %s550 = sld [smem:[#allocation10 + $0x1d]]
        %v551 = vstv %s550
        %v552 = vmul.f32 %v545, %v551
        %v553 = vadd.f32 %v535, %v552
        %s554 = sld [smem:[#allocation10 + $0x1e]]
        %v555 = vstv %s554
        %v556 = vmul.f32 %v545, %v555
        %v557 = vadd.f32 %v539, %v556
        %s558 = sld [smem:[#allocation10 + $0x1f]]
        %v559 = vstv %s558
        %v560 = vmul.f32 %v545, %v559
        %v561 = vadd.f32 %v543, %v560
        %s562 = sld [smem:[#allocation10 + $0x20]]
        %v563 = vstv %s562
        %v564 = vmul.f32 %v419, %v563
        %566 = vrot.lane.b32.xlu0 %v564, 127
        %v567 = vpop.permute.xlu0 %566
        %v568 = vrot.slane %v567, 1
        %vm569 = vcmask 1039360
        %v570 = vsel %vm569, %v567, %v568
        %v572 = vadd.f32 %v549, %v570
        %s573 = sld [smem:[#allocation10 + $0x21]]
        %v574 = vstv %s573
        %v575 = vmul.f32 %v419, %v574
        %577 = vrot.lane.b32.xlu0 %v575, 127
        %v578 = vpop.permute.xlu0 %577
        %v579 = vrot.slane %v578, 1
        %v580 = vsel %vm569, %v578, %v579
        %v582 = vadd.f32 %v553, %v580
        %s583 = sld [smem:[#allocation10 + $0x22]]
        %v584 = vstv %s583
        %v585 = vmul.f32 %v419, %v584
        %587 = vrot.lane.b32.xlu0 %v585, 127
        %v588 = vpop.permute.xlu0 %587
        %v589 = vrot.slane %v588, 1
        %v590 = vsel %vm569, %v588, %v589
        %v592 = vadd.f32 %v557, %v590
        %s593 = sld [smem:[#allocation10 + $0x23]]
        %v594 = vstv %s593
        %v595 = vmul.f32 %v419, %v594
        %597 = vrot.lane.b32.xlu0 %v595, 127
        %v598 = vpop.permute.xlu0 %597
        %v599 = vrot.slane %v598, 1
        %v600 = vsel %vm569, %v598, %v599
        %v602 = vadd.f32 %v561, %v600
        %s603 = sld [smem:[#allocation10 + $0x24]]
        %v604 = vstv %s603
        %v605 = vmul.f32 %v437, %v604
        %607 = vrot.lane.b32.xlu0 %v605, 127
        %v608 = vpop.permute.xlu0 %607
        %v609 = vrot.slane %v608, 1
        %v610 = vsel %vm569, %v608, %v609
        %v612 = vadd.f32 %v572, %v610
        %s613 = sld [smem:[#allocation10 + $0x25]]
        %v614 = vstv %s613
        %v615 = vmul.f32 %v437, %v614
        %617 = vrot.lane.b32.xlu0 %v615, 127
        %v618 = vpop.permute.xlu0 %617
        %v619 = vrot.slane %v618, 1
        %v620 = vsel %vm569, %v618, %v619
        %v622 = vadd.f32 %v582, %v620
        %s623 = sld [smem:[#allocation10 + $0x26]]
        %v624 = vstv %s623
        %v625 = vmul.f32 %v437, %v624
        %627 = vrot.lane.b32.xlu0 %v625, 127
        %v628 = vpop.permute.xlu0 %627
        %v629 = vrot.slane %v628, 1
        %v630 = vsel %vm569, %v628, %v629
        %v632 = vadd.f32 %v592, %v630
        %s633 = sld [smem:[#allocation10 + $0x27]]
        %v634 = vstv %s633
        %v635 = vmul.f32 %v437, %v634
        %637 = vrot.lane.b32.xlu0 %v635, 127
        %v638 = vpop.permute.xlu0 %637
        %v639 = vrot.slane %v638, 1
        %v640 = vsel %vm569, %v638, %v639
        %v642 = vadd.f32 %v602, %v640
        %s643 = sld [smem:[#allocation10 + $0x28]]
        %v644 = vstv %s643
        %v645 = vmul.f32 %v455, %v644
        %647 = vrot.lane.b32.xlu0 %v645, 127
        %v648 = vpop.permute.xlu0 %647
        %v649 = vrot.slane %v648, 1
        %v650 = vsel %vm569, %v648, %v649
        %v652 = vadd.f32 %v612, %v650
        %s653 = sld [smem:[#allocation10 + $0x29]]
        %v654 = vstv %s653
        %v655 = vmul.f32 %v455, %v654
        %657 = vrot.lane.b32.xlu0 %v655, 127
        %v658 = vpop.permute.xlu0 %657
        %v659 = vrot.slane %v658, 1
        %v660 = vsel %vm569, %v658, %v659
        %v662 = vadd.f32 %v622, %v660
        %s663 = sld [smem:[#allocation10 + $0x2a]]
        %v664 = vstv %s663
        %v665 = vmul.f32 %v455, %v664
        %667 = vrot.lane.b32.xlu0 %v665, 127
        %v668 = vpop.permute.xlu0 %667
        %v669 = vrot.slane %v668, 1
        %v670 = vsel %vm569, %v668, %v669
        %v672 = vadd.f32 %v632, %v670
        %s673 = sld [smem:[#allocation10 + $0x2b]]
        %v674 = vstv %s673
        %v675 = vmul.f32 %v455, %v674
        %677 = vrot.lane.b32.xlu0 %v675, 127
        %v678 = vpop.permute.xlu0 %677
        %v679 = vrot.slane %v678, 1
        %v680 = vsel %vm569, %v678, %v679
        %v682 = vadd.f32 %v642, %v680
        %s683 = sld [smem:[#allocation10 + $0x2c]]
        %v684 = vstv %s683
        %v685 = vmul.f32 %v473, %v684
        %687 = vrot.lane.b32.xlu0 %v685, 127
        %v688 = vpop.permute.xlu0 %687
        %v689 = vrot.slane %v688, 1
        %v690 = vsel %vm569, %v688, %v689
        %v692 = vadd.f32 %v652, %v690
        %s693 = sld [smem:[#allocation10 + $0x2d]]
        %v694 = vstv %s693
        %v695 = vmul.f32 %v473, %v694
        %697 = vrot.lane.b32.xlu0 %v695, 127
        %v698 = vpop.permute.xlu0 %697
        %v699 = vrot.slane %v698, 1
        %v700 = vsel %vm569, %v698, %v699
        %v702 = vadd.f32 %v662, %v700
        %s703 = sld [smem:[#allocation10 + $0x2e]]
        %v704 = vstv %s703
        %v705 = vmul.f32 %v473, %v704
        %707 = vrot.lane.b32.xlu0 %v705, 127
        %v708 = vpop.permute.xlu0 %707
        %v709 = vrot.slane %v708, 1
        %v710 = vsel %vm569, %v708, %v709
        %v712 = vadd.f32 %v672, %v710
        %s713 = sld [smem:[#allocation10 + $0x2f]]
        %v714 = vstv %s713
        %v715 = vmul.f32 %v473, %v714
        %717 = vrot.lane.b32.xlu0 %v715, 127
        %v718 = vpop.permute.xlu0 %717
        %v719 = vrot.slane %v718, 1
        %v720 = vsel %vm569, %v718, %v719
        %v722 = vadd.f32 %v682, %v720
        %s723 = sld [smem:[#allocation10 + $0x30]]
        %v724 = vstv %s723
        %v725 = vmul.f32 %v491, %v724
        %727 = vrot.lane.b32.xlu0 %v725, 127
        %v728 = vpop.permute.xlu0 %727
        %v729 = vrot.slane %v728, 1
        %v730 = vsel %vm569, %v728, %v729
        %v732 = vadd.f32 %v692, %v730
        %s733 = sld [smem:[#allocation10 + $0x31]]
        %v734 = vstv %s733
        %v735 = vmul.f32 %v491, %v734
        %737 = vrot.lane.b32.xlu0 %v735, 127
        %v738 = vpop.permute.xlu0 %737
        %v739 = vrot.slane %v738, 1
        %v740 = vsel %vm569, %v738, %v739
        %v742 = vadd.f32 %v702, %v740
        %s743 = sld [smem:[#allocation10 + $0x32]]
        %v744 = vstv %s743
        %v745 = vmul.f32 %v491, %v744
        %747 = vrot.lane.b32.xlu0 %v745, 127
        %v748 = vpop.permute.xlu0 %747
        %v749 = vrot.slane %v748, 1
        %v750 = vsel %vm569, %v748, %v749
        %v752 = vadd.f32 %v712, %v750
        %s753 = sld [smem:[#allocation10 + $0x33]]
        %v754 = vstv %s753
        %v755 = vmul.f32 %v491, %v754
        %757 = vrot.lane.b32.xlu0 %v755, 127
        %v758 = vpop.permute.xlu0 %757
        %v759 = vrot.slane %v758, 1
        %v760 = vsel %vm569, %v758, %v759
        %v762 = vadd.f32 %v722, %v760
        %s763 = sld [smem:[#allocation10 + $0x34]]
        %v764 = vstv %s763
        %v765 = vmul.f32 %v509, %v764
        %767 = vrot.lane.b32.xlu0 %v765, 127
        %v768 = vpop.permute.xlu0 %767
        %v769 = vrot.slane %v768, 1
        %v770 = vsel %vm569, %v768, %v769
        %v772 = vadd.f32 %v732, %v770
        %s773 = sld [smem:[#allocation10 + $0x35]]
        %v774 = vstv %s773
        %v775 = vmul.f32 %v509, %v774
        %777 = vrot.lane.b32.xlu0 %v775, 127
        %v778 = vpop.permute.xlu0 %777
        %v779 = vrot.slane %v778, 1
        %v780 = vsel %vm569, %v778, %v779
        %v782 = vadd.f32 %v742, %v780
        %s783 = sld [smem:[#allocation10 + $0x36]]
        %v784 = vstv %s783
        %v785 = vmul.f32 %v509, %v784
        %787 = vrot.lane.b32.xlu0 %v785, 127
        %v788 = vpop.permute.xlu0 %787
        %v789 = vrot.slane %v788, 1
        %v790 = vsel %vm569, %v788, %v789
        %v792 = vadd.f32 %v752, %v790
        %s793 = sld [smem:[#allocation10 + $0x37]]
        %v794 = vstv %s793
        %v795 = vmul.f32 %v509, %v794
        %797 = vrot.lane.b32.xlu0 %v795, 127
        %v798 = vpop.permute.xlu0 %797
        %v799 = vrot.slane %v798, 1
        %v800 = vsel %vm569, %v798, %v799
        %v802 = vadd.f32 %v762, %v800
        %s803 = sld [smem:[#allocation10 + $0x38]]
        %v804 = vstv %s803
        %v805 = vmul.f32 %v527, %v804
        %807 = vrot.lane.b32.xlu0 %v805, 127
        %v808 = vpop.permute.xlu0 %807
        %v809 = vrot.slane %v808, 1
        %v810 = vsel %vm569, %v808, %v809
        %v812 = vadd.f32 %v772, %v810
        %s813 = sld [smem:[#allocation10 + $0x39]]
        %v814 = vstv %s813
        %v815 = vmul.f32 %v527, %v814
        %817 = vrot.lane.b32.xlu0 %v815, 127
        %v818 = vpop.permute.xlu0 %817
        %v819 = vrot.slane %v818, 1
        %v820 = vsel %vm569, %v818, %v819
        %v822 = vadd.f32 %v782, %v820
        %s823 = sld [smem:[#allocation10 + $0x3a]]
        %v824 = vstv %s823
        %v825 = vmul.f32 %v527, %v824
        %827 = vrot.lane.b32.xlu0 %v825, 127
        %v828 = vpop.permute.xlu0 %827
        %v829 = vrot.slane %v828, 1
        %v830 = vsel %vm569, %v828, %v829
        %v832 = vadd.f32 %v792, %v830
        %s833 = sld [smem:[#allocation10 + $0x3b]]
        %v834 = vstv %s833
        %v835 = vmul.f32 %v527, %v834
        %837 = vrot.lane.b32.xlu0 %v835, 127
        %v838 = vpop.permute.xlu0 %837
        %v839 = vrot.slane %v838, 1
        %v840 = vsel %vm569, %v838, %v839
        %v842 = vadd.f32 %v802, %v840
        %s843 = sld [smem:[#allocation10 + $0x3c]]
        %v844 = vstv %s843
        %v845 = vmul.f32 %v545, %v844
        %847 = vrot.lane.b32.xlu0 %v845, 127
        %v848 = vpop.permute.xlu0 %847
        %v849 = vrot.slane %v848, 1
        %v850 = vsel %vm569, %v848, %v849
        %v852 = vadd.f32 %v812, %v850
        %s853 = sld [smem:[#allocation10 + $0x3d]]
        %v854 = vstv %s853
        %v855 = vmul.f32 %v545, %v854
        %857 = vrot.lane.b32.xlu0 %v855, 127
        %v858 = vpop.permute.xlu0 %857
        %v859 = vrot.slane %v858, 1
        %v860 = vsel %vm569, %v858, %v859
        %v862 = vadd.f32 %v822, %v860
        %s863 = sld [smem:[#allocation10 + $0x3e]]
        %v864 = vstv %s863
        %v865 = vmul.f32 %v545, %v864
        %867 = vrot.lane.b32.xlu0 %v865, 127
        %v868 = vpop.permute.xlu0 %867
        %v869 = vrot.slane %v868, 1
        %v870 = vsel %vm569, %v868, %v869
        %v872 = vadd.f32 %v832, %v870
        %s873 = sld [smem:[#allocation10 + $0x3f]]
        %v874 = vstv %s873
        %v875 = vmul.f32 %v545, %v874
        %877 = vrot.lane.b32.xlu0 %v875, 127
        %v878 = vpop.permute.xlu0 %877
        %v879 = vrot.slane %v878, 1
        %v880 = vsel %vm569, %v878, %v879
        %v882 = vadd.f32 %v842, %v880
        %s883 = sld [smem:[#allocation10 + $0x40]]
        %v884 = vstv %s883
        %v885 = vmul.f32 %v419, %v884
        %887 = vrot.lane.b32.xlu0 %v885, 126
        %v888 = vpop.permute.xlu0 %887
        %v889 = vrot.slane %v888, 1
        %vm890 = vcmask 1031168
        %v891 = vsel %vm890, %v888, %v889
        %v893 = vadd.f32 %v852, %v891
        %s894 = sld [smem:[#allocation10 + $0x41]]
        %v895 = vstv %s894
        %v896 = vmul.f32 %v419, %v895
        %898 = vrot.lane.b32.xlu0 %v896, 126
        %v899 = vpop.permute.xlu0 %898
        %v900 = vrot.slane %v899, 1
        %v901 = vsel %vm890, %v899, %v900
        %v903 = vadd.f32 %v862, %v901
        %s904 = sld [smem:[#allocation10 + $0x42]]
        %v905 = vstv %s904
        %v906 = vmul.f32 %v419, %v905
        %908 = vrot.lane.b32.xlu0 %v906, 126
        %v909 = vpop.permute.xlu0 %908
        %v910 = vrot.slane %v909, 1
        %v911 = vsel %vm890, %v909, %v910
        %v913 = vadd.f32 %v872, %v911
        %s914 = sld [smem:[#allocation10 + $0x43]]
        %v915 = vstv %s914
        %v916 = vmul.f32 %v419, %v915
        %918 = vrot.lane.b32.xlu0 %v916, 126
        %v919 = vpop.permute.xlu0 %918
        %v920 = vrot.slane %v919, 1
        %v921 = vsel %vm890, %v919, %v920
        %v923 = vadd.f32 %v882, %v921
        %s924 = sld [smem:[#allocation10 + $0x44]]
        %v925 = vstv %s924
        %v926 = vmul.f32 %v437, %v925
        %928 = vrot.lane.b32.xlu0 %v926, 126
        %v929 = vpop.permute.xlu0 %928
        %v930 = vrot.slane %v929, 1
        %v931 = vsel %vm890, %v929, %v930
        %v933 = vadd.f32 %v893, %v931
        %s934 = sld [smem:[#allocation10 + $0x45]]
        %v935 = vstv %s934
        %v936 = vmul.f32 %v437, %v935
        %938 = vrot.lane.b32.xlu0 %v936, 126
        %v939 = vpop.permute.xlu0 %938
        %v940 = vrot.slane %v939, 1
        %v941 = vsel %vm890, %v939, %v940
        %v943 = vadd.f32 %v903, %v941
        %s944 = sld [smem:[#allocation10 + $0x46]]
        %v945 = vstv %s944
        %v946 = vmul.f32 %v437, %v945
        %948 = vrot.lane.b32.xlu0 %v946, 126
        %v949 = vpop.permute.xlu0 %948
        %v950 = vrot.slane %v949, 1
        %v951 = vsel %vm890, %v949, %v950
        %v953 = vadd.f32 %v913, %v951
        %s954 = sld [smem:[#allocation10 + $0x47]]
        %v955 = vstv %s954
        %v956 = vmul.f32 %v437, %v955
        %958 = vrot.lane.b32.xlu0 %v956, 126
        %v959 = vpop.permute.xlu0 %958
        %v960 = vrot.slane %v959, 1
        %v961 = vsel %vm890, %v959, %v960
        %v963 = vadd.f32 %v923, %v961
        %s964 = sld [smem:[#allocation10 + $0x48]]
        %v965 = vstv %s964
        %v966 = vmul.f32 %v455, %v965
        %968 = vrot.lane.b32.xlu0 %v966, 126
        %v969 = vpop.permute.xlu0 %968
        %v970 = vrot.slane %v969, 1
        %v971 = vsel %vm890, %v969, %v970
        %v973 = vadd.f32 %v933, %v971
        %s974 = sld [smem:[#allocation10 + $0x49]]
        %v975 = vstv %s974
        %v976 = vmul.f32 %v455, %v975
        %978 = vrot.lane.b32.xlu0 %v976, 126
        %v979 = vpop.permute.xlu0 %978
        %v980 = vrot.slane %v979, 1
        %v981 = vsel %vm890, %v979, %v980
        %v983 = vadd.f32 %v943, %v981
        %s984 = sld [smem:[#allocation10 + $0x4a]]
        %v985 = vstv %s984
        %v986 = vmul.f32 %v455, %v985
        %988 = vrot.lane.b32.xlu0 %v986, 126
        %v989 = vpop.permute.xlu0 %988
        %v990 = vrot.slane %v989, 1
        %v991 = vsel %vm890, %v989, %v990
        %v993 = vadd.f32 %v953, %v991
        %s994 = sld [smem:[#allocation10 + $0x4b]]
        %v995 = vstv %s994
        %v996 = vmul.f32 %v455, %v995
        %998 = vrot.lane.b32.xlu0 %v996, 126
        %v999 = vpop.permute.xlu0 %998
        %v1000 = vrot.slane %v999, 1
        %v1001 = vsel %vm890, %v999, %v1000
        %v1003 = vadd.f32 %v963, %v1001
        %s1004 = sld [smem:[#allocation10 + $0x4c]]
        %v1005 = vstv %s1004
        %v1006 = vmul.f32 %v473, %v1005
        %1008 = vrot.lane.b32.xlu0 %v1006, 126
        %v1009 = vpop.permute.xlu0 %1008
        %v1010 = vrot.slane %v1009, 1
        %v1011 = vsel %vm890, %v1009, %v1010
        %v1013 = vadd.f32 %v973, %v1011
        %s1014 = sld [smem:[#allocation10 + $0x4d]]
        %v1015 = vstv %s1014
        %v1016 = vmul.f32 %v473, %v1015
        %1018 = vrot.lane.b32.xlu0 %v1016, 126
        %v1019 = vpop.permute.xlu0 %1018
        %v1020 = vrot.slane %v1019, 1
        %v1021 = vsel %vm890, %v1019, %v1020
        %v1023 = vadd.f32 %v983, %v1021
        %s1024 = sld [smem:[#allocation10 + $0x4e]]
        %v1025 = vstv %s1024
        %v1026 = vmul.f32 %v473, %v1025
        %1028 = vrot.lane.b32.xlu0 %v1026, 126
        %v1029 = vpop.permute.xlu0 %1028
        %v1030 = vrot.slane %v1029, 1
        %v1031 = vsel %vm890, %v1029, %v1030
        %v1033 = vadd.f32 %v993, %v1031
        %s1034 = sld [smem:[#allocation10 + $0x4f]]
        %v1035 = vstv %s1034
        %v1036 = vmul.f32 %v473, %v1035
        %1038 = vrot.lane.b32.xlu0 %v1036, 126
        %v1039 = vpop.permute.xlu0 %1038
        %v1040 = vrot.slane %v1039, 1
        %v1041 = vsel %vm890, %v1039, %v1040
        %v1043 = vadd.f32 %v1003, %v1041
        %s1044 = sld [smem:[#allocation10 + $0x50]]
        %v1045 = vstv %s1044
        %v1046 = vmul.f32 %v491, %v1045
        %1048 = vrot.lane.b32.xlu0 %v1046, 126
        %v1049 = vpop.permute.xlu0 %1048
        %v1050 = vrot.slane %v1049, 1
        %v1051 = vsel %vm890, %v1049, %v1050
        %v1053 = vadd.f32 %v1013, %v1051
        %s1054 = sld [smem:[#allocation10 + $0x51]]
        %v1055 = vstv %s1054
        %v1056 = vmul.f32 %v491, %v1055
        %1058 = vrot.lane.b32.xlu0 %v1056, 126
        %v1059 = vpop.permute.xlu0 %1058
        %v1060 = vrot.slane %v1059, 1
        %v1061 = vsel %vm890, %v1059, %v1060
        %v1063 = vadd.f32 %v1023, %v1061
        %s1064 = sld [smem:[#allocation10 + $0x52]]
        %v1065 = vstv %s1064
        %v1066 = vmul.f32 %v491, %v1065
        %1068 = vrot.lane.b32.xlu0 %v1066, 126
        %v1069 = vpop.permute.xlu0 %1068
        %v1070 = vrot.slane %v1069, 1
        %v1071 = vsel %vm890, %v1069, %v1070
        %v1073 = vadd.f32 %v1033, %v1071
        %s1074 = sld [smem:[#allocation10 + $0x53]]
        %v1075 = vstv %s1074
        %v1076 = vmul.f32 %v491, %v1075
        %1078 = vrot.lane.b32.xlu0 %v1076, 126
        %v1079 = vpop.permute.xlu0 %1078
        %v1080 = vrot.slane %v1079, 1
        %v1081 = vsel %vm890, %v1079, %v1080
        %v1083 = vadd.f32 %v1043, %v1081
        %s1084 = sld [smem:[#allocation10 + $0x54]]
        %v1085 = vstv %s1084
        %v1086 = vmul.f32 %v509, %v1085
        %1088 = vrot.lane.b32.xlu0 %v1086, 126
        %v1089 = vpop.permute.xlu0 %1088
        %v1090 = vrot.slane %v1089, 1
        %v1091 = vsel %vm890, %v1089, %v1090
        %v1093 = vadd.f32 %v1053, %v1091
        %s1094 = sld [smem:[#allocation10 + $0x55]]
        %v1095 = vstv %s1094
        %v1096 = vmul.f32 %v509, %v1095
        %1098 = vrot.lane.b32.xlu0 %v1096, 126
        %v1099 = vpop.permute.xlu0 %1098
        %v1100 = vrot.slane %v1099, 1
        %v1101 = vsel %vm890, %v1099, %v1100
        %v1103 = vadd.f32 %v1063, %v1101
        %s1104 = sld [smem:[#allocation10 + $0x56]]
        %v1105 = vstv %s1104
        %v1106 = vmul.f32 %v509, %v1105
        %1108 = vrot.lane.b32.xlu0 %v1106, 126
        %v1109 = vpop.permute.xlu0 %1108
        %v1110 = vrot.slane %v1109, 1
        %v1111 = vsel %vm890, %v1109, %v1110
        %v1113 = vadd.f32 %v1073, %v1111
        %s1114 = sld [smem:[#allocation10 + $0x57]]
        %v1115 = vstv %s1114
        %v1116 = vmul.f32 %v509, %v1115
        %1118 = vrot.lane.b32.xlu0 %v1116, 126
        %v1119 = vpop.permute.xlu0 %1118
        %v1120 = vrot.slane %v1119, 1
        %v1121 = vsel %vm890, %v1119, %v1120
        %v1123 = vadd.f32 %v1083, %v1121
        %s1124 = sld [smem:[#allocation10 + $0x58]]
        %v1125 = vstv %s1124
        %v1126 = vmul.f32 %v527, %v1125
        %1128 = vrot.lane.b32.xlu0 %v1126, 126
        %v1129 = vpop.permute.xlu0 %1128
        %v1130 = vrot.slane %v1129, 1
        %v1131 = vsel %vm890, %v1129, %v1130
        %v1133 = vadd.f32 %v1093, %v1131
        %s1134 = sld [smem:[#allocation10 + $0x59]]
        %v1135 = vstv %s1134
        %v1136 = vmul.f32 %v527, %v1135
        %1138 = vrot.lane.b32.xlu0 %v1136, 126
        %v1139 = vpop.permute.xlu0 %1138
        %v1140 = vrot.slane %v1139, 1
        %v1141 = vsel %vm890, %v1139, %v1140
        %v1143 = vadd.f32 %v1103, %v1141
        %s1144 = sld [smem:[#allocation10 + $0x5a]]
        %v1145 = vstv %s1144
        %v1146 = vmul.f32 %v527, %v1145
        %1148 = vrot.lane.b32.xlu0 %v1146, 126
        %v1149 = vpop.permute.xlu0 %1148
        %v1150 = vrot.slane %v1149, 1
        %v1151 = vsel %vm890, %v1149, %v1150
        %v1153 = vadd.f32 %v1113, %v1151
        %s1154 = sld [smem:[#allocation10 + $0x5b]]
        %v1155 = vstv %s1154
        %v1156 = vmul.f32 %v527, %v1155
        %1158 = vrot.lane.b32.xlu0 %v1156, 126
        %v1159 = vpop.permute.xlu0 %1158
        %v1160 = vrot.slane %v1159, 1
        %v1161 = vsel %vm890, %v1159, %v1160
        %v1163 = vadd.f32 %v1123, %v1161
        %s1164 = sld [smem:[#allocation10 + $0x5c]]
        %v1165 = vstv %s1164
        %v1166 = vmul.f32 %v545, %v1165
        %1168 = vrot.lane.b32.xlu0 %v1166, 126
        %v1169 = vpop.permute.xlu0 %1168
        %v1170 = vrot.slane %v1169, 1
        %v1171 = vsel %vm890, %v1169, %v1170
        %v1173 = vadd.f32 %v1133, %v1171
        %s1174 = sld [smem:[#allocation10 + $0x5d]]
        %v1175 = vstv %s1174
        %v1176 = vmul.f32 %v545, %v1175
        %1178 = vrot.lane.b32.xlu0 %v1176, 126
        %v1179 = vpop.permute.xlu0 %1178
        %v1180 = vrot.slane %v1179, 1
        %v1181 = vsel %vm890, %v1179, %v1180
        %v1183 = vadd.f32 %v1143, %v1181
        %s1184 = sld [smem:[#allocation10 + $0x5e]]
        %v1185 = vstv %s1184
        %v1186 = vmul.f32 %v545, %v1185
        %1188 = vrot.lane.b32.xlu0 %v1186, 126
        %v1189 = vpop.permute.xlu0 %1188
        %v1190 = vrot.slane %v1189, 1
        %v1191 = vsel %vm890, %v1189, %v1190
        %v1193 = vadd.f32 %v1153, %v1191
        %s1194 = sld [smem:[#allocation10 + $0x5f]]
        %v1195 = vstv %s1194
        %v1196 = vmul.f32 %v545, %v1195
        %1198 = vrot.lane.b32.xlu0 %v1196, 126
        %v1199 = vpop.permute.xlu0 %1198
        %v1200 = vrot.slane %v1199, 1
        %v1201 = vsel %vm890, %v1199, %v1200
        %v1203 = vadd.f32 %v1163, %v1201
        %s1204 = sld [smem:[#allocation10 + $0x60]]
        %v1205 = vstv %s1204
        %v1206 = vmul.f32 %v419, %v1205
        %1208 = vrot.lane.b32.xlu0 %v1206, 110
        %v1209 = vpop.permute.xlu0 %1208
        %v1210 = vrot.slane %v1209, 1
        %vm1211 = vcmask 900096
        %v1212 = vsel %vm1211, %v1209, %v1210
        %v1214 = vadd.f32 %v1173, %v1212
        %s1215 = sld [smem:[#allocation10 + $0x61]]
        %v1216 = vstv %s1215
        %v1217 = vmul.f32 %v419, %v1216
        %1219 = vrot.lane.b32.xlu0 %v1217, 110
        %v1220 = vpop.permute.xlu0 %1219
        %v1221 = vrot.slane %v1220, 1
        %v1222 = vsel %vm1211, %v1220, %v1221
        %v1224 = vadd.f32 %v1183, %v1222
        %s1225 = sld [smem:[#allocation10 + $0x62]]
        %v1226 = vstv %s1225
        %v1227 = vmul.f32 %v419, %v1226
        %1229 = vrot.lane.b32.xlu0 %v1227, 110
        %v1230 = vpop.permute.xlu0 %1229
        %v1231 = vrot.slane %v1230, 1
        %v1232 = vsel %vm1211, %v1230, %v1231
        %v1234 = vadd.f32 %v1193, %v1232
        %s1235 = sld [smem:[#allocation10 + $0x63]]
        %v1236 = vstv %s1235
        %v1237 = vmul.f32 %v419, %v1236
        %1239 = vrot.lane.b32.xlu0 %v1237, 110
        %v1240 = vpop.permute.xlu0 %1239
        %v1241 = vrot.slane %v1240, 1
        %v1242 = vsel %vm1211, %v1240, %v1241
        %v1244 = vadd.f32 %v1203, %v1242
        %s1245 = sld [smem:[#allocation10 + $0x64]]
        %v1246 = vstv %s1245
        %v1247 = vmul.f32 %v437, %v1246
        %1249 = vrot.lane.b32.xlu0 %v1247, 110
        %v1250 = vpop.permute.xlu0 %1249
        %v1251 = vrot.slane %v1250, 1
        %v1252 = vsel %vm1211, %v1250, %v1251
        %v1254 = vadd.f32 %v1214, %v1252
        %s1255 = sld [smem:[#allocation10 + $0x65]]
        %v1256 = vstv %s1255
        %v1257 = vmul.f32 %v437, %v1256
        %1259 = vrot.lane.b32.xlu0 %v1257, 110
        %v1260 = vpop.permute.xlu0 %1259
        %v1261 = vrot.slane %v1260, 1
        %v1262 = vsel %vm1211, %v1260, %v1261
        %v1264 = vadd.f32 %v1224, %v1262
        %s1265 = sld [smem:[#allocation10 + $0x66]]
        %v1266 = vstv %s1265
        %v1267 = vmul.f32 %v437, %v1266
        %1269 = vrot.lane.b32.xlu0 %v1267, 110
        %v1270 = vpop.permute.xlu0 %1269
        %v1271 = vrot.slane %v1270, 1
        %v1272 = vsel %vm1211, %v1270, %v1271
        %v1274 = vadd.f32 %v1234, %v1272
        %s1275 = sld [smem:[#allocation10 + $0x67]]
        %v1276 = vstv %s1275
        %v1277 = vmul.f32 %v437, %v1276
        %1279 = vrot.lane.b32.xlu0 %v1277, 110
        %v1280 = vpop.permute.xlu0 %1279
        %v1281 = vrot.slane %v1280, 1
        %v1282 = vsel %vm1211, %v1280, %v1281
        %v1284 = vadd.f32 %v1244, %v1282
        %s1285 = sld [smem:[#allocation10 + $0x68]]
        %v1286 = vstv %s1285
        %v1287 = vmul.f32 %v455, %v1286
        %1289 = vrot.lane.b32.xlu0 %v1287, 110
        %v1290 = vpop.permute.xlu0 %1289
        %v1291 = vrot.slane %v1290, 1
        %v1292 = vsel %vm1211, %v1290, %v1291
        %v1294 = vadd.f32 %v1254, %v1292
        %s1295 = sld [smem:[#allocation10 + $0x69]]
        %v1296 = vstv %s1295
        %v1297 = vmul.f32 %v455, %v1296
        %1299 = vrot.lane.b32.xlu0 %v1297, 110
        %v1300 = vpop.permute.xlu0 %1299
        %v1301 = vrot.slane %v1300, 1
        %v1302 = vsel %vm1211, %v1300, %v1301
        %v1304 = vadd.f32 %v1264, %v1302
        %s1305 = sld [smem:[#allocation10 + $0x6a]]
        %v1306 = vstv %s1305
        %v1307 = vmul.f32 %v455, %v1306
        %1309 = vrot.lane.b32.xlu0 %v1307, 110
        %v1310 = vpop.permute.xlu0 %1309
        %v1311 = vrot.slane %v1310, 1
        %v1312 = vsel %vm1211, %v1310, %v1311
        %v1314 = vadd.f32 %v1274, %v1312
        %s1315 = sld [smem:[#allocation10 + $0x6b]]
        %v1316 = vstv %s1315
        %v1317 = vmul.f32 %v455, %v1316
        %1319 = vrot.lane.b32.xlu0 %v1317, 110
        %v1320 = vpop.permute.xlu0 %1319
        %v1321 = vrot.slane %v1320, 1
        %v1322 = vsel %vm1211, %v1320, %v1321
        %v1324 = vadd.f32 %v1284, %v1322
        %s1325 = sld [smem:[#allocation10 + $0x6c]]
        %v1326 = vstv %s1325
        %v1327 = vmul.f32 %v473, %v1326
        %1329 = vrot.lane.b32.xlu0 %v1327, 110
        %v1330 = vpop.permute.xlu0 %1329
        %v1331 = vrot.slane %v1330, 1
        %v1332 = vsel %vm1211, %v1330, %v1331
        %v1334 = vadd.f32 %v1294, %v1332
        %s1335 = sld [smem:[#allocation10 + $0x6d]]
        %v1336 = vstv %s1335
        %v1337 = vmul.f32 %v473, %v1336
        %1339 = vrot.lane.b32.xlu0 %v1337, 110
        %v1340 = vpop.permute.xlu0 %1339
        %v1341 = vrot.slane %v1340, 1
        %v1342 = vsel %vm1211, %v1340, %v1341
        %v1344 = vadd.f32 %v1304, %v1342
        %s1345 = sld [smem:[#allocation10 + $0x6e]]
        %v1346 = vstv %s1345
        %v1347 = vmul.f32 %v473, %v1346
        %1349 = vrot.lane.b32.xlu0 %v1347, 110
        %v1350 = vpop.permute.xlu0 %1349
        %v1351 = vrot.slane %v1350, 1
        %v1352 = vsel %vm1211, %v1350, %v1351
        %v1354 = vadd.f32 %v1314, %v1352
        %s1355 = sld [smem:[#allocation10 + $0x6f]]
        %v1356 = vstv %s1355
        %v1357 = vmul.f32 %v473, %v1356
        %1359 = vrot.lane.b32.xlu0 %v1357, 110
        %v1360 = vpop.permute.xlu0 %1359
        %v1361 = vrot.slane %v1360, 1
        %v1362 = vsel %vm1211, %v1360, %v1361
        %v1364 = vadd.f32 %v1324, %v1362
        %s1365 = sld [smem:[#allocation10 + $0x70]]
        %v1366 = vstv %s1365
        %v1367 = vmul.f32 %v491, %v1366
        %1369 = vrot.lane.b32.xlu0 %v1367, 110
        %v1370 = vpop.permute.xlu0 %1369
        %v1371 = vrot.slane %v1370, 1
        %v1372 = vsel %vm1211, %v1370, %v1371
        %v1374 = vadd.f32 %v1334, %v1372
        %s1375 = sld [smem:[#allocation10 + $0x71]]
        %v1376 = vstv %s1375
        %v1377 = vmul.f32 %v491, %v1376
        %1379 = vrot.lane.b32.xlu0 %v1377, 110
        %v1380 = vpop.permute.xlu0 %1379
        %v1381 = vrot.slane %v1380, 1
        %v1382 = vsel %vm1211, %v1380, %v1381
        %v1384 = vadd.f32 %v1344, %v1382
        %s1385 = sld [smem:[#allocation10 + $0x72]]
        %v1386 = vstv %s1385
        %v1387 = vmul.f32 %v491, %v1386
        %1389 = vrot.lane.b32.xlu0 %v1387, 110
        %v1390 = vpop.permute.xlu0 %1389
        %v1391 = vrot.slane %v1390, 1
        %v1392 = vsel %vm1211, %v1390, %v1391
        %v1394 = vadd.f32 %v1354, %v1392
        %s1395 = sld [smem:[#allocation10 + $0x73]]
        %v1396 = vstv %s1395
        %v1397 = vmul.f32 %v491, %v1396
        %1399 = vrot.lane.b32.xlu0 %v1397, 110
        %v1400 = vpop.permute.xlu0 %1399
        %v1401 = vrot.slane %v1400, 1
        %v1402 = vsel %vm1211, %v1400, %v1401
        %v1404 = vadd.f32 %v1364, %v1402
        %s1405 = sld [smem:[#allocation10 + $0x74]]
        %v1406 = vstv %s1405
        %v1407 = vmul.f32 %v509, %v1406
        %1409 = vrot.lane.b32.xlu0 %v1407, 110
        %v1410 = vpop.permute.xlu0 %1409
        %v1411 = vrot.slane %v1410, 1
        %v1412 = vsel %vm1211, %v1410, %v1411
        %v1414 = vadd.f32 %v1374, %v1412
        %s1415 = sld [smem:[#allocation10 + $0x75]]
        %v1416 = vstv %s1415
        %v1417 = vmul.f32 %v509, %v1416
        %1419 = vrot.lane.b32.xlu0 %v1417, 110
        %v1420 = vpop.permute.xlu0 %1419
        %v1421 = vrot.slane %v1420, 1
        %v1422 = vsel %vm1211, %v1420, %v1421
        %v1424 = vadd.f32 %v1384, %v1422
        %s1425 = sld [smem:[#allocation10 + $0x76]]
        %v1426 = vstv %s1425
        %v1427 = vmul.f32 %v509, %v1426
        %1429 = vrot.lane.b32.xlu0 %v1427, 110
        %v1430 = vpop.permute.xlu0 %1429
        %v1431 = vrot.slane %v1430, 1
        %v1432 = vsel %vm1211, %v1430, %v1431
        %v1434 = vadd.f32 %v1394, %v1432
        %s1435 = sld [smem:[#allocation10 + $0x77]]
        %v1436 = vstv %s1435
        %v1437 = vmul.f32 %v509, %v1436
        %1439 = vrot.lane.b32.xlu0 %v1437, 110
        %v1440 = vpop.permute.xlu0 %1439
        %v1441 = vrot.slane %v1440, 1
        %v1442 = vsel %vm1211, %v1440, %v1441
        %v1444 = vadd.f32 %v1404, %v1442
        %s1445 = sld [smem:[#allocation10 + $0x78]]
        %v1446 = vstv %s1445
        %v1447 = vmul.f32 %v527, %v1446
        %1449 = vrot.lane.b32.xlu0 %v1447, 110
        %v1450 = vpop.permute.xlu0 %1449
        %v1451 = vrot.slane %v1450, 1
        %v1452 = vsel %vm1211, %v1450, %v1451
        %v1454 = vadd.f32 %v1414, %v1452
        %s1455 = sld [smem:[#allocation10 + $0x79]]
        %v1456 = vstv %s1455
        %v1457 = vmul.f32 %v527, %v1456
        %1459 = vrot.lane.b32.xlu0 %v1457, 110
        %v1460 = vpop.permute.xlu0 %1459
        %v1461 = vrot.slane %v1460, 1
        %v1462 = vsel %vm1211, %v1460, %v1461
        %v1464 = vadd.f32 %v1424, %v1462
        %s1465 = sld [smem:[#allocation10 + $0x7a]]
        %v1466 = vstv %s1465
        %v1467 = vmul.f32 %v527, %v1466
        %1469 = vrot.lane.b32.xlu0 %v1467, 110
        %v1470 = vpop.permute.xlu0 %1469
        %v1471 = vrot.slane %v1470, 1
        %v1472 = vsel %vm1211, %v1470, %v1471
        %v1474 = vadd.f32 %v1434, %v1472
        %s1475 = sld [smem:[#allocation10 + $0x7b]]
        %v1476 = vstv %s1475
        %v1477 = vmul.f32 %v527, %v1476
        %1479 = vrot.lane.b32.xlu0 %v1477, 110
        %v1480 = vpop.permute.xlu0 %1479
        %v1481 = vrot.slane %v1480, 1
        %v1482 = vsel %vm1211, %v1480, %v1481
        %v1484 = vadd.f32 %v1444, %v1482
        %s1485 = sld [smem:[#allocation10 + $0x7c]]
        %v1486 = vstv %s1485
        %v1487 = vmul.f32 %v545, %v1486
        %1489 = vrot.lane.b32.xlu0 %v1487, 110
        %v1490 = vpop.permute.xlu0 %1489
        %v1491 = vrot.slane %v1490, 1
        %v1492 = vsel %vm1211, %v1490, %v1491
        %v1494 = vadd.f32 %v1454, %v1492
        %s1495 = sld [smem:[#allocation10 + $0x7d]]
        %v1496 = vstv %s1495
        %v1497 = vmul.f32 %v545, %v1496
        %1499 = vrot.lane.b32.xlu0 %v1497, 110
        %v1500 = vpop.permute.xlu0 %1499
        %v1501 = vrot.slane %v1500, 1
        %v1502 = vsel %vm1211, %v1500, %v1501
        %v1504 = vadd.f32 %v1464, %v1502
        %s1505 = sld [smem:[#allocation10 + $0x7e]]
        %v1506 = vstv %s1505
        %v1507 = vmul.f32 %v545, %v1506
        %1509 = vrot.lane.b32.xlu0 %v1507, 110
        %v1510 = vpop.permute.xlu0 %1509
        %v1511 = vrot.slane %v1510, 1
        %v1512 = vsel %vm1211, %v1510, %v1511
        %v1514 = vadd.f32 %v1474, %v1512
        %s1515 = sld [smem:[#allocation10 + $0x7f]]
        %v1516 = vstv %s1515
        %v1517 = vmul.f32 %v545, %v1516
        %1519 = vrot.lane.b32.xlu0 %v1517, 110
        %v1520 = vpop.permute.xlu0 %1519
        %v1521 = vrot.slane %v1520, 1
        %v1522 = vsel %vm1211, %v1520, %v1521
        %v1524 = vadd.f32 %v1484, %v1522
        %s1525 = sld [smem:[#allocation10 + $0x80]]
        %v1526 = vstv %s1525
        %v1527 = vmul.f32 %v419, %v1526
        %1529 = vrot.lane.b32.xlu0 %v1527, 109
        %v1530 = vpop.permute.xlu0 %1529
        %v1531 = vrot.slane %v1530, 1
        %vm1532 = vcmask 891904
        %v1533 = vsel %vm1532, %v1530, %v1531
        %v1535 = vadd.f32 %v1494, %v1533
        %s1536 = sld [smem:[#allocation10 + $0x81]]
        %v1537 = vstv %s1536
        %v1538 = vmul.f32 %v419, %v1537
        %1540 = vrot.lane.b32.xlu0 %v1538, 109
        %v1541 = vpop.permute.xlu0 %1540
        %v1542 = vrot.slane %v1541, 1
        %v1543 = vsel %vm1532, %v1541, %v1542
        %v1545 = vadd.f32 %v1504, %v1543
        %s1546 = sld [smem:[#allocation10 + $0x82]]
        %v1547 = vstv %s1546
        %v1548 = vmul.f32 %v419, %v1547
        %1550 = vrot.lane.b32.xlu0 %v1548, 109
        %v1551 = vpop.permute.xlu0 %1550
        %v1552 = vrot.slane %v1551, 1
        %v1553 = vsel %vm1532, %v1551, %v1552
        %v1555 = vadd.f32 %v1514, %v1553
        %s1556 = sld [smem:[#allocation10 + $0x83]]
        %v1557 = vstv %s1556
        %v1558 = vmul.f32 %v419, %v1557
        %1560 = vrot.lane.b32.xlu0 %v1558, 109
        %v1561 = vpop.permute.xlu0 %1560
        %v1562 = vrot.slane %v1561, 1
        %v1563 = vsel %vm1532, %v1561, %v1562
        %v1565 = vadd.f32 %v1524, %v1563
        %s1566 = sld [smem:[#allocation10 + $0x84]]
        %v1567 = vstv %s1566
        %v1568 = vmul.f32 %v437, %v1567
        %1570 = vrot.lane.b32.xlu0 %v1568, 109
        %v1571 = vpop.permute.xlu0 %1570
        %v1572 = vrot.slane %v1571, 1
        %v1573 = vsel %vm1532, %v1571, %v1572
        %v1575 = vadd.f32 %v1535, %v1573
        %s1576 = sld [smem:[#allocation10 + $0x85]]
        %v1577 = vstv %s1576
        %v1578 = vmul.f32 %v437, %v1577
        %1580 = vrot.lane.b32.xlu0 %v1578, 109
        %v1581 = vpop.permute.xlu0 %1580
        %v1582 = vrot.slane %v1581, 1
        %v1583 = vsel %vm1532, %v1581, %v1582
        %v1585 = vadd.f32 %v1545, %v1583
        %s1586 = sld [smem:[#allocation10 + $0x86]]
        %v1587 = vstv %s1586
        %v1588 = vmul.f32 %v437, %v1587
        %1590 = vrot.lane.b32.xlu0 %v1588, 109
        %v1591 = vpop.permute.xlu0 %1590
        %v1592 = vrot.slane %v1591, 1
        %v1593 = vsel %vm1532, %v1591, %v1592
        %v1595 = vadd.f32 %v1555, %v1593
        %s1596 = sld [smem:[#allocation10 + $0x87]]
        %v1597 = vstv %s1596
        %v1598 = vmul.f32 %v437, %v1597
        %1600 = vrot.lane.b32.xlu0 %v1598, 109
        %v1601 = vpop.permute.xlu0 %1600
        %v1602 = vrot.slane %v1601, 1
        %v1603 = vsel %vm1532, %v1601, %v1602
        %v1605 = vadd.f32 %v1565, %v1603
        %s1606 = sld [smem:[#allocation10 + $0x88]]
        %v1607 = vstv %s1606
        %v1608 = vmul.f32 %v455, %v1607
        %1610 = vrot.lane.b32.xlu0 %v1608, 109
        %v1611 = vpop.permute.xlu0 %1610
        %v1612 = vrot.slane %v1611, 1
        %v1613 = vsel %vm1532, %v1611, %v1612
        %v1615 = vadd.f32 %v1575, %v1613
        %s1616 = sld [smem:[#allocation10 + $0x89]]
        %v1617 = vstv %s1616
        %v1618 = vmul.f32 %v455, %v1617
        %1620 = vrot.lane.b32.xlu0 %v1618, 109
        %v1621 = vpop.permute.xlu0 %1620
        %v1622 = vrot.slane %v1621, 1
        %v1623 = vsel %vm1532, %v1621, %v1622
        %v1625 = vadd.f32 %v1585, %v1623
        %s1626 = sld [smem:[#allocation10 + $0x8a]]
        %v1627 = vstv %s1626
        %v1628 = vmul.f32 %v455, %v1627
        %1630 = vrot.lane.b32.xlu0 %v1628, 109
        %v1631 = vpop.permute.xlu0 %1630
        %v1632 = vrot.slane %v1631, 1
        %v1633 = vsel %vm1532, %v1631, %v1632
        %v1635 = vadd.f32 %v1595, %v1633
        %s1636 = sld [smem:[#allocation10 + $0x8b]]
        %v1637 = vstv %s1636
        %v1638 = vmul.f32 %v455, %v1637
        %1640 = vrot.lane.b32.xlu0 %v1638, 109
        %v1641 = vpop.permute.xlu0 %1640
        %v1642 = vrot.slane %v1641, 1
        %v1643 = vsel %vm1532, %v1641, %v1642
        %v1645 = vadd.f32 %v1605, %v1643
        %s1646 = sld [smem:[#allocation10 + $0x8c]]
        %v1647 = vstv %s1646
        %v1648 = vmul.f32 %v473, %v1647
        %1650 = vrot.lane.b32.xlu0 %v1648, 109
        %v1651 = vpop.permute.xlu0 %1650
        %v1652 = vrot.slane %v1651, 1
        %v1653 = vsel %vm1532, %v1651, %v1652
        %v1655 = vadd.f32 %v1615, %v1653
        %s1656 = sld [smem:[#allocation10 + $0x8d]]
        %v1657 = vstv %s1656
        %v1658 = vmul.f32 %v473, %v1657
        %1660 = vrot.lane.b32.xlu0 %v1658, 109
        %v1661 = vpop.permute.xlu0 %1660
        %v1662 = vrot.slane %v1661, 1
        %v1663 = vsel %vm1532, %v1661, %v1662
        %v1665 = vadd.f32 %v1625, %v1663
        %s1666 = sld [smem:[#allocation10 + $0x8e]]
        %v1667 = vstv %s1666
        %v1668 = vmul.f32 %v473, %v1667
        %1670 = vrot.lane.b32.xlu0 %v1668, 109
        %v1671 = vpop.permute.xlu0 %1670
        %v1672 = vrot.slane %v1671, 1
        %v1673 = vsel %vm1532, %v1671, %v1672
        %v1675 = vadd.f32 %v1635, %v1673
        %s1676 = sld [smem:[#allocation10 + $0x8f]]
        %v1677 = vstv %s1676
        %v1678 = vmul.f32 %v473, %v1677
        %1680 = vrot.lane.b32.xlu0 %v1678, 109
        %v1681 = vpop.permute.xlu0 %1680
        %v1682 = vrot.slane %v1681, 1
        %v1683 = vsel %vm1532, %v1681, %v1682
        %v1685 = vadd.f32 %v1645, %v1683
        %s1686 = sld [smem:[#allocation10 + $0x90]]
        %v1687 = vstv %s1686
        %v1688 = vmul.f32 %v491, %v1687
        %1690 = vrot.lane.b32.xlu0 %v1688, 109
        %v1691 = vpop.permute.xlu0 %1690
        %v1692 = vrot.slane %v1691, 1
        %v1693 = vsel %vm1532, %v1691, %v1692
        %v1695 = vadd.f32 %v1655, %v1693
        %s1696 = sld [smem:[#allocation10 + $0x91]]
        %v1697 = vstv %s1696
        %v1698 = vmul.f32 %v491, %v1697
        %1700 = vrot.lane.b32.xlu0 %v1698, 109
        %v1701 = vpop.permute.xlu0 %1700
        %v1702 = vrot.slane %v1701, 1
        %v1703 = vsel %vm1532, %v1701, %v1702
        %v1705 = vadd.f32 %v1665, %v1703
        %s1706 = sld [smem:[#allocation10 + $0x92]]
        %v1707 = vstv %s1706
        %v1708 = vmul.f32 %v491, %v1707
        %1710 = vrot.lane.b32.xlu0 %v1708, 109
        %v1711 = vpop.permute.xlu0 %1710
        %v1712 = vrot.slane %v1711, 1
        %v1713 = vsel %vm1532, %v1711, %v1712
        %v1715 = vadd.f32 %v1675, %v1713
        %s1716 = sld [smem:[#allocation10 + $0x93]]
        %v1717 = vstv %s1716
        %v1718 = vmul.f32 %v491, %v1717
        %1720 = vrot.lane.b32.xlu0 %v1718, 109
        %v1721 = vpop.permute.xlu0 %1720
        %v1722 = vrot.slane %v1721, 1
        %v1723 = vsel %vm1532, %v1721, %v1722
        %v1725 = vadd.f32 %v1685, %v1723
        %s1726 = sld [smem:[#allocation10 + $0x94]]
        %v1727 = vstv %s1726
        %v1728 = vmul.f32 %v509, %v1727
        %1730 = vrot.lane.b32.xlu0 %v1728, 109
        %v1731 = vpop.permute.xlu0 %1730
        %v1732 = vrot.slane %v1731, 1
        %v1733 = vsel %vm1532, %v1731, %v1732
        %v1735 = vadd.f32 %v1695, %v1733
        %s1736 = sld [smem:[#allocation10 + $0x95]]
        %v1737 = vstv %s1736
        %v1738 = vmul.f32 %v509, %v1737
        %1740 = vrot.lane.b32.xlu0 %v1738, 109
        %v1741 = vpop.permute.xlu0 %1740
        %v1742 = vrot.slane %v1741, 1
        %v1743 = vsel %vm1532, %v1741, %v1742
        %v1745 = vadd.f32 %v1705, %v1743
        %s1746 = sld [smem:[#allocation10 + $0x96]]
        %v1747 = vstv %s1746
        %v1748 = vmul.f32 %v509, %v1747
        %1750 = vrot.lane.b32.xlu0 %v1748, 109
        %v1751 = vpop.permute.xlu0 %1750
        %v1752 = vrot.slane %v1751, 1
        %v1753 = vsel %vm1532, %v1751, %v1752
        %v1755 = vadd.f32 %v1715, %v1753
        %s1756 = sld [smem:[#allocation10 + $0x97]]
        %v1757 = vstv %s1756
        %v1758 = vmul.f32 %v509, %v1757
        %1760 = vrot.lane.b32.xlu0 %v1758, 109
        %v1761 = vpop.permute.xlu0 %1760
        %v1762 = vrot.slane %v1761, 1
        %v1763 = vsel %vm1532, %v1761, %v1762
        %v1765 = vadd.f32 %v1725, %v1763
        %s1766 = sld [smem:[#allocation10 + $0x98]]
        %v1767 = vstv %s1766
        %v1768 = vmul.f32 %v527, %v1767
        %1770 = vrot.lane.b32.xlu0 %v1768, 109
        %v1771 = vpop.permute.xlu0 %1770
        %v1772 = vrot.slane %v1771, 1
        %v1773 = vsel %vm1532, %v1771, %v1772
        %v1775 = vadd.f32 %v1735, %v1773
        %s1776 = sld [smem:[#allocation10 + $0x99]]
        %v1777 = vstv %s1776
        %v1778 = vmul.f32 %v527, %v1777
        %1780 = vrot.lane.b32.xlu0 %v1778, 109
        %v1781 = vpop.permute.xlu0 %1780
        %v1782 = vrot.slane %v1781, 1
        %v1783 = vsel %vm1532, %v1781, %v1782
        %v1785 = vadd.f32 %v1745, %v1783
        %s1786 = sld [smem:[#allocation10 + $0x9a]]
        %v1787 = vstv %s1786
        %v1788 = vmul.f32 %v527, %v1787
        %1790 = vrot.lane.b32.xlu0 %v1788, 109
        %v1791 = vpop.permute.xlu0 %1790
        %v1792 = vrot.slane %v1791, 1
        %v1793 = vsel %vm1532, %v1791, %v1792
        %v1795 = vadd.f32 %v1755, %v1793
        %s1796 = sld [smem:[#allocation10 + $0x9b]]
        %v1797 = vstv %s1796
        %v1798 = vmul.f32 %v527, %v1797
        %1800 = vrot.lane.b32.xlu0 %v1798, 109
        %v1801 = vpop.permute.xlu0 %1800
        %v1802 = vrot.slane %v1801, 1
        %v1803 = vsel %vm1532, %v1801, %v1802
        %v1805 = vadd.f32 %v1765, %v1803
        %s1806 = sld [smem:[#allocation10 + $0x9c]]
        %v1807 = vstv %s1806
        %v1808 = vmul.f32 %v545, %v1807
        %1810 = vrot.lane.b32.xlu0 %v1808, 109
        %v1811 = vpop.permute.xlu0 %1810
        %v1812 = vrot.slane %v1811, 1
        %v1813 = vsel %vm1532, %v1811, %v1812
        %v1815 = vadd.f32 %v1775, %v1813
        %s1816 = sld [smem:[#allocation10 + $0x9d]]
        %v1817 = vstv %s1816
        %v1818 = vmul.f32 %v545, %v1817
        %1820 = vrot.lane.b32.xlu0 %v1818, 109
        %v1821 = vpop.permute.xlu0 %1820
        %v1822 = vrot.slane %v1821, 1
        %v1823 = vsel %vm1532, %v1821, %v1822
        %v1825 = vadd.f32 %v1785, %v1823
        %s1826 = sld [smem:[#allocation10 + $0x9e]]
        %v1827 = vstv %s1826
        %v1828 = vmul.f32 %v545, %v1827
        %1830 = vrot.lane.b32.xlu0 %v1828, 109
        %v1831 = vpop.permute.xlu0 %1830
        %v1832 = vrot.slane %v1831, 1
        %v1833 = vsel %vm1532, %v1831, %v1832
        %v1835 = vadd.f32 %v1795, %v1833
        %s1836 = sld [smem:[#allocation10 + $0x9f]]
        %v1837 = vstv %s1836
        %v1838 = vmul.f32 %v545, %v1837
        %1840 = vrot.lane.b32.xlu0 %v1838, 109
        %v1841 = vpop.permute.xlu0 %1840
        %v1842 = vrot.slane %v1841, 1
        %v1843 = vsel %vm1532, %v1841, %v1842
        %v1845 = vadd.f32 %v1805, %v1843
        %s1846 = sld [smem:[#allocation10 + $0xa0]]
        %v1847 = vstv %s1846
        %v1848 = vmul.f32 %v419, %v1847
        %1850 = vrot.lane.b32.xlu0 %v1848, 108
        %v1851 = vpop.permute.xlu0 %1850
        %v1852 = vrot.slane %v1851, 1
        %vm1853 = vcmask 883712
        %v1854 = vsel %vm1853, %v1851, %v1852
        %v1856 = vadd.f32 %v1815, %v1854
        %s1857 = sld [smem:[#allocation10 + $0xa1]]
        %v1858 = vstv %s1857
        %v1859 = vmul.f32 %v419, %v1858
        %1861 = vrot.lane.b32.xlu0 %v1859, 108
        %v1862 = vpop.permute.xlu0 %1861
        %v1863 = vrot.slane %v1862, 1
        %v1864 = vsel %vm1853, %v1862, %v1863
        %v1866 = vadd.f32 %v1825, %v1864
        %s1867 = sld [smem:[#allocation10 + $0xa2]]
        %v1868 = vstv %s1867
        %v1869 = vmul.f32 %v419, %v1868
        %1871 = vrot.lane.b32.xlu0 %v1869, 108
        %v1872 = vpop.permute.xlu0 %1871
        %v1873 = vrot.slane %v1872, 1
        %v1874 = vsel %vm1853, %v1872, %v1873
        %v1876 = vadd.f32 %v1835, %v1874
        %s1877 = sld [smem:[#allocation10 + $0xa3]]
        %v1878 = vstv %s1877
        %v1879 = vmul.f32 %v419, %v1878
        %1881 = vrot.lane.b32.xlu0 %v1879, 108
        %v1882 = vpop.permute.xlu0 %1881
        %v1883 = vrot.slane %v1882, 1
        %v1884 = vsel %vm1853, %v1882, %v1883
        %v1886 = vadd.f32 %v1845, %v1884
        %s1887 = sld [smem:[#allocation10 + $0xa4]]
        %v1888 = vstv %s1887
        %v1889 = vmul.f32 %v437, %v1888
        %1891 = vrot.lane.b32.xlu0 %v1889, 108
        %v1892 = vpop.permute.xlu0 %1891
        %v1893 = vrot.slane %v1892, 1
        %v1894 = vsel %vm1853, %v1892, %v1893
        %v1896 = vadd.f32 %v1856, %v1894
        %s1897 = sld [smem:[#allocation10 + $0xa5]]
        %v1898 = vstv %s1897
        %v1899 = vmul.f32 %v437, %v1898
        %1901 = vrot.lane.b32.xlu0 %v1899, 108
        %v1902 = vpop.permute.xlu0 %1901
        %v1903 = vrot.slane %v1902, 1
        %v1904 = vsel %vm1853, %v1902, %v1903
        %v1906 = vadd.f32 %v1866, %v1904
        %s1907 = sld [smem:[#allocation10 + $0xa6]]
        %v1908 = vstv %s1907
        %v1909 = vmul.f32 %v437, %v1908
        %1911 = vrot.lane.b32.xlu0 %v1909, 108
        %v1912 = vpop.permute.xlu0 %1911
        %v1913 = vrot.slane %v1912, 1
        %v1914 = vsel %vm1853, %v1912, %v1913
        %v1916 = vadd.f32 %v1876, %v1914
        %s1917 = sld [smem:[#allocation10 + $0xa7]]
        %v1918 = vstv %s1917
        %v1919 = vmul.f32 %v437, %v1918
        %1921 = vrot.lane.b32.xlu0 %v1919, 108
        %v1922 = vpop.permute.xlu0 %1921
        %v1923 = vrot.slane %v1922, 1
        %v1924 = vsel %vm1853, %v1922, %v1923
        %v1926 = vadd.f32 %v1886, %v1924
        %s1927 = sld [smem:[#allocation10 + $0xa8]]
        %v1928 = vstv %s1927
        %v1929 = vmul.f32 %v455, %v1928
        %1931 = vrot.lane.b32.xlu0 %v1929, 108
        %v1932 = vpop.permute.xlu0 %1931
        %v1933 = vrot.slane %v1932, 1
        %v1934 = vsel %vm1853, %v1932, %v1933
        %v1936 = vadd.f32 %v1896, %v1934
        %s1937 = sld [smem:[#allocation10 + $0xa9]]
        %v1938 = vstv %s1937
        %v1939 = vmul.f32 %v455, %v1938
        %1941 = vrot.lane.b32.xlu0 %v1939, 108
        %v1942 = vpop.permute.xlu0 %1941
        %v1943 = vrot.slane %v1942, 1
        %v1944 = vsel %vm1853, %v1942, %v1943
        %v1946 = vadd.f32 %v1906, %v1944
        %s1947 = sld [smem:[#allocation10 + $0xaa]]
        %v1948 = vstv %s1947
        %v1949 = vmul.f32 %v455, %v1948
        %1951 = vrot.lane.b32.xlu0 %v1949, 108
        %v1952 = vpop.permute.xlu0 %1951
        %v1953 = vrot.slane %v1952, 1
        %v1954 = vsel %vm1853, %v1952, %v1953
        %v1956 = vadd.f32 %v1916, %v1954
        %s1957 = sld [smem:[#allocation10 + $0xab]]
        %v1958 = vstv %s1957
        %v1959 = vmul.f32 %v455, %v1958
        %1961 = vrot.lane.b32.xlu0 %v1959, 108
        %v1962 = vpop.permute.xlu0 %1961
        %v1963 = vrot.slane %v1962, 1
        %v1964 = vsel %vm1853, %v1962, %v1963
        %v1966 = vadd.f32 %v1926, %v1964
        %s1967 = sld [smem:[#allocation10 + $0xac]]
        %v1968 = vstv %s1967
        %v1969 = vmul.f32 %v473, %v1968
        %1971 = vrot.lane.b32.xlu0 %v1969, 108
        %v1972 = vpop.permute.xlu0 %1971
        %v1973 = vrot.slane %v1972, 1
        %v1974 = vsel %vm1853, %v1972, %v1973
        %v1976 = vadd.f32 %v1936, %v1974
        %s1977 = sld [smem:[#allocation10 + $0xad]]
        %v1978 = vstv %s1977
        %v1979 = vmul.f32 %v473, %v1978
        %1981 = vrot.lane.b32.xlu0 %v1979, 108
        %v1982 = vpop.permute.xlu0 %1981
        %v1983 = vrot.slane %v1982, 1
        %v1984 = vsel %vm1853, %v1982, %v1983
        %v1986 = vadd.f32 %v1946, %v1984
        %s1987 = sld [smem:[#allocation10 + $0xae]]
        %v1988 = vstv %s1987
        %v1989 = vmul.f32 %v473, %v1988
        %1991 = vrot.lane.b32.xlu0 %v1989, 108
        %v1992 = vpop.permute.xlu0 %1991
        %v1993 = vrot.slane %v1992, 1
        %v1994 = vsel %vm1853, %v1992, %v1993
        %v1996 = vadd.f32 %v1956, %v1994
        %s1997 = sld [smem:[#allocation10 + $0xaf]]
        %v1998 = vstv %s1997
        %v1999 = vmul.f32 %v473, %v1998
        %2001 = vrot.lane.b32.xlu0 %v1999, 108
        %v2002 = vpop.permute.xlu0 %2001
        %v2003 = vrot.slane %v2002, 1
        %v2004 = vsel %vm1853, %v2002, %v2003
        %v2006 = vadd.f32 %v1966, %v2004
        %s2007 = sld [smem:[#allocation10 + $0xb0]]
        %v2008 = vstv %s2007
        %v2009 = vmul.f32 %v491, %v2008
        %2011 = vrot.lane.b32.xlu0 %v2009, 108
        %v2012 = vpop.permute.xlu0 %2011
        %v2013 = vrot.slane %v2012, 1
        %v2014 = vsel %vm1853, %v2012, %v2013
        %v2016 = vadd.f32 %v1976, %v2014
        %s2017 = sld [smem:[#allocation10 + $0xb1]]
        %v2018 = vstv %s2017
        %v2019 = vmul.f32 %v491, %v2018
        %2021 = vrot.lane.b32.xlu0 %v2019, 108
        %v2022 = vpop.permute.xlu0 %2021
        %v2023 = vrot.slane %v2022, 1
        %v2024 = vsel %vm1853, %v2022, %v2023
        %v2026 = vadd.f32 %v1986, %v2024
        %s2027 = sld [smem:[#allocation10 + $0xb2]]
        %v2028 = vstv %s2027
        %v2029 = vmul.f32 %v491, %v2028
        %2031 = vrot.lane.b32.xlu0 %v2029, 108
        %v2032 = vpop.permute.xlu0 %2031
        %v2033 = vrot.slane %v2032, 1
        %v2034 = vsel %vm1853, %v2032, %v2033
        %v2036 = vadd.f32 %v1996, %v2034
        %s2037 = sld [smem:[#allocation10 + $0xb3]]
        %v2038 = vstv %s2037
        %v2039 = vmul.f32 %v491, %v2038
        %2041 = vrot.lane.b32.xlu0 %v2039, 108
        %v2042 = vpop.permute.xlu0 %2041
        %v2043 = vrot.slane %v2042, 1
        %v2044 = vsel %vm1853, %v2042, %v2043
        %v2046 = vadd.f32 %v2006, %v2044
        %s2047 = sld [smem:[#allocation10 + $0xb4]]
        %v2048 = vstv %s2047
        %v2049 = vmul.f32 %v509, %v2048
        %2051 = vrot.lane.b32.xlu0 %v2049, 108
        %v2052 = vpop.permute.xlu0 %2051
        %v2053 = vrot.slane %v2052, 1
        %v2054 = vsel %vm1853, %v2052, %v2053
        %v2056 = vadd.f32 %v2016, %v2054
        %s2057 = sld [smem:[#allocation10 + $0xb5]]
        %v2058 = vstv %s2057
        %v2059 = vmul.f32 %v509, %v2058
        %2061 = vrot.lane.b32.xlu0 %v2059, 108
        %v2062 = vpop.permute.xlu0 %2061
        %v2063 = vrot.slane %v2062, 1
        %v2064 = vsel %vm1853, %v2062, %v2063
        %v2066 = vadd.f32 %v2026, %v2064
        %s2067 = sld [smem:[#allocation10 + $0xb6]]
        %v2068 = vstv %s2067
        %v2069 = vmul.f32 %v509, %v2068
        %2071 = vrot.lane.b32.xlu0 %v2069, 108
        %v2072 = vpop.permute.xlu0 %2071
        %v2073 = vrot.slane %v2072, 1
        %v2074 = vsel %vm1853, %v2072, %v2073
        %v2076 = vadd.f32 %v2036, %v2074
        %s2077 = sld [smem:[#allocation10 + $0xb7]]
        %v2078 = vstv %s2077
        %v2079 = vmul.f32 %v509, %v2078
        %2081 = vrot.lane.b32.xlu0 %v2079, 108
        %v2082 = vpop.permute.xlu0 %2081
        %v2083 = vrot.slane %v2082, 1
        %v2084 = vsel %vm1853, %v2082, %v2083
        %v2086 = vadd.f32 %v2046, %v2084
        %s2087 = sld [smem:[#allocation10 + $0xb8]]
        %v2088 = vstv %s2087
        %v2089 = vmul.f32 %v527, %v2088
        %2091 = vrot.lane.b32.xlu0 %v2089, 108
        %v2092 = vpop.permute.xlu0 %2091
        %v2093 = vrot.slane %v2092, 1
        %v2094 = vsel %vm1853, %v2092, %v2093
        %v2096 = vadd.f32 %v2056, %v2094
        %s2097 = sld [smem:[#allocation10 + $0xb9]]
        %v2098 = vstv %s2097
        %v2099 = vmul.f32 %v527, %v2098
        %2101 = vrot.lane.b32.xlu0 %v2099, 108
        %v2102 = vpop.permute.xlu0 %2101
        %v2103 = vrot.slane %v2102, 1
        %v2104 = vsel %vm1853, %v2102, %v2103
        %v2106 = vadd.f32 %v2066, %v2104
        %s2107 = sld [smem:[#allocation10 + $0xba]]
        %v2108 = vstv %s2107
        %v2109 = vmul.f32 %v527, %v2108
        %2111 = vrot.lane.b32.xlu0 %v2109, 108
        %v2112 = vpop.permute.xlu0 %2111
        %v2113 = vrot.slane %v2112, 1
        %v2114 = vsel %vm1853, %v2112, %v2113
        %v2116 = vadd.f32 %v2076, %v2114
        %s2117 = sld [smem:[#allocation10 + $0xbb]]
        %v2118 = vstv %s2117
        %v2119 = vmul.f32 %v527, %v2118
        %2121 = vrot.lane.b32.xlu0 %v2119, 108
        %v2122 = vpop.permute.xlu0 %2121
        %v2123 = vrot.slane %v2122, 1
        %v2124 = vsel %vm1853, %v2122, %v2123
        %v2126 = vadd.f32 %v2086, %v2124
        %s2127 = sld [smem:[#allocation10 + $0xbc]]
        %v2128 = vstv %s2127
        %v2129 = vmul.f32 %v545, %v2128
        %2131 = vrot.lane.b32.xlu0 %v2129, 108
        %v2132 = vpop.permute.xlu0 %2131
        %v2133 = vrot.slane %v2132, 1
        %v2134 = vsel %vm1853, %v2132, %v2133
        %v2136 = vadd.f32 %v2096, %v2134
        %s2137 = sld [smem:[#allocation10 + $0xbd]]
        %v2138 = vstv %s2137
        %v2139 = vmul.f32 %v545, %v2138
        %2141 = vrot.lane.b32.xlu0 %v2139, 108
        %v2142 = vpop.permute.xlu0 %2141
        %v2143 = vrot.slane %v2142, 1
        %v2144 = vsel %vm1853, %v2142, %v2143
        %v2146 = vadd.f32 %v2106, %v2144
        %s2147 = sld [smem:[#allocation10 + $0xbe]]
        %v2148 = vstv %s2147
        %v2149 = vmul.f32 %v545, %v2148
        %2151 = vrot.lane.b32.xlu0 %v2149, 108
        %v2152 = vpop.permute.xlu0 %2151
        %v2153 = vrot.slane %v2152, 1
        %v2154 = vsel %vm1853, %v2152, %v2153
        %v2156 = vadd.f32 %v2116, %v2154
        %s2157 = sld [smem:[#allocation10 + $0xbf]]
        %v2158 = vstv %s2157
        %v2159 = vmul.f32 %v545, %v2158
        %2161 = vrot.lane.b32.xlu0 %v2159, 108
        %v2162 = vpop.permute.xlu0 %2161
        %v2163 = vrot.slane %v2162, 1
        %v2164 = vsel %vm1853, %v2162, %v2163
        %v2166 = vadd.f32 %v2126, %v2164
        %s2167 = sld [smem:[#allocation10 + $0xc0]]
        %v2168 = vstv %s2167
        %v2169 = vmul.f32 %v419, %v2168
        %2171 = vrot.lane.b32.xlu0 %v2169, 92
        %v2172 = vpop.permute.xlu0 %2171
        %v2173 = vrot.slane %v2172, 1
        %vm2174 = vcmask 752640
        %v2175 = vsel %vm2174, %v2172, %v2173
        %v2177 = vadd.f32 %v2136, %v2175
        %s2178 = sld [smem:[#allocation10 + $0xc1]]
        %v2179 = vstv %s2178
        %v2180 = vmul.f32 %v419, %v2179
        %2182 = vrot.lane.b32.xlu0 %v2180, 92
        %v2183 = vpop.permute.xlu0 %2182
        %v2184 = vrot.slane %v2183, 1
        %v2185 = vsel %vm2174, %v2183, %v2184
        %v2187 = vadd.f32 %v2146, %v2185
        %s2188 = sld [smem:[#allocation10 + $0xc2]]
        %v2189 = vstv %s2188
        %v2190 = vmul.f32 %v419, %v2189
        %2192 = vrot.lane.b32.xlu0 %v2190, 92
        %v2193 = vpop.permute.xlu0 %2192
        %v2194 = vrot.slane %v2193, 1
        %v2195 = vsel %vm2174, %v2193, %v2194
        %v2197 = vadd.f32 %v2156, %v2195
        %s2198 = sld [smem:[#allocation10 + $0xc3]]
        %v2199 = vstv %s2198
        %v2200 = vmul.f32 %v419, %v2199
        %2202 = vrot.lane.b32.xlu0 %v2200, 92
        %v2203 = vpop.permute.xlu0 %2202
        %v2204 = vrot.slane %v2203, 1
        %v2205 = vsel %vm2174, %v2203, %v2204
        %v2207 = vadd.f32 %v2166, %v2205
        %s2208 = sld [smem:[#allocation10 + $0xc4]]
        %v2209 = vstv %s2208
        %v2210 = vmul.f32 %v437, %v2209
        %2212 = vrot.lane.b32.xlu0 %v2210, 92
        %v2213 = vpop.permute.xlu0 %2212
        %v2214 = vrot.slane %v2213, 1
        %v2215 = vsel %vm2174, %v2213, %v2214
        %v2217 = vadd.f32 %v2177, %v2215
        %s2218 = sld [smem:[#allocation10 + $0xc5]]
        %v2219 = vstv %s2218
        %v2220 = vmul.f32 %v437, %v2219
        %2222 = vrot.lane.b32.xlu0 %v2220, 92
        %v2223 = vpop.permute.xlu0 %2222
        %v2224 = vrot.slane %v2223, 1
        %v2225 = vsel %vm2174, %v2223, %v2224
        %v2227 = vadd.f32 %v2187, %v2225
        %s2228 = sld [smem:[#allocation10 + $0xc6]]
        %v2229 = vstv %s2228
        %v2230 = vmul.f32 %v437, %v2229
        %2232 = vrot.lane.b32.xlu0 %v2230, 92
        %v2233 = vpop.permute.xlu0 %2232
        %v2234 = vrot.slane %v2233, 1
        %v2235 = vsel %vm2174, %v2233, %v2234
        %v2237 = vadd.f32 %v2197, %v2235
        %s2238 = sld [smem:[#allocation10 + $0xc7]]
        %v2239 = vstv %s2238
        %v2240 = vmul.f32 %v437, %v2239
        %2242 = vrot.lane.b32.xlu0 %v2240, 92
        %v2243 = vpop.permute.xlu0 %2242
        %v2244 = vrot.slane %v2243, 1
        %v2245 = vsel %vm2174, %v2243, %v2244
        %v2247 = vadd.f32 %v2207, %v2245
        %s2248 = sld [smem:[#allocation10 + $0xc8]]
        %v2249 = vstv %s2248
        %v2250 = vmul.f32 %v455, %v2249
        %2252 = vrot.lane.b32.xlu0 %v2250, 92
        %v2253 = vpop.permute.xlu0 %2252
        %v2254 = vrot.slane %v2253, 1
        %v2255 = vsel %vm2174, %v2253, %v2254
        %v2257 = vadd.f32 %v2217, %v2255
        %s2258 = sld [smem:[#allocation10 + $0xc9]]
        %v2259 = vstv %s2258
        %v2260 = vmul.f32 %v455, %v2259
        %2262 = vrot.lane.b32.xlu0 %v2260, 92
        %v2263 = vpop.permute.xlu0 %2262
        %v2264 = vrot.slane %v2263, 1
        %v2265 = vsel %vm2174, %v2263, %v2264
        %v2267 = vadd.f32 %v2227, %v2265
        %s2268 = sld [smem:[#allocation10 + $0xca]]
        %v2269 = vstv %s2268
        %v2270 = vmul.f32 %v455, %v2269
        %2272 = vrot.lane.b32.xlu0 %v2270, 92
        %v2273 = vpop.permute.xlu0 %2272
        %v2274 = vrot.slane %v2273, 1
        %v2275 = vsel %vm2174, %v2273, %v2274
        %v2277 = vadd.f32 %v2237, %v2275
        %s2278 = sld [smem:[#allocation10 + $0xcb]]
        %v2279 = vstv %s2278
        %v2280 = vmul.f32 %v455, %v2279
        %2282 = vrot.lane.b32.xlu0 %v2280, 92
        %v2283 = vpop.permute.xlu0 %2282
        %v2284 = vrot.slane %v2283, 1
        %v2285 = vsel %vm2174, %v2283, %v2284
        %v2287 = vadd.f32 %v2247, %v2285
        %s2288 = sld [smem:[#allocation10 + $0xcc]]
        %v2289 = vstv %s2288
        %v2290 = vmul.f32 %v473, %v2289
        %2292 = vrot.lane.b32.xlu0 %v2290, 92
        %v2293 = vpop.permute.xlu0 %2292
        %v2294 = vrot.slane %v2293, 1
        %v2295 = vsel %vm2174, %v2293, %v2294
        %v2297 = vadd.f32 %v2257, %v2295
        %s2298 = sld [smem:[#allocation10 + $0xcd]]
        %v2299 = vstv %s2298
        %v2300 = vmul.f32 %v473, %v2299
        %2302 = vrot.lane.b32.xlu0 %v2300, 92
        %v2303 = vpop.permute.xlu0 %2302
        %v2304 = vrot.slane %v2303, 1
        %v2305 = vsel %vm2174, %v2303, %v2304
        %v2307 = vadd.f32 %v2267, %v2305
        %s2308 = sld [smem:[#allocation10 + $0xce]]
        %v2309 = vstv %s2308
        %v2310 = vmul.f32 %v473, %v2309
        %2312 = vrot.lane.b32.xlu0 %v2310, 92
        %v2313 = vpop.permute.xlu0 %2312
        %v2314 = vrot.slane %v2313, 1
        %v2315 = vsel %vm2174, %v2313, %v2314
        %v2317 = vadd.f32 %v2277, %v2315
        %s2318 = sld [smem:[#allocation10 + $0xcf]]
        %v2319 = vstv %s2318
        %v2320 = vmul.f32 %v473, %v2319
        %2322 = vrot.lane.b32.xlu0 %v2320, 92
        %v2323 = vpop.permute.xlu0 %2322
        %v2324 = vrot.slane %v2323, 1
        %v2325 = vsel %vm2174, %v2323, %v2324
        %v2327 = vadd.f32 %v2287, %v2325
        %s2328 = sld [smem:[#allocation10 + $0xd0]]
        %v2329 = vstv %s2328
        %v2330 = vmul.f32 %v491, %v2329
        %2332 = vrot.lane.b32.xlu0 %v2330, 92
        %v2333 = vpop.permute.xlu0 %2332
        %v2334 = vrot.slane %v2333, 1
        %v2335 = vsel %vm2174, %v2333, %v2334
        %v2337 = vadd.f32 %v2297, %v2335
        %s2338 = sld [smem:[#allocation10 + $0xd1]]
        %v2339 = vstv %s2338
        %v2340 = vmul.f32 %v491, %v2339
        %2342 = vrot.lane.b32.xlu0 %v2340, 92
        %v2343 = vpop.permute.xlu0 %2342
        %v2344 = vrot.slane %v2343, 1
        %v2345 = vsel %vm2174, %v2343, %v2344
        %v2347 = vadd.f32 %v2307, %v2345
        %s2348 = sld [smem:[#allocation10 + $0xd2]]
        %v2349 = vstv %s2348
        %v2350 = vmul.f32 %v491, %v2349
        %2352 = vrot.lane.b32.xlu0 %v2350, 92
        %v2353 = vpop.permute.xlu0 %2352
        %v2354 = vrot.slane %v2353, 1
        %v2355 = vsel %vm2174, %v2353, %v2354
        %v2357 = vadd.f32 %v2317, %v2355
        %s2358 = sld [smem:[#allocation10 + $0xd3]]
        %v2359 = vstv %s2358
        %v2360 = vmul.f32 %v491, %v2359
        %2362 = vrot.lane.b32.xlu0 %v2360, 92
        %v2363 = vpop.permute.xlu0 %2362
        %v2364 = vrot.slane %v2363, 1
        %v2365 = vsel %vm2174, %v2363, %v2364
        %v2367 = vadd.f32 %v2327, %v2365
        %s2368 = sld [smem:[#allocation10 + $0xd4]]
        %v2369 = vstv %s2368
        %v2370 = vmul.f32 %v509, %v2369
        %2372 = vrot.lane.b32.xlu0 %v2370, 92
        %v2373 = vpop.permute.xlu0 %2372
        %v2374 = vrot.slane %v2373, 1
        %v2375 = vsel %vm2174, %v2373, %v2374
        %v2377 = vadd.f32 %v2337, %v2375
        %s2378 = sld [smem:[#allocation10 + $0xd5]]
        %v2379 = vstv %s2378
        %v2380 = vmul.f32 %v509, %v2379
        %2382 = vrot.lane.b32.xlu0 %v2380, 92
        %v2383 = vpop.permute.xlu0 %2382
        %v2384 = vrot.slane %v2383, 1
        %v2385 = vsel %vm2174, %v2383, %v2384
        %v2387 = vadd.f32 %v2347, %v2385
        %s2388 = sld [smem:[#allocation10 + $0xd6]]
        %v2389 = vstv %s2388
        %v2390 = vmul.f32 %v509, %v2389
        %2392 = vrot.lane.b32.xlu0 %v2390, 92
        %v2393 = vpop.permute.xlu0 %2392
        %v2394 = vrot.slane %v2393, 1
        %v2395 = vsel %vm2174, %v2393, %v2394
        %v2397 = vadd.f32 %v2357, %v2395
        %s2398 = sld [smem:[#allocation10 + $0xd7]]
        %v2399 = vstv %s2398
        %v2400 = vmul.f32 %v509, %v2399
        %2402 = vrot.lane.b32.xlu0 %v2400, 92
        %v2403 = vpop.permute.xlu0 %2402
        %v2404 = vrot.slane %v2403, 1
        %v2405 = vsel %vm2174, %v2403, %v2404
        %v2407 = vadd.f32 %v2367, %v2405
        %s2408 = sld [smem:[#allocation10 + $0xd8]]
        %v2409 = vstv %s2408
        %v2410 = vmul.f32 %v527, %v2409
        %2412 = vrot.lane.b32.xlu0 %v2410, 92
        %v2413 = vpop.permute.xlu0 %2412
        %v2414 = vrot.slane %v2413, 1
        %v2415 = vsel %vm2174, %v2413, %v2414
        %v2417 = vadd.f32 %v2377, %v2415
        %s2418 = sld [smem:[#allocation10 + $0xd9]]
        %v2419 = vstv %s2418
        %v2420 = vmul.f32 %v527, %v2419
        %2422 = vrot.lane.b32.xlu0 %v2420, 92
        %v2423 = vpop.permute.xlu0 %2422
        %v2424 = vrot.slane %v2423, 1
        %v2425 = vsel %vm2174, %v2423, %v2424
        %v2427 = vadd.f32 %v2387, %v2425
        %s2428 = sld [smem:[#allocation10 + $0xda]]
        %v2429 = vstv %s2428
        %v2430 = vmul.f32 %v527, %v2429
        %2432 = vrot.lane.b32.xlu0 %v2430, 92
        %v2433 = vpop.permute.xlu0 %2432
        %v2434 = vrot.slane %v2433, 1
        %v2435 = vsel %vm2174, %v2433, %v2434
        %v2437 = vadd.f32 %v2397, %v2435
        %s2438 = sld [smem:[#allocation10 + $0xdb]]
        %v2439 = vstv %s2438
        %v2440 = vmul.f32 %v527, %v2439
        %2442 = vrot.lane.b32.xlu0 %v2440, 92
        %v2443 = vpop.permute.xlu0 %2442
        %v2444 = vrot.slane %v2443, 1
        %v2445 = vsel %vm2174, %v2443, %v2444
        %v2447 = vadd.f32 %v2407, %v2445
        %s2448 = sld [smem:[#allocation10 + $0xdc]]
        %v2449 = vstv %s2448
        %v2450 = vmul.f32 %v545, %v2449
        %2452 = vrot.lane.b32.xlu0 %v2450, 92
        %v2453 = vpop.permute.xlu0 %2452
        %v2454 = vrot.slane %v2453, 1
        %v2455 = vsel %vm2174, %v2453, %v2454
        %v2457 = vadd.f32 %v2417, %v2455
        %s2458 = sld [smem:[#allocation10 + $0xdd]]
        %v2459 = vstv %s2458
        %v2460 = vmul.f32 %v545, %v2459
        %2462 = vrot.lane.b32.xlu0 %v2460, 92
        %v2463 = vpop.permute.xlu0 %2462
        %v2464 = vrot.slane %v2463, 1
        %v2465 = vsel %vm2174, %v2463, %v2464
        %v2467 = vadd.f32 %v2427, %v2465
        %s2468 = sld [smem:[#allocation10 + $0xde]]
        %v2469 = vstv %s2468
        %v2470 = vmul.f32 %v545, %v2469
        %2472 = vrot.lane.b32.xlu0 %v2470, 92
        %v2473 = vpop.permute.xlu0 %2472
        %v2474 = vrot.slane %v2473, 1
        %v2475 = vsel %vm2174, %v2473, %v2474
        %v2477 = vadd.f32 %v2437, %v2475
        %s2478 = sld [smem:[#allocation10 + $0xdf]]
        %v2479 = vstv %s2478
        %v2480 = vmul.f32 %v545, %v2479
        %2482 = vrot.lane.b32.xlu0 %v2480, 92
        %v2483 = vpop.permute.xlu0 %2482
        %v2484 = vrot.slane %v2483, 1
        %v2485 = vsel %vm2174, %v2483, %v2484
        %v2487 = vadd.f32 %v2447, %v2485
        %s2488 = sld [smem:[#allocation10 + $0xe0]]
        %v2489 = vstv %s2488
        %v2490 = vmul.f32 %v419, %v2489
        %2492 = vrot.lane.b32.xlu0 %v2490, 91
        %v2493 = vpop.permute.xlu0 %2492
        %v2494 = vrot.slane %v2493, 1
        %vm2495 = vcmask 744448
        %v2496 = vsel %vm2495, %v2493, %v2494
        %v2498 = vadd.f32 %v2457, %v2496
        %s2499 = sld [smem:[#allocation10 + $0xe1]]
        %v2500 = vstv %s2499
        %v2501 = vmul.f32 %v419, %v2500
        %2503 = vrot.lane.b32.xlu0 %v2501, 91
        %v2504 = vpop.permute.xlu0 %2503
        %v2505 = vrot.slane %v2504, 1
        %v2506 = vsel %vm2495, %v2504, %v2505
        %v2508 = vadd.f32 %v2467, %v2506
        %s2509 = sld [smem:[#allocation10 + $0xe2]]
        %v2510 = vstv %s2509
        %v2511 = vmul.f32 %v419, %v2510
        %2513 = vrot.lane.b32.xlu0 %v2511, 91
        %v2514 = vpop.permute.xlu0 %2513
        %v2515 = vrot.slane %v2514, 1
        %v2516 = vsel %vm2495, %v2514, %v2515
        %v2518 = vadd.f32 %v2477, %v2516
        %s2519 = sld [smem:[#allocation10 + $0xe3]]
        %v2520 = vstv %s2519
        %v2521 = vmul.f32 %v419, %v2520
        %2523 = vrot.lane.b32.xlu0 %v2521, 91
        %v2524 = vpop.permute.xlu0 %2523
        %v2525 = vrot.slane %v2524, 1
        %v2526 = vsel %vm2495, %v2524, %v2525
        %v2528 = vadd.f32 %v2487, %v2526
        %s2529 = sld [smem:[#allocation10 + $0xe4]]
        %v2530 = vstv %s2529
        %v2531 = vmul.f32 %v437, %v2530
        %2533 = vrot.lane.b32.xlu0 %v2531, 91
        %v2534 = vpop.permute.xlu0 %2533
        %v2535 = vrot.slane %v2534, 1
        %v2536 = vsel %vm2495, %v2534, %v2535
        %v2538 = vadd.f32 %v2498, %v2536
        %s2539 = sld [smem:[#allocation10 + $0xe5]]
        %v2540 = vstv %s2539
        %v2541 = vmul.f32 %v437, %v2540
        %2543 = vrot.lane.b32.xlu0 %v2541, 91
        %v2544 = vpop.permute.xlu0 %2543
        %v2545 = vrot.slane %v2544, 1
        %v2546 = vsel %vm2495, %v2544, %v2545
        %v2548 = vadd.f32 %v2508, %v2546
        %s2549 = sld [smem:[#allocation10 + $0xe6]]
        %v2550 = vstv %s2549
        %v2551 = vmul.f32 %v437, %v2550
        %2553 = vrot.lane.b32.xlu0 %v2551, 91
        %v2554 = vpop.permute.xlu0 %2553
        %v2555 = vrot.slane %v2554, 1
        %v2556 = vsel %vm2495, %v2554, %v2555
        %v2558 = vadd.f32 %v2518, %v2556
        %s2559 = sld [smem:[#allocation10 + $0xe7]]
        %v2560 = vstv %s2559
        %v2561 = vmul.f32 %v437, %v2560
        %2563 = vrot.lane.b32.xlu0 %v2561, 91
        %v2564 = vpop.permute.xlu0 %2563
        %v2565 = vrot.slane %v2564, 1
        %v2566 = vsel %vm2495, %v2564, %v2565
        %v2568 = vadd.f32 %v2528, %v2566
        %s2569 = sld [smem:[#allocation10 + $0xe8]]
        %v2570 = vstv %s2569
        %v2571 = vmul.f32 %v455, %v2570
        %2573 = vrot.lane.b32.xlu0 %v2571, 91
        %v2574 = vpop.permute.xlu0 %2573
        %v2575 = vrot.slane %v2574, 1
        %v2576 = vsel %vm2495, %v2574, %v2575
        %v2578 = vadd.f32 %v2538, %v2576
        %s2579 = sld [smem:[#allocation10 + $0xe9]]
        %v2580 = vstv %s2579
        %v2581 = vmul.f32 %v455, %v2580
        %2583 = vrot.lane.b32.xlu0 %v2581, 91
        %v2584 = vpop.permute.xlu0 %2583
        %v2585 = vrot.slane %v2584, 1
        %v2586 = vsel %vm2495, %v2584, %v2585
        %v2588 = vadd.f32 %v2548, %v2586
        %s2589 = sld [smem:[#allocation10 + $0xea]]
        %v2590 = vstv %s2589
        %v2591 = vmul.f32 %v455, %v2590
        %2593 = vrot.lane.b32.xlu0 %v2591, 91
        %v2594 = vpop.permute.xlu0 %2593
        %v2595 = vrot.slane %v2594, 1
        %v2596 = vsel %vm2495, %v2594, %v2595
        %v2598 = vadd.f32 %v2558, %v2596
        %s2599 = sld [smem:[#allocation10 + $0xeb]]
        %v2600 = vstv %s2599
        %v2601 = vmul.f32 %v455, %v2600
        %2603 = vrot.lane.b32.xlu0 %v2601, 91
        %v2604 = vpop.permute.xlu0 %2603
        %v2605 = vrot.slane %v2604, 1
        %v2606 = vsel %vm2495, %v2604, %v2605
        %v2608 = vadd.f32 %v2568, %v2606
        %s2609 = sld [smem:[#allocation10 + $0xec]]
        %v2610 = vstv %s2609
        %v2611 = vmul.f32 %v473, %v2610
        %2613 = vrot.lane.b32.xlu0 %v2611, 91
        %v2614 = vpop.permute.xlu0 %2613
        %v2615 = vrot.slane %v2614, 1
        %v2616 = vsel %vm2495, %v2614, %v2615
        %v2618 = vadd.f32 %v2578, %v2616
        %s2619 = sld [smem:[#allocation10 + $0xed]]
        %v2620 = vstv %s2619
        %v2621 = vmul.f32 %v473, %v2620
        %2623 = vrot.lane.b32.xlu0 %v2621, 91
        %v2624 = vpop.permute.xlu0 %2623
        %v2625 = vrot.slane %v2624, 1
        %v2626 = vsel %vm2495, %v2624, %v2625
        %v2628 = vadd.f32 %v2588, %v2626
        %s2629 = sld [smem:[#allocation10 + $0xee]]
        %v2630 = vstv %s2629
        %v2631 = vmul.f32 %v473, %v2630
        %2633 = vrot.lane.b32.xlu0 %v2631, 91
        %v2634 = vpop.permute.xlu0 %2633
        %v2635 = vrot.slane %v2634, 1
        %v2636 = vsel %vm2495, %v2634, %v2635
        %v2638 = vadd.f32 %v2598, %v2636
        %s2639 = sld [smem:[#allocation10 + $0xef]]
        %v2640 = vstv %s2639
        %v2641 = vmul.f32 %v473, %v2640
        %2643 = vrot.lane.b32.xlu0 %v2641, 91
        %v2644 = vpop.permute.xlu0 %2643
        %v2645 = vrot.slane %v2644, 1
        %v2646 = vsel %vm2495, %v2644, %v2645
        %v2648 = vadd.f32 %v2608, %v2646
        %s2649 = sld [smem:[#allocation10 + $0xf0]]
        %v2650 = vstv %s2649
        %v2651 = vmul.f32 %v491, %v2650
        %2653 = vrot.lane.b32.xlu0 %v2651, 91
        %v2654 = vpop.permute.xlu0 %2653
        %v2655 = vrot.slane %v2654, 1
        %v2656 = vsel %vm2495, %v2654, %v2655
        %v2658 = vadd.f32 %v2618, %v2656
        %s2659 = sld [smem:[#allocation10 + $0xf1]]
        %v2660 = vstv %s2659
        %v2661 = vmul.f32 %v491, %v2660
        %2663 = vrot.lane.b32.xlu0 %v2661, 91
        %v2664 = vpop.permute.xlu0 %2663
        %v2665 = vrot.slane %v2664, 1
        %v2666 = vsel %vm2495, %v2664, %v2665
        %v2668 = vadd.f32 %v2628, %v2666
        %s2669 = sld [smem:[#allocation10 + $0xf2]]
        %v2670 = vstv %s2669
        %v2671 = vmul.f32 %v491, %v2670
        %2673 = vrot.lane.b32.xlu0 %v2671, 91
        %v2674 = vpop.permute.xlu0 %2673
        %v2675 = vrot.slane %v2674, 1
        %v2676 = vsel %vm2495, %v2674, %v2675
        %v2678 = vadd.f32 %v2638, %v2676
        %s2679 = sld [smem:[#allocation10 + $0xf3]]
        %v2680 = vstv %s2679
        %v2681 = vmul.f32 %v491, %v2680
        %2683 = vrot.lane.b32.xlu0 %v2681, 91
        %v2684 = vpop.permute.xlu0 %2683
        %v2685 = vrot.slane %v2684, 1
        %v2686 = vsel %vm2495, %v2684, %v2685
        %v2688 = vadd.f32 %v2648, %v2686
        %s2689 = sld [smem:[#allocation10 + $0xf4]]
        %v2690 = vstv %s2689
        %v2691 = vmul.f32 %v509, %v2690
        %2693 = vrot.lane.b32.xlu0 %v2691, 91
        %v2694 = vpop.permute.xlu0 %2693
        %v2695 = vrot.slane %v2694, 1
        %v2696 = vsel %vm2495, %v2694, %v2695
        %v2698 = vadd.f32 %v2658, %v2696
        %s2699 = sld [smem:[#allocation10 + $0xf5]]
        %v2700 = vstv %s2699
        %v2701 = vmul.f32 %v509, %v2700
        %2703 = vrot.lane.b32.xlu0 %v2701, 91
        %v2704 = vpop.permute.xlu0 %2703
        %v2705 = vrot.slane %v2704, 1
        %v2706 = vsel %vm2495, %v2704, %v2705
        %v2708 = vadd.f32 %v2668, %v2706
        %s2709 = sld [smem:[#allocation10 + $0xf6]]
        %v2710 = vstv %s2709
        %v2711 = vmul.f32 %v509, %v2710
        %2713 = vrot.lane.b32.xlu0 %v2711, 91
        %v2714 = vpop.permute.xlu0 %2713
        %v2715 = vrot.slane %v2714, 1
        %v2716 = vsel %vm2495, %v2714, %v2715
        %v2718 = vadd.f32 %v2678, %v2716
        %s2719 = sld [smem:[#allocation10 + $0xf7]]
        %v2720 = vstv %s2719
        %v2721 = vmul.f32 %v509, %v2720
        %2723 = vrot.lane.b32.xlu0 %v2721, 91
        %v2724 = vpop.permute.xlu0 %2723
        %v2725 = vrot.slane %v2724, 1
        %v2726 = vsel %vm2495, %v2724, %v2725
        %v2728 = vadd.f32 %v2688, %v2726
        %s2729 = sld [smem:[#allocation10 + $0xf8]]
        %v2730 = vstv %s2729
        %v2731 = vmul.f32 %v527, %v2730
        %2733 = vrot.lane.b32.xlu0 %v2731, 91
        %v2734 = vpop.permute.xlu0 %2733
        %v2735 = vrot.slane %v2734, 1
        %v2736 = vsel %vm2495, %v2734, %v2735
        %v2738 = vadd.f32 %v2698, %v2736
        %s2739 = sld [smem:[#allocation10 + $0xf9]]
        %v2740 = vstv %s2739
        %v2741 = vmul.f32 %v527, %v2740
        %2743 = vrot.lane.b32.xlu0 %v2741, 91
        %v2744 = vpop.permute.xlu0 %2743
        %v2745 = vrot.slane %v2744, 1
        %v2746 = vsel %vm2495, %v2744, %v2745
        %v2748 = vadd.f32 %v2708, %v2746
        %s2749 = sld [smem:[#allocation10 + $0xfa]]
        %v2750 = vstv %s2749
        %v2751 = vmul.f32 %v527, %v2750
        %2753 = vrot.lane.b32.xlu0 %v2751, 91
        %v2754 = vpop.permute.xlu0 %2753
        %v2755 = vrot.slane %v2754, 1
        %v2756 = vsel %vm2495, %v2754, %v2755
        %v2758 = vadd.f32 %v2718, %v2756
        %s2759 = sld [smem:[#allocation10 + $0xfb]]
        %v2760 = vstv %s2759
        %v2761 = vmul.f32 %v527, %v2760
        %2763 = vrot.lane.b32.xlu0 %v2761, 91
        %v2764 = vpop.permute.xlu0 %2763
        %v2765 = vrot.slane %v2764, 1
        %v2766 = vsel %vm2495, %v2764, %v2765
        %v2768 = vadd.f32 %v2728, %v2766
        %s2769 = sld [smem:[#allocation10 + $0xfc]]
        %v2770 = vstv %s2769
        %v2771 = vmul.f32 %v545, %v2770
        %2773 = vrot.lane.b32.xlu0 %v2771, 91
        %v2774 = vpop.permute.xlu0 %2773
        %v2775 = vrot.slane %v2774, 1
        %v2776 = vsel %vm2495, %v2774, %v2775
        %v2778 = vadd.f32 %v2738, %v2776
        %s2779 = sld [smem:[#allocation10 + $0xfd]]
        %v2780 = vstv %s2779
        %v2781 = vmul.f32 %v545, %v2780
        %2783 = vrot.lane.b32.xlu0 %v2781, 91
        %v2784 = vpop.permute.xlu0 %2783
        %v2785 = vrot.slane %v2784, 1
        %v2786 = vsel %vm2495, %v2784, %v2785
        %v2788 = vadd.f32 %v2748, %v2786
        %s2789 = sld [smem:[#allocation10 + $0xfe]]
        %v2790 = vstv %s2789
        %v2791 = vmul.f32 %v545, %v2790
        %2793 = vrot.lane.b32.xlu0 %v2791, 91
        %v2794 = vpop.permute.xlu0 %2793
        %v2795 = vrot.slane %v2794, 1
        %v2796 = vsel %vm2495, %v2794, %v2795
        %v2798 = vadd.f32 %v2758, %v2796
        %s2799 = sld [smem:[#allocation10 + $0xff]]
        %v2800 = vstv %s2799
        %v2801 = vmul.f32 %v545, %v2800
        %2803 = vrot.lane.b32.xlu0 %v2801, 91
        %v2804 = vpop.permute.xlu0 %2803
        %v2805 = vrot.slane %v2804, 1
        %v2806 = vsel %vm2495, %v2804, %v2805
        %v2808 = vadd.f32 %v2768, %v2806
        %s2809 = sld [smem:[#allocation10 + $0x100]]
        %v2810 = vstv %s2809
        %v2811 = vmul.f32 %v419, %v2810
        %2813 = vrot.lane.b32.xlu0 %v2811, 90
        %v2814 = vpop.permute.xlu0 %2813
        %v2815 = vrot.slane %v2814, 1
        %vm2816 = vcmask 736256
        %v2817 = vsel %vm2816, %v2814, %v2815
        %v2819 = vadd.f32 %v2778, %v2817
        %s2820 = sld [smem:[#allocation10 + $0x101]]
        %v2821 = vstv %s2820
        %v2822 = vmul.f32 %v419, %v2821
        %2824 = vrot.lane.b32.xlu0 %v2822, 90
        %v2825 = vpop.permute.xlu0 %2824
        %v2826 = vrot.slane %v2825, 1
        %v2827 = vsel %vm2816, %v2825, %v2826
        %v2829 = vadd.f32 %v2788, %v2827
        %s2830 = sld [smem:[#allocation10 + $0x102]]
        %v2831 = vstv %s2830
        %v2832 = vmul.f32 %v419, %v2831
        %2834 = vrot.lane.b32.xlu0 %v2832, 90
        %v2835 = vpop.permute.xlu0 %2834
        %v2836 = vrot.slane %v2835, 1
        %v2837 = vsel %vm2816, %v2835, %v2836
        %v2839 = vadd.f32 %v2798, %v2837
        %s2840 = sld [smem:[#allocation10 + $0x103]]
        %v2841 = vstv %s2840
        %v2842 = vmul.f32 %v419, %v2841
        %2844 = vrot.lane.b32.xlu0 %v2842, 90
        %v2845 = vpop.permute.xlu0 %2844
        %v2846 = vrot.slane %v2845, 1
        %v2847 = vsel %vm2816, %v2845, %v2846
        %v2849 = vadd.f32 %v2808, %v2847
        %s2850 = sld [smem:[#allocation10 + $0x104]]
        %v2851 = vstv %s2850
        %v2852 = vmul.f32 %v437, %v2851
        %2854 = vrot.lane.b32.xlu0 %v2852, 90
        %v2855 = vpop.permute.xlu0 %2854
        %v2856 = vrot.slane %v2855, 1
        %v2857 = vsel %vm2816, %v2855, %v2856
        %v2859 = vadd.f32 %v2819, %v2857
        %s2860 = sld [smem:[#allocation10 + $0x105]]
        %v2861 = vstv %s2860
        %v2862 = vmul.f32 %v437, %v2861
        %2864 = vrot.lane.b32.xlu0 %v2862, 90
        %v2865 = vpop.permute.xlu0 %2864
        %v2866 = vrot.slane %v2865, 1
        %v2867 = vsel %vm2816, %v2865, %v2866
        %v2869 = vadd.f32 %v2829, %v2867
        %s2870 = sld [smem:[#allocation10 + $0x106]]
        %v2871 = vstv %s2870
        %v2872 = vmul.f32 %v437, %v2871
        %2874 = vrot.lane.b32.xlu0 %v2872, 90
        %v2875 = vpop.permute.xlu0 %2874
        %v2876 = vrot.slane %v2875, 1
        %v2877 = vsel %vm2816, %v2875, %v2876
        %v2879 = vadd.f32 %v2839, %v2877
        %s2880 = sld [smem:[#allocation10 + $0x107]]
        %v2881 = vstv %s2880
        %v2882 = vmul.f32 %v437, %v2881
        %2884 = vrot.lane.b32.xlu0 %v2882, 90
        %v2885 = vpop.permute.xlu0 %2884
        %v2886 = vrot.slane %v2885, 1
        %v2887 = vsel %vm2816, %v2885, %v2886
        %v2889 = vadd.f32 %v2849, %v2887
        %s2890 = sld [smem:[#allocation10 + $0x108]]
        %v2891 = vstv %s2890
        %v2892 = vmul.f32 %v455, %v2891
        %2894 = vrot.lane.b32.xlu0 %v2892, 90
        %v2895 = vpop.permute.xlu0 %2894
        %v2896 = vrot.slane %v2895, 1
        %v2897 = vsel %vm2816, %v2895, %v2896
        %v2899 = vadd.f32 %v2859, %v2897
        %s2900 = sld [smem:[#allocation10 + $0x109]]
        %v2901 = vstv %s2900
        %v2902 = vmul.f32 %v455, %v2901
        %2904 = vrot.lane.b32.xlu0 %v2902, 90
        %v2905 = vpop.permute.xlu0 %2904
        %v2906 = vrot.slane %v2905, 1
        %v2907 = vsel %vm2816, %v2905, %v2906
        %v2909 = vadd.f32 %v2869, %v2907
        %s2910 = sld [smem:[#allocation10 + $0x10a]]
        %v2911 = vstv %s2910
        %v2912 = vmul.f32 %v455, %v2911
        %2914 = vrot.lane.b32.xlu0 %v2912, 90
        %v2915 = vpop.permute.xlu0 %2914
        %v2916 = vrot.slane %v2915, 1
        %v2917 = vsel %vm2816, %v2915, %v2916
        %v2919 = vadd.f32 %v2879, %v2917
        %s2920 = sld [smem:[#allocation10 + $0x10b]]
        %v2921 = vstv %s2920
        %v2922 = vmul.f32 %v455, %v2921
        %2924 = vrot.lane.b32.xlu0 %v2922, 90
        %v2925 = vpop.permute.xlu0 %2924
        %v2926 = vrot.slane %v2925, 1
        %v2927 = vsel %vm2816, %v2925, %v2926
        %v2929 = vadd.f32 %v2889, %v2927
        %s2930 = sld [smem:[#allocation10 + $0x10c]]
        %v2931 = vstv %s2930
        %v2932 = vmul.f32 %v473, %v2931
        %2934 = vrot.lane.b32.xlu0 %v2932, 90
        %v2935 = vpop.permute.xlu0 %2934
        %v2936 = vrot.slane %v2935, 1
        %v2937 = vsel %vm2816, %v2935, %v2936
        %v2939 = vadd.f32 %v2899, %v2937
        %s2940 = sld [smem:[#allocation10 + $0x10d]]
        %v2941 = vstv %s2940
        %v2942 = vmul.f32 %v473, %v2941
        %2944 = vrot.lane.b32.xlu0 %v2942, 90
        %v2945 = vpop.permute.xlu0 %2944
        %v2946 = vrot.slane %v2945, 1
        %v2947 = vsel %vm2816, %v2945, %v2946
        %v2949 = vadd.f32 %v2909, %v2947
        %s2950 = sld [smem:[#allocation10 + $0x10e]]
        %v2951 = vstv %s2950
        %v2952 = vmul.f32 %v473, %v2951
        %2954 = vrot.lane.b32.xlu0 %v2952, 90
        %v2955 = vpop.permute.xlu0 %2954
        %v2956 = vrot.slane %v2955, 1
        %v2957 = vsel %vm2816, %v2955, %v2956
        %v2959 = vadd.f32 %v2919, %v2957
        %s2960 = sld [smem:[#allocation10 + $0x10f]]
        %v2961 = vstv %s2960
        %v2962 = vmul.f32 %v473, %v2961
        %2964 = vrot.lane.b32.xlu0 %v2962, 90
        %v2965 = vpop.permute.xlu0 %2964
        %v2966 = vrot.slane %v2965, 1
        %v2967 = vsel %vm2816, %v2965, %v2966
        %v2969 = vadd.f32 %v2929, %v2967
        %s2970 = sld [smem:[#allocation10 + $0x110]]
        %v2971 = vstv %s2970
        %v2972 = vmul.f32 %v491, %v2971
        %2974 = vrot.lane.b32.xlu0 %v2972, 90
        %v2975 = vpop.permute.xlu0 %2974
        %v2976 = vrot.slane %v2975, 1
        %v2977 = vsel %vm2816, %v2975, %v2976
        %v2979 = vadd.f32 %v2939, %v2977
        %s2980 = sld [smem:[#allocation10 + $0x111]]
        %v2981 = vstv %s2980
        %v2982 = vmul.f32 %v491, %v2981
        %2984 = vrot.lane.b32.xlu0 %v2982, 90
        %v2985 = vpop.permute.xlu0 %2984
        %v2986 = vrot.slane %v2985, 1
        %v2987 = vsel %vm2816, %v2985, %v2986
        %v2989 = vadd.f32 %v2949, %v2987
        %s2990 = sld [smem:[#allocation10 + $0x112]]
        %v2991 = vstv %s2990
        %v2992 = vmul.f32 %v491, %v2991
        %2994 = vrot.lane.b32.xlu0 %v2992, 90
        %v2995 = vpop.permute.xlu0 %2994
        %v2996 = vrot.slane %v2995, 1
        %v2997 = vsel %vm2816, %v2995, %v2996
        %v2999 = vadd.f32 %v2959, %v2997
        %s3000 = sld [smem:[#allocation10 + $0x113]]
        %v3001 = vstv %s3000
        %v3002 = vmul.f32 %v491, %v3001
        %3004 = vrot.lane.b32.xlu0 %v3002, 90
        %v3005 = vpop.permute.xlu0 %3004
        %v3006 = vrot.slane %v3005, 1
        %v3007 = vsel %vm2816, %v3005, %v3006
        %v3009 = vadd.f32 %v2969, %v3007
        %s3010 = sld [smem:[#allocation10 + $0x114]]
        %v3011 = vstv %s3010
        %v3012 = vmul.f32 %v509, %v3011
        %3014 = vrot.lane.b32.xlu0 %v3012, 90
        %v3015 = vpop.permute.xlu0 %3014
        %v3016 = vrot.slane %v3015, 1
        %v3017 = vsel %vm2816, %v3015, %v3016
        %v3019 = vadd.f32 %v2979, %v3017
        %s3020 = sld [smem:[#allocation10 + $0x115]]
        %v3021 = vstv %s3020
        %v3022 = vmul.f32 %v509, %v3021
        %3024 = vrot.lane.b32.xlu0 %v3022, 90
        %v3025 = vpop.permute.xlu0 %3024
        %v3026 = vrot.slane %v3025, 1
        %v3027 = vsel %vm2816, %v3025, %v3026
        %v3029 = vadd.f32 %v2989, %v3027
        %s3030 = sld [smem:[#allocation10 + $0x116]]
        %v3031 = vstv %s3030
        %v3032 = vmul.f32 %v509, %v3031
        %3034 = vrot.lane.b32.xlu0 %v3032, 90
        %v3035 = vpop.permute.xlu0 %3034
        %v3036 = vrot.slane %v3035, 1
        %v3037 = vsel %vm2816, %v3035, %v3036
        %v3039 = vadd.f32 %v2999, %v3037
        %s3040 = sld [smem:[#allocation10 + $0x117]]
        %v3041 = vstv %s3040
        %v3042 = vmul.f32 %v509, %v3041
        %3044 = vrot.lane.b32.xlu0 %v3042, 90
        %v3045 = vpop.permute.xlu0 %3044
        %v3046 = vrot.slane %v3045, 1
        %v3047 = vsel %vm2816, %v3045, %v3046
        %v3049 = vadd.f32 %v3009, %v3047
        %s3050 = sld [smem:[#allocation10 + $0x118]]
        %v3051 = vstv %s3050
        %v3052 = vmul.f32 %v527, %v3051
        %3054 = vrot.lane.b32.xlu0 %v3052, 90
        %v3055 = vpop.permute.xlu0 %3054
        %v3056 = vrot.slane %v3055, 1
        %v3057 = vsel %vm2816, %v3055, %v3056
        %v3059 = vadd.f32 %v3019, %v3057
        %s3060 = sld [smem:[#allocation10 + $0x119]]
        %v3061 = vstv %s3060
        %v3062 = vmul.f32 %v527, %v3061
        %3064 = vrot.lane.b32.xlu0 %v3062, 90
        %v3065 = vpop.permute.xlu0 %3064
        %v3066 = vrot.slane %v3065, 1
        %v3067 = vsel %vm2816, %v3065, %v3066
        %v3069 = vadd.f32 %v3029, %v3067
        %s3070 = sld [smem:[#allocation10 + $0x11a]]
        %v3071 = vstv %s3070
        %v3072 = vmul.f32 %v527, %v3071
        %3074 = vrot.lane.b32.xlu0 %v3072, 90
        %v3075 = vpop.permute.xlu0 %3074
        %v3076 = vrot.slane %v3075, 1
        %v3077 = vsel %vm2816, %v3075, %v3076
        %v3079 = vadd.f32 %v3039, %v3077
        %s3080 = sld [smem:[#allocation10 + $0x11b]]
        %v3081 = vstv %s3080
        %v3082 = vmul.f32 %v527, %v3081
        %3084 = vrot.lane.b32.xlu0 %v3082, 90
        %v3085 = vpop.permute.xlu0 %3084
        %v3086 = vrot.slane %v3085, 1
        %v3087 = vsel %vm2816, %v3085, %v3086
        %v3089 = vadd.f32 %v3049, %v3087
        %s3090 = sld [smem:[#allocation10 + $0x11c]]
        %v3091 = vstv %s3090
        %v3092 = vmul.f32 %v545, %v3091
        %3094 = vrot.lane.b32.xlu0 %v3092, 90
        %v3095 = vpop.permute.xlu0 %3094
        %v3096 = vrot.slane %v3095, 1
        %v3097 = vsel %vm2816, %v3095, %v3096
        %v3099 = vadd.f32 %v3059, %v3097
        %s3100 = sld [smem:[#allocation10 + $0x11d]]
        %v3101 = vstv %s3100
        %v3102 = vmul.f32 %v545, %v3101
        %3104 = vrot.lane.b32.xlu0 %v3102, 90
        %v3105 = vpop.permute.xlu0 %3104
        %v3106 = vrot.slane %v3105, 1
        %v3107 = vsel %vm2816, %v3105, %v3106
        %v3109 = vadd.f32 %v3069, %v3107
        %s3110 = sld [smem:[#allocation10 + $0x11e]]
        %v3111 = vstv %s3110
        %v3112 = vmul.f32 %v545, %v3111
        %3114 = vrot.lane.b32.xlu0 %v3112, 90
        %v3115 = vpop.permute.xlu0 %3114
        %v3116 = vrot.slane %v3115, 1
        %v3117 = vsel %vm2816, %v3115, %v3116
        %v3119 = vadd.f32 %v3079, %v3117
        %s3120 = sld [smem:[#allocation10 + $0x11f]]
        %v3121 = vstv %s3120
        %v3122 = vmul.f32 %v545, %v3121
        %3124 = vrot.lane.b32.xlu0 %v3122, 90
        %v3125 = vpop.permute.xlu0 %3124
        %v3126 = vrot.slane %v3125, 1
        %v3127 = vsel %vm2816, %v3125, %v3126
        %v3129 = vadd.f32 %v3089, %v3127
        %s3130 = sld [smem:[#allocation11]]
        %v3131 = vstv %s3130
        %v3132 = vadd.f32 %v3099, %v3131
        %v3133 = vmax.f32 %v3132, 0.0
        %s3134 = sld [smem:[#allocation11 + $0x1]]
        %v3135 = vstv %s3134
        %v3136 = vadd.f32 %v3109, %v3135
        %v3137 = vmax.f32 %v3136, 0.0
        %s3138 = sld [smem:[#allocation11 + $0x2]]
        %v3139 = vstv %s3138
        %v3140 = vadd.f32 %v3119, %v3139
        %v3141 = vmax.f32 %v3140, 0.0
        %s3142 = sld [smem:[#allocation11 + $0x3]]
        %v3143 = vstv %s3142
        %v3144 = vadd.f32 %v3129, %v3143
        %v3145 = vmax.f32 %v3144, 0.0
        %v3146 = vmul.f32 %v3133, %v414
        %3148 = vrot.lane.b32.xlu0 %v3146, 19
        %v3149 = vpop.permute.xlu0 %3148
        %v3150 = vrot.slane %v3149, 7
        %vm3151 = vcmask 154624
        %v3152 = vsel %vm3151, %v3150, %v3149
        %v3154 = vlaneseq
        %vm3155 = vcmp.ge.s32.totalorder %v3154, 19
        %vm3156 = vcmp.lt.s32.totalorder %v3154, 307
        %vm3157 = vmand %vm3155, %vm3156
        %3158 = vst.msk [vmem:[#allocation2] ss:$4 sm:$0x7] %vm3157, %v3152
        %v3159 = vmul.f32 %v3137, %v414
        %3161 = vrot.lane.b32.xlu0 %v3159, 19
        %v3162 = vpop.permute.xlu0 %3161
        %v3163 = vrot.slane %v3162, 7
        %v3164 = vsel %vm3151, %v3163, %v3162
        %s3166 = scalar_lea.vmem [#allocation2], 1
        %3167 = vst.msk [vmem:[%s3166] ss:$4 sm:$0x7] %vm3157, %v3164
        %v3168 = vmul.f32 %v3141, %v414
        %3170 = vrot.lane.b32.xlu0 %v3168, 19
        %v3171 = vpop.permute.xlu0 %3170
        %v3172 = vrot.slane %v3171, 7
        %v3173 = vsel %vm3151, %v3172, %v3171
        %s3175 = scalar_lea.vmem [#allocation2], 2
        %3176 = vst.msk [vmem:[%s3175] ss:$4 sm:$0x7] %vm3157, %v3173
        %v3177 = vmul.f32 %v3145, %v414
        %3179 = vrot.lane.b32.xlu0 %v3177, 19
        %v3180 = vpop.permute.xlu0 %3179
        %v3181 = vrot.slane %v3180, 7
        %v3182 = vsel %vm3151, %v3181, %v3180
        %s3184 = scalar_lea.vmem [#allocation2], 3
        %3185 = vst.msk [vmem:[%s3184] ss:$4 sm:$0x7] %vm3157, %v3182
        %v3186 = vld [vmem:[#allocation2] ss:$4 sm:$0x7]
        %s3187 = sld [smem:[#allocation12]]
        %v3188 = vstv %s3187
        %v3189 = vmul.f32 %v3186, %v3188
        %v3190 = vadd.f32 %v3189, 0.0
        %s3191 = sld [smem:[#allocation12 + $0x1]]
        %v3192 = vstv %s3191
        %v3193 = vmul.f32 %v3186, %v3192
        %v3194 = vadd.f32 %v3193, 0.0
        %s3195 = sld [smem:[#allocation12 + $0x2]]
        %v3196 = vstv %s3195
        %v3197 = vmul.f32 %v3186, %v3196
        %v3198 = vadd.f32 %v3197, 0.0
        %s3199 = sld [smem:[#allocation12 + $0x3]]
        %v3200 = vstv %s3199
        %v3201 = vmul.f32 %v3186, %v3200
        %v3202 = vadd.f32 %v3201, 0.0
        %v3203 = vld [vmem:[%s3166] ss:$4 sm:$0x7]
        %s3204 = sld [smem:[#allocation12 + $0x4]]
        %v3205 = vstv %s3204
        %v3206 = vmul.f32 %v3203, %v3205
        %v3207 = vadd.f32 %v3190, %v3206
        %s3208 = sld [smem:[#allocation12 + $0x5]]
        %v3209 = vstv %s3208
        %v3210 = vmul.f32 %v3203, %v3209
        %v3211 = vadd.f32 %v3194, %v3210
        %s3212 = sld [smem:[#allocation12 + $0x6]]
        %v3213 = vstv %s3212
        %v3214 = vmul.f32 %v3203, %v3213
        %v3215 = vadd.f32 %v3198, %v3214
        %s3216 = sld [smem:[#allocation12 + $0x7]]
        %v3217 = vstv %s3216
        %v3218 = vmul.f32 %v3203, %v3217
        %v3219 = vadd.f32 %v3202, %v3218
        %v3220 = vld [vmem:[%s3175] ss:$4 sm:$0x7]
        %s3221 = sld [smem:[#allocation12 + $0x8]]
        %v3222 = vstv %s3221
        %v3223 = vmul.f32 %v3220, %v3222
        %v3224 = vadd.f32 %v3207, %v3223
        %s3225 = sld [smem:[#allocation12 + $0x9]]
        %v3226 = vstv %s3225
        %v3227 = vmul.f32 %v3220, %v3226
        %v3228 = vadd.f32 %v3211, %v3227
        %s3229 = sld [smem:[#allocation12 + $0xa]]
        %v3230 = vstv %s3229
        %v3231 = vmul.f32 %v3220, %v3230
        %v3232 = vadd.f32 %v3215, %v3231
        %s3233 = sld [smem:[#allocation12 + $0xb]]
        %v3234 = vstv %s3233
        %v3235 = vmul.f32 %v3220, %v3234
        %v3236 = vadd.f32 %v3219, %v3235
        %v3237 = vld [vmem:[%s3184] ss:$4 sm:$0x7]
        %s3238 = sld [smem:[#allocation12 + $0xc]]
        %v3239 = vstv %s3238
        %v3240 = vmul.f32 %v3237, %v3239
        %v3241 = vadd.f32 %v3224, %v3240
        %s3242 = sld [smem:[#allocation12 + $0xd]]
        %v3243 = vstv %s3242
        %v3244 = vmul.f32 %v3237, %v3243
        %v3245 = vadd.f32 %v3228, %v3244
        %s3246 = sld [smem:[#allocation12 + $0xe]]
        %v3247 = vstv %s3246
        %v3248 = vmul.f32 %v3237, %v3247
        %v3249 = vadd.f32 %v3232, %v3248
        %s3250 = sld [smem:[#allocation12 + $0xf]]
        %v3251 = vstv %s3250
        %v3252 = vmul.f32 %v3237, %v3251
        %v3253 = vadd.f32 %v3236, %v3252
        %s3254 = sld [smem:[#allocation12 + $0x10]]
        %v3255 = vstv %s3254
        %v3256 = vmul.f32 %v3186, %v3255
        %3258 = vrot.lane.b32.xlu0 %v3256, 127
        %v3259 = vpop.permute.xlu0 %3258
        %v3260 = vrot.slane %v3259, 1
        %v3261 = vsel %vm569, %v3259, %v3260
        %v3263 = vadd.f32 %v3241, %v3261
        %s3264 = sld [smem:[#allocation12 + $0x11]]
        %v3265 = vstv %s3264
        %v3266 = vmul.f32 %v3186, %v3265
        %3268 = vrot.lane.b32.xlu0 %v3266, 127
        %v3269 = vpop.permute.xlu0 %3268
        %v3270 = vrot.slane %v3269, 1
        %v3271 = vsel %vm569, %v3269, %v3270
        %v3273 = vadd.f32 %v3245, %v3271
        %s3274 = sld [smem:[#allocation12 + $0x12]]
        %v3275 = vstv %s3274
        %v3276 = vmul.f32 %v3186, %v3275
        %3278 = vrot.lane.b32.xlu0 %v3276, 127
        %v3279 = vpop.permute.xlu0 %3278
        %v3280 = vrot.slane %v3279, 1
        %v3281 = vsel %vm569, %v3279, %v3280
        %v3283 = vadd.f32 %v3249, %v3281
        %s3284 = sld [smem:[#allocation12 + $0x13]]
        %v3285 = vstv %s3284
        %v3286 = vmul.f32 %v3186, %v3285
        %3288 = vrot.lane.b32.xlu0 %v3286, 127
        %v3289 = vpop.permute.xlu0 %3288
        %v3290 = vrot.slane %v3289, 1
        %v3291 = vsel %vm569, %v3289, %v3290
        %v3293 = vadd.f32 %v3253, %v3291
        %s3294 = sld [smem:[#allocation12 + $0x14]]
        %v3295 = vstv %s3294
        %v3296 = vmul.f32 %v3203, %v3295
        %3298 = vrot.lane.b32.xlu0 %v3296, 127
        %v3299 = vpop.permute.xlu0 %3298
        %v3300 = vrot.slane %v3299, 1
        %v3301 = vsel %vm569, %v3299, %v3300
        %v3303 = vadd.f32 %v3263, %v3301
        %s3304 = sld [smem:[#allocation12 + $0x15]]
        %v3305 = vstv %s3304
        %v3306 = vmul.f32 %v3203, %v3305
        %3308 = vrot.lane.b32.xlu0 %v3306, 127
        %v3309 = vpop.permute.xlu0 %3308
        %v3310 = vrot.slane %v3309, 1
        %v3311 = vsel %vm569, %v3309, %v3310
        %v3313 = vadd.f32 %v3273, %v3311
        %s3314 = sld [smem:[#allocation12 + $0x16]]
        %v3315 = vstv %s3314
        %v3316 = vmul.f32 %v3203, %v3315
        %3318 = vrot.lane.b32.xlu0 %v3316, 127
        %v3319 = vpop.permute.xlu0 %3318
        %v3320 = vrot.slane %v3319, 1
        %v3321 = vsel %vm569, %v3319, %v3320
        %v3323 = vadd.f32 %v3283, %v3321
        %s3324 = sld [smem:[#allocation12 + $0x17]]
        %v3325 = vstv %s3324
        %v3326 = vmul.f32 %v3203, %v3325
        %3328 = vrot.lane.b32.xlu0 %v3326, 127
        %v3329 = vpop.permute.xlu0 %3328
        %v3330 = vrot.slane %v3329, 1
        %v3331 = vsel %vm569, %v3329, %v3330
        %v3333 = vadd.f32 %v3293, %v3331
        %s3334 = sld [smem:[#allocation12 + $0x18]]
        %v3335 = vstv %s3334
        %v3336 = vmul.f32 %v3220, %v3335
        %3338 = vrot.lane.b32.xlu0 %v3336, 127
        %v3339 = vpop.permute.xlu0 %3338
        %v3340 = vrot.slane %v3339, 1
        %v3341 = vsel %vm569, %v3339, %v3340
        %v3343 = vadd.f32 %v3303, %v3341
        %s3344 = sld [smem:[#allocation12 + $0x19]]
        %v3345 = vstv %s3344
        %v3346 = vmul.f32 %v3220, %v3345
        %3348 = vrot.lane.b32.xlu0 %v3346, 127
        %v3349 = vpop.permute.xlu0 %3348
        %v3350 = vrot.slane %v3349, 1
        %v3351 = vsel %vm569, %v3349, %v3350
        %v3353 = vadd.f32 %v3313, %v3351
        %s3354 = sld [smem:[#allocation12 + $0x1a]]
        %v3355 = vstv %s3354
        %v3356 = vmul.f32 %v3220, %v3355
        %3358 = vrot.lane.b32.xlu0 %v3356, 127
        %v3359 = vpop.permute.xlu0 %3358
        %v3360 = vrot.slane %v3359, 1
        %v3361 = vsel %vm569, %v3359, %v3360
        %v3363 = vadd.f32 %v3323, %v3361
        %s3364 = sld [smem:[#allocation12 + $0x1b]]
        %v3365 = vstv %s3364
        %v3366 = vmul.f32 %v3220, %v3365
        %3368 = vrot.lane.b32.xlu0 %v3366, 127
        %v3369 = vpop.permute.xlu0 %3368
        %v3370 = vrot.slane %v3369, 1
        %v3371 = vsel %vm569, %v3369, %v3370
        %v3373 = vadd.f32 %v3333, %v3371
        %s3374 = sld [smem:[#allocation12 + $0x1c]]
        %v3375 = vstv %s3374
        %v3376 = vmul.f32 %v3237, %v3375
        %3378 = vrot.lane.b32.xlu0 %v3376, 127
        %v3379 = vpop.permute.xlu0 %3378
        %v3380 = vrot.slane %v3379, 1
        %v3381 = vsel %vm569, %v3379, %v3380
        %v3383 = vadd.f32 %v3343, %v3381
        %s3384 = sld [smem:[#allocation12 + $0x1d]]
        %v3385 = vstv %s3384
        %v3386 = vmul.f32 %v3237, %v3385
        %3388 = vrot.lane.b32.xlu0 %v3386, 127
        %v3389 = vpop.permute.xlu0 %3388
        %v3390 = vrot.slane %v3389, 1
        %v3391 = vsel %vm569, %v3389, %v3390
        %v3393 = vadd.f32 %v3353, %v3391
        %s3394 = sld [smem:[#allocation12 + $0x1e]]
        %v3395 = vstv %s3394
        %v3396 = vmul.f32 %v3237, %v3395
        %3398 = vrot.lane.b32.xlu0 %v3396, 127
        %v3399 = vpop.permute.xlu0 %3398
        %v3400 = vrot.slane %v3399, 1
        %v3401 = vsel %vm569, %v3399, %v3400
        %v3403 = vadd.f32 %v3363, %v3401
        %s3404 = sld [smem:[#allocation12 + $0x1f]]
        %v3405 = vstv %s3404
        %v3406 = vmul.f32 %v3237, %v3405
        %3408 = vrot.lane.b32.xlu0 %v3406, 127
        %v3409 = vpop.permute.xlu0 %3408
        %v3410 = vrot.slane %v3409, 1
        %v3411 = vsel %vm569, %v3409, %v3410
        %v3413 = vadd.f32 %v3373, %v3411
        %s3414 = sld [smem:[#allocation12 + $0x20]]
        %v3415 = vstv %s3414
        %v3416 = vmul.f32 %v3186, %v3415
        %3418 = vrot.lane.b32.xlu0 %v3416, 126
        %v3419 = vpop.permute.xlu0 %3418
        %v3420 = vrot.slane %v3419, 1
        %v3421 = vsel %vm890, %v3419, %v3420
        %v3423 = vadd.f32 %v3383, %v3421
        %s3424 = sld [smem:[#allocation12 + $0x21]]
        %v3425 = vstv %s3424
        %v3426 = vmul.f32 %v3186, %v3425
        %3428 = vrot.lane.b32.xlu0 %v3426, 126
        %v3429 = vpop.permute.xlu0 %3428
        %v3430 = vrot.slane %v3429, 1
        %v3431 = vsel %vm890, %v3429, %v3430
        %v3433 = vadd.f32 %v3393, %v3431
        %s3434 = sld [smem:[#allocation12 + $0x22]]
        %v3435 = vstv %s3434
        %v3436 = vmul.f32 %v3186, %v3435
        %3438 = vrot.lane.b32.xlu0 %v3436, 126
        %v3439 = vpop.permute.xlu0 %3438
        %v3440 = vrot.slane %v3439, 1
        %v3441 = vsel %vm890, %v3439, %v3440
        %v3443 = vadd.f32 %v3403, %v3441
        %s3444 = sld [smem:[#allocation12 + $0x23]]
        %v3445 = vstv %s3444
        %v3446 = vmul.f32 %v3186, %v3445
        %3448 = vrot.lane.b32.xlu0 %v3446, 126
        %v3449 = vpop.permute.xlu0 %3448
        %v3450 = vrot.slane %v3449, 1
        %v3451 = vsel %vm890, %v3449, %v3450
        %v3453 = vadd.f32 %v3413, %v3451
        %s3454 = sld [smem:[#allocation12 + $0x24]]
        %v3455 = vstv %s3454
        %v3456 = vmul.f32 %v3203, %v3455
        %3458 = vrot.lane.b32.xlu0 %v3456, 126
        %v3459 = vpop.permute.xlu0 %3458
        %v3460 = vrot.slane %v3459, 1
        %v3461 = vsel %vm890, %v3459, %v3460
        %v3463 = vadd.f32 %v3423, %v3461
        %s3464 = sld [smem:[#allocation12 + $0x25]]
        %v3465 = vstv %s3464
        %v3466 = vmul.f32 %v3203, %v3465
        %3468 = vrot.lane.b32.xlu0 %v3466, 126
        %v3469 = vpop.permute.xlu0 %3468
        %v3470 = vrot.slane %v3469, 1
        %v3471 = vsel %vm890, %v3469, %v3470
        %v3473 = vadd.f32 %v3433, %v3471
        %s3474 = sld [smem:[#allocation12 + $0x26]]
        %v3475 = vstv %s3474
        %v3476 = vmul.f32 %v3203, %v3475
        %3478 = vrot.lane.b32.xlu0 %v3476, 126
        %v3479 = vpop.permute.xlu0 %3478
        %v3480 = vrot.slane %v3479, 1
        %v3481 = vsel %vm890, %v3479, %v3480
        %v3483 = vadd.f32 %v3443, %v3481
        %s3484 = sld [smem:[#allocation12 + $0x27]]
        %v3485 = vstv %s3484
        %v3486 = vmul.f32 %v3203, %v3485
        %3488 = vrot.lane.b32.xlu0 %v3486, 126
        %v3489 = vpop.permute.xlu0 %3488
        %v3490 = vrot.slane %v3489, 1
        %v3491 = vsel %vm890, %v3489, %v3490
        %v3493 = vadd.f32 %v3453, %v3491
        %s3494 = sld [smem:[#allocation12 + $0x28]]
        %v3495 = vstv %s3494
        %v3496 = vmul.f32 %v3220, %v3495
        %3498 = vrot.lane.b32.xlu0 %v3496, 126
        %v3499 = vpop.permute.xlu0 %3498
        %v3500 = vrot.slane %v3499, 1
        %v3501 = vsel %vm890, %v3499, %v3500
        %v3503 = vadd.f32 %v3463, %v3501
        %s3504 = sld [smem:[#allocation12 + $0x29]]
        %v3505 = vstv %s3504
        %v3506 = vmul.f32 %v3220, %v3505
        %3508 = vrot.lane.b32.xlu0 %v3506, 126
        %v3509 = vpop.permute.xlu0 %3508
        %v3510 = vrot.slane %v3509, 1
        %v3511 = vsel %vm890, %v3509, %v3510
        %v3513 = vadd.f32 %v3473, %v3511
        %s3514 = sld [smem:[#allocation12 + $0x2a]]
        %v3515 = vstv %s3514
        %v3516 = vmul.f32 %v3220, %v3515
        %3518 = vrot.lane.b32.xlu0 %v3516, 126
        %v3519 = vpop.permute.xlu0 %3518
        %v3520 = vrot.slane %v3519, 1
        %v3521 = vsel %vm890, %v3519, %v3520
        %v3523 = vadd.f32 %v3483, %v3521
        %s3524 = sld [smem:[#allocation12 + $0x2b]]
        %v3525 = vstv %s3524
        %v3526 = vmul.f32 %v3220, %v3525
        %3528 = vrot.lane.b32.xlu0 %v3526, 126
        %v3529 = vpop.permute.xlu0 %3528
        %v3530 = vrot.slane %v3529, 1
        %v3531 = vsel %vm890, %v3529, %v3530
        %v3533 = vadd.f32 %v3493, %v3531
        %s3534 = sld [smem:[#allocation12 + $0x2c]]
        %v3535 = vstv %s3534
        %v3536 = vmul.f32 %v3237, %v3535
        %3538 = vrot.lane.b32.xlu0 %v3536, 126
        %v3539 = vpop.permute.xlu0 %3538
        %v3540 = vrot.slane %v3539, 1
        %v3541 = vsel %vm890, %v3539, %v3540
        %v3543 = vadd.f32 %v3503, %v3541
        %s3544 = sld [smem:[#allocation12 + $0x2d]]
        %v3545 = vstv %s3544
        %v3546 = vmul.f32 %v3237, %v3545
        %3548 = vrot.lane.b32.xlu0 %v3546, 126
        %v3549 = vpop.permute.xlu0 %3548
        %v3550 = vrot.slane %v3549, 1
        %v3551 = vsel %vm890, %v3549, %v3550
        %v3553 = vadd.f32 %v3513, %v3551
        %s3554 = sld [smem:[#allocation12 + $0x2e]]
        %v3555 = vstv %s3554
        %v3556 = vmul.f32 %v3237, %v3555
        %3558 = vrot.lane.b32.xlu0 %v3556, 126
        %v3559 = vpop.permute.xlu0 %3558
        %v3560 = vrot.slane %v3559, 1
        %v3561 = vsel %vm890, %v3559, %v3560
        %v3563 = vadd.f32 %v3523, %v3561
        %s3564 = sld [smem:[#allocation12 + $0x2f]]
        %v3565 = vstv %s3564
        %v3566 = vmul.f32 %v3237, %v3565
        %3568 = vrot.lane.b32.xlu0 %v3566, 126
        %v3569 = vpop.permute.xlu0 %3568
        %v3570 = vrot.slane %v3569, 1
        %v3571 = vsel %vm890, %v3569, %v3570
        %v3573 = vadd.f32 %v3533, %v3571
        %s3574 = sld [smem:[#allocation12 + $0x30]]
        %v3575 = vstv %s3574
        %v3576 = vmul.f32 %v3186, %v3575
        %3578 = vrot.lane.b32.xlu0 %v3576, 110
        %v3579 = vpop.permute.xlu0 %3578
        %v3580 = vrot.slane %v3579, 1
        %v3581 = vsel %vm1211, %v3579, %v3580
        %v3583 = vadd.f32 %v3543, %v3581
        %s3584 = sld [smem:[#allocation12 + $0x31]]
        %v3585 = vstv %s3584
        %v3586 = vmul.f32 %v3186, %v3585
        %3588 = vrot.lane.b32.xlu0 %v3586, 110
        %v3589 = vpop.permute.xlu0 %3588
        %v3590 = vrot.slane %v3589, 1
        %v3591 = vsel %vm1211, %v3589, %v3590
        %v3593 = vadd.f32 %v3553, %v3591
        %s3594 = sld [smem:[#allocation12 + $0x32]]
        %v3595 = vstv %s3594
        %v3596 = vmul.f32 %v3186, %v3595
        %3598 = vrot.lane.b32.xlu0 %v3596, 110
        %v3599 = vpop.permute.xlu0 %3598
        %v3600 = vrot.slane %v3599, 1
        %v3601 = vsel %vm1211, %v3599, %v3600
        %v3603 = vadd.f32 %v3563, %v3601
        %s3604 = sld [smem:[#allocation12 + $0x33]]
        %v3605 = vstv %s3604
        %v3606 = vmul.f32 %v3186, %v3605
        %3608 = vrot.lane.b32.xlu0 %v3606, 110
        %v3609 = vpop.permute.xlu0 %3608
        %v3610 = vrot.slane %v3609, 1
        %v3611 = vsel %vm1211, %v3609, %v3610
        %v3613 = vadd.f32 %v3573, %v3611
        %s3614 = sld [smem:[#allocation12 + $0x34]]
        %v3615 = vstv %s3614
        %v3616 = vmul.f32 %v3203, %v3615
        %3618 = vrot.lane.b32.xlu0 %v3616, 110
        %v3619 = vpop.permute.xlu0 %3618
        %v3620 = vrot.slane %v3619, 1
        %v3621 = vsel %vm1211, %v3619, %v3620
        %v3623 = vadd.f32 %v3583, %v3621
        %s3624 = sld [smem:[#allocation12 + $0x35]]
        %v3625 = vstv %s3624
        %v3626 = vmul.f32 %v3203, %v3625
        %3628 = vrot.lane.b32.xlu0 %v3626, 110
        %v3629 = vpop.permute.xlu0 %3628
        %v3630 = vrot.slane %v3629, 1
        %v3631 = vsel %vm1211, %v3629, %v3630
        %v3633 = vadd.f32 %v3593, %v3631
        %s3634 = sld [smem:[#allocation12 + $0x36]]
        %v3635 = vstv %s3634
        %v3636 = vmul.f32 %v3203, %v3635
        %3638 = vrot.lane.b32.xlu0 %v3636, 110
        %v3639 = vpop.permute.xlu0 %3638
        %v3640 = vrot.slane %v3639, 1
        %v3641 = vsel %vm1211, %v3639, %v3640
        %v3643 = vadd.f32 %v3603, %v3641
        %s3644 = sld [smem:[#allocation12 + $0x37]]
        %v3645 = vstv %s3644
        %v3646 = vmul.f32 %v3203, %v3645
        %3648 = vrot.lane.b32.xlu0 %v3646, 110
        %v3649 = vpop.permute.xlu0 %3648
        %v3650 = vrot.slane %v3649, 1
        %v3651 = vsel %vm1211, %v3649, %v3650
        %v3653 = vadd.f32 %v3613, %v3651
        %s3654 = sld [smem:[#allocation12 + $0x38]]
        %v3655 = vstv %s3654
        %v3656 = vmul.f32 %v3220, %v3655
        %3658 = vrot.lane.b32.xlu0 %v3656, 110
        %v3659 = vpop.permute.xlu0 %3658
        %v3660 = vrot.slane %v3659, 1
        %v3661 = vsel %vm1211, %v3659, %v3660
        %v3663 = vadd.f32 %v3623, %v3661
        %s3664 = sld [smem:[#allocation12 + $0x39]]
        %v3665 = vstv %s3664
        %v3666 = vmul.f32 %v3220, %v3665
        %3668 = vrot.lane.b32.xlu0 %v3666, 110
        %v3669 = vpop.permute.xlu0 %3668
        %v3670 = vrot.slane %v3669, 1
        %v3671 = vsel %vm1211, %v3669, %v3670
        %v3673 = vadd.f32 %v3633, %v3671
        %s3674 = sld [smem:[#allocation12 + $0x3a]]
        %v3675 = vstv %s3674
        %v3676 = vmul.f32 %v3220, %v3675
        %3678 = vrot.lane.b32.xlu0 %v3676, 110
        %v3679 = vpop.permute.xlu0 %3678
        %v3680 = vrot.slane %v3679, 1
        %v3681 = vsel %vm1211, %v3679, %v3680
        %v3683 = vadd.f32 %v3643, %v3681
        %s3684 = sld [smem:[#allocation12 + $0x3b]]
        %v3685 = vstv %s3684
        %v3686 = vmul.f32 %v3220, %v3685
        %3688 = vrot.lane.b32.xlu0 %v3686, 110
        %v3689 = vpop.permute.xlu0 %3688
        %v3690 = vrot.slane %v3689, 1
        %v3691 = vsel %vm1211, %v3689, %v3690
        %v3693 = vadd.f32 %v3653, %v3691
        %s3694 = sld [smem:[#allocation12 + $0x3c]]
        %v3695 = vstv %s3694
        %v3696 = vmul.f32 %v3237, %v3695
        %3698 = vrot.lane.b32.xlu0 %v3696, 110
        %v3699 = vpop.permute.xlu0 %3698
        %v3700 = vrot.slane %v3699, 1
        %v3701 = vsel %vm1211, %v3699, %v3700
        %v3703 = vadd.f32 %v3663, %v3701
        %s3704 = sld [smem:[#allocation12 + $0x3d]]
        %v3705 = vstv %s3704
        %v3706 = vmul.f32 %v3237, %v3705
        %3708 = vrot.lane.b32.xlu0 %v3706, 110
        %v3709 = vpop.permute.xlu0 %3708
        %v3710 = vrot.slane %v3709, 1
        %v3711 = vsel %vm1211, %v3709, %v3710
        %v3713 = vadd.f32 %v3673, %v3711
        %s3714 = sld [smem:[#allocation12 + $0x3e]]
        %v3715 = vstv %s3714
        %v3716 = vmul.f32 %v3237, %v3715
        %3718 = vrot.lane.b32.xlu0 %v3716, 110
        %v3719 = vpop.permute.xlu0 %3718
        %v3720 = vrot.slane %v3719, 1
        %v3721 = vsel %vm1211, %v3719, %v3720
        %v3723 = vadd.f32 %v3683, %v3721
        %s3724 = sld [smem:[#allocation12 + $0x3f]]
        %v3725 = vstv %s3724
        %v3726 = vmul.f32 %v3237, %v3725
        %3728 = vrot.lane.b32.xlu0 %v3726, 110
        %v3729 = vpop.permute.xlu0 %3728
        %v3730 = vrot.slane %v3729, 1
        %v3731 = vsel %vm1211, %v3729, %v3730
        %v3733 = vadd.f32 %v3693, %v3731
        %s3734 = sld [smem:[#allocation12 + $0x40]]
        %v3735 = vstv %s3734
        %v3736 = vmul.f32 %v3186, %v3735
        %3738 = vrot.lane.b32.xlu0 %v3736, 109
        %v3739 = vpop.permute.xlu0 %3738
        %v3740 = vrot.slane %v3739, 1
        %v3741 = vsel %vm1532, %v3739, %v3740
        %v3743 = vadd.f32 %v3703, %v3741
        %s3744 = sld [smem:[#allocation12 + $0x41]]
        %v3745 = vstv %s3744
        %v3746 = vmul.f32 %v3186, %v3745
        %3748 = vrot.lane.b32.xlu0 %v3746, 109
        %v3749 = vpop.permute.xlu0 %3748
        %v3750 = vrot.slane %v3749, 1
        %v3751 = vsel %vm1532, %v3749, %v3750
        %v3753 = vadd.f32 %v3713, %v3751
        %s3754 = sld [smem:[#allocation12 + $0x42]]
        %v3755 = vstv %s3754
        %v3756 = vmul.f32 %v3186, %v3755
        %3758 = vrot.lane.b32.xlu0 %v3756, 109
        %v3759 = vpop.permute.xlu0 %3758
        %v3760 = vrot.slane %v3759, 1
        %v3761 = vsel %vm1532, %v3759, %v3760
        %v3763 = vadd.f32 %v3723, %v3761
        %s3764 = sld [smem:[#allocation12 + $0x43]]
        %v3765 = vstv %s3764
        %v3766 = vmul.f32 %v3186, %v3765
        %3768 = vrot.lane.b32.xlu0 %v3766, 109
        %v3769 = vpop.permute.xlu0 %3768
        %v3770 = vrot.slane %v3769, 1
        %v3771 = vsel %vm1532, %v3769, %v3770
        %v3773 = vadd.f32 %v3733, %v3771
        %s3774 = sld [smem:[#allocation12 + $0x44]]
        %v3775 = vstv %s3774
        %v3776 = vmul.f32 %v3203, %v3775
        %3778 = vrot.lane.b32.xlu0 %v3776, 109
        %v3779 = vpop.permute.xlu0 %3778
        %v3780 = vrot.slane %v3779, 1
        %v3781 = vsel %vm1532, %v3779, %v3780
        %v3783 = vadd.f32 %v3743, %v3781
        %s3784 = sld [smem:[#allocation12 + $0x45]]
        %v3785 = vstv %s3784
        %v3786 = vmul.f32 %v3203, %v3785
        %3788 = vrot.lane.b32.xlu0 %v3786, 109
        %v3789 = vpop.permute.xlu0 %3788
        %v3790 = vrot.slane %v3789, 1
        %v3791 = vsel %vm1532, %v3789, %v3790
        %v3793 = vadd.f32 %v3753, %v3791
        %s3794 = sld [smem:[#allocation12 + $0x46]]
        %v3795 = vstv %s3794
        %v3796 = vmul.f32 %v3203, %v3795
        %3798 = vrot.lane.b32.xlu0 %v3796, 109
        %v3799 = vpop.permute.xlu0 %3798
        %v3800 = vrot.slane %v3799, 1
        %v3801 = vsel %vm1532, %v3799, %v3800
        %v3803 = vadd.f32 %v3763, %v3801
        %s3804 = sld [smem:[#allocation12 + $0x47]]
        %v3805 = vstv %s3804
        %v3806 = vmul.f32 %v3203, %v3805
        %3808 = vrot.lane.b32.xlu0 %v3806, 109
        %v3809 = vpop.permute.xlu0 %3808
        %v3810 = vrot.slane %v3809, 1
        %v3811 = vsel %vm1532, %v3809, %v3810
        %v3813 = vadd.f32 %v3773, %v3811
        %s3814 = sld [smem:[#allocation12 + $0x48]]
        %v3815 = vstv %s3814
        %v3816 = vmul.f32 %v3220, %v3815
        %3818 = vrot.lane.b32.xlu0 %v3816, 109
        %v3819 = vpop.permute.xlu0 %3818
        %v3820 = vrot.slane %v3819, 1
        %v3821 = vsel %vm1532, %v3819, %v3820
        %v3823 = vadd.f32 %v3783, %v3821
        %s3824 = sld [smem:[#allocation12 + $0x49]]
        %v3825 = vstv %s3824
        %v3826 = vmul.f32 %v3220, %v3825
        %3828 = vrot.lane.b32.xlu0 %v3826, 109
        %v3829 = vpop.permute.xlu0 %3828
        %v3830 = vrot.slane %v3829, 1
        %v3831 = vsel %vm1532, %v3829, %v3830
        %v3833 = vadd.f32 %v3793, %v3831
        %s3834 = sld [smem:[#allocation12 + $0x4a]]
        %v3835 = vstv %s3834
        %v3836 = vmul.f32 %v3220, %v3835
        %3838 = vrot.lane.b32.xlu0 %v3836, 109
        %v3839 = vpop.permute.xlu0 %3838
        %v3840 = vrot.slane %v3839, 1
        %v3841 = vsel %vm1532, %v3839, %v3840
        %v3843 = vadd.f32 %v3803, %v3841
        %s3844 = sld [smem:[#allocation12 + $0x4b]]
        %v3845 = vstv %s3844
        %v3846 = vmul.f32 %v3220, %v3845
        %3848 = vrot.lane.b32.xlu0 %v3846, 109
        %v3849 = vpop.permute.xlu0 %3848
        %v3850 = vrot.slane %v3849, 1
        %v3851 = vsel %vm1532, %v3849, %v3850
        %v3853 = vadd.f32 %v3813, %v3851
        %s3854 = sld [smem:[#allocation12 + $0x4c]]
        %v3855 = vstv %s3854
        %v3856 = vmul.f32 %v3237, %v3855
        %3858 = vrot.lane.b32.xlu0 %v3856, 109
        %v3859 = vpop.permute.xlu0 %3858
        %v3860 = vrot.slane %v3859, 1
        %v3861 = vsel %vm1532, %v3859, %v3860
        %v3863 = vadd.f32 %v3823, %v3861
        %s3864 = sld [smem:[#allocation12 + $0x4d]]
        %v3865 = vstv %s3864
        %v3866 = vmul.f32 %v3237, %v3865
        %3868 = vrot.lane.b32.xlu0 %v3866, 109
        %v3869 = vpop.permute.xlu0 %3868
        %v3870 = vrot.slane %v3869, 1
        %v3871 = vsel %vm1532, %v3869, %v3870
        %v3873 = vadd.f32 %v3833, %v3871
        %s3874 = sld [smem:[#allocation12 + $0x4e]]
        %v3875 = vstv %s3874
        %v3876 = vmul.f32 %v3237, %v3875
        %3878 = vrot.lane.b32.xlu0 %v3876, 109
        %v3879 = vpop.permute.xlu0 %3878
        %v3880 = vrot.slane %v3879, 1
        %v3881 = vsel %vm1532, %v3879, %v3880
        %v3883 = vadd.f32 %v3843, %v3881
        %s3884 = sld [smem:[#allocation12 + $0x4f]]
        %v3885 = vstv %s3884
        %v3886 = vmul.f32 %v3237, %v3885
        %3888 = vrot.lane.b32.xlu0 %v3886, 109
        %v3889 = vpop.permute.xlu0 %3888
        %v3890 = vrot.slane %v3889, 1
        %v3891 = vsel %vm1532, %v3889, %v3890
        %v3893 = vadd.f32 %v3853, %v3891
        %s3894 = sld [smem:[#allocation12 + $0x50]]
        %v3895 = vstv %s3894
        %v3896 = vmul.f32 %v3186, %v3895
        %3898 = vrot.lane.b32.xlu0 %v3896, 108
        %v3899 = vpop.permute.xlu0 %3898
        %v3900 = vrot.slane %v3899, 1
        %v3901 = vsel %vm1853, %v3899, %v3900
        %v3903 = vadd.f32 %v3863, %v3901
        %s3904 = sld [smem:[#allocation12 + $0x51]]
        %v3905 = vstv %s3904
        %v3906 = vmul.f32 %v3186, %v3905
        %3908 = vrot.lane.b32.xlu0 %v3906, 108
        %v3909 = vpop.permute.xlu0 %3908
        %v3910 = vrot.slane %v3909, 1
        %v3911 = vsel %vm1853, %v3909, %v3910
        %v3913 = vadd.f32 %v3873, %v3911
        %s3914 = sld [smem:[#allocation12 + $0x52]]
        %v3915 = vstv %s3914
        %v3916 = vmul.f32 %v3186, %v3915
        %3918 = vrot.lane.b32.xlu0 %v3916, 108
        %v3919 = vpop.permute.xlu0 %3918
        %v3920 = vrot.slane %v3919, 1
        %v3921 = vsel %vm1853, %v3919, %v3920
        %v3923 = vadd.f32 %v3883, %v3921
        %s3924 = sld [smem:[#allocation12 + $0x53]]
        %v3925 = vstv %s3924
        %v3926 = vmul.f32 %v3186, %v3925
        %3928 = vrot.lane.b32.xlu0 %v3926, 108
        %v3929 = vpop.permute.xlu0 %3928
        %v3930 = vrot.slane %v3929, 1
        %v3931 = vsel %vm1853, %v3929, %v3930
        %v3933 = vadd.f32 %v3893, %v3931
        %s3934 = sld [smem:[#allocation12 + $0x54]]
        %v3935 = vstv %s3934
        %v3936 = vmul.f32 %v3203, %v3935
        %3938 = vrot.lane.b32.xlu0 %v3936, 108
        %v3939 = vpop.permute.xlu0 %3938
        %v3940 = vrot.slane %v3939, 1
        %v3941 = vsel %vm1853, %v3939, %v3940
        %v3943 = vadd.f32 %v3903, %v3941
        %s3944 = sld [smem:[#allocation12 + $0x55]]
        %v3945 = vstv %s3944
        %v3946 = vmul.f32 %v3203, %v3945
        %3948 = vrot.lane.b32.xlu0 %v3946, 108
        %v3949 = vpop.permute.xlu0 %3948
        %v3950 = vrot.slane %v3949, 1
        %v3951 = vsel %vm1853, %v3949, %v3950
        %v3953 = vadd.f32 %v3913, %v3951
        %s3954 = sld [smem:[#allocation12 + $0x56]]
        %v3955 = vstv %s3954
        %v3956 = vmul.f32 %v3203, %v3955
        %3958 = vrot.lane.b32.xlu0 %v3956, 108
        %v3959 = vpop.permute.xlu0 %3958
        %v3960 = vrot.slane %v3959, 1
        %v3961 = vsel %vm1853, %v3959, %v3960
        %v3963 = vadd.f32 %v3923, %v3961
        %s3964 = sld [smem:[#allocation12 + $0x57]]
        %v3965 = vstv %s3964
        %v3966 = vmul.f32 %v3203, %v3965
        %3968 = vrot.lane.b32.xlu0 %v3966, 108
        %v3969 = vpop.permute.xlu0 %3968
        %v3970 = vrot.slane %v3969, 1
        %v3971 = vsel %vm1853, %v3969, %v3970
        %v3973 = vadd.f32 %v3933, %v3971
        %s3974 = sld [smem:[#allocation12 + $0x58]]
        %v3975 = vstv %s3974
        %v3976 = vmul.f32 %v3220, %v3975
        %3978 = vrot.lane.b32.xlu0 %v3976, 108
        %v3979 = vpop.permute.xlu0 %3978
        %v3980 = vrot.slane %v3979, 1
        %v3981 = vsel %vm1853, %v3979, %v3980
        %v3983 = vadd.f32 %v3943, %v3981
        %s3984 = sld [smem:[#allocation12 + $0x59]]
        %v3985 = vstv %s3984
        %v3986 = vmul.f32 %v3220, %v3985
        %3988 = vrot.lane.b32.xlu0 %v3986, 108
        %v3989 = vpop.permute.xlu0 %3988
        %v3990 = vrot.slane %v3989, 1
        %v3991 = vsel %vm1853, %v3989, %v3990
        %v3993 = vadd.f32 %v3953, %v3991
        %s3994 = sld [smem:[#allocation12 + $0x5a]]
        %v3995 = vstv %s3994
        %v3996 = vmul.f32 %v3220, %v3995
        %3998 = vrot.lane.b32.xlu0 %v3996, 108
        %v3999 = vpop.permute.xlu0 %3998
        %v4000 = vrot.slane %v3999, 1
        %v4001 = vsel %vm1853, %v3999, %v4000
        %v4003 = vadd.f32 %v3963, %v4001
        %s4004 = sld [smem:[#allocation12 + $0x5b]]
        %v4005 = vstv %s4004
        %v4006 = vmul.f32 %v3220, %v4005
        %4008 = vrot.lane.b32.xlu0 %v4006, 108
        %v4009 = vpop.permute.xlu0 %4008
        %v4010 = vrot.slane %v4009, 1
        %v4011 = vsel %vm1853, %v4009, %v4010
        %v4013 = vadd.f32 %v3973, %v4011
        %s4014 = sld [smem:[#allocation12 + $0x5c]]
        %v4015 = vstv %s4014
        %v4016 = vmul.f32 %v3237, %v4015
        %4018 = vrot.lane.b32.xlu0 %v4016, 108
        %v4019 = vpop.permute.xlu0 %4018
        %v4020 = vrot.slane %v4019, 1
        %v4021 = vsel %vm1853, %v4019, %v4020
        %v4023 = vadd.f32 %v3983, %v4021
        %s4024 = sld [smem:[#allocation12 + $0x5d]]
        %v4025 = vstv %s4024
        %v4026 = vmul.f32 %v3237, %v4025
        %4028 = vrot.lane.b32.xlu0 %v4026, 108
        %v4029 = vpop.permute.xlu0 %4028
        %v4030 = vrot.slane %v4029, 1
        %v4031 = vsel %vm1853, %v4029, %v4030
        %v4033 = vadd.f32 %v3993, %v4031
        %s4034 = sld [smem:[#allocation12 + $0x5e]]
        %v4035 = vstv %s4034
        %v4036 = vmul.f32 %v3237, %v4035
        %4038 = vrot.lane.b32.xlu0 %v4036, 108
        %v4039 = vpop.permute.xlu0 %4038
        %v4040 = vrot.slane %v4039, 1
        %v4041 = vsel %vm1853, %v4039, %v4040
        %v4043 = vadd.f32 %v4003, %v4041
        %s4044 = sld [smem:[#allocation12 + $0x5f]]
        %v4045 = vstv %s4044
        %v4046 = vmul.f32 %v3237, %v4045
        %4048 = vrot.lane.b32.xlu0 %v4046, 108
        %v4049 = vpop.permute.xlu0 %4048
        %v4050 = vrot.slane %v4049, 1
        %v4051 = vsel %vm1853, %v4049, %v4050
        %v4053 = vadd.f32 %v4013, %v4051
        %s4054 = sld [smem:[#allocation12 + $0x60]]
        %v4055 = vstv %s4054
        %v4056 = vmul.f32 %v3186, %v4055
        %4058 = vrot.lane.b32.xlu0 %v4056, 92
        %v4059 = vpop.permute.xlu0 %4058
        %v4060 = vrot.slane %v4059, 1
        %v4061 = vsel %vm2174, %v4059, %v4060
        %v4063 = vadd.f32 %v4023, %v4061
        %s4064 = sld [smem:[#allocation12 + $0x61]]
        %v4065 = vstv %s4064
        %v4066 = vmul.f32 %v3186, %v4065
        %4068 = vrot.lane.b32.xlu0 %v4066, 92
        %v4069 = vpop.permute.xlu0 %4068
        %v4070 = vrot.slane %v4069, 1
        %v4071 = vsel %vm2174, %v4069, %v4070
        %v4073 = vadd.f32 %v4033, %v4071
        %s4074 = sld [smem:[#allocation12 + $0x62]]
        %v4075 = vstv %s4074
        %v4076 = vmul.f32 %v3186, %v4075
        %4078 = vrot.lane.b32.xlu0 %v4076, 92
        %v4079 = vpop.permute.xlu0 %4078
        %v4080 = vrot.slane %v4079, 1
        %v4081 = vsel %vm2174, %v4079, %v4080
        %v4083 = vadd.f32 %v4043, %v4081
        %s4084 = sld [smem:[#allocation12 + $0x63]]
        %v4085 = vstv %s4084
        %v4086 = vmul.f32 %v3186, %v4085
        %4088 = vrot.lane.b32.xlu0 %v4086, 92
        %v4089 = vpop.permute.xlu0 %4088
        %v4090 = vrot.slane %v4089, 1
        %v4091 = vsel %vm2174, %v4089, %v4090
        %v4093 = vadd.f32 %v4053, %v4091
        %s4094 = sld [smem:[#allocation12 + $0x64]]
        %v4095 = vstv %s4094
        %v4096 = vmul.f32 %v3203, %v4095
        %4098 = vrot.lane.b32.xlu0 %v4096, 92
        %v4099 = vpop.permute.xlu0 %4098
        %v4100 = vrot.slane %v4099, 1
        %v4101 = vsel %vm2174, %v4099, %v4100
        %v4103 = vadd.f32 %v4063, %v4101
        %s4104 = sld [smem:[#allocation12 + $0x65]]
        %v4105 = vstv %s4104
        %v4106 = vmul.f32 %v3203, %v4105
        %4108 = vrot.lane.b32.xlu0 %v4106, 92
        %v4109 = vpop.permute.xlu0 %4108
        %v4110 = vrot.slane %v4109, 1
        %v4111 = vsel %vm2174, %v4109, %v4110
        %v4113 = vadd.f32 %v4073, %v4111
        %s4114 = sld [smem:[#allocation12 + $0x66]]
        %v4115 = vstv %s4114
        %v4116 = vmul.f32 %v3203, %v4115
        %4118 = vrot.lane.b32.xlu0 %v4116, 92
        %v4119 = vpop.permute.xlu0 %4118
        %v4120 = vrot.slane %v4119, 1
        %v4121 = vsel %vm2174, %v4119, %v4120
        %v4123 = vadd.f32 %v4083, %v4121
        %s4124 = sld [smem:[#allocation12 + $0x67]]
        %v4125 = vstv %s4124
        %v4126 = vmul.f32 %v3203, %v4125
        %4128 = vrot.lane.b32.xlu0 %v4126, 92
        %v4129 = vpop.permute.xlu0 %4128
        %v4130 = vrot.slane %v4129, 1
        %v4131 = vsel %vm2174, %v4129, %v4130
        %v4133 = vadd.f32 %v4093, %v4131
        %s4134 = sld [smem:[#allocation12 + $0x68]]
        %v4135 = vstv %s4134
        %v4136 = vmul.f32 %v3220, %v4135
        %4138 = vrot.lane.b32.xlu0 %v4136, 92
        %v4139 = vpop.permute.xlu0 %4138
        %v4140 = vrot.slane %v4139, 1
        %v4141 = vsel %vm2174, %v4139, %v4140
        %v4143 = vadd.f32 %v4103, %v4141
        %s4144 = sld [smem:[#allocation12 + $0x69]]
        %v4145 = vstv %s4144
        %v4146 = vmul.f32 %v3220, %v4145
        %4148 = vrot.lane.b32.xlu0 %v4146, 92
        %v4149 = vpop.permute.xlu0 %4148
        %v4150 = vrot.slane %v4149, 1
        %v4151 = vsel %vm2174, %v4149, %v4150
        %v4153 = vadd.f32 %v4113, %v4151
        %s4154 = sld [smem:[#allocation12 + $0x6a]]
        %v4155 = vstv %s4154
        %v4156 = vmul.f32 %v3220, %v4155
        %4158 = vrot.lane.b32.xlu0 %v4156, 92
        %v4159 = vpop.permute.xlu0 %4158
        %v4160 = vrot.slane %v4159, 1
        %v4161 = vsel %vm2174, %v4159, %v4160
        %v4163 = vadd.f32 %v4123, %v4161
        %s4164 = sld [smem:[#allocation12 + $0x6b]]
        %v4165 = vstv %s4164
        %v4166 = vmul.f32 %v3220, %v4165
        %4168 = vrot.lane.b32.xlu0 %v4166, 92
        %v4169 = vpop.permute.xlu0 %4168
        %v4170 = vrot.slane %v4169, 1
        %v4171 = vsel %vm2174, %v4169, %v4170
        %v4173 = vadd.f32 %v4133, %v4171
        %s4174 = sld [smem:[#allocation12 + $0x6c]]
        %v4175 = vstv %s4174
        %v4176 = vmul.f32 %v3237, %v4175
        %4178 = vrot.lane.b32.xlu0 %v4176, 92
        %v4179 = vpop.permute.xlu0 %4178
        %v4180 = vrot.slane %v4179, 1
        %v4181 = vsel %vm2174, %v4179, %v4180
        %v4183 = vadd.f32 %v4143, %v4181
        %s4184 = sld [smem:[#allocation12 + $0x6d]]
        %v4185 = vstv %s4184
        %v4186 = vmul.f32 %v3237, %v4185
        %4188 = vrot.lane.b32.xlu0 %v4186, 92
        %v4189 = vpop.permute.xlu0 %4188
        %v4190 = vrot.slane %v4189, 1
        %v4191 = vsel %vm2174, %v4189, %v4190
        %v4193 = vadd.f32 %v4153, %v4191
        %s4194 = sld [smem:[#allocation12 + $0x6e]]
        %v4195 = vstv %s4194
        %v4196 = vmul.f32 %v3237, %v4195
        %4198 = vrot.lane.b32.xlu0 %v4196, 92
        %v4199 = vpop.permute.xlu0 %4198
        %v4200 = vrot.slane %v4199, 1
        %v4201 = vsel %vm2174, %v4199, %v4200
        %v4203 = vadd.f32 %v4163, %v4201
        %s4204 = sld [smem:[#allocation12 + $0x6f]]
        %v4205 = vstv %s4204
        %v4206 = vmul.f32 %v3237, %v4205
        %4208 = vrot.lane.b32.xlu0 %v4206, 92
        %v4209 = vpop.permute.xlu0 %4208
        %v4210 = vrot.slane %v4209, 1
        %v4211 = vsel %vm2174, %v4209, %v4210
        %v4213 = vadd.f32 %v4173, %v4211
        %s4214 = sld [smem:[#allocation12 + $0x70]]
        %v4215 = vstv %s4214
        %v4216 = vmul.f32 %v3186, %v4215
        %4218 = vrot.lane.b32.xlu0 %v4216, 91
        %v4219 = vpop.permute.xlu0 %4218
        %v4220 = vrot.slane %v4219, 1
        %v4221 = vsel %vm2495, %v4219, %v4220
        %v4223 = vadd.f32 %v4183, %v4221
        %s4224 = sld [smem:[#allocation12 + $0x71]]
        %v4225 = vstv %s4224
        %v4226 = vmul.f32 %v3186, %v4225
        %4228 = vrot.lane.b32.xlu0 %v4226, 91
        %v4229 = vpop.permute.xlu0 %4228
        %v4230 = vrot.slane %v4229, 1
        %v4231 = vsel %vm2495, %v4229, %v4230
        %v4233 = vadd.f32 %v4193, %v4231
        %s4234 = sld [smem:[#allocation12 + $0x72]]
        %v4235 = vstv %s4234
        %v4236 = vmul.f32 %v3186, %v4235
        %4238 = vrot.lane.b32.xlu0 %v4236, 91
        %v4239 = vpop.permute.xlu0 %4238
        %v4240 = vrot.slane %v4239, 1
        %v4241 = vsel %vm2495, %v4239, %v4240
        %v4243 = vadd.f32 %v4203, %v4241
        %s4244 = sld [smem:[#allocation12 + $0x73]]
        %v4245 = vstv %s4244
        %v4246 = vmul.f32 %v3186, %v4245
        %4248 = vrot.lane.b32.xlu0 %v4246, 91
        %v4249 = vpop.permute.xlu0 %4248
        %v4250 = vrot.slane %v4249, 1
        %v4251 = vsel %vm2495, %v4249, %v4250
        %v4253 = vadd.f32 %v4213, %v4251
        %s4254 = sld [smem:[#allocation12 + $0x74]]
        %v4255 = vstv %s4254
        %v4256 = vmul.f32 %v3203, %v4255
        %4258 = vrot.lane.b32.xlu0 %v4256, 91
        %v4259 = vpop.permute.xlu0 %4258
        %v4260 = vrot.slane %v4259, 1
        %v4261 = vsel %vm2495, %v4259, %v4260
        %v4263 = vadd.f32 %v4223, %v4261
        %s4264 = sld [smem:[#allocation12 + $0x75]]
        %v4265 = vstv %s4264
        %v4266 = vmul.f32 %v3203, %v4265
        %4268 = vrot.lane.b32.xlu0 %v4266, 91
        %v4269 = vpop.permute.xlu0 %4268
        %v4270 = vrot.slane %v4269, 1
        %v4271 = vsel %vm2495, %v4269, %v4270
        %v4273 = vadd.f32 %v4233, %v4271
        %s4274 = sld [smem:[#allocation12 + $0x76]]
        %v4275 = vstv %s4274
        %v4276 = vmul.f32 %v3203, %v4275
        %4278 = vrot.lane.b32.xlu0 %v4276, 91
        %v4279 = vpop.permute.xlu0 %4278
        %v4280 = vrot.slane %v4279, 1
        %v4281 = vsel %vm2495, %v4279, %v4280
        %v4283 = vadd.f32 %v4243, %v4281
        %s4284 = sld [smem:[#allocation12 + $0x77]]
        %v4285 = vstv %s4284
        %v4286 = vmul.f32 %v3203, %v4285
        %4288 = vrot.lane.b32.xlu0 %v4286, 91
        %v4289 = vpop.permute.xlu0 %4288
        %v4290 = vrot.slane %v4289, 1
        %v4291 = vsel %vm2495, %v4289, %v4290
        %v4293 = vadd.f32 %v4253, %v4291
        %s4294 = sld [smem:[#allocation12 + $0x78]]
        %v4295 = vstv %s4294
        %v4296 = vmul.f32 %v3220, %v4295
        %4298 = vrot.lane.b32.xlu0 %v4296, 91
        %v4299 = vpop.permute.xlu0 %4298
        %v4300 = vrot.slane %v4299, 1
        %v4301 = vsel %vm2495, %v4299, %v4300
        %v4303 = vadd.f32 %v4263, %v4301
        %s4304 = sld [smem:[#allocation12 + $0x79]]
        %v4305 = vstv %s4304
        %v4306 = vmul.f32 %v3220, %v4305
        %4308 = vrot.lane.b32.xlu0 %v4306, 91
        %v4309 = vpop.permute.xlu0 %4308
        %v4310 = vrot.slane %v4309, 1
        %v4311 = vsel %vm2495, %v4309, %v4310
        %v4313 = vadd.f32 %v4273, %v4311
        %s4314 = sld [smem:[#allocation12 + $0x7a]]
        %v4315 = vstv %s4314
        %v4316 = vmul.f32 %v3220, %v4315
        %4318 = vrot.lane.b32.xlu0 %v4316, 91
        %v4319 = vpop.permute.xlu0 %4318
        %v4320 = vrot.slane %v4319, 1
        %v4321 = vsel %vm2495, %v4319, %v4320
        %v4323 = vadd.f32 %v4283, %v4321
        %s4324 = sld [smem:[#allocation12 + $0x7b]]
        %v4325 = vstv %s4324
        %v4326 = vmul.f32 %v3220, %v4325
        %4328 = vrot.lane.b32.xlu0 %v4326, 91
        %v4329 = vpop.permute.xlu0 %4328
        %v4330 = vrot.slane %v4329, 1
        %v4331 = vsel %vm2495, %v4329, %v4330
        %v4333 = vadd.f32 %v4293, %v4331
        %s4334 = sld [smem:[#allocation12 + $0x7c]]
        %v4335 = vstv %s4334
        %v4336 = vmul.f32 %v3237, %v4335
        %4338 = vrot.lane.b32.xlu0 %v4336, 91
        %v4339 = vpop.permute.xlu0 %4338
        %v4340 = vrot.slane %v4339, 1
        %v4341 = vsel %vm2495, %v4339, %v4340
        %v4343 = vadd.f32 %v4303, %v4341
        %s4344 = sld [smem:[#allocation12 + $0x7d]]
        %v4345 = vstv %s4344
        %v4346 = vmul.f32 %v3237, %v4345
        %4348 = vrot.lane.b32.xlu0 %v4346, 91
        %v4349 = vpop.permute.xlu0 %4348
        %v4350 = vrot.slane %v4349, 1
        %v4351 = vsel %vm2495, %v4349, %v4350
        %v4353 = vadd.f32 %v4313, %v4351
        %s4354 = sld [smem:[#allocation12 + $0x7e]]
        %v4355 = vstv %s4354
        %v4356 = vmul.f32 %v3237, %v4355
        %4358 = vrot.lane.b32.xlu0 %v4356, 91
        %v4359 = vpop.permute.xlu0 %4358
        %v4360 = vrot.slane %v4359, 1
        %v4361 = vsel %vm2495, %v4359, %v4360
        %v4363 = vadd.f32 %v4323, %v4361
        %s4364 = sld [smem:[#allocation12 + $0x7f]]
        %v4365 = vstv %s4364
        %v4366 = vmul.f32 %v3237, %v4365
        %4368 = vrot.lane.b32.xlu0 %v4366, 91
        %v4369 = vpop.permute.xlu0 %4368
        %v4370 = vrot.slane %v4369, 1
        %v4371 = vsel %vm2495, %v4369, %v4370
        %v4373 = vadd.f32 %v4333, %v4371
        %s4374 = sld [smem:[#allocation12 + $0x80]]
        %v4375 = vstv %s4374
        %v4376 = vmul.f32 %v3186, %v4375
        %4378 = vrot.lane.b32.xlu0 %v4376, 90
        %v4379 = vpop.permute.xlu0 %4378
        %v4380 = vrot.slane %v4379, 1
        %v4381 = vsel %vm2816, %v4379, %v4380
        %v4383 = vadd.f32 %v4343, %v4381
        %s4384 = sld [smem:[#allocation12 + $0x81]]
        %v4385 = vstv %s4384
        %v4386 = vmul.f32 %v3186, %v4385
        %4388 = vrot.lane.b32.xlu0 %v4386, 90
        %v4389 = vpop.permute.xlu0 %4388
        %v4390 = vrot.slane %v4389, 1
        %v4391 = vsel %vm2816, %v4389, %v4390
        %v4393 = vadd.f32 %v4353, %v4391
        %s4394 = sld [smem:[#allocation12 + $0x82]]
        %v4395 = vstv %s4394
        %v4396 = vmul.f32 %v3186, %v4395
        %4398 = vrot.lane.b32.xlu0 %v4396, 90
        %v4399 = vpop.permute.xlu0 %4398
        %v4400 = vrot.slane %v4399, 1
        %v4401 = vsel %vm2816, %v4399, %v4400
        %v4403 = vadd.f32 %v4363, %v4401
        %s4404 = sld [smem:[#allocation12 + $0x83]]
        %v4405 = vstv %s4404
        %v4406 = vmul.f32 %v3186, %v4405
        %4408 = vrot.lane.b32.xlu0 %v4406, 90
        %v4409 = vpop.permute.xlu0 %4408
        %v4410 = vrot.slane %v4409, 1
        %v4411 = vsel %vm2816, %v4409, %v4410
        %v4413 = vadd.f32 %v4373, %v4411
        %s4414 = sld [smem:[#allocation12 + $0x84]]
        %v4415 = vstv %s4414
        %v4416 = vmul.f32 %v3203, %v4415
        %4418 = vrot.lane.b32.xlu0 %v4416, 90
        %v4419 = vpop.permute.xlu0 %4418
        %v4420 = vrot.slane %v4419, 1
        %v4421 = vsel %vm2816, %v4419, %v4420
        %v4423 = vadd.f32 %v4383, %v4421
        %s4424 = sld [smem:[#allocation12 + $0x85]]
        %v4425 = vstv %s4424
        %v4426 = vmul.f32 %v3203, %v4425
        %4428 = vrot.lane.b32.xlu0 %v4426, 90
        %v4429 = vpop.permute.xlu0 %4428
        %v4430 = vrot.slane %v4429, 1
        %v4431 = vsel %vm2816, %v4429, %v4430
        %v4433 = vadd.f32 %v4393, %v4431
        %s4434 = sld [smem:[#allocation12 + $0x86]]
        %v4435 = vstv %s4434
        %v4436 = vmul.f32 %v3203, %v4435
        %4438 = vrot.lane.b32.xlu0 %v4436, 90
        %v4439 = vpop.permute.xlu0 %4438
        %v4440 = vrot.slane %v4439, 1
        %v4441 = vsel %vm2816, %v4439, %v4440
        %v4443 = vadd.f32 %v4403, %v4441
        %s4444 = sld [smem:[#allocation12 + $0x87]]
        %v4445 = vstv %s4444
        %v4446 = vmul.f32 %v3203, %v4445
        %4448 = vrot.lane.b32.xlu0 %v4446, 90
        %v4449 = vpop.permute.xlu0 %4448
        %v4450 = vrot.slane %v4449, 1
        %v4451 = vsel %vm2816, %v4449, %v4450
        %v4453 = vadd.f32 %v4413, %v4451
        %s4454 = sld [smem:[#allocation12 + $0x88]]
        %v4455 = vstv %s4454
        %v4456 = vmul.f32 %v3220, %v4455
        %4458 = vrot.lane.b32.xlu0 %v4456, 90
        %v4459 = vpop.permute.xlu0 %4458
        %v4460 = vrot.slane %v4459, 1
        %v4461 = vsel %vm2816, %v4459, %v4460
        %v4463 = vadd.f32 %v4423, %v4461
        %s4464 = sld [smem:[#allocation12 + $0x89]]
        %v4465 = vstv %s4464
        %v4466 = vmul.f32 %v3220, %v4465
        %4468 = vrot.lane.b32.xlu0 %v4466, 90
        %v4469 = vpop.permute.xlu0 %4468
        %v4470 = vrot.slane %v4469, 1
        %v4471 = vsel %vm2816, %v4469, %v4470
        %v4473 = vadd.f32 %v4433, %v4471
        %s4474 = sld [smem:[#allocation12 + $0x8a]]
        %v4475 = vstv %s4474
        %v4476 = vmul.f32 %v3220, %v4475
        %4478 = vrot.lane.b32.xlu0 %v4476, 90
        %v4479 = vpop.permute.xlu0 %4478
        %v4480 = vrot.slane %v4479, 1
        %v4481 = vsel %vm2816, %v4479, %v4480
        %v4483 = vadd.f32 %v4443, %v4481
        %s4484 = sld [smem:[#allocation12 + $0x8b]]
        %v4485 = vstv %s4484
        %v4486 = vmul.f32 %v3220, %v4485
        %4488 = vrot.lane.b32.xlu0 %v4486, 90
        %v4489 = vpop.permute.xlu0 %4488
        %v4490 = vrot.slane %v4489, 1
        %v4491 = vsel %vm2816, %v4489, %v4490
        %v4493 = vadd.f32 %v4453, %v4491
        %s4494 = sld [smem:[#allocation12 + $0x8c]]
        %v4495 = vstv %s4494
        %v4496 = vmul.f32 %v3237, %v4495
        %4498 = vrot.lane.b32.xlu0 %v4496, 90
        %v4499 = vpop.permute.xlu0 %4498
        %v4500 = vrot.slane %v4499, 1
        %v4501 = vsel %vm2816, %v4499, %v4500
        %v4503 = vadd.f32 %v4463, %v4501
        %s4504 = sld [smem:[#allocation12 + $0x8d]]
        %v4505 = vstv %s4504
        %v4506 = vmul.f32 %v3237, %v4505
        %4508 = vrot.lane.b32.xlu0 %v4506, 90
        %v4509 = vpop.permute.xlu0 %4508
        %v4510 = vrot.slane %v4509, 1
        %v4511 = vsel %vm2816, %v4509, %v4510
        %v4513 = vadd.f32 %v4473, %v4511
        %s4514 = sld [smem:[#allocation12 + $0x8e]]
        %v4515 = vstv %s4514
        %v4516 = vmul.f32 %v3237, %v4515
        %4518 = vrot.lane.b32.xlu0 %v4516, 90
        %v4519 = vpop.permute.xlu0 %4518
        %v4520 = vrot.slane %v4519, 1
        %v4521 = vsel %vm2816, %v4519, %v4520
        %v4523 = vadd.f32 %v4483, %v4521
        %s4524 = sld [smem:[#allocation12 + $0x8f]]
        %v4525 = vstv %s4524
        %v4526 = vmul.f32 %v3237, %v4525
        %4528 = vrot.lane.b32.xlu0 %v4526, 90
        %v4529 = vpop.permute.xlu0 %4528
        %v4530 = vrot.slane %v4529, 1
        %v4531 = vsel %vm2816, %v4529, %v4530
        %v4533 = vadd.f32 %v4493, %v4531
        %s4534 = sld [smem:[#allocation14]]
        %v4535 = vstv %s4534
        %v4536 = vadd.f32 %v4503, %v4535
        %v4537 = vmax.f32 %v4536, 0.0
        %s4538 = sld [smem:[#allocation14 + $0x1]]
        %v4539 = vstv %s4538
        %v4540 = vadd.f32 %v4513, %v4539
        %v4541 = vmax.f32 %v4540, 0.0
        %s4542 = sld [smem:[#allocation14 + $0x2]]
        %v4543 = vstv %s4542
        %v4544 = vadd.f32 %v4523, %v4543
        %v4545 = vmax.f32 %v4544, 0.0
        %s4546 = sld [smem:[#allocation14 + $0x3]]
        %v4547 = vstv %s4546
        %v4548 = vadd.f32 %v4533, %v4547
        %v4549 = vmax.f32 %v4548, 0.0
        %v4550 = vmul.f32 %v4537, %v414
        %4552 = vrot.lane.b32.xlu0 %v4550, 19
        %v4553 = vpop.permute.xlu0 %4552
        %v4554 = vrot.slane %v4553, 7
        %v4555 = vsel %vm3151, %v4554, %v4553
        %4557 = vst.msk [vmem:[#allocation2] ss:$4 sm:$0x7] %vm3157, %v4555
        %v4558 = vmul.f32 %v4541, %v414
        %4560 = vrot.lane.b32.xlu0 %v4558, 19
        %v4561 = vpop.permute.xlu0 %4560
        %v4562 = vrot.slane %v4561, 7
        %v4563 = vsel %vm3151, %v4562, %v4561
        %4565 = vst.msk [vmem:[%s3166] ss:$4 sm:$0x7] %vm3157, %v4563
        %v4566 = vmul.f32 %v4545, %v414
        %4568 = vrot.lane.b32.xlu0 %v4566, 19
        %v4569 = vpop.permute.xlu0 %4568
        %v4570 = vrot.slane %v4569, 7
        %v4571 = vsel %vm3151, %v4570, %v4569
        %4573 = vst.msk [vmem:[%s3175] ss:$4 sm:$0x7] %vm3157, %v4571
        %v4574 = vmul.f32 %v4549, %v414
        %4576 = vrot.lane.b32.xlu0 %v4574, 19
        %v4577 = vpop.permute.xlu0 %4576
        %v4578 = vrot.slane %v4577, 7
        %v4579 = vsel %vm3151, %v4578, %v4577
        %4581 = vst.msk [vmem:[%s3184] ss:$4 sm:$0x7] %vm3157, %v4579
        %v4582 = vld [vmem:[#allocation2] ss:$4 sm:$0x7]
        %s4583 = sld [smem:[#allocation15]]
        %v4584 = vstv %s4583
        %v4585 = vmul.f32 %v4582, %v4584
        %v4586 = vadd.f32 %v4585, 0.0
        %v4587 = vld [vmem:[%s3166] ss:$4 sm:$0x7]
        %s4588 = sld [smem:[#allocation15 + $0x1]]
        %v4589 = vstv %s4588
        %v4590 = vmul.f32 %v4587, %v4589
        %v4591 = vadd.f32 %v4586, %v4590
        %v4592 = vld [vmem:[%s3175] ss:$4 sm:$0x7]
        %s4593 = sld [smem:[#allocation15 + $0x2]]
        %v4594 = vstv %s4593
        %v4595 = vmul.f32 %v4592, %v4594
        %v4596 = vadd.f32 %v4591, %v4595
        %v4597 = vld [vmem:[%s3184] ss:$4 sm:$0x7]
        %s4598 = sld [smem:[#allocation15 + $0x3]]
        %v4599 = vstv %s4598
        %v4600 = vmul.f32 %v4597, %v4599
        %v4601 = vadd.f32 %v4596, %v4600
        %s4602 = sld [smem:[#allocation15 + $0x4]]
        %v4603 = vstv %s4602
        %v4604 = vmul.f32 %v4582, %v4603
        %4606 = vrot.lane.b32.xlu0 %v4604, 127
        %v4607 = vpop.permute.xlu0 %4606
        %v4608 = vrot.slane %v4607, 1
        %v4609 = vsel %vm569, %v4607, %v4608
        %v4611 = vadd.f32 %v4601, %v4609
        %s4612 = sld [smem:[#allocation15 + $0x5]]
        %v4613 = vstv %s4612
        %v4614 = vmul.f32 %v4587, %v4613
        %4616 = vrot.lane.b32.xlu0 %v4614, 127
        %v4617 = vpop.permute.xlu0 %4616
        %v4618 = vrot.slane %v4617, 1
        %v4619 = vsel %vm569, %v4617, %v4618
        %v4621 = vadd.f32 %v4611, %v4619
        %s4622 = sld [smem:[#allocation15 + $0x6]]
        %v4623 = vstv %s4622
        %v4624 = vmul.f32 %v4592, %v4623
        %4626 = vrot.lane.b32.xlu0 %v4624, 127
        %v4627 = vpop.permute.xlu0 %4626
        %v4628 = vrot.slane %v4627, 1
        %v4629 = vsel %vm569, %v4627, %v4628
        %v4631 = vadd.f32 %v4621, %v4629
        %s4632 = sld [smem:[#allocation15 + $0x7]]
        %v4633 = vstv %s4632
        %v4634 = vmul.f32 %v4597, %v4633
        %4636 = vrot.lane.b32.xlu0 %v4634, 127
        %v4637 = vpop.permute.xlu0 %4636
        %v4638 = vrot.slane %v4637, 1
        %v4639 = vsel %vm569, %v4637, %v4638
        %v4641 = vadd.f32 %v4631, %v4639
        %s4642 = sld [smem:[#allocation15 + $0x8]]
        %v4643 = vstv %s4642
        %v4644 = vmul.f32 %v4582, %v4643
        %4646 = vrot.lane.b32.xlu0 %v4644, 126
        %v4647 = vpop.permute.xlu0 %4646
        %v4648 = vrot.slane %v4647, 1
        %v4649 = vsel %vm890, %v4647, %v4648
        %v4651 = vadd.f32 %v4641, %v4649
        %s4652 = sld [smem:[#allocation15 + $0x9]]
        %v4653 = vstv %s4652
        %v4654 = vmul.f32 %v4587, %v4653
        %4656 = vrot.lane.b32.xlu0 %v4654, 126
        %v4657 = vpop.permute.xlu0 %4656
        %v4658 = vrot.slane %v4657, 1
        %v4659 = vsel %vm890, %v4657, %v4658
        %v4661 = vadd.f32 %v4651, %v4659
        %s4662 = sld [smem:[#allocation15 + $0xa]]
        %v4663 = vstv %s4662
        %v4664 = vmul.f32 %v4592, %v4663
        %4666 = vrot.lane.b32.xlu0 %v4664, 126
        %v4667 = vpop.permute.xlu0 %4666
        %v4668 = vrot.slane %v4667, 1
        %v4669 = vsel %vm890, %v4667, %v4668
        %v4671 = vadd.f32 %v4661, %v4669
        %s4672 = sld [smem:[#allocation15 + $0xb]]
        %v4673 = vstv %s4672
        %v4674 = vmul.f32 %v4597, %v4673
        %4676 = vrot.lane.b32.xlu0 %v4674, 126
        %v4677 = vpop.permute.xlu0 %4676
        %v4678 = vrot.slane %v4677, 1
        %v4679 = vsel %vm890, %v4677, %v4678
        %v4681 = vadd.f32 %v4671, %v4679
        %s4682 = sld [smem:[#allocation15 + $0xc]]
        %v4683 = vstv %s4682
        %v4684 = vmul.f32 %v4582, %v4683
        %4686 = vrot.lane.b32.xlu0 %v4684, 110
        %v4687 = vpop.permute.xlu0 %4686
        %v4688 = vrot.slane %v4687, 1
        %v4689 = vsel %vm1211, %v4687, %v4688
        %v4691 = vadd.f32 %v4681, %v4689
        %s4692 = sld [smem:[#allocation15 + $0xd]]
        %v4693 = vstv %s4692
        %v4694 = vmul.f32 %v4587, %v4693
        %4696 = vrot.lane.b32.xlu0 %v4694, 110
        %v4697 = vpop.permute.xlu0 %4696
        %v4698 = vrot.slane %v4697, 1
        %v4699 = vsel %vm1211, %v4697, %v4698
        %v4701 = vadd.f32 %v4691, %v4699
        %s4702 = sld [smem:[#allocation15 + $0xe]]
        %v4703 = vstv %s4702
        %v4704 = vmul.f32 %v4592, %v4703
        %4706 = vrot.lane.b32.xlu0 %v4704, 110
        %v4707 = vpop.permute.xlu0 %4706
        %v4708 = vrot.slane %v4707, 1
        %v4709 = vsel %vm1211, %v4707, %v4708
        %v4711 = vadd.f32 %v4701, %v4709
        %s4712 = sld [smem:[#allocation15 + $0xf]]
        %v4713 = vstv %s4712
        %v4714 = vmul.f32 %v4597, %v4713
        %4716 = vrot.lane.b32.xlu0 %v4714, 110
        %v4717 = vpop.permute.xlu0 %4716
        %v4718 = vrot.slane %v4717, 1
        %v4719 = vsel %vm1211, %v4717, %v4718
        %v4721 = vadd.f32 %v4711, %v4719
        %s4722 = sld [smem:[#allocation15 + $0x10]]
        %v4723 = vstv %s4722
        %v4724 = vmul.f32 %v4582, %v4723
        %4726 = vrot.lane.b32.xlu0 %v4724, 109
        %v4727 = vpop.permute.xlu0 %4726
        %v4728 = vrot.slane %v4727, 1
        %v4729 = vsel %vm1532, %v4727, %v4728
        %v4731 = vadd.f32 %v4721, %v4729
        %s4732 = sld [smem:[#allocation15 + $0x11]]
        %v4733 = vstv %s4732
        %v4734 = vmul.f32 %v4587, %v4733
        %4736 = vrot.lane.b32.xlu0 %v4734, 109
        %v4737 = vpop.permute.xlu0 %4736
        %v4738 = vrot.slane %v4737, 1
        %v4739 = vsel %vm1532, %v4737, %v4738
        %v4741 = vadd.f32 %v4731, %v4739
        %s4742 = sld [smem:[#allocation15 + $0x12]]
        %v4743 = vstv %s4742
        %v4744 = vmul.f32 %v4592, %v4743
        %4746 = vrot.lane.b32.xlu0 %v4744, 109
        %v4747 = vpop.permute.xlu0 %4746
        %v4748 = vrot.slane %v4747, 1
        %v4749 = vsel %vm1532, %v4747, %v4748
        %v4751 = vadd.f32 %v4741, %v4749
        %s4752 = sld [smem:[#allocation15 + $0x13]]
        %v4753 = vstv %s4752
        %v4754 = vmul.f32 %v4597, %v4753
        %4756 = vrot.lane.b32.xlu0 %v4754, 109
        %v4757 = vpop.permute.xlu0 %4756
        %v4758 = vrot.slane %v4757, 1
        %v4759 = vsel %vm1532, %v4757, %v4758
        %v4761 = vadd.f32 %v4751, %v4759
        %s4762 = sld [smem:[#allocation15 + $0x14]]
        %v4763 = vstv %s4762
        %v4764 = vmul.f32 %v4582, %v4763
        %4766 = vrot.lane.b32.xlu0 %v4764, 108
        %v4767 = vpop.permute.xlu0 %4766
        %v4768 = vrot.slane %v4767, 1
        %v4769 = vsel %vm1853, %v4767, %v4768
        %v4771 = vadd.f32 %v4761, %v4769
        %s4772 = sld [smem:[#allocation15 + $0x15]]
        %v4773 = vstv %s4772
        %v4774 = vmul.f32 %v4587, %v4773
        %4776 = vrot.lane.b32.xlu0 %v4774, 108
        %v4777 = vpop.permute.xlu0 %4776
        %v4778 = vrot.slane %v4777, 1
        %v4779 = vsel %vm1853, %v4777, %v4778
        %v4781 = vadd.f32 %v4771, %v4779
        %s4782 = sld [smem:[#allocation15 + $0x16]]
        %v4783 = vstv %s4782
        %v4784 = vmul.f32 %v4592, %v4783
        %4786 = vrot.lane.b32.xlu0 %v4784, 108
        %v4787 = vpop.permute.xlu0 %4786
        %v4788 = vrot.slane %v4787, 1
        %v4789 = vsel %vm1853, %v4787, %v4788
        %v4791 = vadd.f32 %v4781, %v4789
        %s4792 = sld [smem:[#allocation15 + $0x17]]
        %v4793 = vstv %s4792
        %v4794 = vmul.f32 %v4597, %v4793
        %4796 = vrot.lane.b32.xlu0 %v4794, 108
        %v4797 = vpop.permute.xlu0 %4796
        %v4798 = vrot.slane %v4797, 1
        %v4799 = vsel %vm1853, %v4797, %v4798
        %v4801 = vadd.f32 %v4791, %v4799
        %s4802 = sld [smem:[#allocation15 + $0x18]]
        %v4803 = vstv %s4802
        %v4804 = vmul.f32 %v4582, %v4803
        %4806 = vrot.lane.b32.xlu0 %v4804, 92
        %v4807 = vpop.permute.xlu0 %4806
        %v4808 = vrot.slane %v4807, 1
        %v4809 = vsel %vm2174, %v4807, %v4808
        %v4811 = vadd.f32 %v4801, %v4809
        %s4812 = sld [smem:[#allocation15 + $0x19]]
        %v4813 = vstv %s4812
        %v4814 = vmul.f32 %v4587, %v4813
        %4816 = vrot.lane.b32.xlu0 %v4814, 92
        %v4817 = vpop.permute.xlu0 %4816
        %v4818 = vrot.slane %v4817, 1
        %v4819 = vsel %vm2174, %v4817, %v4818
        %v4821 = vadd.f32 %v4811, %v4819
        %s4822 = sld [smem:[#allocation15 + $0x1a]]
        %v4823 = vstv %s4822
        %v4824 = vmul.f32 %v4592, %v4823
        %4826 = vrot.lane.b32.xlu0 %v4824, 92
        %v4827 = vpop.permute.xlu0 %4826
        %v4828 = vrot.slane %v4827, 1
        %v4829 = vsel %vm2174, %v4827, %v4828
        %v4831 = vadd.f32 %v4821, %v4829
        %s4832 = sld [smem:[#allocation15 + $0x1b]]
        %v4833 = vstv %s4832
        %v4834 = vmul.f32 %v4597, %v4833
        %4836 = vrot.lane.b32.xlu0 %v4834, 92
        %v4837 = vpop.permute.xlu0 %4836
        %v4838 = vrot.slane %v4837, 1
        %v4839 = vsel %vm2174, %v4837, %v4838
        %v4841 = vadd.f32 %v4831, %v4839
        %s4842 = sld [smem:[#allocation15 + $0x1c]]
        %v4843 = vstv %s4842
        %v4844 = vmul.f32 %v4582, %v4843
        %4846 = vrot.lane.b32.xlu0 %v4844, 91
        %v4847 = vpop.permute.xlu0 %4846
        %v4848 = vrot.slane %v4847, 1
        %v4849 = vsel %vm2495, %v4847, %v4848
        %v4851 = vadd.f32 %v4841, %v4849
        %s4852 = sld [smem:[#allocation15 + $0x1d]]
        %v4853 = vstv %s4852
        %v4854 = vmul.f32 %v4587, %v4853
        %4856 = vrot.lane.b32.xlu0 %v4854, 91
        %v4857 = vpop.permute.xlu0 %4856
        %v4858 = vrot.slane %v4857, 1
        %v4859 = vsel %vm2495, %v4857, %v4858
        %v4861 = vadd.f32 %v4851, %v4859
        %s4862 = sld [smem:[#allocation15 + $0x1e]]
        %v4863 = vstv %s4862
        %v4864 = vmul.f32 %v4592, %v4863
        %4866 = vrot.lane.b32.xlu0 %v4864, 91
        %v4867 = vpop.permute.xlu0 %4866
        %v4868 = vrot.slane %v4867, 1
        %v4869 = vsel %vm2495, %v4867, %v4868
        %v4871 = vadd.f32 %v4861, %v4869
        %s4872 = sld [smem:[#allocation15 + $0x1f]]
        %v4873 = vstv %s4872
        %v4874 = vmul.f32 %v4597, %v4873
        %4876 = vrot.lane.b32.xlu0 %v4874, 91
        %v4877 = vpop.permute.xlu0 %4876
        %v4878 = vrot.slane %v4877, 1
        %v4879 = vsel %vm2495, %v4877, %v4878
        %v4881 = vadd.f32 %v4871, %v4879
        %s4882 = sld [smem:[#allocation15 + $0x20]]
        %v4883 = vstv %s4882
        %v4884 = vmul.f32 %v4582, %v4883
        %4886 = vrot.lane.b32.xlu0 %v4884, 90
        %v4887 = vpop.permute.xlu0 %4886
        %v4888 = vrot.slane %v4887, 1
        %v4889 = vsel %vm2816, %v4887, %v4888
        %v4891 = vadd.f32 %v4881, %v4889
        %s4892 = sld [smem:[#allocation15 + $0x21]]
        %v4893 = vstv %s4892
        %v4894 = vmul.f32 %v4587, %v4893
        %4896 = vrot.lane.b32.xlu0 %v4894, 90
        %v4897 = vpop.permute.xlu0 %4896
        %v4898 = vrot.slane %v4897, 1
        %v4899 = vsel %vm2816, %v4897, %v4898
        %v4901 = vadd.f32 %v4891, %v4899
        %s4902 = sld [smem:[#allocation15 + $0x22]]
        %v4903 = vstv %s4902
        %v4904 = vmul.f32 %v4592, %v4903
        %4906 = vrot.lane.b32.xlu0 %v4904, 90
        %v4907 = vpop.permute.xlu0 %4906
        %v4908 = vrot.slane %v4907, 1
        %v4909 = vsel %vm2816, %v4907, %v4908
        %v4911 = vadd.f32 %v4901, %v4909
        %s4912 = sld [smem:[#allocation15 + $0x23]]
        %v4913 = vstv %s4912
        %v4914 = vmul.f32 %v4597, %v4913
        %4916 = vrot.lane.b32.xlu0 %v4914, 90
        %v4917 = vpop.permute.xlu0 %4916
        %v4918 = vrot.slane %v4917, 1
        %v4919 = vsel %vm2816, %v4917, %v4918
        %v4921 = vadd.f32 %v4911, %v4919
        %s4922 = sld [smem:[#allocation3]]
        %v4923 = vstv %s4922
        %v4924 = vadd.f32 %v4921, %v4923
        %v4925 = vmax.f32 %v4924, 0.0
        %s4926 = sld [smem:[#allocation4]]
        %v4927 = vstv %s4926
        %v4928 = vmul.f32 %v4925, %v4927
        %v4929 = vadd.f32 %v4928, 0.0
        %v4930 = vxor.u32 %v4929, 2147483648
        %v4931 = vmul.f32 %v4930, 1.442695
        %v4932 = vpow.pop %v4931
        %v4933 = vadd.f32 %v4932, 1.0
        %v4934 = vrcp.pop %v4933
        %v4935 = vmul.f32 1.0, %v4934
        %vm4936 = vcmp.ge.s32.totalorder %v3154, 0
        %vm4937 = vcmp.lt.s32.totalorder %v3154, 288
        %vm4938 = vmand %vm4936, %vm4937
        %4939 = vst.msk [vmem:[%s413] sm:$0x7] %vm4938, %v4935
        %s4940 = sand.u32 %s234, 1
        %s4941 = scalar_lea.sflag [#allocation7], %s4940
        %s4942 = sand.u32 %s234, 1
        %s4943 = smul.addr %s4942, 3
        %s4944 = scalar_lea.vmem [#allocation17], %s4943
        // Predicated region
        $region81: #{tpu_custom_call.1} parent=55 // pred_check
          %p4945 = pneg %p244
        $region82: #{tpu_custom_call.1} parent=55 // pred_check_branch
          %4947 = sbr.rel (%p4945) target = $region84
        $region83: #{tpu_custom_call.1} parent=55 // pred_region
          %s4949 = ssub.s32 48, 48
          %4950 = vsyncadd %s4941, %s4949
          %s4951 = smul.addr %s32, 3
          %s4952 = smul.addr %s4951, 16
          %s4953 = scalar_lea.hbm %s9, %s4952
          %s4955 = sshll.u32 %s4944, 4
          %s4956 = int_to_ptr.vmem [resolvable:$true] %s4955
          %4958 = dma.vmem_to_hbm [thread:$0]  %s4956, 48, %s4953, %s4941
        $region84: #{tpu_custom_call.1} parent=55 // pred_fallthru
          _
      $region56: #{tpu_custom_call.1} parent=5 // pred_fallthru
        _
      %p4959 = scmp.le.s32.totalorder 2, %s27
      // Predicated region
      $region85: #{tpu_custom_call.1} parent=5 // pred_check
        %p4960 = pneg %p4959
      $region86: #{tpu_custom_call.1} parent=5 // pred_check_branch
        %4962 = sbr.rel (%p4960) target = $region88
      $region87: #{tpu_custom_call.1} parent=5 // pred_region
        %s4963 = ssub.s32 %s27, 2
        // Predicated region
        $region89: #{tpu_custom_call.1} parent=87 // pred_check
          %p4964 = pneg %p250
        $region90: #{tpu_custom_call.1} parent=87 // pred_check_branch
          %4966 = sbr.rel (%p4964) target = $region92
        $region91: #{tpu_custom_call.1} parent=87 // pred_region
          %s4967 = sand.u32 %s235, 1
          %s4968 = scalar_lea.sflag [#allocation7], %s4967
          %s4969 = sand.u32 %s235, 1
          %s4970 = smul.addr %s4969, 3
          %s4971 = scalar_lea.vmem [#allocation17], %s4970
          %4972 = dma.done %s4968, 48
        $region92: #{tpu_custom_call.1} parent=87 // pred_fallthru
          _
      $region88: #{tpu_custom_call.1} parent=5 // pred_fallthru
        _
    $region6: #{tpu_custom_call.1} parent=1 // loop_footer
      %s31 = sadd.s32 1, %s27
    $region7: #{tpu_custom_call.1} parent=1 // loop_footer_branch
      %26 = sbr.rel target = $region3
    $region8: #{tpu_custom_call.1} parent=1 // loop_exit
      _
    %4973 = vsyncpa [#allocation6], 1
    %s4974 = scalar_lea.sflag [#allocation6], 1
    %4975 = vsyncpa %s4974, 1
    %4976 = vsyncpa [#allocation7], 1
    %s4977 = scalar_lea.sflag [#allocation7], 1
    %4978 = vsyncpa %s4977, 1
    %4979 = vsyncpa [#allocation8], 1
    %s4980 = scalar_lea.sflag [#allocation8], 1
    %4981 = vsyncpa %s4980, 1
    %4982 = vsyncpa [#allocation9], 1
    %s4983 = scalar_lea.sflag [#allocation9], 1
    %4984 = vsyncpa %s4983, 1
    %4985 = vsyncpa [#allocation13], 1
    %4986 = vsyncpa [#allocation16], 1

</llo_original>
